<compile_context>
chip_gen: v7x
topology: tpu7x:2x2x1
jax: 0.10.0
libtpu: 0.0.40
codegen_flags: <defaults>
</compile_context>

<pallas_src>
import functools

import jax
import jax.numpy as jnp
from jax.experimental import pallas as pl
from jax.experimental.pallas import tpu as pltpu


def _rope_kernel(q_ref, k_ref, cos_ref, sin_ref, q_out_ref, k_out_ref, *, use_roll):
    # q_ref / k_ref: (1, TS, H, D) VMEM tiles; cos_ref / sin_ref: (TS, D) f32.
    q = q_ref[...]
    k = k_ref[...]
    # Hoisted broadcast, shared by the q and k updates (budgeted in VMEM math).
    cos = cos_ref[...][None, :, None, :]   # (1, TS, 1, D) f32
    sin = sin_ref[...][None, :, None, :]   # (1, TS, 1, D) f32 (sign-folded if use_roll)

    half = q.shape[-1] // 2
    last = q.ndim - 1

    if use_roll:
        # sin_ref carries sin * ([-1]*half + [+1]*half), so
        # rotate_half(x) * sin == roll(x, half, axis=-1) * sin_signed.
        # (shift == D/2, so roll direction is irrelevant.)
        q_rot = pltpu.roll(q, shift=half, axis=last)
        k_rot = pltpu.roll(k, shift=half, axis=last)
    else:
        def rotate_half(x):
            return jnp.concatenate([-x[..., half:], x[..., :half]], axis=-1)
        q_rot = rotate_half(q)
        k_rot = rotate_half(k)

    # bf16 inputs are promoted to f32 by the f32 cos/sin; cast back on store.
    q_out_ref[...] = (q * cos + q_rot * sin).astype(q_out_ref.dtype)
    k_out_ref[...] = (k * cos + k_rot * sin).astype(k_out_ref.dtype)


def make_rope_caches(dim, max_seq_len=2048 * 2, rope_theta=10000.0):
    """Deterministic equivalent of the PyTorch module's __init__ buffers."""
    inv_freq = 1.0 / (rope_theta ** (jnp.arange(0, dim, 2, dtype=jnp.float32) / dim))
    t = jnp.arange(max_seq_len, dtype=jnp.float32)[:, None]          # (L, 1)
    freqs = t @ inv_freq[None, :]                                     # (L, D/2)
    freqs = jnp.concatenate([freqs, freqs], axis=-1)                  # (L, D)
    return jnp.cos(freqs), jnp.sin(freqs)


def _pick_seq_tile(seq_len, heads, head_dim, target_bytes=2 * 1024 * 1024):
    """Largest TS with S % TS == 0, TS sublane-friendly (TS == S or TS % 8 == 0),
    and one f32-equivalent (1, TS, H, D) block <= target_bytes (~2 MiB, the
    >=85%-of-HBM-roofline regime from the measured tiled-add data)."""
    bytes_per_row = heads * head_dim * 4          # f32-equivalent compute row
    legal = [d for d in range(1, seq_len + 1)
             if seq_len % d == 0 and (d == seq_len or d % 8 == 0)]
    fitting = [d for d in legal if d * bytes_per_row <= target_bytes]
    return max(fitting) if fitting else min(legal)


def rotary_embedding(q, k, cos_cached, sin_cached):
    """Forward pass of RotaryEmbedding: returns (q_embed, k_embed)."""
    B, S, H, D = q.shape
    assert k.shape == q.shape and k.dtype == q.dtype
    assert D % 2 == 0
    half = D // 2
    itemsize = jnp.dtype(q.dtype).itemsize

    # Keep cos/sin in f32 for bit-accuracy vs. the f32 reference (their HBM
    # traffic is tiny, and with the seq-outer grid it is fetched once per
    # seq-block, not once per (b, s) step).
    cos = cos_cached[:S, :].astype(jnp.float32)
    sin = sin_cached[:S, :].astype(jnp.float32)

    # XLU roll fast path: lane-axis rotation, f32 only (Mosaic rotate is
    # 32-bit); H gate dropped (H is always the full array dim).
    use_roll = (jnp.dtype(q.dtype) == jnp.dtype(jnp.float32) and D % 128 == 0)
    if use_roll:
        sign = jnp.concatenate([-jnp.ones((half,), jnp.float32),
                                jnp.ones((half,), jnp.float32)])
        sin = sin * sign   # fold rotate_half's sign into the (tiny) sin cache

    ts = _pick_seq_tile(S, H, D)
    # Seq outer, batch inner: cos/sin block index is constant across the inner
    # batch axis, so Pallas keeps them resident instead of re-DMA'ing per step.
    grid = (S // ts, B)

    qk_spec = pl.BlockSpec((1, ts, H, D), lambda s, b: (b, s, 0, 0))
    cs_spec = pl.BlockSpec((ts, D), lambda s, b: (s, 0))

    # VMEM budget: 4 q/k/q_out/k_out specs x 2 buffers, 2 cos/sin specs x 2
    # buffers (f32), plus ~6 block-sized f32 temporaries (the materialized
    # cos/sin broadcasts, the rotate results, and slack for the concat path /
    # f32 upcast).  Cap at 48 MiB (safe on v7x's 64 MiB per-TC VMEM), floor at
    # 24 MiB (above the v5e 16 MiB scoped default so bigger tiles fit).
    in_block = ts * H * D * itemsize
    f32_block = ts * H * D * 4
    cs_block = ts * D * 4
    need = 8 * in_block + 4 * cs_block + 6 * f32_block
    vmem_limit = int(min(48 * 2**20, max(24 * 2**20, int(need * 1.25))))

    elems = B * S * H * D
    cost = pl.CostEstimate(
        flops=6 * elems,                                    # 2 tensors x (2 mul + 1 add)
        transcendentals=0,
        bytes_accessed=4 * elems * itemsize + 2 * S * D * 4,  # r/w q,k + cos,sin
    )

    return pl.pallas_call(
        functools.partial(_rope_kernel, use_roll=use_roll),
        grid=grid,
        in_specs=[qk_spec, qk_spec, cs_spec, cs_spec],
        out_specs=(qk_spec, qk_spec),
        out_shape=(
            jax.ShapeDtypeStruct(q.shape, q.dtype),
            jax.ShapeDtypeStruct(k.shape, k.dtype),
        ),
        input_output_aliases={0: 0, 1: 1},   # RoPE is applied "in place"
        compiler_params=pltpu.CompilerParams(
            dimension_semantics=("parallel", "parallel"),
            vmem_limit_bytes=vmem_limit),
        cost_estimate=cost,
    )(q, k, cos, sin)


def _reference(q, k, cos_cached, sin_cached):
    """Pure-JAX reference mirroring the PyTorch forward."""
    S = q.shape[1]
    cos = cos_cached[:S, :][None, :, None, :]
    sin = sin_cached[:S, :][None, :, None, :]

    def rotate_half(x):
        half = x.shape[-1] // 2
        return jnp.concatenate([-x[..., half:], x[..., :half]], axis=-1)

    q_embed = q * cos + rotate_half(q) * sin
    k_embed = k * cos + rotate_half(k) * sin
    return q_embed, k_embed


def _run_case(rope_fn, key, B, S, H, D, max_seq_len):
    cos_c, sin_c = make_rope_caches(D, max_seq_len)
    kq, kk = jax.random.split(key)
    q = jax.random.normal(kq, (B, S, H, D), dtype=jnp.float32)
    k = jax.random.normal(kk, (B, S, H, D), dtype=jnp.float32)

    # Reference first: the kernel aliases q/k into its outputs, so be safe
    # about ordering even though the non-donated jit inputs stay valid.
    q_ref, k_ref = _reference(q, k, cos_c, sin_c)

    q_out, k_out = rope_fn(q, k, cos_c, sin_c)
    jax.block_until_ready((q_out, k_out))

    assert jnp.allclose(q_out, q_ref, atol=1e-5, rtol=1e-5)
    assert jnp.allclose(k_out, k_ref, atol=1e-5, rtol=1e-5)


if __name__ == "__main__":
    rope = jax.jit(rotary_embedding)

    # Case 1: lane/sublane-dense, production-like shape.
    # Exercises the seq-outer / batch-inner grid (cos/sin resident across B)
    # and the pltpu.roll + sign-folded-sin fast path.
    _run_case(rope, jax.random.PRNGKey(0), B=2, S=256, H=8, D=128, max_seq_len=512)

    # Case 2: small toy shape (unaligned D/H) -> concatenate fallback path.
    _run_case(rope, jax.random.PRNGKey(1), B=2, S=8, H=2, D=32, max_seq_len=64)

    print("KERNEL_OK")
</pallas_src>

<mosaic_0001>
module attributes {stable_mosaic.version = 11 : i64} {
  func.func @_rope_kernel(%arg0: i32, %arg1: i32, %arg2: memref<1x256x8x128xf32, #tpu.memory_space<vmem>>, %arg3: memref<1x256x8x128xf32, #tpu.memory_space<vmem>>, %arg4: memref<256x128xf32, #tpu.memory_space<vmem>>, %arg5: memref<256x128xf32, #tpu.memory_space<vmem>>, %arg6: memref<1x256x8x128xf32, #tpu.memory_space<vmem>>, %arg7: memref<1x256x8x128xf32, #tpu.memory_space<vmem>>) attributes {dimension_semantics = [#tpu.dimension_semantics<parallel>, #tpu.dimension_semantics<parallel>], iteration_bounds = array<i64: 1, 2>, scalar_prefetch = 0 : i64, scratch_operands = 0 : i64, tpu.core_type = #tpu.core_type<tc>, window_params = [{transform_indices = @transform_0, window_bounds = array<i64: 1, 256, 8, 128>}, {transform_indices = @transform_1, window_bounds = array<i64: 1, 256, 8, 128>}, {transform_indices = @transform_2, window_bounds = array<i64: 256, 128>}, {transform_indices = @transform_3, window_bounds = array<i64: 256, 128>}, {transform_indices = @transform_4, window_bounds = array<i64: 1, 256, 8, 128>}, {transform_indices = @transform_5, window_bounds = array<i64: 1, 256, 8, 128>}]} {
    %c0 = arith.constant 0 : index
    %c0_0 = arith.constant 0 : index
    %c0_1 = arith.constant 0 : index
    %c0_2 = arith.constant 0 : index
    %0 = vector.load %arg2[%c0, %c0_0, %c0_1, %c0_2] : memref<1x256x8x128xf32, #tpu.memory_space<vmem>>, vector<1x256x8x128xf32>
    %c0_3 = arith.constant 0 : index
    %c0_4 = arith.constant 0 : index
    %c0_5 = arith.constant 0 : index
    %c0_6 = arith.constant 0 : index
    %1 = vector.load %arg3[%c0_3, %c0_4, %c0_5, %c0_6] : memref<1x256x8x128xf32, #tpu.memory_space<vmem>>, vector<1x256x8x128xf32>
    %c0_7 = arith.constant 0 : index
    %c0_8 = arith.constant 0 : index
    %2 = vector.load %arg4[%c0_7, %c0_8] : memref<256x128xf32, #tpu.memory_space<vmem>>, vector<256x128xf32>
    %3 = vector.shape_cast %2 : vector<256x128xf32> to vector<1x256x1x128xf32>
    %c0_9 = arith.constant 0 : index
    %c0_10 = arith.constant 0 : index
    %4 = vector.load %arg5[%c0_9, %c0_10] : memref<256x128xf32, #tpu.memory_space<vmem>>, vector<256x128xf32>
    %5 = vector.shape_cast %4 : vector<256x128xf32> to vector<1x256x1x128xf32>
    %c64_i32 = arith.constant 64 : i32
    %6 = tpu.dynamic_rotate %0 by %c64_i32 dim 3 : vector<1x256x8x128xf32>, i32 -> vector<1x256x8x128xf32>
    %c64_i32_11 = arith.constant 64 : i32
    %7 = tpu.dynamic_rotate %1 by %c64_i32_11 dim 3 : vector<1x256x8x128xf32>, i32 -> vector<1x256x8x128xf32>
    %8 = vector.broadcast %3 : vector<1x256x1x128xf32> to vector<1x256x8x128xf32>
    %9 = arith.mulf %0, %8 : vector<1x256x8x128xf32>
    %10 = vector.broadcast %5 : vector<1x256x1x128xf32> to vector<1x256x8x128xf32>
    %11 = arith.mulf %6, %10 : vector<1x256x8x128xf32>
    %12 = arith.addf %9, %11 : vector<1x256x8x128xf32>
    %c0_12 = arith.constant 0 : index
    %c0_13 = arith.constant 0 : index
    %c0_14 = arith.constant 0 : index
    %c0_15 = arith.constant 0 : index
    %13 = vector.load %arg6[%c0_12, %c0_13, %c0_14, %c0_15] : memref<1x256x8x128xf32, #tpu.memory_space<vmem>>, vector<1x256x8x128xf32>
    tpu.vector_store %arg6[%c0_12, %c0_13, %c0_14, %c0_15], %12 {strides = array<i32>} : memref<1x256x8x128xf32, #tpu.memory_space<vmem>>, vector<1x256x8x128xf32>,
    %14 = vector.broadcast %3 : vector<1x256x1x128xf32> to vector<1x256x8x128xf32>
    %15 = arith.mulf %1, %14 : vector<1x256x8x128xf32>
    %16 = vector.broadcast %5 : vector<1x256x1x128xf32> to vector<1x256x8x128xf32>
    %17 = arith.mulf %7, %16 : vector<1x256x8x128xf32>
    %18 = arith.addf %15, %17 : vector<1x256x8x128xf32>
    %c0_16 = arith.constant 0 : index
    %c0_17 = arith.constant 0 : index
    %c0_18 = arith.constant 0 : index
    %c0_19 = arith.constant 0 : index
    %19 = vector.load %arg7[%c0_16, %c0_17, %c0_18, %c0_19] : memref<1x256x8x128xf32, #tpu.memory_space<vmem>>, vector<1x256x8x128xf32>
    tpu.vector_store %arg7[%c0_16, %c0_17, %c0_18, %c0_19], %18 {strides = array<i32>} : memref<1x256x8x128xf32, #tpu.memory_space<vmem>>, vector<1x256x8x128xf32>,
    return
  }
  func.func @transform_0(%arg0: i32, %arg1: i32) -> (i32, i32, i32, i32) {
    %c0_i32 = arith.constant 0 : i32
    %c0_i32_0 = arith.constant 0 : i32
    %c0_i32_1 = arith.constant 0 : i32
    return %arg1, %arg0, %c0_i32, %c0_i32_0 : i32, i32, i32, i32
  }
  func.func @transform_1(%arg0: i32, %arg1: i32) -> (i32, i32, i32, i32) {
    %c0_i32 = arith.constant 0 : i32
    %c0_i32_0 = arith.constant 0 : i32
    %c0_i32_1 = arith.constant 0 : i32
    return %arg1, %arg0, %c0_i32, %c0_i32_0 : i32, i32, i32, i32
  }
  func.func @transform_2(%arg0: i32, %arg1: i32) -> (i32, i32) {
    %c0_i32 = arith.constant 0 : i32
    %c0_i32_0 = arith.constant 0 : i32
    return %arg0, %c0_i32 : i32, i32
  }
  func.func @transform_3(%arg0: i32, %arg1: i32) -> (i32, i32) {
    %c0_i32 = arith.constant 0 : i32
    %c0_i32_0 = arith.constant 0 : i32
    return %arg0, %c0_i32 : i32, i32
  }
  func.func @transform_4(%arg0: i32, %arg1: i32) -> (i32, i32, i32, i32) {
    %c0_i32 = arith.constant 0 : i32
    %c0_i32_0 = arith.constant 0 : i32
    %c0_i32_1 = arith.constant 0 : i32
    return %arg1, %arg0, %c0_i32, %c0_i32_0 : i32, i32, i32, i32
  }
  func.func @transform_5(%arg0: i32, %arg1: i32) -> (i32, i32, i32, i32) {
    %c0_i32 = arith.constant 0 : i32
    %c0_i32_0 = arith.constant 0 : i32
    %c0_i32_1 = arith.constant 0 : i32
    return %arg1, %arg0, %c0_i32, %c0_i32_0 : i32, i32, i32, i32
  }
}

</mosaic_0001>

<llo_original>
// kernel: rotary_embedding.1
$region0: #{rotary_embedding.1}
  #allocation0 [shape = 'u32[]', space=smem, size = 0x4, offset = 0x4, fixed_abs, tag = 'smem constant byte address 0x4 - core index']
  #allocation1 [shape = 'u32[144,128]{1,0:T(1,128)}', space=vmem, size = 0x12000, scoped, tag = 'internal scratch']
  %s0 = inlined_call_operand.hbm [shape: f32[2,256,8,128], index: 0, kind: input, shape index: {}, may-alias: {0,4}]
  %s1 = inlined_call_operand.hbm [shape: f32[2,256,8,128], index: 1, kind: input, shape index: {}, may-alias: {1,5}]
  %s2 = inlined_call_operand.vmem [shape: f32[256,128], index: 2, kind: input, shape index: {}]
  %s3 = inlined_call_operand.vmem [shape: f32[256,128], index: 3, kind: input, shape index: {}]
  %s4 = inlined_call_operand.hbm [shape: f32[2,256,8,128], index: 4, kind: output, shape index: {0}, may-alias: {0,4}]
  %s5 = inlined_call_operand.hbm [shape: f32[2,256,8,128], index: 5, kind: output, shape index: {1}, may-alias: {1,5}]
  %6 = xla_tuple %s4, %s5
  %s7 = sld [smem:[#allocation0]]
  $region65: #{rotary_embedding.1} parent=0
    _
  %s9 = ssub.s32 1, %s7
  %s10 = scalar_select 0, %s9, %s7
  $region1: #{rotary_embedding.1} parent=0
    #allocation2 [shape = 'u8[2097152]{0}', space=vmem, size = 0x200000, scoped, tag = 'input window, operand 0']
    #allocation3 [shape = 's32[2]{0}', space=sflag, size = 0x8, scoped, tag = 'scoped memory for rotary_embedding.1']
    #allocation4 [shape = 's32[2]{0}', space=sflag, size = 0x8, scoped, tag = 'scoped memory for rotary_embedding.1']
    #allocation5 [shape = 'u8[2097152]{0}', space=vmem, size = 0x200000, scoped, tag = 'input window, operand 1']
    #allocation6 [shape = 's32[2]{0}', space=sflag, size = 0x8, scoped, tag = 'scoped memory for rotary_embedding.1']
    #allocation7 [shape = 'u8[2097152]{0}', space=vmem, size = 0x200000, scoped, tag = 'output window, operand 0']
    #allocation8 [shape = 'u8[2097152]{0}', space=vmem, size = 0x200000, scoped, tag = 'output window, operand 1']
    #allocation9 [shape = 's32[2]{0}', space=sflag, size = 0x8, scoped, tag = 'scoped memory for rotary_embedding.1']
    %11 = vsyncpa [#allocation3], 0
    %s12 = scalar_lea.sflag [#allocation3], 1
    %13 = vsyncpa %s12, 0
    %14 = vsyncpa [#allocation6], 0
    %s15 = scalar_lea.sflag [#allocation6], 1
    %16 = vsyncpa %s15, 0
    %17 = vsyncpa [#allocation4], 0
    %s18 = scalar_lea.sflag [#allocation4], 1
    %19 = vsyncpa %s18, 0
    %20 = vsyncpa [#allocation9], 0
    %s21 = scalar_lea.sflag [#allocation9], 1
    %22 = vsyncpa %s21, 0
    loop: start=0, step=1, limit=4
    $region2: #{rotary_embedding.1} parent=1 // loop_pre_header
      _
    $region3: #{rotary_embedding.1} parent=1 // loop_header
      %s24 = sphi 0, %s28
      %p25 = scmp.ge.s32.totalorder %s24, 4
      %s31 = sphi 0, %s43
      %s32 = sphi 0, %s39
      %s33 = sphi 0, %s31
      %s34 = sphi 0, %s32
      %s35 = sphi 0, %s33
      %s36 = sphi 0, %s34
      %s48 = sphi 0, %s50
      %s51 = sphi 0, %s48
      %s52 = sphi 0, %s51
      %s68 = sphi 0, %s52
      %s76 = sphi 0, %s78
      %s79 = sphi 0, %s76
      %s80 = sphi 0, %s79
      %s96 = sphi 0, %s80
      %s102 = sphi 0, %s104
      %s105 = sphi 0, %s102
      %s106 = sphi 0, %s105
      %s122 = sphi 0, %s106
      %s128 = sphi 0, %s130
      %s131 = sphi 0, %s128
      %s132 = sphi 0, %s131
      %s148 = sphi 0, %s132
      %s156 = sphi 0, %s158
      %s159 = sphi 0, %s156
      %s160 = sphi 0, %s159
      %s176 = sphi 0, %s160
      %s184 = sphi 0, %s186
      %s187 = sphi 0, %s184
      %s188 = sphi 0, %s187
      %s204 = sphi 0, %s188
    $region4: #{rotary_embedding.1} parent=1 // loop_header_branch
      %27 = sbr.rel (%p25) target = $region8
    $region5: #{rotary_embedding.1} parent=1 // loop_body
      %s29 = ssub.s32 %s24, 1
      %s30 = ssub.s32 %s24, 2
      %s37 = sadd.s32 1, %s32
      %p38 = scmp.ge.s32.totalorder %s37, 2
      %s39 = scalar_select %p38, 0, %s37
      %s40 = sadd.s32 1, %s31
      %s41 = scalar_select %p38, %s40, %s31
      %p42 = scmp.ge.s32.totalorder %s41, 1
      %s43 = scalar_select %p42, 0, %s41
      %s44 = ssub.s32 %s32, %s39
      %s45 = ssub.s32 %s31, %s43
      %s46 = sor.u32 %s44, %s45
      %p47 = scmp.eq.s32.totalorder %s46, 0
      %s49 = sadd.s32 %s48, 1
      %s50 = scalar_select %p47, %s48, %s49
      %p53 = pneg %p47
      %p54 = scmp.eq.s32.totalorder %s24, 1
      %p55 = por %p53, %p54
      %p56 = scmp.ne.s32.totalorder %s48, %s51
      %p57 = scmp.eq.s32.totalorder %s24, 0
      %p58 = por %p56, %p57
      %p59 = scmp.ne.s32.totalorder %s48, %s51
      %p60 = scmp.eq.s32.totalorder %s29, 1
      %p61 = por %p59, %p60
      %p62 = scmp.ne.s32.totalorder %s51, %s52
      %p63 = scmp.eq.s32.totalorder %s29, 0
      %p64 = por %p62, %p63
      %p65 = scmp.ne.s32.totalorder %s51, %s52
      %p66 = scmp.eq.s32.totalorder %s30, 1
      %p67 = por %p65, %p66
      %p69 = scmp.ne.s32.totalorder %s52, %s68
      %p70 = scmp.eq.s32.totalorder %s30, 0
      %p71 = por %p69, %p70
      %s72 = ssub.s32 %s32, %s39
      %s73 = ssub.s32 %s31, %s43
      %s74 = sor.u32 %s72, %s73
      %p75 = scmp.eq.s32.totalorder %s74, 0
      %s77 = sadd.s32 %s76, 1
      %s78 = scalar_select %p75, %s76, %s77
      %p81 = pneg %p75
      %p82 = scmp.eq.s32.totalorder %s24, 1
      %p83 = por %p81, %p82
      %p84 = scmp.ne.s32.totalorder %s76, %s79
      %p85 = scmp.eq.s32.totalorder %s24, 0
      %p86 = por %p84, %p85
      %p87 = scmp.ne.s32.totalorder %s76, %s79
      %p88 = scmp.eq.s32.totalorder %s29, 1
      %p89 = por %p87, %p88
      %p90 = scmp.ne.s32.totalorder %s79, %s80
      %p91 = scmp.eq.s32.totalorder %s29, 0
      %p92 = por %p90, %p91
      %p93 = scmp.ne.s32.totalorder %s79, %s80
      %p94 = scmp.eq.s32.totalorder %s30, 1
      %p95 = por %p93, %p94
      %p97 = scmp.ne.s32.totalorder %s80, %s96
      %p98 = scmp.eq.s32.totalorder %s30, 0
      %p99 = por %p97, %p98
      %s100 = ssub.s32 %s31, %s43
      %p101 = scmp.eq.s32.totalorder %s100, 0
      %s103 = sadd.s32 %s102, 1
      %s104 = scalar_select %p101, %s102, %s103
      %p107 = pneg %p101
      %p108 = scmp.eq.s32.totalorder %s24, 1
      %p109 = por %p107, %p108
      %p110 = scmp.ne.s32.totalorder %s102, %s105
      %p111 = scmp.eq.s32.totalorder %s24, 0
      %p112 = por %p110, %p111
      %p113 = scmp.ne.s32.totalorder %s102, %s105
      %p114 = scmp.eq.s32.totalorder %s29, 1
      %p115 = por %p113, %p114
      %p116 = scmp.ne.s32.totalorder %s105, %s106
      %p117 = scmp.eq.s32.totalorder %s29, 0
      %p118 = por %p116, %p117
      %p119 = scmp.ne.s32.totalorder %s105, %s106
      %p120 = scmp.eq.s32.totalorder %s30, 1
      %p121 = por %p119, %p120
      %p123 = scmp.ne.s32.totalorder %s106, %s122
      %p124 = scmp.eq.s32.totalorder %s30, 0
      %p125 = por %p123, %p124
      %s126 = ssub.s32 %s31, %s43
      %p127 = scmp.eq.s32.totalorder %s126, 0
      %s129 = sadd.s32 %s128, 1
      %s130 = scalar_select %p127, %s128, %s129
      %p133 = pneg %p127
      %p134 = scmp.eq.s32.totalorder %s24, 1
      %p135 = por %p133, %p134
      %p136 = scmp.ne.s32.totalorder %s128, %s131
      %p137 = scmp.eq.s32.totalorder %s24, 0
      %p138 = por %p136, %p137
      %p139 = scmp.ne.s32.totalorder %s128, %s131
      %p140 = scmp.eq.s32.totalorder %s29, 1
      %p141 = por %p139, %p140
      %p142 = scmp.ne.s32.totalorder %s131, %s132
      %p143 = scmp.eq.s32.totalorder %s29, 0
      %p144 = por %p142, %p143
      %p145 = scmp.ne.s32.totalorder %s131, %s132
      %p146 = scmp.eq.s32.totalorder %s30, 1
      %p147 = por %p145, %p146
      %p149 = scmp.ne.s32.totalorder %s132, %s148
      %p150 = scmp.eq.s32.totalorder %s30, 0
      %p151 = por %p149, %p150
      %s152 = ssub.s32 %s32, %s39
      %s153 = ssub.s32 %s31, %s43
      %s154 = sor.u32 %s152, %s153
      %p155 = scmp.eq.s32.totalorder %s154, 0
      %s157 = sadd.s32 %s156, 1
      %s158 = scalar_select %p155, %s156, %s157
      %p161 = pneg %p155
      %p162 = scmp.eq.s32.totalorder %s24, 1
      %p163 = por %p161, %p162
      %p164 = scmp.ne.s32.totalorder %s156, %s159
      %p165 = scmp.eq.s32.totalorder %s24, 0
      %p166 = por %p164, %p165
      %p167 = scmp.ne.s32.totalorder %s156, %s159
      %p168 = scmp.eq.s32.totalorder %s29, 1
      %p169 = por %p167, %p168
      %p170 = scmp.ne.s32.totalorder %s159, %s160
      %p171 = scmp.eq.s32.totalorder %s29, 0
      %p172 = por %p170, %p171
      %p173 = scmp.ne.s32.totalorder %s159, %s160
      %p174 = scmp.eq.s32.totalorder %s30, 1
      %p175 = por %p173, %p174
      %p177 = scmp.ne.s32.totalorder %s160, %s176
      %p178 = scmp.eq.s32.totalorder %s30, 0
      %p179 = por %p177, %p178
      %s180 = ssub.s32 %s32, %s39
      %s181 = ssub.s32 %s31, %s43
      %s182 = sor.u32 %s180, %s181
      %p183 = scmp.eq.s32.totalorder %s182, 0
      %s185 = sadd.s32 %s184, 1
      %s186 = scalar_select %p183, %s184, %s185
      %p189 = pneg %p183
      %p190 = scmp.eq.s32.totalorder %s24, 1
      %p191 = por %p189, %p190
      %p192 = scmp.ne.s32.totalorder %s184, %s187
      %p193 = scmp.eq.s32.totalorder %s24, 0
      %p194 = por %p192, %p193
      %p195 = scmp.ne.s32.totalorder %s184, %s187
      %p196 = scmp.eq.s32.totalorder %s29, 1
      %p197 = por %p195, %p196
      %p198 = scmp.ne.s32.totalorder %s187, %s188
      %p199 = scmp.eq.s32.totalorder %s29, 0
      %p200 = por %p198, %p199
      %p201 = scmp.ne.s32.totalorder %s187, %s188
      %p202 = scmp.eq.s32.totalorder %s30, 1
      %p203 = por %p201, %p202
      %p205 = scmp.ne.s32.totalorder %s188, %s204
      %p206 = scmp.eq.s32.totalorder %s30, 0
      %p207 = por %p205, %p206
      %p208 = scmp.le.s32.totalorder 1, %s24
      %p209 = scmp.lt.s32.totalorder %s24, 3
      %p210 = pnand %p208, %p209
      %p211 = pneg %p210
      // Predicated region
      $region9: #{rotary_embedding.1} parent=5 // pred_check
        _
      $region10: #{rotary_embedding.1} parent=5 // pred_check_branch
        %213 = sbr.rel (%p210) target = $region12
      $region11: #{rotary_embedding.1} parent=5 // pred_region
        %s214 = ssub.s32 %s24, 1
        // Predicated region
        $region13: #{rotary_embedding.1} parent=11 // pred_check
          %p215 = pneg %p118
        $region14: #{rotary_embedding.1} parent=11 // pred_check_branch
          %217 = sbr.rel (%p215) target = $region16
        $region15: #{rotary_embedding.1} parent=11 // pred_region
          %s218 = smul.u32 32, %s33
          %p219 = scmp.lt.s32.totalorder %s218, 31
          %s220 = scalar_select %p219, %s218, 31
          %s221 = smul.addr %s220, 8
          %s222 = scalar_lea.vmem %s2, %s221
          %s223 = smul.u32 32, %s33
        $region16: #{rotary_embedding.1} parent=11 // pred_fallthru
          _
        // Predicated region
        $region17: #{rotary_embedding.1} parent=11 // pred_check
          %p224 = pneg %p144
        $region18: #{rotary_embedding.1} parent=11 // pred_check_branch
          %226 = sbr.rel (%p224) target = $region20
        $region19: #{rotary_embedding.1} parent=11 // pred_region
          %s227 = smul.u32 32, %s33
          %p228 = scmp.lt.s32.totalorder %s227, 31
          %s229 = scalar_select %p228, %s227, 31
          %s230 = smul.addr %s229, 8
          %s231 = scalar_lea.vmem %s3, %s230
          %s232 = smul.u32 32, %s33
        $region20: #{rotary_embedding.1} parent=11 // pred_fallthru
          _
      $region12: #{rotary_embedding.1} parent=5 // pred_fallthru
        _
      %p233 = scmp.lt.s32.totalorder %s24, 2
      // Predicated region
      $region21: #{rotary_embedding.1} parent=5 // pred_check
        %p234 = pneg %p233
      $region22: #{rotary_embedding.1} parent=5 // pred_check_branch
        %236 = sbr.rel (%p234) target = $region24
      $region23: #{rotary_embedding.1} parent=5 // pred_region
        // Predicated region
        $region25: #{rotary_embedding.1} parent=23 // pred_check
          %p237 = pneg %p58
        $region26: #{rotary_embedding.1} parent=23 // pred_check_branch
          %239 = sbr.rel (%p237) target = $region28
        $region27: #{rotary_embedding.1} parent=23 // pred_region
          %s240 = sand.u32 %s48, 1
          %s241 = scalar_lea.sflag [#allocation3], %s240
          %s242 = sand.u32 %s48, 1
          %s243 = smul.addr %s242, 2048
          %s244 = scalar_lea.vmem [#allocation2], %s243
          %s245 = smul.u32 256, %s31
          %s247 = ssub.s32 32768, 32768
          %248 = vsyncadd %s241, %s247
          %s249 = smul.addr %s32, 256
          %s250 = sadd.s32 %s245, %s249
          %s251 = smul.addr %s250, 128
          %s252 = scalar_lea.hbm %s0, %s251
          %s253 = sshll.u32 %s244, 4
          %s254 = int_to_ptr.vmem [resolvable:$true] %s253
          %259 = dma.hbm_to_vmem [thread:$0]  %s252, 32768, %s254, %s241, 128, 128, 8
        $region28: #{rotary_embedding.1} parent=23 // pred_fallthru
          _
        // Predicated region
        $region29: #{rotary_embedding.1} parent=23 // pred_check
          %p260 = pneg %p86
        $region30: #{rotary_embedding.1} parent=23 // pred_check_branch
          %262 = sbr.rel (%p260) target = $region32
        $region31: #{rotary_embedding.1} parent=23 // pred_region
          %s263 = sand.u32 %s76, 1
          %s264 = scalar_lea.sflag [#allocation6], %s263
          %s265 = sand.u32 %s76, 1
          %s266 = smul.addr %s265, 2048
          %s267 = scalar_lea.vmem [#allocation5], %s266
          %s268 = smul.u32 256, %s31
          %s270 = ssub.s32 32768, 32768
          %271 = vsyncadd %s264, %s270
          %s272 = smul.addr %s32, 256
          %s273 = sadd.s32 %s268, %s272
          %s274 = smul.addr %s273, 128
          %s275 = scalar_lea.hbm %s1, %s274
          %s276 = sshll.u32 %s267, 4
          %s277 = int_to_ptr.vmem [resolvable:$true] %s276
          %282 = dma.hbm_to_vmem [thread:$0]  %s275, 32768, %s277, %s264, 128, 128, 8
        $region32: #{rotary_embedding.1} parent=23 // pred_fallthru
          _
      $region24: #{rotary_embedding.1} parent=5 // pred_fallthru
        _
      %p283 = scmp.le.s32.totalorder 1, %s24
      %p284 = scmp.lt.s32.totalorder %s24, 3
      %p285 = pnand %p283, %p284
      %p286 = pneg %p285
      // Predicated region
      $region33: #{rotary_embedding.1} parent=5 // pred_check
        _
      $region34: #{rotary_embedding.1} parent=5 // pred_check_branch
        %288 = sbr.rel (%p285) target = $region36
      $region35: #{rotary_embedding.1} parent=5 // pred_region
        %s289 = ssub.s32 %s24, 1
        %s290 = sand.u32 %s51, 1
        %s291 = scalar_lea.sflag [#allocation3], %s290
        %s292 = sand.u32 %s51, 1
        %s293 = smul.addr %s292, 2048
        %s294 = scalar_lea.vmem [#allocation2], %s293
        // Predicated region
        $region37: #{rotary_embedding.1} parent=35 // pred_check
          %p295 = pneg %p64
        $region38: #{rotary_embedding.1} parent=35 // pred_check_branch
          %297 = sbr.rel (%p295) target = $region40
        $region39: #{rotary_embedding.1} parent=35 // pred_region
          %298 = dma.done %s291, 32768
        $region40: #{rotary_embedding.1} parent=35 // pred_fallthru
          _
        %s299 = sand.u32 %s79, 1
        %s300 = scalar_lea.sflag [#allocation6], %s299
        %s301 = sand.u32 %s79, 1
        %s302 = smul.addr %s301, 2048
        %s303 = scalar_lea.vmem [#allocation5], %s302
        // Predicated region
        $region41: #{rotary_embedding.1} parent=35 // pred_check
          %p304 = pneg %p92
        $region42: #{rotary_embedding.1} parent=35 // pred_check_branch
          %306 = sbr.rel (%p304) target = $region44
        $region43: #{rotary_embedding.1} parent=35 // pred_region
          %307 = dma.done %s300, 32768
        $region44: #{rotary_embedding.1} parent=35 // pred_fallthru
          _
        %s308 = sand.u32 %s51, 1
        %s309 = scalar_lea.sflag [#allocation3], %s308
        %s310 = sand.u32 %s51, 1
        %s311 = smul.addr %s310, 2048
        %s312 = scalar_lea.vmem [#allocation2], %s311
        %p313 = pneg %p64
        %p314 = pneg %p61
        %s315 = sand.u32 %s79, 1
        %s316 = scalar_lea.sflag [#allocation6], %s315
        %s317 = sand.u32 %s79, 1
        %s318 = smul.addr %s317, 2048
        %s319 = scalar_lea.vmem [#allocation5], %s318
        %p320 = pneg %p92
        %p321 = pneg %p89
        %s322 = smul.u32 32, %s33
        %p323 = scmp.lt.s32.totalorder %s322, 31
        %s324 = scalar_select %p323, %s322, 31
        %s325 = smul.addr %s324, 8
        %s326 = scalar_lea.vmem %s2, %s325
        %p327 = pneg %p118
        %p328 = pneg %p115
        %s329 = smul.u32 32, %s33
        %p330 = scmp.lt.s32.totalorder %s329, 31
        %s331 = scalar_select %p330, %s329, 31
        %s332 = smul.addr %s331, 8
        %s333 = scalar_lea.vmem %s3, %s332
        %p334 = pneg %p144
        %p335 = pneg %p141
        %p336 = pneg %p172
        %p337 = pneg %p169
        %s338 = sand.u32 %s159, 1
        %s339 = scalar_lea.sflag [#allocation4], %s338
        %s340 = sand.u32 %s159, 1
        %s341 = smul.addr %s340, 2048
        %s342 = scalar_lea.vmem [#allocation7], %s341
        %p343 = pneg %p200
        %p344 = pneg %p197
        %s345 = sand.u32 %s187, 1
        %s346 = scalar_lea.sflag [#allocation9], %s345
        %s347 = sand.u32 %s187, 1
        %s348 = smul.addr %s347, 2048
        %s349 = scalar_lea.vmem [#allocation8], %s348
        %s350 = smul.u32 256, %s33
        %s351 = smul.u32 256, %s33
        %s352 = smul.u32 32, %s33
        %p353 = scmp.lt.s32.totalorder %s352, 31
        %s354 = scalar_select %p353, %s352, 31
        %s355 = smul.addr %s354, 8
        %s356 = scalar_lea.vmem %s2, %s355
        %s357 = smul.u32 32, %s33
        %s358 = smul.u32 32, %s33
        %p359 = scmp.lt.s32.totalorder %s358, 31
        %s360 = scalar_select %p359, %s358, 31
        %s361 = smul.addr %s360, 8
        %s362 = scalar_lea.vmem %s3, %s361
        %s363 = smul.u32 32, %s33
        %s364 = smul.u32 256, %s33
        %s365 = smul.u32 256, %s33
        %v366 = vld [vmem:[%s294] sm:$0xff]
        %v367 = vld [vmem:[%s294 + $0x8] sm:$0xff]
        %v368 = vld [vmem:[%s294 + $0x10] sm:$0xff]
        %v369 = vld [vmem:[%s294 + $0x18] sm:$0xff]
        %v370 = vld [vmem:[%s294 + $0x20] sm:$0xff]
        %v371 = vld [vmem:[%s294 + $0x28] sm:$0xff]
        %v372 = vld [vmem:[%s294 + $0x30] sm:$0xff]
        %v373 = vld [vmem:[%s294 + $0x38] sm:$0xff]
        %v374 = vld [vmem:[%s294 + $0x40] sm:$0xff]
        %v375 = vld [vmem:[%s294 + $0x48] sm:$0xff]
        %v376 = vld [vmem:[%s294 + $0x50] sm:$0xff]
        %v377 = vld [vmem:[%s294 + $0x58] sm:$0xff]
        %v378 = vld [vmem:[%s294 + $0x60] sm:$0xff]
        %v379 = vld [vmem:[%s294 + $0x68] sm:$0xff]
        %v380 = vld [vmem:[%s294 + $0x70] sm:$0xff]
        %v381 = vld [vmem:[%s294 + $0x78] sm:$0xff]
        %v382 = vld [vmem:[%s294 + $0x80] sm:$0xff]
        %v383 = vld [vmem:[%s294 + $0x88] sm:$0xff]
        %v384 = vld [vmem:[%s294 + $0x90] sm:$0xff]
        %v385 = vld [vmem:[%s294 + $0x98] sm:$0xff]
        %v386 = vld [vmem:[%s294 + $0xa0] sm:$0xff]
        %v387 = vld [vmem:[%s294 + $0xa8] sm:$0xff]
        %v388 = vld [vmem:[%s294 + $0xb0] sm:$0xff]
        %v389 = vld [vmem:[%s294 + $0xb8] sm:$0xff]
        %v390 = vld [vmem:[%s294 + $0xc0] sm:$0xff]
        %v391 = vld [vmem:[%s294 + $0xc8] sm:$0xff]
        %v392 = vld [vmem:[%s294 + $0xd0] sm:$0xff]
        %v393 = vld [vmem:[%s294 + $0xd8] sm:$0xff]
        %v394 = vld [vmem:[%s294 + $0xe0] sm:$0xff]
        %v395 = vld [vmem:[%s294 + $0xe8] sm:$0xff]
        %v396 = vld [vmem:[%s294 + $0xf0] sm:$0xff]
        %v397 = vld [vmem:[%s294 + $0xf8] sm:$0xff]
        %v398 = vld [vmem:[%s294 + $0x100] sm:$0xff]
        %v399 = vld [vmem:[%s294 + $0x108] sm:$0xff]
        %v400 = vld [vmem:[%s294 + $0x110] sm:$0xff]
        %v401 = vld [vmem:[%s294 + $0x118] sm:$0xff]
        %v402 = vld [vmem:[%s294 + $0x120] sm:$0xff]
        %v403 = vld [vmem:[%s294 + $0x128] sm:$0xff]
        %v404 = vld [vmem:[%s294 + $0x130] sm:$0xff]
        %v405 = vld [vmem:[%s294 + $0x138] sm:$0xff]
        %v406 = vld [vmem:[%s294 + $0x140] sm:$0xff]
        %v407 = vld [vmem:[%s294 + $0x148] sm:$0xff]
        %v408 = vld [vmem:[%s294 + $0x150] sm:$0xff]
        %v409 = vld [vmem:[%s294 + $0x158] sm:$0xff]
        %v410 = vld [vmem:[%s294 + $0x160] sm:$0xff]
        %v411 = vld [vmem:[%s294 + $0x168] sm:$0xff]
        %v412 = vld [vmem:[%s294 + $0x170] sm:$0xff]
        %v413 = vld [vmem:[%s294 + $0x178] sm:$0xff]
        %v414 = vld [vmem:[%s294 + $0x180] sm:$0xff]
        %v415 = vld [vmem:[%s294 + $0x188] sm:$0xff]
        %v416 = vld [vmem:[%s294 + $0x190] sm:$0xff]
        %v417 = vld [vmem:[%s294 + $0x198] sm:$0xff]
        %v418 = vld [vmem:[%s294 + $0x1a0] sm:$0xff]
        %v419 = vld [vmem:[%s294 + $0x1a8] sm:$0xff]
        %v420 = vld [vmem:[%s294 + $0x1b0] sm:$0xff]
        %v421 = vld [vmem:[%s294 + $0x1b8] sm:$0xff]
        %v422 = vld [vmem:[%s294 + $0x1c0] sm:$0xff]
        %v423 = vld [vmem:[%s294 + $0x1c8] sm:$0xff]
        %v424 = vld [vmem:[%s294 + $0x1d0] sm:$0xff]
        %v425 = vld [vmem:[%s294 + $0x1d8] sm:$0xff]
        %v426 = vld [vmem:[%s294 + $0x1e0] sm:$0xff]
        %v427 = vld [vmem:[%s294 + $0x1e8] sm:$0xff]
        %v428 = vld [vmem:[%s294 + $0x1f0] sm:$0xff]
        %v429 = vld [vmem:[%s294 + $0x1f8] sm:$0xff]
        %v430 = vld [vmem:[%s294 + $0x200] sm:$0xff]
        %v431 = vld [vmem:[%s294 + $0x208] sm:$0xff]
        %v432 = vld [vmem:[%s294 + $0x210] sm:$0xff]
        %v433 = vld [vmem:[%s294 + $0x218] sm:$0xff]
        %v434 = vld [vmem:[%s294 + $0x220] sm:$0xff]
        %v435 = vld [vmem:[%s294 + $0x228] sm:$0xff]
        %v436 = vld [vmem:[%s294 + $0x230] sm:$0xff]
        %v437 = vld [vmem:[%s294 + $0x238] sm:$0xff]
        %v438 = vld [vmem:[%s294 + $0x240] sm:$0xff]
        %v439 = vld [vmem:[%s294 + $0x248] sm:$0xff]
        %v440 = vld [vmem:[%s294 + $0x250] sm:$0xff]
        %v441 = vld [vmem:[%s294 + $0x258] sm:$0xff]
        %v442 = vld [vmem:[%s294 + $0x260] sm:$0xff]
        %v443 = vld [vmem:[%s294 + $0x268] sm:$0xff]
        %v444 = vld [vmem:[%s294 + $0x270] sm:$0xff]
        %v445 = vld [vmem:[%s294 + $0x278] sm:$0xff]
        %v446 = vld [vmem:[%s294 + $0x280] sm:$0xff]
        %v447 = vld [vmem:[%s294 + $0x288] sm:$0xff]
        %v448 = vld [vmem:[%s294 + $0x290] sm:$0xff]
        %v449 = vld [vmem:[%s294 + $0x298] sm:$0xff]
        %v450 = vld [vmem:[%s294 + $0x2a0] sm:$0xff]
        %v451 = vld [vmem:[%s294 + $0x2a8] sm:$0xff]
        %v452 = vld [vmem:[%s294 + $0x2b0] sm:$0xff]
        %v453 = vld [vmem:[%s294 + $0x2b8] sm:$0xff]
        %v454 = vld [vmem:[%s294 + $0x2c0] sm:$0xff]
        %v455 = vld [vmem:[%s294 + $0x2c8] sm:$0xff]
        %v456 = vld [vmem:[%s294 + $0x2d0] sm:$0xff]
        %v457 = vld [vmem:[%s294 + $0x2d8] sm:$0xff]
        %v458 = vld [vmem:[%s294 + $0x2e0] sm:$0xff]
        %v459 = vld [vmem:[%s294 + $0x2e8] sm:$0xff]
        %v460 = vld [vmem:[%s294 + $0x2f0] sm:$0xff]
        %v461 = vld [vmem:[%s294 + $0x2f8] sm:$0xff]
        %v462 = vld [vmem:[%s294 + $0x300] sm:$0xff]
        %v463 = vld [vmem:[%s294 + $0x308] sm:$0xff]
        %v464 = vld [vmem:[%s294 + $0x310] sm:$0xff]
        %v465 = vld [vmem:[%s294 + $0x318] sm:$0xff]
        %v466 = vld [vmem:[%s294 + $0x320] sm:$0xff]
        %v467 = vld [vmem:[%s294 + $0x328] sm:$0xff]
        %v468 = vld [vmem:[%s294 + $0x330] sm:$0xff]
        %v469 = vld [vmem:[%s294 + $0x338] sm:$0xff]
        %v470 = vld [vmem:[%s294 + $0x340] sm:$0xff]
        %v471 = vld [vmem:[%s294 + $0x348] sm:$0xff]
        %v472 = vld [vmem:[%s294 + $0x350] sm:$0xff]
        %v473 = vld [vmem:[%s294 + $0x358] sm:$0xff]
        %v474 = vld [vmem:[%s294 + $0x360] sm:$0xff]
        %v475 = vld [vmem:[%s294 + $0x368] sm:$0xff]
        %v476 = vld [vmem:[%s294 + $0x370] sm:$0xff]
        %v477 = vld [vmem:[%s294 + $0x378] sm:$0xff]
        %v478 = vld [vmem:[%s294 + $0x380] sm:$0xff]
        %v479 = vld [vmem:[%s294 + $0x388] sm:$0xff]
        %v480 = vld [vmem:[%s294 + $0x390] sm:$0xff]
        %v481 = vld [vmem:[%s294 + $0x398] sm:$0xff]
        %v482 = vld [vmem:[%s294 + $0x3a0] sm:$0xff]
        %v483 = vld [vmem:[%s294 + $0x3a8] sm:$0xff]
        %v484 = vld [vmem:[%s294 + $0x3b0] sm:$0xff]
        %v485 = vld [vmem:[%s294 + $0x3b8] sm:$0xff]
        %v486 = vld [vmem:[%s294 + $0x3c0] sm:$0xff]
        %v487 = vld [vmem:[%s294 + $0x3c8] sm:$0xff]
        %v488 = vld [vmem:[%s294 + $0x3d0] sm:$0xff]
        %v489 = vld [vmem:[%s294 + $0x3d8] sm:$0xff]
        %v490 = vld [vmem:[%s294 + $0x3e0] sm:$0xff]
        %v491 = vld [vmem:[%s294 + $0x3e8] sm:$0xff]
        %v492 = vld [vmem:[%s294 + $0x3f0] sm:$0xff]
        %v493 = vld [vmem:[%s294 + $0x3f8] sm:$0xff]
        %v494 = vld [vmem:[%s294 + $0x400] sm:$0xff]
        %v495 = vld [vmem:[%s294 + $0x408] sm:$0xff]
        %v496 = vld [vmem:[%s294 + $0x410] sm:$0xff]
        %v497 = vld [vmem:[%s294 + $0x418] sm:$0xff]
        %v498 = vld [vmem:[%s294 + $0x420] sm:$0xff]
        %v499 = vld [vmem:[%s294 + $0x428] sm:$0xff]
        %v500 = vld [vmem:[%s294 + $0x430] sm:$0xff]
        %v501 = vld [vmem:[%s294 + $0x438] sm:$0xff]
        %v502 = vld [vmem:[%s294 + $0x440] sm:$0xff]
        %v503 = vld [vmem:[%s294 + $0x448] sm:$0xff]
        %v504 = vld [vmem:[%s294 + $0x450] sm:$0xff]
        %v505 = vld [vmem:[%s294 + $0x458] sm:$0xff]
        %v506 = vld [vmem:[%s294 + $0x460] sm:$0xff]
        %v507 = vld [vmem:[%s294 + $0x468] sm:$0xff]
        %v508 = vld [vmem:[%s294 + $0x470] sm:$0xff]
        %v509 = vld [vmem:[%s294 + $0x478] sm:$0xff]
        %v510 = vld [vmem:[%s294 + $0x480] sm:$0xff]
        %v511 = vld [vmem:[%s294 + $0x488] sm:$0xff]
        %v512 = vld [vmem:[%s294 + $0x490] sm:$0xff]
        %v513 = vld [vmem:[%s294 + $0x498] sm:$0xff]
        %v514 = vld [vmem:[%s294 + $0x4a0] sm:$0xff]
        %v515 = vld [vmem:[%s294 + $0x4a8] sm:$0xff]
        %v516 = vld [vmem:[%s294 + $0x4b0] sm:$0xff]
        %v517 = vld [vmem:[%s294 + $0x4b8] sm:$0xff]
        %v518 = vld [vmem:[%s294 + $0x4c0] sm:$0xff]
        %v519 = vld [vmem:[%s294 + $0x4c8] sm:$0xff]
        %v520 = vld [vmem:[%s294 + $0x4d0] sm:$0xff]
        %v521 = vld [vmem:[%s294 + $0x4d8] sm:$0xff]
        %v522 = vld [vmem:[%s294 + $0x4e0] sm:$0xff]
        %v523 = vld [vmem:[%s294 + $0x4e8] sm:$0xff]
        %v524 = vld [vmem:[%s294 + $0x4f0] sm:$0xff]
        %v525 = vld [vmem:[%s294 + $0x4f8] sm:$0xff]
        %v526 = vld [vmem:[%s294 + $0x500] sm:$0xff]
        %v527 = vld [vmem:[%s294 + $0x508] sm:$0xff]
        %v528 = vld [vmem:[%s294 + $0x510] sm:$0xff]
        %v529 = vld [vmem:[%s294 + $0x518] sm:$0xff]
        %v530 = vld [vmem:[%s294 + $0x520] sm:$0xff]
        %v531 = vld [vmem:[%s294 + $0x528] sm:$0xff]
        %v532 = vld [vmem:[%s294 + $0x530] sm:$0xff]
        %v533 = vld [vmem:[%s294 + $0x538] sm:$0xff]
        %v534 = vld [vmem:[%s294 + $0x540] sm:$0xff]
        %v535 = vld [vmem:[%s294 + $0x548] sm:$0xff]
        %v536 = vld [vmem:[%s294 + $0x550] sm:$0xff]
        %v537 = vld [vmem:[%s294 + $0x558] sm:$0xff]
        %v538 = vld [vmem:[%s294 + $0x560] sm:$0xff]
        %v539 = vld [vmem:[%s294 + $0x568] sm:$0xff]
        %v540 = vld [vmem:[%s294 + $0x570] sm:$0xff]
        %v541 = vld [vmem:[%s294 + $0x578] sm:$0xff]
        %v542 = vld [vmem:[%s294 + $0x580] sm:$0xff]
        %v543 = vld [vmem:[%s294 + $0x588] sm:$0xff]
        %v544 = vld [vmem:[%s294 + $0x590] sm:$0xff]
        %v545 = vld [vmem:[%s294 + $0x598] sm:$0xff]
        %v546 = vld [vmem:[%s294 + $0x5a0] sm:$0xff]
        %v547 = vld [vmem:[%s294 + $0x5a8] sm:$0xff]
        %v548 = vld [vmem:[%s294 + $0x5b0] sm:$0xff]
        %v549 = vld [vmem:[%s294 + $0x5b8] sm:$0xff]
        %v550 = vld [vmem:[%s294 + $0x5c0] sm:$0xff]
        %v551 = vld [vmem:[%s294 + $0x5c8] sm:$0xff]
        %v552 = vld [vmem:[%s294 + $0x5d0] sm:$0xff]
        %v553 = vld [vmem:[%s294 + $0x5d8] sm:$0xff]
        %v554 = vld [vmem:[%s294 + $0x5e0] sm:$0xff]
        %v555 = vld [vmem:[%s294 + $0x5e8] sm:$0xff]
        %v556 = vld [vmem:[%s294 + $0x5f0] sm:$0xff]
        %v557 = vld [vmem:[%s294 + $0x5f8] sm:$0xff]
        %v558 = vld [vmem:[%s294 + $0x600] sm:$0xff]
        %v559 = vld [vmem:[%s294 + $0x608] sm:$0xff]
        %v560 = vld [vmem:[%s294 + $0x610] sm:$0xff]
        %v561 = vld [vmem:[%s294 + $0x618] sm:$0xff]
        %v562 = vld [vmem:[%s294 + $0x620] sm:$0xff]
        %v563 = vld [vmem:[%s294 + $0x628] sm:$0xff]
        %v564 = vld [vmem:[%s294 + $0x630] sm:$0xff]
        %v565 = vld [vmem:[%s294 + $0x638] sm:$0xff]
        %v566 = vld [vmem:[%s294 + $0x640] sm:$0xff]
        %v567 = vld [vmem:[%s294 + $0x648] sm:$0xff]
        %v568 = vld [vmem:[%s294 + $0x650] sm:$0xff]
        %v569 = vld [vmem:[%s294 + $0x658] sm:$0xff]
        %v570 = vld [vmem:[%s294 + $0x660] sm:$0xff]
        %v571 = vld [vmem:[%s294 + $0x668] sm:$0xff]
        %v572 = vld [vmem:[%s294 + $0x670] sm:$0xff]
        %v573 = vld [vmem:[%s294 + $0x678] sm:$0xff]
        %v574 = vld [vmem:[%s294 + $0x680] sm:$0xff]
        %v575 = vld [vmem:[%s294 + $0x688] sm:$0xff]
        %v576 = vld [vmem:[%s294 + $0x690] sm:$0xff]
        %v577 = vld [vmem:[%s294 + $0x698] sm:$0xff]
        %v578 = vld [vmem:[%s294 + $0x6a0] sm:$0xff]
        %v579 = vld [vmem:[%s294 + $0x6a8] sm:$0xff]
        %v580 = vld [vmem:[%s294 + $0x6b0] sm:$0xff]
        %v581 = vld [vmem:[%s294 + $0x6b8] sm:$0xff]
        %v582 = vld [vmem:[%s294 + $0x6c0] sm:$0xff]
        %v583 = vld [vmem:[%s294 + $0x6c8] sm:$0xff]
        %v584 = vld [vmem:[%s294 + $0x6d0] sm:$0xff]
        %v585 = vld [vmem:[%s294 + $0x6d8] sm:$0xff]
        %v586 = vld [vmem:[%s294 + $0x6e0] sm:$0xff]
        %v587 = vld [vmem:[%s294 + $0x6e8] sm:$0xff]
        %v588 = vld [vmem:[%s294 + $0x6f0] sm:$0xff]
        %v589 = vld [vmem:[%s294 + $0x6f8] sm:$0xff]
        %v590 = vld [vmem:[%s294 + $0x700] sm:$0xff]
        %v591 = vld [vmem:[%s294 + $0x708] sm:$0xff]
        %v592 = vld [vmem:[%s294 + $0x710] sm:$0xff]
        %v593 = vld [vmem:[%s294 + $0x718] sm:$0xff]
        %v594 = vld [vmem:[%s294 + $0x720] sm:$0xff]
        %v595 = vld [vmem:[%s294 + $0x728] sm:$0xff]
        %v596 = vld [vmem:[%s294 + $0x730] sm:$0xff]
        %v597 = vld [vmem:[%s294 + $0x738] sm:$0xff]
        %v598 = vld [vmem:[%s294 + $0x740] sm:$0xff]
        %v599 = vld [vmem:[%s294 + $0x748] sm:$0xff]
        %v600 = vld [vmem:[%s294 + $0x750] sm:$0xff]
        %v601 = vld [vmem:[%s294 + $0x758] sm:$0xff]
        %v602 = vld [vmem:[%s294 + $0x760] sm:$0xff]
        %v603 = vld [vmem:[%s294 + $0x768] sm:$0xff]
        %v604 = vld [vmem:[%s294 + $0x770] sm:$0xff]
        %v605 = vld [vmem:[%s294 + $0x778] sm:$0xff]
        %v606 = vld [vmem:[%s294 + $0x780] sm:$0xff]
        %v607 = vld [vmem:[%s294 + $0x788] sm:$0xff]
        %v608 = vld [vmem:[%s294 + $0x790] sm:$0xff]
        %v609 = vld [vmem:[%s294 + $0x798] sm:$0xff]
        %v610 = vld [vmem:[%s294 + $0x7a0] sm:$0xff]
        %v611 = vld [vmem:[%s294 + $0x7a8] sm:$0xff]
        %v612 = vld [vmem:[%s294 + $0x7b0] sm:$0xff]
        %v613 = vld [vmem:[%s294 + $0x7b8] sm:$0xff]
        %v614 = vld [vmem:[%s294 + $0x7c0] sm:$0xff]
        %v615 = vld [vmem:[%s294 + $0x7c8] sm:$0xff]
        %v616 = vld [vmem:[%s294 + $0x7d0] sm:$0xff]
        %v617 = vld [vmem:[%s294 + $0x7d8] sm:$0xff]
        %v618 = vld [vmem:[%s294 + $0x7e0] sm:$0xff]
        %v619 = vld [vmem:[%s294 + $0x7e8] sm:$0xff]
        %v620 = vld [vmem:[%s294 + $0x7f0] sm:$0xff]
        %v621 = vld [vmem:[%s294 + $0x7f8] sm:$0xff]
        %v622 = vld [vmem:[%s303] sm:$0xff]
        %v623 = vld [vmem:[%s303 + $0x8] sm:$0xff]
        %v624 = vld [vmem:[%s303 + $0x10] sm:$0xff]
        %v625 = vld [vmem:[%s303 + $0x18] sm:$0xff]
        %v626 = vld [vmem:[%s303 + $0x20] sm:$0xff]
        %v627 = vld [vmem:[%s303 + $0x28] sm:$0xff]
        %v628 = vld [vmem:[%s303 + $0x30] sm:$0xff]
        %v629 = vld [vmem:[%s303 + $0x38] sm:$0xff]
        %v630 = vld [vmem:[%s303 + $0x40] sm:$0xff]
        %v631 = vld [vmem:[%s303 + $0x48] sm:$0xff]
        %v632 = vld [vmem:[%s303 + $0x50] sm:$0xff]
        %v633 = vld [vmem:[%s303 + $0x58] sm:$0xff]
        %v634 = vld [vmem:[%s303 + $0x60] sm:$0xff]
        %v635 = vld [vmem:[%s303 + $0x68] sm:$0xff]
        %v636 = vld [vmem:[%s303 + $0x70] sm:$0xff]
        %v637 = vld [vmem:[%s303 + $0x78] sm:$0xff]
        %v638 = vld [vmem:[%s303 + $0x80] sm:$0xff]
        %v639 = vld [vmem:[%s303 + $0x88] sm:$0xff]
        %v640 = vld [vmem:[%s303 + $0x90] sm:$0xff]
        %v641 = vld [vmem:[%s303 + $0x98] sm:$0xff]
        %v642 = vld [vmem:[%s303 + $0xa0] sm:$0xff]
        %v643 = vld [vmem:[%s303 + $0xa8] sm:$0xff]
        %v644 = vld [vmem:[%s303 + $0xb0] sm:$0xff]
        %v645 = vld [vmem:[%s303 + $0xb8] sm:$0xff]
        %v646 = vld [vmem:[%s303 + $0xc0] sm:$0xff]
        %v647 = vld [vmem:[%s303 + $0xc8] sm:$0xff]
        %v648 = vld [vmem:[%s303 + $0xd0] sm:$0xff]
        %v649 = vld [vmem:[%s303 + $0xd8] sm:$0xff]
        %v650 = vld [vmem:[%s303 + $0xe0] sm:$0xff]
        %v651 = vld [vmem:[%s303 + $0xe8] sm:$0xff]
        %v652 = vld [vmem:[%s303 + $0xf0] sm:$0xff]
        %v653 = vld [vmem:[%s303 + $0xf8] sm:$0xff]
        %v654 = vld [vmem:[%s303 + $0x100] sm:$0xff]
        %v655 = vld [vmem:[%s303 + $0x108] sm:$0xff]
        %v656 = vld [vmem:[%s303 + $0x110] sm:$0xff]
        %v657 = vld [vmem:[%s303 + $0x118] sm:$0xff]
        %v658 = vld [vmem:[%s303 + $0x120] sm:$0xff]
        %v659 = vld [vmem:[%s303 + $0x128] sm:$0xff]
        %v660 = vld [vmem:[%s303 + $0x130] sm:$0xff]
        %v661 = vld [vmem:[%s303 + $0x138] sm:$0xff]
        %v662 = vld [vmem:[%s303 + $0x140] sm:$0xff]
        %v663 = vld [vmem:[%s303 + $0x148] sm:$0xff]
        %v664 = vld [vmem:[%s303 + $0x150] sm:$0xff]
        %v665 = vld [vmem:[%s303 + $0x158] sm:$0xff]
        %v666 = vld [vmem:[%s303 + $0x160] sm:$0xff]
        %v667 = vld [vmem:[%s303 + $0x168] sm:$0xff]
        %v668 = vld [vmem:[%s303 + $0x170] sm:$0xff]
        %v669 = vld [vmem:[%s303 + $0x178] sm:$0xff]
        %v670 = vld [vmem:[%s303 + $0x180] sm:$0xff]
        %v671 = vld [vmem:[%s303 + $0x188] sm:$0xff]
        %v672 = vld [vmem:[%s303 + $0x190] sm:$0xff]
        %v673 = vld [vmem:[%s303 + $0x198] sm:$0xff]
        %v674 = vld [vmem:[%s303 + $0x1a0] sm:$0xff]
        %v675 = vld [vmem:[%s303 + $0x1a8] sm:$0xff]
        %v676 = vld [vmem:[%s303 + $0x1b0] sm:$0xff]
        %v677 = vld [vmem:[%s303 + $0x1b8] sm:$0xff]
        %v678 = vld [vmem:[%s303 + $0x1c0] sm:$0xff]
        %v679 = vld [vmem:[%s303 + $0x1c8] sm:$0xff]
        %v680 = vld [vmem:[%s303 + $0x1d0] sm:$0xff]
        %v681 = vld [vmem:[%s303 + $0x1d8] sm:$0xff]
        %v682 = vld [vmem:[%s303 + $0x1e0] sm:$0xff]
        %v683 = vld [vmem:[%s303 + $0x1e8] sm:$0xff]
        %v684 = vld [vmem:[%s303 + $0x1f0] sm:$0xff]
        %v685 = vld [vmem:[%s303 + $0x1f8] sm:$0xff]
        %v686 = vld [vmem:[%s303 + $0x200] sm:$0xff]
        %v687 = vld [vmem:[%s303 + $0x208] sm:$0xff]
        %v688 = vld [vmem:[%s303 + $0x210] sm:$0xff]
        %v689 = vld [vmem:[%s303 + $0x218] sm:$0xff]
        %v690 = vld [vmem:[%s303 + $0x220] sm:$0xff]
        %v691 = vld [vmem:[%s303 + $0x228] sm:$0xff]
        %v692 = vld [vmem:[%s303 + $0x230] sm:$0xff]
        %v693 = vld [vmem:[%s303 + $0x238] sm:$0xff]
        %v694 = vld [vmem:[%s303 + $0x240] sm:$0xff]
        %v695 = vld [vmem:[%s303 + $0x248] sm:$0xff]
        %v696 = vld [vmem:[%s303 + $0x250] sm:$0xff]
        %v697 = vld [vmem:[%s303 + $0x258] sm:$0xff]
        %v698 = vld [vmem:[%s303 + $0x260] sm:$0xff]
        %v699 = vld [vmem:[%s303 + $0x268] sm:$0xff]
        %v700 = vld [vmem:[%s303 + $0x270] sm:$0xff]
        %v701 = vld [vmem:[%s303 + $0x278] sm:$0xff]
        %v702 = vld [vmem:[%s303 + $0x280] sm:$0xff]
        %v703 = vld [vmem:[%s303 + $0x288] sm:$0xff]
        %v704 = vld [vmem:[%s303 + $0x290] sm:$0xff]
        %v705 = vld [vmem:[%s303 + $0x298] sm:$0xff]
        %v706 = vld [vmem:[%s303 + $0x2a0] sm:$0xff]
        %v707 = vld [vmem:[%s303 + $0x2a8] sm:$0xff]
        %v708 = vld [vmem:[%s303 + $0x2b0] sm:$0xff]
        %v709 = vld [vmem:[%s303 + $0x2b8] sm:$0xff]
        %v710 = vld [vmem:[%s303 + $0x2c0] sm:$0xff]
        %v711 = vld [vmem:[%s303 + $0x2c8] sm:$0xff]
        %v712 = vld [vmem:[%s303 + $0x2d0] sm:$0xff]
        %v713 = vld [vmem:[%s303 + $0x2d8] sm:$0xff]
        %v714 = vld [vmem:[%s303 + $0x2e0] sm:$0xff]
        %v715 = vld [vmem:[%s303 + $0x2e8] sm:$0xff]
        %v716 = vld [vmem:[%s303 + $0x2f0] sm:$0xff]
        %v717 = vld [vmem:[%s303 + $0x2f8] sm:$0xff]
        %v718 = vld [vmem:[%s303 + $0x300] sm:$0xff]
        %v719 = vld [vmem:[%s303 + $0x308] sm:$0xff]
        %v720 = vld [vmem:[%s303 + $0x310] sm:$0xff]
        %v721 = vld [vmem:[%s303 + $0x318] sm:$0xff]
        %v722 = vld [vmem:[%s303 + $0x320] sm:$0xff]
        %v723 = vld [vmem:[%s303 + $0x328] sm:$0xff]
        %v724 = vld [vmem:[%s303 + $0x330] sm:$0xff]
        %v725 = vld [vmem:[%s303 + $0x338] sm:$0xff]
        %v726 = vld [vmem:[%s303 + $0x340] sm:$0xff]
        %v727 = vld [vmem:[%s303 + $0x348] sm:$0xff]
        %v728 = vld [vmem:[%s303 + $0x350] sm:$0xff]
        %v729 = vld [vmem:[%s303 + $0x358] sm:$0xff]
        %v730 = vld [vmem:[%s303 + $0x360] sm:$0xff]
        %v731 = vld [vmem:[%s303 + $0x368] sm:$0xff]
        %v732 = vld [vmem:[%s303 + $0x370] sm:$0xff]
        %v733 = vld [vmem:[%s303 + $0x378] sm:$0xff]
        %v734 = vld [vmem:[%s303 + $0x380] sm:$0xff]
        %v735 = vld [vmem:[%s303 + $0x388] sm:$0xff]
        %v736 = vld [vmem:[%s303 + $0x390] sm:$0xff]
        %v737 = vld [vmem:[%s303 + $0x398] sm:$0xff]
        %v738 = vld [vmem:[%s303 + $0x3a0] sm:$0xff]
        %v739 = vld [vmem:[%s303 + $0x3a8] sm:$0xff]
        %v740 = vld [vmem:[%s303 + $0x3b0] sm:$0xff]
        %v741 = vld [vmem:[%s303 + $0x3b8] sm:$0xff]
        %v742 = vld [vmem:[%s303 + $0x3c0] sm:$0xff]
        %v743 = vld [vmem:[%s303 + $0x3c8] sm:$0xff]
        %v744 = vld [vmem:[%s303 + $0x3d0] sm:$0xff]
        %v745 = vld [vmem:[%s303 + $0x3d8] sm:$0xff]
        %v746 = vld [vmem:[%s303 + $0x3e0] sm:$0xff]
        %v747 = vld [vmem:[%s303 + $0x3e8] sm:$0xff]
        %v748 = vld [vmem:[%s303 + $0x3f0] sm:$0xff]
        %v749 = vld [vmem:[%s303 + $0x3f8] sm:$0xff]
        %v750 = vld [vmem:[%s303 + $0x400] sm:$0xff]
        %v751 = vld [vmem:[%s303 + $0x408] sm:$0xff]
        %v752 = vld [vmem:[%s303 + $0x410] sm:$0xff]
        %v753 = vld [vmem:[%s303 + $0x418] sm:$0xff]
        %v754 = vld [vmem:[%s303 + $0x420] sm:$0xff]
        %v755 = vld [vmem:[%s303 + $0x428] sm:$0xff]
        %v756 = vld [vmem:[%s303 + $0x430] sm:$0xff]
        %v757 = vld [vmem:[%s303 + $0x438] sm:$0xff]
        %v758 = vld [vmem:[%s303 + $0x440] sm:$0xff]
        %v759 = vld [vmem:[%s303 + $0x448] sm:$0xff]
        %v760 = vld [vmem:[%s303 + $0x450] sm:$0xff]
        %v761 = vld [vmem:[%s303 + $0x458] sm:$0xff]
        %v762 = vld [vmem:[%s303 + $0x460] sm:$0xff]
        %v763 = vld [vmem:[%s303 + $0x468] sm:$0xff]
        %v764 = vld [vmem:[%s303 + $0x470] sm:$0xff]
        %v765 = vld [vmem:[%s303 + $0x478] sm:$0xff]
        %v766 = vld [vmem:[%s303 + $0x480] sm:$0xff]
        %v767 = vld [vmem:[%s303 + $0x488] sm:$0xff]
        %v768 = vld [vmem:[%s303 + $0x490] sm:$0xff]
        %v769 = vld [vmem:[%s303 + $0x498] sm:$0xff]
        %v770 = vld [vmem:[%s303 + $0x4a0] sm:$0xff]
        %v771 = vld [vmem:[%s303 + $0x4a8] sm:$0xff]
        %v772 = vld [vmem:[%s303 + $0x4b0] sm:$0xff]
        %v773 = vld [vmem:[%s303 + $0x4b8] sm:$0xff]
        %v774 = vld [vmem:[%s303 + $0x4c0] sm:$0xff]
        %v775 = vld [vmem:[%s303 + $0x4c8] sm:$0xff]
        %v776 = vld [vmem:[%s303 + $0x4d0] sm:$0xff]
        %v777 = vld [vmem:[%s303 + $0x4d8] sm:$0xff]
        %v778 = vld [vmem:[%s303 + $0x4e0] sm:$0xff]
        %v779 = vld [vmem:[%s303 + $0x4e8] sm:$0xff]
        %v780 = vld [vmem:[%s303 + $0x4f0] sm:$0xff]
        %v781 = vld [vmem:[%s303 + $0x4f8] sm:$0xff]
        %v782 = vld [vmem:[%s303 + $0x500] sm:$0xff]
        %v783 = vld [vmem:[%s303 + $0x508] sm:$0xff]
        %v784 = vld [vmem:[%s303 + $0x510] sm:$0xff]
        %v785 = vld [vmem:[%s303 + $0x518] sm:$0xff]
        %v786 = vld [vmem:[%s303 + $0x520] sm:$0xff]
        %v787 = vld [vmem:[%s303 + $0x528] sm:$0xff]
        %v788 = vld [vmem:[%s303 + $0x530] sm:$0xff]
        %v789 = vld [vmem:[%s303 + $0x538] sm:$0xff]
        %v790 = vld [vmem:[%s303 + $0x540] sm:$0xff]
        %v791 = vld [vmem:[%s303 + $0x548] sm:$0xff]
        %v792 = vld [vmem:[%s303 + $0x550] sm:$0xff]
        %v793 = vld [vmem:[%s303 + $0x558] sm:$0xff]
        %v794 = vld [vmem:[%s303 + $0x560] sm:$0xff]
        %v795 = vld [vmem:[%s303 + $0x568] sm:$0xff]
        %v796 = vld [vmem:[%s303 + $0x570] sm:$0xff]
        %v797 = vld [vmem:[%s303 + $0x578] sm:$0xff]
        %v798 = vld [vmem:[%s303 + $0x580] sm:$0xff]
        %v799 = vld [vmem:[%s303 + $0x588] sm:$0xff]
        %v800 = vld [vmem:[%s303 + $0x590] sm:$0xff]
        %v801 = vld [vmem:[%s303 + $0x598] sm:$0xff]
        %v802 = vld [vmem:[%s303 + $0x5a0] sm:$0xff]
        %v803 = vld [vmem:[%s303 + $0x5a8] sm:$0xff]
        %v804 = vld [vmem:[%s303 + $0x5b0] sm:$0xff]
        %v805 = vld [vmem:[%s303 + $0x5b8] sm:$0xff]
        %v806 = vld [vmem:[%s303 + $0x5c0] sm:$0xff]
        %v807 = vld [vmem:[%s303 + $0x5c8] sm:$0xff]
        %v808 = vld [vmem:[%s303 + $0x5d0] sm:$0xff]
        %v809 = vld [vmem:[%s303 + $0x5d8] sm:$0xff]
        %v810 = vld [vmem:[%s303 + $0x5e0] sm:$0xff]
        %v811 = vld [vmem:[%s303 + $0x5e8] sm:$0xff]
        %v812 = vld [vmem:[%s303 + $0x5f0] sm:$0xff]
        %v813 = vld [vmem:[%s303 + $0x5f8] sm:$0xff]
        %v814 = vld [vmem:[%s303 + $0x600] sm:$0xff]
        %v815 = vld [vmem:[%s303 + $0x608] sm:$0xff]
        %v816 = vld [vmem:[%s303 + $0x610] sm:$0xff]
        %v817 = vld [vmem:[%s303 + $0x618] sm:$0xff]
        %v818 = vld [vmem:[%s303 + $0x620] sm:$0xff]
        %v819 = vld [vmem:[%s303 + $0x628] sm:$0xff]
        %v820 = vld [vmem:[%s303 + $0x630] sm:$0xff]
        %v821 = vld [vmem:[%s303 + $0x638] sm:$0xff]
        %v822 = vld [vmem:[%s303 + $0x640] sm:$0xff]
        %v823 = vld [vmem:[%s303 + $0x648] sm:$0xff]
        %v824 = vld [vmem:[%s303 + $0x650] sm:$0xff]
        %v825 = vld [vmem:[%s303 + $0x658] sm:$0xff]
        %v826 = vld [vmem:[%s303 + $0x660] sm:$0xff]
        %v827 = vld [vmem:[%s303 + $0x668] sm:$0xff]
        %v828 = vld [vmem:[%s303 + $0x670] sm:$0xff]
        %v829 = vld [vmem:[%s303 + $0x678] sm:$0xff]
        %v830 = vld [vmem:[%s303 + $0x680] sm:$0xff]
        %v831 = vld [vmem:[%s303 + $0x688] sm:$0xff]
        %v832 = vld [vmem:[%s303 + $0x690] sm:$0xff]
        %v833 = vld [vmem:[%s303 + $0x698] sm:$0xff]
        %v834 = vld [vmem:[%s303 + $0x6a0] sm:$0xff]
        %v835 = vld [vmem:[%s303 + $0x6a8] sm:$0xff]
        %v836 = vld [vmem:[%s303 + $0x6b0] sm:$0xff]
        %v837 = vld [vmem:[%s303 + $0x6b8] sm:$0xff]
        %v838 = vld [vmem:[%s303 + $0x6c0] sm:$0xff]
        %v839 = vld [vmem:[%s303 + $0x6c8] sm:$0xff]
        %v840 = vld [vmem:[%s303 + $0x6d0] sm:$0xff]
        %v841 = vld [vmem:[%s303 + $0x6d8] sm:$0xff]
        %v842 = vld [vmem:[%s303 + $0x6e0] sm:$0xff]
        %v843 = vld [vmem:[%s303 + $0x6e8] sm:$0xff]
        %v844 = vld [vmem:[%s303 + $0x6f0] sm:$0xff]
        %v845 = vld [vmem:[%s303 + $0x6f8] sm:$0xff]
        %v846 = vld [vmem:[%s303 + $0x700] sm:$0xff]
        %v847 = vld [vmem:[%s303 + $0x708] sm:$0xff]
        %v848 = vld [vmem:[%s303 + $0x710] sm:$0xff]
        %v849 = vld [vmem:[%s303 + $0x718] sm:$0xff]
        %v850 = vld [vmem:[%s303 + $0x720] sm:$0xff]
        %v851 = vld [vmem:[%s303 + $0x728] sm:$0xff]
        %v852 = vld [vmem:[%s303 + $0x730] sm:$0xff]
        %v853 = vld [vmem:[%s303 + $0x738] sm:$0xff]
        %v854 = vld [vmem:[%s303 + $0x740] sm:$0xff]
        %v855 = vld [vmem:[%s303 + $0x748] sm:$0xff]
        %v856 = vld [vmem:[%s303 + $0x750] sm:$0xff]
        %v857 = vld [vmem:[%s303 + $0x758] sm:$0xff]
        %v858 = vld [vmem:[%s303 + $0x760] sm:$0xff]
        %v859 = vld [vmem:[%s303 + $0x768] sm:$0xff]
        %v860 = vld [vmem:[%s303 + $0x770] sm:$0xff]
        %v861 = vld [vmem:[%s303 + $0x778] sm:$0xff]
        %v862 = vld [vmem:[%s303 + $0x780] sm:$0xff]
        %v863 = vld [vmem:[%s303 + $0x788] sm:$0xff]
        %v864 = vld [vmem:[%s303 + $0x790] sm:$0xff]
        %v865 = vld [vmem:[%s303 + $0x798] sm:$0xff]
        %v866 = vld [vmem:[%s303 + $0x7a0] sm:$0xff]
        %v867 = vld [vmem:[%s303 + $0x7a8] sm:$0xff]
        %v868 = vld [vmem:[%s303 + $0x7b0] sm:$0xff]
        %v869 = vld [vmem:[%s303 + $0x7b8] sm:$0xff]
        %v870 = vld [vmem:[%s303 + $0x7c0] sm:$0xff]
        %v871 = vld [vmem:[%s303 + $0x7c8] sm:$0xff]
        %v872 = vld [vmem:[%s303 + $0x7d0] sm:$0xff]
        %v873 = vld [vmem:[%s303 + $0x7d8] sm:$0xff]
        %v874 = vld [vmem:[%s303 + $0x7e0] sm:$0xff]
        %v875 = vld [vmem:[%s303 + $0x7e8] sm:$0xff]
        %v876 = vld [vmem:[%s303 + $0x7f0] sm:$0xff]
        %v877 = vld [vmem:[%s303 + $0x7f8] sm:$0xff]
        %v878 = vld [vmem:[%s356] sm:$0xff]
        %v879 = vld [vmem:[%s356 + $0x8] sm:$0xff]
        %v880 = vld [vmem:[%s356 + $0x10] sm:$0xff]
        %v881 = vld [vmem:[%s356 + $0x18] sm:$0xff]
        %v882 = vld [vmem:[%s356 + $0x20] sm:$0xff]
        %v883 = vld [vmem:[%s356 + $0x28] sm:$0xff]
        %v884 = vld [vmem:[%s356 + $0x30] sm:$0xff]
        %v885 = vld [vmem:[%s356 + $0x38] sm:$0xff]
        %v886 = vld [vmem:[%s356 + $0x40] sm:$0xff]
        %v887 = vld [vmem:[%s356 + $0x48] sm:$0xff]
        %v888 = vld [vmem:[%s356 + $0x50] sm:$0xff]
        %v889 = vld [vmem:[%s356 + $0x58] sm:$0xff]
        %v890 = vld [vmem:[%s356 + $0x60] sm:$0xff]
        %v891 = vld [vmem:[%s356 + $0x68] sm:$0xff]
        %v892 = vld [vmem:[%s356 + $0x70] sm:$0xff]
        %v893 = vld [vmem:[%s356 + $0x78] sm:$0xff]
        %v894 = vld [vmem:[%s356 + $0x80] sm:$0xff]
        %v895 = vld [vmem:[%s356 + $0x88] sm:$0xff]
        %v896 = vld [vmem:[%s356 + $0x90] sm:$0xff]
        %v897 = vld [vmem:[%s356 + $0x98] sm:$0xff]
        %v898 = vld [vmem:[%s356 + $0xa0] sm:$0xff]
        %v899 = vld [vmem:[%s356 + $0xa8] sm:$0xff]
        %v900 = vld [vmem:[%s356 + $0xb0] sm:$0xff]
        %v901 = vld [vmem:[%s356 + $0xb8] sm:$0xff]
        %v902 = vld [vmem:[%s356 + $0xc0] sm:$0xff]
        %v903 = vld [vmem:[%s356 + $0xc8] sm:$0xff]
        %v904 = vld [vmem:[%s356 + $0xd0] sm:$0xff]
        %v905 = vld [vmem:[%s356 + $0xd8] sm:$0xff]
        %v906 = vld [vmem:[%s356 + $0xe0] sm:$0xff]
        %v907 = vld [vmem:[%s356 + $0xe8] sm:$0xff]
        %v908 = vld [vmem:[%s356 + $0xf0] sm:$0xff]
        %v909 = vld [vmem:[%s356 + $0xf8] sm:$0xff]
        %v942 = vcombine.high %v878, %v878
        %v944 = vunpack.c.l.s4 1966171168
        %v945 = vunpack.c.0.s8 %v944
        %v946 = vlaneseq
        %v947 = vshrl.u32 %v946, 7
        %v948 = vsub.s32 %v945, %v947
        %v949 = vrot.slane %v878, %v948
        %v951 = vunpack.c.l.s4 1966171168
        %v952 = vunpack.c.0.s8 %v951
        %v953 = vlaneseq
        %v954 = vshrl.u32 %v953, 7
        %v955 = vsub.s32 %v952, %v954
        %v956 = vrot.slane %v942, %v955
        %v957 = vcombine.high %v949, %v949
        %v958 = vcombine.high %v956, %v956
        %v960 = vunpack.c.l.s4 1966171168
        %v961 = vunpack.c.0.s8 %v960
        %v962 = vlaneseq
        %v963 = vshrl.u32 %v962, 7
        %v964 = vsub.s32 %v961, %v963
        %v965 = vrot.slane %v949, %v964
        %v967 = vunpack.c.l.s4 1966171168
        %v968 = vunpack.c.0.s8 %v967
        %v969 = vlaneseq
        %v970 = vshrl.u32 %v969, 7
        %v971 = vsub.s32 %v968, %v970
        %v972 = vrot.slane %v956, %v971
        %v974 = vunpack.c.l.s4 1966171168
        %v975 = vunpack.c.0.s8 %v974
        %v976 = vlaneseq
        %v977 = vshrl.u32 %v976, 7
        %v978 = vsub.s32 %v975, %v977
        %v979 = vrot.slane %v957, %v978
        %v981 = vunpack.c.l.s4 1966171168
        %v982 = vunpack.c.0.s8 %v981
        %v983 = vlaneseq
        %v984 = vshrl.u32 %v983, 7
        %v985 = vsub.s32 %v982, %v984
        %v986 = vrot.slane %v958, %v985
        %v987 = vcombine.high %v965, %v965
        %v988 = vcombine.high %v972, %v972
        %v989 = vcombine.high %v979, %v979
        %v990 = vcombine.high %v986, %v986
        %v991 = vcombine.high %v879, %v879
        %v993 = vunpack.c.l.s4 1966171168
        %v994 = vunpack.c.0.s8 %v993
        %v995 = vlaneseq
        %v996 = vshrl.u32 %v995, 7
        %v997 = vsub.s32 %v994, %v996
        %v998 = vrot.slane %v879, %v997
        %v1000 = vunpack.c.l.s4 1966171168
        %v1001 = vunpack.c.0.s8 %v1000
        %v1002 = vlaneseq
        %v1003 = vshrl.u32 %v1002, 7
        %v1004 = vsub.s32 %v1001, %v1003
        %v1005 = vrot.slane %v991, %v1004
        %v1006 = vcombine.high %v998, %v998
        %v1007 = vcombine.high %v1005, %v1005
        %v1009 = vunpack.c.l.s4 1966171168
        %v1010 = vunpack.c.0.s8 %v1009
        %v1011 = vlaneseq
        %v1012 = vshrl.u32 %v1011, 7
        %v1013 = vsub.s32 %v1010, %v1012
        %v1014 = vrot.slane %v998, %v1013
        %v1016 = vunpack.c.l.s4 1966171168
        %v1017 = vunpack.c.0.s8 %v1016
        %v1018 = vlaneseq
        %v1019 = vshrl.u32 %v1018, 7
        %v1020 = vsub.s32 %v1017, %v1019
        %v1021 = vrot.slane %v1005, %v1020
        %v1023 = vunpack.c.l.s4 1966171168
        %v1024 = vunpack.c.0.s8 %v1023
        %v1025 = vlaneseq
        %v1026 = vshrl.u32 %v1025, 7
        %v1027 = vsub.s32 %v1024, %v1026
        %v1028 = vrot.slane %v1006, %v1027
        %v1030 = vunpack.c.l.s4 1966171168
        %v1031 = vunpack.c.0.s8 %v1030
        %v1032 = vlaneseq
        %v1033 = vshrl.u32 %v1032, 7
        %v1034 = vsub.s32 %v1031, %v1033
        %v1035 = vrot.slane %v1007, %v1034
        %v1036 = vcombine.high %v1014, %v1014
        %v1037 = vcombine.high %v1021, %v1021
        %v1038 = vcombine.high %v1028, %v1028
        %v1039 = vcombine.high %v1035, %v1035
        %v1040 = vcombine.high %v880, %v880
        %v1042 = vunpack.c.l.s4 1966171168
        %v1043 = vunpack.c.0.s8 %v1042
        %v1044 = vlaneseq
        %v1045 = vshrl.u32 %v1044, 7
        %v1046 = vsub.s32 %v1043, %v1045
        %v1047 = vrot.slane %v880, %v1046
        %v1049 = vunpack.c.l.s4 1966171168
        %v1050 = vunpack.c.0.s8 %v1049
        %v1051 = vlaneseq
        %v1052 = vshrl.u32 %v1051, 7
        %v1053 = vsub.s32 %v1050, %v1052
        %v1054 = vrot.slane %v1040, %v1053
        %v1055 = vcombine.high %v1047, %v1047
        %v1056 = vcombine.high %v1054, %v1054
        %v1058 = vunpack.c.l.s4 1966171168
        %v1059 = vunpack.c.0.s8 %v1058
        %v1060 = vlaneseq
        %v1061 = vshrl.u32 %v1060, 7
        %v1062 = vsub.s32 %v1059, %v1061
        %v1063 = vrot.slane %v1047, %v1062
        %v1065 = vunpack.c.l.s4 1966171168
        %v1066 = vunpack.c.0.s8 %v1065
        %v1067 = vlaneseq
        %v1068 = vshrl.u32 %v1067, 7
        %v1069 = vsub.s32 %v1066, %v1068
        %v1070 = vrot.slane %v1054, %v1069
        %v1072 = vunpack.c.l.s4 1966171168
        %v1073 = vunpack.c.0.s8 %v1072
        %v1074 = vlaneseq
        %v1075 = vshrl.u32 %v1074, 7
        %v1076 = vsub.s32 %v1073, %v1075
        %v1077 = vrot.slane %v1055, %v1076
        %v1079 = vunpack.c.l.s4 1966171168
        %v1080 = vunpack.c.0.s8 %v1079
        %v1081 = vlaneseq
        %v1082 = vshrl.u32 %v1081, 7
        %v1083 = vsub.s32 %v1080, %v1082
        %v1084 = vrot.slane %v1056, %v1083
        %v1085 = vcombine.high %v1063, %v1063
        %v1086 = vcombine.high %v1070, %v1070
        %v1087 = vcombine.high %v1077, %v1077
        %v1088 = vcombine.high %v1084, %v1084
        %v1089 = vcombine.high %v881, %v881
        %v1091 = vunpack.c.l.s4 1966171168
        %v1092 = vunpack.c.0.s8 %v1091
        %v1093 = vlaneseq
        %v1094 = vshrl.u32 %v1093, 7
        %v1095 = vsub.s32 %v1092, %v1094
        %v1096 = vrot.slane %v881, %v1095
        %v1098 = vunpack.c.l.s4 1966171168
        %v1099 = vunpack.c.0.s8 %v1098
        %v1100 = vlaneseq
        %v1101 = vshrl.u32 %v1100, 7
        %v1102 = vsub.s32 %v1099, %v1101
        %v1103 = vrot.slane %v1089, %v1102
        %v1104 = vcombine.high %v1096, %v1096
        %v1105 = vcombine.high %v1103, %v1103
        %v1107 = vunpack.c.l.s4 1966171168
        %v1108 = vunpack.c.0.s8 %v1107
        %v1109 = vlaneseq
        %v1110 = vshrl.u32 %v1109, 7
        %v1111 = vsub.s32 %v1108, %v1110
        %v1112 = vrot.slane %v1096, %v1111
        %v1114 = vunpack.c.l.s4 1966171168
        %v1115 = vunpack.c.0.s8 %v1114
        %v1116 = vlaneseq
        %v1117 = vshrl.u32 %v1116, 7
        %v1118 = vsub.s32 %v1115, %v1117
        %v1119 = vrot.slane %v1103, %v1118
        %v1121 = vunpack.c.l.s4 1966171168
        %v1122 = vunpack.c.0.s8 %v1121
        %v1123 = vlaneseq
        %v1124 = vshrl.u32 %v1123, 7
        %v1125 = vsub.s32 %v1122, %v1124
        %v1126 = vrot.slane %v1104, %v1125
        %v1128 = vunpack.c.l.s4 1966171168
        %v1129 = vunpack.c.0.s8 %v1128
        %v1130 = vlaneseq
        %v1131 = vshrl.u32 %v1130, 7
        %v1132 = vsub.s32 %v1129, %v1131
        %v1133 = vrot.slane %v1105, %v1132
        %v1134 = vcombine.high %v1112, %v1112
        %v1135 = vcombine.high %v1119, %v1119
        %v1136 = vcombine.high %v1126, %v1126
        %v1137 = vcombine.high %v1133, %v1133
        %v1138 = vcombine.high %v882, %v882
        %v1140 = vunpack.c.l.s4 1966171168
        %v1141 = vunpack.c.0.s8 %v1140
        %v1142 = vlaneseq
        %v1143 = vshrl.u32 %v1142, 7
        %v1144 = vsub.s32 %v1141, %v1143
        %v1145 = vrot.slane %v882, %v1144
        %v1147 = vunpack.c.l.s4 1966171168
        %v1148 = vunpack.c.0.s8 %v1147
        %v1149 = vlaneseq
        %v1150 = vshrl.u32 %v1149, 7
        %v1151 = vsub.s32 %v1148, %v1150
        %v1152 = vrot.slane %v1138, %v1151
        %v1153 = vcombine.high %v1145, %v1145
        %v1154 = vcombine.high %v1152, %v1152
        %v1156 = vunpack.c.l.s4 1966171168
        %v1157 = vunpack.c.0.s8 %v1156
        %v1158 = vlaneseq
        %v1159 = vshrl.u32 %v1158, 7
        %v1160 = vsub.s32 %v1157, %v1159
        %v1161 = vrot.slane %v1145, %v1160
        %v1163 = vunpack.c.l.s4 1966171168
        %v1164 = vunpack.c.0.s8 %v1163
        %v1165 = vlaneseq
        %v1166 = vshrl.u32 %v1165, 7
        %v1167 = vsub.s32 %v1164, %v1166
        %v1168 = vrot.slane %v1152, %v1167
        %v1170 = vunpack.c.l.s4 1966171168
        %v1171 = vunpack.c.0.s8 %v1170
        %v1172 = vlaneseq
        %v1173 = vshrl.u32 %v1172, 7
        %v1174 = vsub.s32 %v1171, %v1173
        %v1175 = vrot.slane %v1153, %v1174
        %v1177 = vunpack.c.l.s4 1966171168
        %v1178 = vunpack.c.0.s8 %v1177
        %v1179 = vlaneseq
        %v1180 = vshrl.u32 %v1179, 7
        %v1181 = vsub.s32 %v1178, %v1180
        %v1182 = vrot.slane %v1154, %v1181
        %v1183 = vcombine.high %v1161, %v1161
        %v1184 = vcombine.high %v1168, %v1168
        %v1185 = vcombine.high %v1175, %v1175
        %v1186 = vcombine.high %v1182, %v1182
        %v1187 = vcombine.high %v883, %v883
        %v1189 = vunpack.c.l.s4 1966171168
        %v1190 = vunpack.c.0.s8 %v1189
        %v1191 = vlaneseq
        %v1192 = vshrl.u32 %v1191, 7
        %v1193 = vsub.s32 %v1190, %v1192
        %v1194 = vrot.slane %v883, %v1193
        %v1196 = vunpack.c.l.s4 1966171168
        %v1197 = vunpack.c.0.s8 %v1196
        %v1198 = vlaneseq
        %v1199 = vshrl.u32 %v1198, 7
        %v1200 = vsub.s32 %v1197, %v1199
        %v1201 = vrot.slane %v1187, %v1200
        %v1202 = vcombine.high %v1194, %v1194
        %v1203 = vcombine.high %v1201, %v1201
        %v1205 = vunpack.c.l.s4 1966171168
        %v1206 = vunpack.c.0.s8 %v1205
        %v1207 = vlaneseq
        %v1208 = vshrl.u32 %v1207, 7
        %v1209 = vsub.s32 %v1206, %v1208
        %v1210 = vrot.slane %v1194, %v1209
        %v1212 = vunpack.c.l.s4 1966171168
        %v1213 = vunpack.c.0.s8 %v1212
        %v1214 = vlaneseq
        %v1215 = vshrl.u32 %v1214, 7
        %v1216 = vsub.s32 %v1213, %v1215
        %v1217 = vrot.slane %v1201, %v1216
        %v1219 = vunpack.c.l.s4 1966171168
        %v1220 = vunpack.c.0.s8 %v1219
        %v1221 = vlaneseq
        %v1222 = vshrl.u32 %v1221, 7
        %v1223 = vsub.s32 %v1220, %v1222
        %v1224 = vrot.slane %v1202, %v1223
        %v1226 = vunpack.c.l.s4 1966171168
        %v1227 = vunpack.c.0.s8 %v1226
        %v1228 = vlaneseq
        %v1229 = vshrl.u32 %v1228, 7
        %v1230 = vsub.s32 %v1227, %v1229
        %v1231 = vrot.slane %v1203, %v1230
        %v1232 = vcombine.high %v1210, %v1210
        %v1233 = vcombine.high %v1217, %v1217
        %v1234 = vcombine.high %v1224, %v1224
        %v1235 = vcombine.high %v1231, %v1231
        %v1236 = vcombine.high %v884, %v884
        %v1238 = vunpack.c.l.s4 1966171168
        %v1239 = vunpack.c.0.s8 %v1238
        %v1240 = vlaneseq
        %v1241 = vshrl.u32 %v1240, 7
        %v1242 = vsub.s32 %v1239, %v1241
        %v1243 = vrot.slane %v884, %v1242
        %v1245 = vunpack.c.l.s4 1966171168
        %v1246 = vunpack.c.0.s8 %v1245
        %v1247 = vlaneseq
        %v1248 = vshrl.u32 %v1247, 7
        %v1249 = vsub.s32 %v1246, %v1248
        %v1250 = vrot.slane %v1236, %v1249
        %v1251 = vcombine.high %v1243, %v1243
        %v1252 = vcombine.high %v1250, %v1250
        %v1254 = vunpack.c.l.s4 1966171168
        %v1255 = vunpack.c.0.s8 %v1254
        %v1256 = vlaneseq
        %v1257 = vshrl.u32 %v1256, 7
        %v1258 = vsub.s32 %v1255, %v1257
        %v1259 = vrot.slane %v1243, %v1258
        %v1261 = vunpack.c.l.s4 1966171168
        %v1262 = vunpack.c.0.s8 %v1261
        %v1263 = vlaneseq
        %v1264 = vshrl.u32 %v1263, 7
        %v1265 = vsub.s32 %v1262, %v1264
        %v1266 = vrot.slane %v1250, %v1265
        %v1268 = vunpack.c.l.s4 1966171168
        %v1269 = vunpack.c.0.s8 %v1268
        %v1270 = vlaneseq
        %v1271 = vshrl.u32 %v1270, 7
        %v1272 = vsub.s32 %v1269, %v1271
        %v1273 = vrot.slane %v1251, %v1272
        %v1275 = vunpack.c.l.s4 1966171168
        %v1276 = vunpack.c.0.s8 %v1275
        %v1277 = vlaneseq
        %v1278 = vshrl.u32 %v1277, 7
        %v1279 = vsub.s32 %v1276, %v1278
        %v1280 = vrot.slane %v1252, %v1279
        %v1281 = vcombine.high %v1259, %v1259
        %v1282 = vcombine.high %v1266, %v1266
        %v1283 = vcombine.high %v1273, %v1273
        %v1284 = vcombine.high %v1280, %v1280
        %v1285 = vcombine.high %v885, %v885
        %v1287 = vunpack.c.l.s4 1966171168
        %v1288 = vunpack.c.0.s8 %v1287
        %v1289 = vlaneseq
        %v1290 = vshrl.u32 %v1289, 7
        %v1291 = vsub.s32 %v1288, %v1290
        %v1292 = vrot.slane %v885, %v1291
        %v1294 = vunpack.c.l.s4 1966171168
        %v1295 = vunpack.c.0.s8 %v1294
        %v1296 = vlaneseq
        %v1297 = vshrl.u32 %v1296, 7
        %v1298 = vsub.s32 %v1295, %v1297
        %v1299 = vrot.slane %v1285, %v1298
        %v1300 = vcombine.high %v1292, %v1292
        %v1301 = vcombine.high %v1299, %v1299
        %v1303 = vunpack.c.l.s4 1966171168
        %v1304 = vunpack.c.0.s8 %v1303
        %v1305 = vlaneseq
        %v1306 = vshrl.u32 %v1305, 7
        %v1307 = vsub.s32 %v1304, %v1306
        %v1308 = vrot.slane %v1292, %v1307
        %v1310 = vunpack.c.l.s4 1966171168
        %v1311 = vunpack.c.0.s8 %v1310
        %v1312 = vlaneseq
        %v1313 = vshrl.u32 %v1312, 7
        %v1314 = vsub.s32 %v1311, %v1313
        %v1315 = vrot.slane %v1299, %v1314
        %v1317 = vunpack.c.l.s4 1966171168
        %v1318 = vunpack.c.0.s8 %v1317
        %v1319 = vlaneseq
        %v1320 = vshrl.u32 %v1319, 7
        %v1321 = vsub.s32 %v1318, %v1320
        %v1322 = vrot.slane %v1300, %v1321
        %v1324 = vunpack.c.l.s4 1966171168
        %v1325 = vunpack.c.0.s8 %v1324
        %v1326 = vlaneseq
        %v1327 = vshrl.u32 %v1326, 7
        %v1328 = vsub.s32 %v1325, %v1327
        %v1329 = vrot.slane %v1301, %v1328
        %v1330 = vcombine.high %v1308, %v1308
        %v1331 = vcombine.high %v1315, %v1315
        %v1332 = vcombine.high %v1322, %v1322
        %v1333 = vcombine.high %v1329, %v1329
        %v1334 = vcombine.high %v886, %v886
        %v1336 = vunpack.c.l.s4 1966171168
        %v1337 = vunpack.c.0.s8 %v1336
        %v1338 = vlaneseq
        %v1339 = vshrl.u32 %v1338, 7
        %v1340 = vsub.s32 %v1337, %v1339
        %v1341 = vrot.slane %v886, %v1340
        %v1343 = vunpack.c.l.s4 1966171168
        %v1344 = vunpack.c.0.s8 %v1343
        %v1345 = vlaneseq
        %v1346 = vshrl.u32 %v1345, 7
        %v1347 = vsub.s32 %v1344, %v1346
        %v1348 = vrot.slane %v1334, %v1347
        %v1349 = vcombine.high %v1341, %v1341
        %v1350 = vcombine.high %v1348, %v1348
        %v1352 = vunpack.c.l.s4 1966171168
        %v1353 = vunpack.c.0.s8 %v1352
        %v1354 = vlaneseq
        %v1355 = vshrl.u32 %v1354, 7
        %v1356 = vsub.s32 %v1353, %v1355
        %v1357 = vrot.slane %v1341, %v1356
        %v1359 = vunpack.c.l.s4 1966171168
        %v1360 = vunpack.c.0.s8 %v1359
        %v1361 = vlaneseq
        %v1362 = vshrl.u32 %v1361, 7
        %v1363 = vsub.s32 %v1360, %v1362
        %v1364 = vrot.slane %v1348, %v1363
        %v1366 = vunpack.c.l.s4 1966171168
        %v1367 = vunpack.c.0.s8 %v1366
        %v1368 = vlaneseq
        %v1369 = vshrl.u32 %v1368, 7
        %v1370 = vsub.s32 %v1367, %v1369
        %v1371 = vrot.slane %v1349, %v1370
        %v1373 = vunpack.c.l.s4 1966171168
        %v1374 = vunpack.c.0.s8 %v1373
        %v1375 = vlaneseq
        %v1376 = vshrl.u32 %v1375, 7
        %v1377 = vsub.s32 %v1374, %v1376
        %v1378 = vrot.slane %v1350, %v1377
        %v1379 = vcombine.high %v1357, %v1357
        %v1380 = vcombine.high %v1364, %v1364
        %v1381 = vcombine.high %v1371, %v1371
        %v1382 = vcombine.high %v1378, %v1378
        %v1383 = vcombine.high %v887, %v887
        %v1385 = vunpack.c.l.s4 1966171168
        %v1386 = vunpack.c.0.s8 %v1385
        %v1387 = vlaneseq
        %v1388 = vshrl.u32 %v1387, 7
        %v1389 = vsub.s32 %v1386, %v1388
        %v1390 = vrot.slane %v887, %v1389
        %v1392 = vunpack.c.l.s4 1966171168
        %v1393 = vunpack.c.0.s8 %v1392
        %v1394 = vlaneseq
        %v1395 = vshrl.u32 %v1394, 7
        %v1396 = vsub.s32 %v1393, %v1395
        %v1397 = vrot.slane %v1383, %v1396
        %v1398 = vcombine.high %v1390, %v1390
        %v1399 = vcombine.high %v1397, %v1397
        %v1401 = vunpack.c.l.s4 1966171168
        %v1402 = vunpack.c.0.s8 %v1401
        %v1403 = vlaneseq
        %v1404 = vshrl.u32 %v1403, 7
        %v1405 = vsub.s32 %v1402, %v1404
        %v1406 = vrot.slane %v1390, %v1405
        %v1408 = vunpack.c.l.s4 1966171168
        %v1409 = vunpack.c.0.s8 %v1408
        %v1410 = vlaneseq
        %v1411 = vshrl.u32 %v1410, 7
        %v1412 = vsub.s32 %v1409, %v1411
        %v1413 = vrot.slane %v1397, %v1412
        %v1415 = vunpack.c.l.s4 1966171168
        %v1416 = vunpack.c.0.s8 %v1415
        %v1417 = vlaneseq
        %v1418 = vshrl.u32 %v1417, 7
        %v1419 = vsub.s32 %v1416, %v1418
        %v1420 = vrot.slane %v1398, %v1419
        %v1422 = vunpack.c.l.s4 1966171168
        %v1423 = vunpack.c.0.s8 %v1422
        %v1424 = vlaneseq
        %v1425 = vshrl.u32 %v1424, 7
        %v1426 = vsub.s32 %v1423, %v1425
        %v1427 = vrot.slane %v1399, %v1426
        %v1428 = vcombine.high %v1406, %v1406
        %v1429 = vcombine.high %v1413, %v1413
        %v1430 = vcombine.high %v1420, %v1420
        %v1431 = vcombine.high %v1427, %v1427
        %v1432 = vcombine.high %v888, %v888
        %v1434 = vunpack.c.l.s4 1966171168
        %v1435 = vunpack.c.0.s8 %v1434
        %v1436 = vlaneseq
        %v1437 = vshrl.u32 %v1436, 7
        %v1438 = vsub.s32 %v1435, %v1437
        %v1439 = vrot.slane %v888, %v1438
        %v1441 = vunpack.c.l.s4 1966171168
        %v1442 = vunpack.c.0.s8 %v1441
        %v1443 = vlaneseq
        %v1444 = vshrl.u32 %v1443, 7
        %v1445 = vsub.s32 %v1442, %v1444
        %v1446 = vrot.slane %v1432, %v1445
        %v1447 = vcombine.high %v1439, %v1439
        %v1448 = vcombine.high %v1446, %v1446
        %v1450 = vunpack.c.l.s4 1966171168
        %v1451 = vunpack.c.0.s8 %v1450
        %v1452 = vlaneseq
        %v1453 = vshrl.u32 %v1452, 7
        %v1454 = vsub.s32 %v1451, %v1453
        %v1455 = vrot.slane %v1439, %v1454
        %v1457 = vunpack.c.l.s4 1966171168
        %v1458 = vunpack.c.0.s8 %v1457
        %v1459 = vlaneseq
        %v1460 = vshrl.u32 %v1459, 7
        %v1461 = vsub.s32 %v1458, %v1460
        %v1462 = vrot.slane %v1446, %v1461
        %v1464 = vunpack.c.l.s4 1966171168
        %v1465 = vunpack.c.0.s8 %v1464
        %v1466 = vlaneseq
        %v1467 = vshrl.u32 %v1466, 7
        %v1468 = vsub.s32 %v1465, %v1467
        %v1469 = vrot.slane %v1447, %v1468
        %v1471 = vunpack.c.l.s4 1966171168
        %v1472 = vunpack.c.0.s8 %v1471
        %v1473 = vlaneseq
        %v1474 = vshrl.u32 %v1473, 7
        %v1475 = vsub.s32 %v1472, %v1474
        %v1476 = vrot.slane %v1448, %v1475
        %v1477 = vcombine.high %v1455, %v1455
        %v1478 = vcombine.high %v1462, %v1462
        %v1479 = vcombine.high %v1469, %v1469
        %v1480 = vcombine.high %v1476, %v1476
        %v1481 = vcombine.high %v889, %v889
        %v1483 = vunpack.c.l.s4 1966171168
        %v1484 = vunpack.c.0.s8 %v1483
        %v1485 = vlaneseq
        %v1486 = vshrl.u32 %v1485, 7
        %v1487 = vsub.s32 %v1484, %v1486
        %v1488 = vrot.slane %v889, %v1487
        %v1490 = vunpack.c.l.s4 1966171168
        %v1491 = vunpack.c.0.s8 %v1490
        %v1492 = vlaneseq
        %v1493 = vshrl.u32 %v1492, 7
        %v1494 = vsub.s32 %v1491, %v1493
        %v1495 = vrot.slane %v1481, %v1494
        %v1496 = vcombine.high %v1488, %v1488
        %v1497 = vcombine.high %v1495, %v1495
        %v1499 = vunpack.c.l.s4 1966171168
        %v1500 = vunpack.c.0.s8 %v1499
        %v1501 = vlaneseq
        %v1502 = vshrl.u32 %v1501, 7
        %v1503 = vsub.s32 %v1500, %v1502
        %v1504 = vrot.slane %v1488, %v1503
        %v1506 = vunpack.c.l.s4 1966171168
        %v1507 = vunpack.c.0.s8 %v1506
        %v1508 = vlaneseq
        %v1509 = vshrl.u32 %v1508, 7
        %v1510 = vsub.s32 %v1507, %v1509
        %v1511 = vrot.slane %v1495, %v1510
        %v1513 = vunpack.c.l.s4 1966171168
        %v1514 = vunpack.c.0.s8 %v1513
        %v1515 = vlaneseq
        %v1516 = vshrl.u32 %v1515, 7
        %v1517 = vsub.s32 %v1514, %v1516
        %v1518 = vrot.slane %v1496, %v1517
        %v1520 = vunpack.c.l.s4 1966171168
        %v1521 = vunpack.c.0.s8 %v1520
        %v1522 = vlaneseq
        %v1523 = vshrl.u32 %v1522, 7
        %v1524 = vsub.s32 %v1521, %v1523
        %v1525 = vrot.slane %v1497, %v1524
        %v1526 = vcombine.high %v1504, %v1504
        %v1527 = vcombine.high %v1511, %v1511
        %v1528 = vcombine.high %v1518, %v1518
        %v1529 = vcombine.high %v1525, %v1525
        %v1530 = vcombine.high %v890, %v890
        %v1532 = vunpack.c.l.s4 1966171168
        %v1533 = vunpack.c.0.s8 %v1532
        %v1534 = vlaneseq
        %v1535 = vshrl.u32 %v1534, 7
        %v1536 = vsub.s32 %v1533, %v1535
        %v1537 = vrot.slane %v890, %v1536
        %v1539 = vunpack.c.l.s4 1966171168
        %v1540 = vunpack.c.0.s8 %v1539
        %v1541 = vlaneseq
        %v1542 = vshrl.u32 %v1541, 7
        %v1543 = vsub.s32 %v1540, %v1542
        %v1544 = vrot.slane %v1530, %v1543
        %v1545 = vcombine.high %v1537, %v1537
        %v1546 = vcombine.high %v1544, %v1544
        %v1548 = vunpack.c.l.s4 1966171168
        %v1549 = vunpack.c.0.s8 %v1548
        %v1550 = vlaneseq
        %v1551 = vshrl.u32 %v1550, 7
        %v1552 = vsub.s32 %v1549, %v1551
        %v1553 = vrot.slane %v1537, %v1552
        %v1555 = vunpack.c.l.s4 1966171168
        %v1556 = vunpack.c.0.s8 %v1555
        %v1557 = vlaneseq
        %v1558 = vshrl.u32 %v1557, 7
        %v1559 = vsub.s32 %v1556, %v1558
        %v1560 = vrot.slane %v1544, %v1559
        %v1562 = vunpack.c.l.s4 1966171168
        %v1563 = vunpack.c.0.s8 %v1562
        %v1564 = vlaneseq
        %v1565 = vshrl.u32 %v1564, 7
        %v1566 = vsub.s32 %v1563, %v1565
        %v1567 = vrot.slane %v1545, %v1566
        %v1569 = vunpack.c.l.s4 1966171168
        %v1570 = vunpack.c.0.s8 %v1569
        %v1571 = vlaneseq
        %v1572 = vshrl.u32 %v1571, 7
        %v1573 = vsub.s32 %v1570, %v1572
        %v1574 = vrot.slane %v1546, %v1573
        %v1575 = vcombine.high %v1553, %v1553
        %v1576 = vcombine.high %v1560, %v1560
        %v1577 = vcombine.high %v1567, %v1567
        %v1578 = vcombine.high %v1574, %v1574
        %v1579 = vcombine.high %v891, %v891
        %v1581 = vunpack.c.l.s4 1966171168
        %v1582 = vunpack.c.0.s8 %v1581
        %v1583 = vlaneseq
        %v1584 = vshrl.u32 %v1583, 7
        %v1585 = vsub.s32 %v1582, %v1584
        %v1586 = vrot.slane %v891, %v1585
        %v1588 = vunpack.c.l.s4 1966171168
        %v1589 = vunpack.c.0.s8 %v1588
        %v1590 = vlaneseq
        %v1591 = vshrl.u32 %v1590, 7
        %v1592 = vsub.s32 %v1589, %v1591
        %v1593 = vrot.slane %v1579, %v1592
        %v1594 = vcombine.high %v1586, %v1586
        %v1595 = vcombine.high %v1593, %v1593
        %v1597 = vunpack.c.l.s4 1966171168
        %v1598 = vunpack.c.0.s8 %v1597
        %v1599 = vlaneseq
        %v1600 = vshrl.u32 %v1599, 7
        %v1601 = vsub.s32 %v1598, %v1600
        %v1602 = vrot.slane %v1586, %v1601
        %v1604 = vunpack.c.l.s4 1966171168
        %v1605 = vunpack.c.0.s8 %v1604
        %v1606 = vlaneseq
        %v1607 = vshrl.u32 %v1606, 7
        %v1608 = vsub.s32 %v1605, %v1607
        %v1609 = vrot.slane %v1593, %v1608
        %v1611 = vunpack.c.l.s4 1966171168
        %v1612 = vunpack.c.0.s8 %v1611
        %v1613 = vlaneseq
        %v1614 = vshrl.u32 %v1613, 7
        %v1615 = vsub.s32 %v1612, %v1614
        %v1616 = vrot.slane %v1594, %v1615
        %v1618 = vunpack.c.l.s4 1966171168
        %v1619 = vunpack.c.0.s8 %v1618
        %v1620 = vlaneseq
        %v1621 = vshrl.u32 %v1620, 7
        %v1622 = vsub.s32 %v1619, %v1621
        %v1623 = vrot.slane %v1595, %v1622
        %v1624 = vcombine.high %v1602, %v1602
        %v1625 = vcombine.high %v1609, %v1609
        %v1626 = vcombine.high %v1616, %v1616
        %v1627 = vcombine.high %v1623, %v1623
        %v1628 = vcombine.high %v892, %v892
        %v1630 = vunpack.c.l.s4 1966171168
        %v1631 = vunpack.c.0.s8 %v1630
        %v1632 = vlaneseq
        %v1633 = vshrl.u32 %v1632, 7
        %v1634 = vsub.s32 %v1631, %v1633
        %v1635 = vrot.slane %v892, %v1634
        %v1637 = vunpack.c.l.s4 1966171168
        %v1638 = vunpack.c.0.s8 %v1637
        %v1639 = vlaneseq
        %v1640 = vshrl.u32 %v1639, 7
        %v1641 = vsub.s32 %v1638, %v1640
        %v1642 = vrot.slane %v1628, %v1641
        %v1643 = vcombine.high %v1635, %v1635
        %v1644 = vcombine.high %v1642, %v1642
        %v1646 = vunpack.c.l.s4 1966171168
        %v1647 = vunpack.c.0.s8 %v1646
        %v1648 = vlaneseq
        %v1649 = vshrl.u32 %v1648, 7
        %v1650 = vsub.s32 %v1647, %v1649
        %v1651 = vrot.slane %v1635, %v1650
        %v1653 = vunpack.c.l.s4 1966171168
        %v1654 = vunpack.c.0.s8 %v1653
        %v1655 = vlaneseq
        %v1656 = vshrl.u32 %v1655, 7
        %v1657 = vsub.s32 %v1654, %v1656
        %v1658 = vrot.slane %v1642, %v1657
        %v1660 = vunpack.c.l.s4 1966171168
        %v1661 = vunpack.c.0.s8 %v1660
        %v1662 = vlaneseq
        %v1663 = vshrl.u32 %v1662, 7
        %v1664 = vsub.s32 %v1661, %v1663
        %v1665 = vrot.slane %v1643, %v1664
        %v1667 = vunpack.c.l.s4 1966171168
        %v1668 = vunpack.c.0.s8 %v1667
        %v1669 = vlaneseq
        %v1670 = vshrl.u32 %v1669, 7
        %v1671 = vsub.s32 %v1668, %v1670
        %v1672 = vrot.slane %v1644, %v1671
        %v1673 = vcombine.high %v1651, %v1651
        %v1674 = vcombine.high %v1658, %v1658
        %v1675 = vcombine.high %v1665, %v1665
        %v1676 = vcombine.high %v1672, %v1672
        %v1677 = vcombine.high %v893, %v893
        %v1679 = vunpack.c.l.s4 1966171168
        %v1680 = vunpack.c.0.s8 %v1679
        %v1681 = vlaneseq
        %v1682 = vshrl.u32 %v1681, 7
        %v1683 = vsub.s32 %v1680, %v1682
        %v1684 = vrot.slane %v893, %v1683
        %v1686 = vunpack.c.l.s4 1966171168
        %v1687 = vunpack.c.0.s8 %v1686
        %v1688 = vlaneseq
        %v1689 = vshrl.u32 %v1688, 7
        %v1690 = vsub.s32 %v1687, %v1689
        %v1691 = vrot.slane %v1677, %v1690
        %v1692 = vcombine.high %v1684, %v1684
        %v1693 = vcombine.high %v1691, %v1691
        %v1695 = vunpack.c.l.s4 1966171168
        %v1696 = vunpack.c.0.s8 %v1695
        %v1697 = vlaneseq
        %v1698 = vshrl.u32 %v1697, 7
        %v1699 = vsub.s32 %v1696, %v1698
        %v1700 = vrot.slane %v1684, %v1699
        %v1702 = vunpack.c.l.s4 1966171168
        %v1703 = vunpack.c.0.s8 %v1702
        %v1704 = vlaneseq
        %v1705 = vshrl.u32 %v1704, 7
        %v1706 = vsub.s32 %v1703, %v1705
        %v1707 = vrot.slane %v1691, %v1706
        %v1709 = vunpack.c.l.s4 1966171168
        %v1710 = vunpack.c.0.s8 %v1709
        %v1711 = vlaneseq
        %v1712 = vshrl.u32 %v1711, 7
        %v1713 = vsub.s32 %v1710, %v1712
        %v1714 = vrot.slane %v1692, %v1713
        %v1716 = vunpack.c.l.s4 1966171168
        %v1717 = vunpack.c.0.s8 %v1716
        %v1718 = vlaneseq
        %v1719 = vshrl.u32 %v1718, 7
        %v1720 = vsub.s32 %v1717, %v1719
        %v1721 = vrot.slane %v1693, %v1720
        %v1722 = vcombine.high %v1700, %v1700
        %v1723 = vcombine.high %v1707, %v1707
        %v1724 = vcombine.high %v1714, %v1714
        %v1725 = vcombine.high %v1721, %v1721
        %v1726 = vcombine.high %v894, %v894
        %v1728 = vunpack.c.l.s4 1966171168
        %v1729 = vunpack.c.0.s8 %v1728
        %v1730 = vlaneseq
        %v1731 = vshrl.u32 %v1730, 7
        %v1732 = vsub.s32 %v1729, %v1731
        %v1733 = vrot.slane %v894, %v1732
        %v1735 = vunpack.c.l.s4 1966171168
        %v1736 = vunpack.c.0.s8 %v1735
        %v1737 = vlaneseq
        %v1738 = vshrl.u32 %v1737, 7
        %v1739 = vsub.s32 %v1736, %v1738
        %v1740 = vrot.slane %v1726, %v1739
        %v1741 = vcombine.high %v1733, %v1733
        %v1742 = vcombine.high %v1740, %v1740
        %v1744 = vunpack.c.l.s4 1966171168
        %v1745 = vunpack.c.0.s8 %v1744
        %v1746 = vlaneseq
        %v1747 = vshrl.u32 %v1746, 7
        %v1748 = vsub.s32 %v1745, %v1747
        %v1749 = vrot.slane %v1733, %v1748
        %v1751 = vunpack.c.l.s4 1966171168
        %v1752 = vunpack.c.0.s8 %v1751
        %v1753 = vlaneseq
        %v1754 = vshrl.u32 %v1753, 7
        %v1755 = vsub.s32 %v1752, %v1754
        %v1756 = vrot.slane %v1740, %v1755
        %v1758 = vunpack.c.l.s4 1966171168
        %v1759 = vunpack.c.0.s8 %v1758
        %v1760 = vlaneseq
        %v1761 = vshrl.u32 %v1760, 7
        %v1762 = vsub.s32 %v1759, %v1761
        %v1763 = vrot.slane %v1741, %v1762
        %v1765 = vunpack.c.l.s4 1966171168
        %v1766 = vunpack.c.0.s8 %v1765
        %v1767 = vlaneseq
        %v1768 = vshrl.u32 %v1767, 7
        %v1769 = vsub.s32 %v1766, %v1768
        %v1770 = vrot.slane %v1742, %v1769
        %v1771 = vcombine.high %v1749, %v1749
        %v1772 = vcombine.high %v1756, %v1756
        %v1773 = vcombine.high %v1763, %v1763
        %v1774 = vcombine.high %v1770, %v1770
        %v1775 = vcombine.high %v895, %v895
        %v1777 = vunpack.c.l.s4 1966171168
        %v1778 = vunpack.c.0.s8 %v1777
        %v1779 = vlaneseq
        %v1780 = vshrl.u32 %v1779, 7
        %v1781 = vsub.s32 %v1778, %v1780
        %v1782 = vrot.slane %v895, %v1781
        %v1784 = vunpack.c.l.s4 1966171168
        %v1785 = vunpack.c.0.s8 %v1784
        %v1786 = vlaneseq
        %v1787 = vshrl.u32 %v1786, 7
        %v1788 = vsub.s32 %v1785, %v1787
        %v1789 = vrot.slane %v1775, %v1788
        %v1790 = vcombine.high %v1782, %v1782
        %v1791 = vcombine.high %v1789, %v1789
        %v1793 = vunpack.c.l.s4 1966171168
        %v1794 = vunpack.c.0.s8 %v1793
        %v1795 = vlaneseq
        %v1796 = vshrl.u32 %v1795, 7
        %v1797 = vsub.s32 %v1794, %v1796
        %v1798 = vrot.slane %v1782, %v1797
        %v1800 = vunpack.c.l.s4 1966171168
        %v1801 = vunpack.c.0.s8 %v1800
        %v1802 = vlaneseq
        %v1803 = vshrl.u32 %v1802, 7
        %v1804 = vsub.s32 %v1801, %v1803
        %v1805 = vrot.slane %v1789, %v1804
        %v1807 = vunpack.c.l.s4 1966171168
        %v1808 = vunpack.c.0.s8 %v1807
        %v1809 = vlaneseq
        %v1810 = vshrl.u32 %v1809, 7
        %v1811 = vsub.s32 %v1808, %v1810
        %v1812 = vrot.slane %v1790, %v1811
        %v1814 = vunpack.c.l.s4 1966171168
        %v1815 = vunpack.c.0.s8 %v1814
        %v1816 = vlaneseq
        %v1817 = vshrl.u32 %v1816, 7
        %v1818 = vsub.s32 %v1815, %v1817
        %v1819 = vrot.slane %v1791, %v1818
        %v1820 = vcombine.high %v1798, %v1798
        %v1821 = vcombine.high %v1805, %v1805
        %v1822 = vcombine.high %v1812, %v1812
        %v1823 = vcombine.high %v1819, %v1819
        %v1824 = vcombine.high %v896, %v896
        %v1826 = vunpack.c.l.s4 1966171168
        %v1827 = vunpack.c.0.s8 %v1826
        %v1828 = vlaneseq
        %v1829 = vshrl.u32 %v1828, 7
        %v1830 = vsub.s32 %v1827, %v1829
        %v1831 = vrot.slane %v896, %v1830
        %v1833 = vunpack.c.l.s4 1966171168
        %v1834 = vunpack.c.0.s8 %v1833
        %v1835 = vlaneseq
        %v1836 = vshrl.u32 %v1835, 7
        %v1837 = vsub.s32 %v1834, %v1836
        %v1838 = vrot.slane %v1824, %v1837
        %v1839 = vcombine.high %v1831, %v1831
        %v1840 = vcombine.high %v1838, %v1838
        %v1842 = vunpack.c.l.s4 1966171168
        %v1843 = vunpack.c.0.s8 %v1842
        %v1844 = vlaneseq
        %v1845 = vshrl.u32 %v1844, 7
        %v1846 = vsub.s32 %v1843, %v1845
        %v1847 = vrot.slane %v1831, %v1846
        %v1849 = vunpack.c.l.s4 1966171168
        %v1850 = vunpack.c.0.s8 %v1849
        %v1851 = vlaneseq
        %v1852 = vshrl.u32 %v1851, 7
        %v1853 = vsub.s32 %v1850, %v1852
        %v1854 = vrot.slane %v1838, %v1853
        %v1856 = vunpack.c.l.s4 1966171168
        %v1857 = vunpack.c.0.s8 %v1856
        %v1858 = vlaneseq
        %v1859 = vshrl.u32 %v1858, 7
        %v1860 = vsub.s32 %v1857, %v1859
        %v1861 = vrot.slane %v1839, %v1860
        %v1863 = vunpack.c.l.s4 1966171168
        %v1864 = vunpack.c.0.s8 %v1863
        %v1865 = vlaneseq
        %v1866 = vshrl.u32 %v1865, 7
        %v1867 = vsub.s32 %v1864, %v1866
        %v1868 = vrot.slane %v1840, %v1867
        %v1869 = vcombine.high %v1847, %v1847
        %v1870 = vcombine.high %v1854, %v1854
        %v1871 = vcombine.high %v1861, %v1861
        %v1872 = vcombine.high %v1868, %v1868
        %v1873 = vcombine.high %v897, %v897
        %v1875 = vunpack.c.l.s4 1966171168
        %v1876 = vunpack.c.0.s8 %v1875
        %v1877 = vlaneseq
        %v1878 = vshrl.u32 %v1877, 7
        %v1879 = vsub.s32 %v1876, %v1878
        %v1880 = vrot.slane %v897, %v1879
        %v1882 = vunpack.c.l.s4 1966171168
        %v1883 = vunpack.c.0.s8 %v1882
        %v1884 = vlaneseq
        %v1885 = vshrl.u32 %v1884, 7
        %v1886 = vsub.s32 %v1883, %v1885
        %v1887 = vrot.slane %v1873, %v1886
        %v1888 = vcombine.high %v1880, %v1880
        %v1889 = vcombine.high %v1887, %v1887
        %v1891 = vunpack.c.l.s4 1966171168
        %v1892 = vunpack.c.0.s8 %v1891
        %v1893 = vlaneseq
        %v1894 = vshrl.u32 %v1893, 7
        %v1895 = vsub.s32 %v1892, %v1894
        %v1896 = vrot.slane %v1880, %v1895
        %v1898 = vunpack.c.l.s4 1966171168
        %v1899 = vunpack.c.0.s8 %v1898
        %v1900 = vlaneseq
        %v1901 = vshrl.u32 %v1900, 7
        %v1902 = vsub.s32 %v1899, %v1901
        %v1903 = vrot.slane %v1887, %v1902
        %v1905 = vunpack.c.l.s4 1966171168
        %v1906 = vunpack.c.0.s8 %v1905
        %v1907 = vlaneseq
        %v1908 = vshrl.u32 %v1907, 7
        %v1909 = vsub.s32 %v1906, %v1908
        %v1910 = vrot.slane %v1888, %v1909
        %v1912 = vunpack.c.l.s4 1966171168
        %v1913 = vunpack.c.0.s8 %v1912
        %v1914 = vlaneseq
        %v1915 = vshrl.u32 %v1914, 7
        %v1916 = vsub.s32 %v1913, %v1915
        %v1917 = vrot.slane %v1889, %v1916
        %v1918 = vcombine.high %v1896, %v1896
        %v1919 = vcombine.high %v1903, %v1903
        %v1920 = vcombine.high %v1910, %v1910
        %v1921 = vcombine.high %v1917, %v1917
        %v1922 = vcombine.high %v898, %v898
        %v1924 = vunpack.c.l.s4 1966171168
        %v1925 = vunpack.c.0.s8 %v1924
        %v1926 = vlaneseq
        %v1927 = vshrl.u32 %v1926, 7
        %v1928 = vsub.s32 %v1925, %v1927
        %v1929 = vrot.slane %v898, %v1928
        %v1931 = vunpack.c.l.s4 1966171168
        %v1932 = vunpack.c.0.s8 %v1931
        %v1933 = vlaneseq
        %v1934 = vshrl.u32 %v1933, 7
        %v1935 = vsub.s32 %v1932, %v1934
        %v1936 = vrot.slane %v1922, %v1935
        %v1937 = vcombine.high %v1929, %v1929
        %v1938 = vcombine.high %v1936, %v1936
        %v1940 = vunpack.c.l.s4 1966171168
        %v1941 = vunpack.c.0.s8 %v1940
        %v1942 = vlaneseq
        %v1943 = vshrl.u32 %v1942, 7
        %v1944 = vsub.s32 %v1941, %v1943
        %v1945 = vrot.slane %v1929, %v1944
        %v1947 = vunpack.c.l.s4 1966171168
        %v1948 = vunpack.c.0.s8 %v1947
        %v1949 = vlaneseq
        %v1950 = vshrl.u32 %v1949, 7
        %v1951 = vsub.s32 %v1948, %v1950
        %v1952 = vrot.slane %v1936, %v1951
        %v1954 = vunpack.c.l.s4 1966171168
        %v1955 = vunpack.c.0.s8 %v1954
        %v1956 = vlaneseq
        %v1957 = vshrl.u32 %v1956, 7
        %v1958 = vsub.s32 %v1955, %v1957
        %v1959 = vrot.slane %v1937, %v1958
        %v1961 = vunpack.c.l.s4 1966171168
        %v1962 = vunpack.c.0.s8 %v1961
        %v1963 = vlaneseq
        %v1964 = vshrl.u32 %v1963, 7
        %v1965 = vsub.s32 %v1962, %v1964
        %v1966 = vrot.slane %v1938, %v1965
        %v1967 = vcombine.high %v1945, %v1945
        %v1968 = vcombine.high %v1952, %v1952
        %v1969 = vcombine.high %v1959, %v1959
        %v1970 = vcombine.high %v1966, %v1966
        %v1971 = vcombine.high %v899, %v899
        %v1973 = vunpack.c.l.s4 1966171168
        %v1974 = vunpack.c.0.s8 %v1973
        %v1975 = vlaneseq
        %v1976 = vshrl.u32 %v1975, 7
        %v1977 = vsub.s32 %v1974, %v1976
        %v1978 = vrot.slane %v899, %v1977
        %v1980 = vunpack.c.l.s4 1966171168
        %v1981 = vunpack.c.0.s8 %v1980
        %v1982 = vlaneseq
        %v1983 = vshrl.u32 %v1982, 7
        %v1984 = vsub.s32 %v1981, %v1983
        %v1985 = vrot.slane %v1971, %v1984
        %v1986 = vcombine.high %v1978, %v1978
        %v1987 = vcombine.high %v1985, %v1985
        %v1989 = vunpack.c.l.s4 1966171168
        %v1990 = vunpack.c.0.s8 %v1989
        %v1991 = vlaneseq
        %v1992 = vshrl.u32 %v1991, 7
        %v1993 = vsub.s32 %v1990, %v1992
        %v1994 = vrot.slane %v1978, %v1993
        %v1996 = vunpack.c.l.s4 1966171168
        %v1997 = vunpack.c.0.s8 %v1996
        %v1998 = vlaneseq
        %v1999 = vshrl.u32 %v1998, 7
        %v2000 = vsub.s32 %v1997, %v1999
        %v2001 = vrot.slane %v1985, %v2000
        %v2003 = vunpack.c.l.s4 1966171168
        %v2004 = vunpack.c.0.s8 %v2003
        %v2005 = vlaneseq
        %v2006 = vshrl.u32 %v2005, 7
        %v2007 = vsub.s32 %v2004, %v2006
        %v2008 = vrot.slane %v1986, %v2007
        %v2010 = vunpack.c.l.s4 1966171168
        %v2011 = vunpack.c.0.s8 %v2010
        %v2012 = vlaneseq
        %v2013 = vshrl.u32 %v2012, 7
        %v2014 = vsub.s32 %v2011, %v2013
        %v2015 = vrot.slane %v1987, %v2014
        %v2016 = vcombine.high %v1994, %v1994
        %v2017 = vcombine.high %v2001, %v2001
        %v2018 = vcombine.high %v2008, %v2008
        %v2019 = vcombine.high %v2015, %v2015
        %v2020 = vcombine.high %v900, %v900
        %v2022 = vunpack.c.l.s4 1966171168
        %v2023 = vunpack.c.0.s8 %v2022
        %v2024 = vlaneseq
        %v2025 = vshrl.u32 %v2024, 7
        %v2026 = vsub.s32 %v2023, %v2025
        %v2027 = vrot.slane %v900, %v2026
        %v2029 = vunpack.c.l.s4 1966171168
        %v2030 = vunpack.c.0.s8 %v2029
        %v2031 = vlaneseq
        %v2032 = vshrl.u32 %v2031, 7
        %v2033 = vsub.s32 %v2030, %v2032
        %v2034 = vrot.slane %v2020, %v2033
        %v2035 = vcombine.high %v2027, %v2027
        %v2036 = vcombine.high %v2034, %v2034
        %v2038 = vunpack.c.l.s4 1966171168
        %v2039 = vunpack.c.0.s8 %v2038
        %v2040 = vlaneseq
        %v2041 = vshrl.u32 %v2040, 7
        %v2042 = vsub.s32 %v2039, %v2041
        %v2043 = vrot.slane %v2027, %v2042
        %v2045 = vunpack.c.l.s4 1966171168
        %v2046 = vunpack.c.0.s8 %v2045
        %v2047 = vlaneseq
        %v2048 = vshrl.u32 %v2047, 7
        %v2049 = vsub.s32 %v2046, %v2048
        %v2050 = vrot.slane %v2034, %v2049
        %v2052 = vunpack.c.l.s4 1966171168
        %v2053 = vunpack.c.0.s8 %v2052
        %v2054 = vlaneseq
        %v2055 = vshrl.u32 %v2054, 7
        %v2056 = vsub.s32 %v2053, %v2055
        %v2057 = vrot.slane %v2035, %v2056
        %v2059 = vunpack.c.l.s4 1966171168
        %v2060 = vunpack.c.0.s8 %v2059
        %v2061 = vlaneseq
        %v2062 = vshrl.u32 %v2061, 7
        %v2063 = vsub.s32 %v2060, %v2062
        %v2064 = vrot.slane %v2036, %v2063
        %v2065 = vcombine.high %v2043, %v2043
        %v2066 = vcombine.high %v2050, %v2050
        %v2067 = vcombine.high %v2057, %v2057
        %v2068 = vcombine.high %v2064, %v2064
        %v2069 = vcombine.high %v901, %v901
        %v2071 = vunpack.c.l.s4 1966171168
        %v2072 = vunpack.c.0.s8 %v2071
        %v2073 = vlaneseq
        %v2074 = vshrl.u32 %v2073, 7
        %v2075 = vsub.s32 %v2072, %v2074
        %v2076 = vrot.slane %v901, %v2075
        %v2078 = vunpack.c.l.s4 1966171168
        %v2079 = vunpack.c.0.s8 %v2078
        %v2080 = vlaneseq
        %v2081 = vshrl.u32 %v2080, 7
        %v2082 = vsub.s32 %v2079, %v2081
        %v2083 = vrot.slane %v2069, %v2082
        %v2084 = vcombine.high %v2076, %v2076
        %v2085 = vcombine.high %v2083, %v2083
        %v2087 = vunpack.c.l.s4 1966171168
        %v2088 = vunpack.c.0.s8 %v2087
        %v2089 = vlaneseq
        %v2090 = vshrl.u32 %v2089, 7
        %v2091 = vsub.s32 %v2088, %v2090
        %v2092 = vrot.slane %v2076, %v2091
        %v2094 = vunpack.c.l.s4 1966171168
        %v2095 = vunpack.c.0.s8 %v2094
        %v2096 = vlaneseq
        %v2097 = vshrl.u32 %v2096, 7
        %v2098 = vsub.s32 %v2095, %v2097
        %v2099 = vrot.slane %v2083, %v2098
        %v2101 = vunpack.c.l.s4 1966171168
        %v2102 = vunpack.c.0.s8 %v2101
        %v2103 = vlaneseq
        %v2104 = vshrl.u32 %v2103, 7
        %v2105 = vsub.s32 %v2102, %v2104
        %v2106 = vrot.slane %v2084, %v2105
        %v2108 = vunpack.c.l.s4 1966171168
        %v2109 = vunpack.c.0.s8 %v2108
        %v2110 = vlaneseq
        %v2111 = vshrl.u32 %v2110, 7
        %v2112 = vsub.s32 %v2109, %v2111
        %v2113 = vrot.slane %v2085, %v2112
        %v2114 = vcombine.high %v2092, %v2092
        %v2115 = vcombine.high %v2099, %v2099
        %v2116 = vcombine.high %v2106, %v2106
        %v2117 = vcombine.high %v2113, %v2113
        %v2118 = vcombine.high %v902, %v902
        %v2120 = vunpack.c.l.s4 1966171168
        %v2121 = vunpack.c.0.s8 %v2120
        %v2122 = vlaneseq
        %v2123 = vshrl.u32 %v2122, 7
        %v2124 = vsub.s32 %v2121, %v2123
        %v2125 = vrot.slane %v902, %v2124
        %v2127 = vunpack.c.l.s4 1966171168
        %v2128 = vunpack.c.0.s8 %v2127
        %v2129 = vlaneseq
        %v2130 = vshrl.u32 %v2129, 7
        %v2131 = vsub.s32 %v2128, %v2130
        %v2132 = vrot.slane %v2118, %v2131
        %v2133 = vcombine.high %v2125, %v2125
        %v2134 = vcombine.high %v2132, %v2132
        %v2136 = vunpack.c.l.s4 1966171168
        %v2137 = vunpack.c.0.s8 %v2136
        %v2138 = vlaneseq
        %v2139 = vshrl.u32 %v2138, 7
        %v2140 = vsub.s32 %v2137, %v2139
        %v2141 = vrot.slane %v2125, %v2140
        %v2143 = vunpack.c.l.s4 1966171168
        %v2144 = vunpack.c.0.s8 %v2143
        %v2145 = vlaneseq
        %v2146 = vshrl.u32 %v2145, 7
        %v2147 = vsub.s32 %v2144, %v2146
        %v2148 = vrot.slane %v2132, %v2147
        %v2150 = vunpack.c.l.s4 1966171168
        %v2151 = vunpack.c.0.s8 %v2150
        %v2152 = vlaneseq
        %v2153 = vshrl.u32 %v2152, 7
        %v2154 = vsub.s32 %v2151, %v2153
        %v2155 = vrot.slane %v2133, %v2154
        %v2157 = vunpack.c.l.s4 1966171168
        %v2158 = vunpack.c.0.s8 %v2157
        %v2159 = vlaneseq
        %v2160 = vshrl.u32 %v2159, 7
        %v2161 = vsub.s32 %v2158, %v2160
        %v2162 = vrot.slane %v2134, %v2161
        %v2163 = vcombine.high %v2141, %v2141
        %v2164 = vcombine.high %v2148, %v2148
        %v2165 = vcombine.high %v2155, %v2155
        %v2166 = vcombine.high %v2162, %v2162
        %v2167 = vcombine.high %v903, %v903
        %v2169 = vunpack.c.l.s4 1966171168
        %v2170 = vunpack.c.0.s8 %v2169
        %v2171 = vlaneseq
        %v2172 = vshrl.u32 %v2171, 7
        %v2173 = vsub.s32 %v2170, %v2172
        %v2174 = vrot.slane %v903, %v2173
        %v2176 = vunpack.c.l.s4 1966171168
        %v2177 = vunpack.c.0.s8 %v2176
        %v2178 = vlaneseq
        %v2179 = vshrl.u32 %v2178, 7
        %v2180 = vsub.s32 %v2177, %v2179
        %v2181 = vrot.slane %v2167, %v2180
        %v2182 = vcombine.high %v2174, %v2174
        %v2183 = vcombine.high %v2181, %v2181
        %v2185 = vunpack.c.l.s4 1966171168
        %v2186 = vunpack.c.0.s8 %v2185
        %v2187 = vlaneseq
        %v2188 = vshrl.u32 %v2187, 7
        %v2189 = vsub.s32 %v2186, %v2188
        %v2190 = vrot.slane %v2174, %v2189
        %v2192 = vunpack.c.l.s4 1966171168
        %v2193 = vunpack.c.0.s8 %v2192
        %v2194 = vlaneseq
        %v2195 = vshrl.u32 %v2194, 7
        %v2196 = vsub.s32 %v2193, %v2195
        %v2197 = vrot.slane %v2181, %v2196
        %v2199 = vunpack.c.l.s4 1966171168
        %v2200 = vunpack.c.0.s8 %v2199
        %v2201 = vlaneseq
        %v2202 = vshrl.u32 %v2201, 7
        %v2203 = vsub.s32 %v2200, %v2202
        %v2204 = vrot.slane %v2182, %v2203
        %v2206 = vunpack.c.l.s4 1966171168
        %v2207 = vunpack.c.0.s8 %v2206
        %v2208 = vlaneseq
        %v2209 = vshrl.u32 %v2208, 7
        %v2210 = vsub.s32 %v2207, %v2209
        %v2211 = vrot.slane %v2183, %v2210
        %v2212 = vcombine.high %v2190, %v2190
        %v2213 = vcombine.high %v2197, %v2197
        %v2214 = vcombine.high %v2204, %v2204
        %v2215 = vcombine.high %v2211, %v2211
        %v2216 = vcombine.high %v904, %v904
        %v2218 = vunpack.c.l.s4 1966171168
        %v2219 = vunpack.c.0.s8 %v2218
        %v2220 = vlaneseq
        %v2221 = vshrl.u32 %v2220, 7
        %v2222 = vsub.s32 %v2219, %v2221
        %v2223 = vrot.slane %v904, %v2222
        %v2225 = vunpack.c.l.s4 1966171168
        %v2226 = vunpack.c.0.s8 %v2225
        %v2227 = vlaneseq
        %v2228 = vshrl.u32 %v2227, 7
        %v2229 = vsub.s32 %v2226, %v2228
        %v2230 = vrot.slane %v2216, %v2229
        %v2231 = vcombine.high %v2223, %v2223
        %v2232 = vcombine.high %v2230, %v2230
        %v2234 = vunpack.c.l.s4 1966171168
        %v2235 = vunpack.c.0.s8 %v2234
        %v2236 = vlaneseq
        %v2237 = vshrl.u32 %v2236, 7
        %v2238 = vsub.s32 %v2235, %v2237
        %v2239 = vrot.slane %v2223, %v2238
        %v2241 = vunpack.c.l.s4 1966171168
        %v2242 = vunpack.c.0.s8 %v2241
        %v2243 = vlaneseq
        %v2244 = vshrl.u32 %v2243, 7
        %v2245 = vsub.s32 %v2242, %v2244
        %v2246 = vrot.slane %v2230, %v2245
        %v2248 = vunpack.c.l.s4 1966171168
        %v2249 = vunpack.c.0.s8 %v2248
        %v2250 = vlaneseq
        %v2251 = vshrl.u32 %v2250, 7
        %v2252 = vsub.s32 %v2249, %v2251
        %v2253 = vrot.slane %v2231, %v2252
        %v2255 = vunpack.c.l.s4 1966171168
        %v2256 = vunpack.c.0.s8 %v2255
        %v2257 = vlaneseq
        %v2258 = vshrl.u32 %v2257, 7
        %v2259 = vsub.s32 %v2256, %v2258
        %v2260 = vrot.slane %v2232, %v2259
        %v2261 = vcombine.high %v2239, %v2239
        %v2262 = vcombine.high %v2246, %v2246
        %v2263 = vcombine.high %v2253, %v2253
        %v2264 = vcombine.high %v2260, %v2260
        %v2265 = vcombine.high %v905, %v905
        %v2267 = vunpack.c.l.s4 1966171168
        %v2268 = vunpack.c.0.s8 %v2267
        %v2269 = vlaneseq
        %v2270 = vshrl.u32 %v2269, 7
        %v2271 = vsub.s32 %v2268, %v2270
        %v2272 = vrot.slane %v905, %v2271
        %v2274 = vunpack.c.l.s4 1966171168
        %v2275 = vunpack.c.0.s8 %v2274
        %v2276 = vlaneseq
        %v2277 = vshrl.u32 %v2276, 7
        %v2278 = vsub.s32 %v2275, %v2277
        %v2279 = vrot.slane %v2265, %v2278
        %v2280 = vcombine.high %v2272, %v2272
        %v2281 = vcombine.high %v2279, %v2279
        %v2283 = vunpack.c.l.s4 1966171168
        %v2284 = vunpack.c.0.s8 %v2283
        %v2285 = vlaneseq
        %v2286 = vshrl.u32 %v2285, 7
        %v2287 = vsub.s32 %v2284, %v2286
        %v2288 = vrot.slane %v2272, %v2287
        %v2290 = vunpack.c.l.s4 1966171168
        %v2291 = vunpack.c.0.s8 %v2290
        %v2292 = vlaneseq
        %v2293 = vshrl.u32 %v2292, 7
        %v2294 = vsub.s32 %v2291, %v2293
        %v2295 = vrot.slane %v2279, %v2294
        %v2297 = vunpack.c.l.s4 1966171168
        %v2298 = vunpack.c.0.s8 %v2297
        %v2299 = vlaneseq
        %v2300 = vshrl.u32 %v2299, 7
        %v2301 = vsub.s32 %v2298, %v2300
        %v2302 = vrot.slane %v2280, %v2301
        %v2304 = vunpack.c.l.s4 1966171168
        %v2305 = vunpack.c.0.s8 %v2304
        %v2306 = vlaneseq
        %v2307 = vshrl.u32 %v2306, 7
        %v2308 = vsub.s32 %v2305, %v2307
        %v2309 = vrot.slane %v2281, %v2308
        %v2310 = vcombine.high %v2288, %v2288
        %v2311 = vcombine.high %v2295, %v2295
        %v2312 = vcombine.high %v2302, %v2302
        %v2313 = vcombine.high %v2309, %v2309
        %v2314 = vcombine.high %v906, %v906
        %v2316 = vunpack.c.l.s4 1966171168
        %v2317 = vunpack.c.0.s8 %v2316
        %v2318 = vlaneseq
        %v2319 = vshrl.u32 %v2318, 7
        %v2320 = vsub.s32 %v2317, %v2319
        %v2321 = vrot.slane %v906, %v2320
        %v2323 = vunpack.c.l.s4 1966171168
        %v2324 = vunpack.c.0.s8 %v2323
        %v2325 = vlaneseq
        %v2326 = vshrl.u32 %v2325, 7
        %v2327 = vsub.s32 %v2324, %v2326
        %v2328 = vrot.slane %v2314, %v2327
        %v2329 = vcombine.high %v2321, %v2321
        %v2330 = vcombine.high %v2328, %v2328
        %v2332 = vunpack.c.l.s4 1966171168
        %v2333 = vunpack.c.0.s8 %v2332
        %v2334 = vlaneseq
        %v2335 = vshrl.u32 %v2334, 7
        %v2336 = vsub.s32 %v2333, %v2335
        %v2337 = vrot.slane %v2321, %v2336
        %v2339 = vunpack.c.l.s4 1966171168
        %v2340 = vunpack.c.0.s8 %v2339
        %v2341 = vlaneseq
        %v2342 = vshrl.u32 %v2341, 7
        %v2343 = vsub.s32 %v2340, %v2342
        %v2344 = vrot.slane %v2328, %v2343
        %v2346 = vunpack.c.l.s4 1966171168
        %v2347 = vunpack.c.0.s8 %v2346
        %v2348 = vlaneseq
        %v2349 = vshrl.u32 %v2348, 7
        %v2350 = vsub.s32 %v2347, %v2349
        %v2351 = vrot.slane %v2329, %v2350
        %v2353 = vunpack.c.l.s4 1966171168
        %v2354 = vunpack.c.0.s8 %v2353
        %v2355 = vlaneseq
        %v2356 = vshrl.u32 %v2355, 7
        %v2357 = vsub.s32 %v2354, %v2356
        %v2358 = vrot.slane %v2330, %v2357
        %v2359 = vcombine.high %v2337, %v2337
        %v2360 = vcombine.high %v2344, %v2344
        %v2361 = vcombine.high %v2351, %v2351
        %v2362 = vcombine.high %v2358, %v2358
        %v2363 = vcombine.high %v907, %v907
        %v2365 = vunpack.c.l.s4 1966171168
        %v2366 = vunpack.c.0.s8 %v2365
        %v2367 = vlaneseq
        %v2368 = vshrl.u32 %v2367, 7
        %v2369 = vsub.s32 %v2366, %v2368
        %v2370 = vrot.slane %v907, %v2369
        %v2372 = vunpack.c.l.s4 1966171168
        %v2373 = vunpack.c.0.s8 %v2372
        %v2374 = vlaneseq
        %v2375 = vshrl.u32 %v2374, 7
        %v2376 = vsub.s32 %v2373, %v2375
        %v2377 = vrot.slane %v2363, %v2376
        %v2378 = vcombine.high %v2370, %v2370
        %v2379 = vcombine.high %v2377, %v2377
        %v2381 = vunpack.c.l.s4 1966171168
        %v2382 = vunpack.c.0.s8 %v2381
        %v2383 = vlaneseq
        %v2384 = vshrl.u32 %v2383, 7
        %v2385 = vsub.s32 %v2382, %v2384
        %v2386 = vrot.slane %v2370, %v2385
        %v2388 = vunpack.c.l.s4 1966171168
        %v2389 = vunpack.c.0.s8 %v2388
        %v2390 = vlaneseq
        %v2391 = vshrl.u32 %v2390, 7
        %v2392 = vsub.s32 %v2389, %v2391
        %v2393 = vrot.slane %v2377, %v2392
        %v2395 = vunpack.c.l.s4 1966171168
        %v2396 = vunpack.c.0.s8 %v2395
        %v2397 = vlaneseq
        %v2398 = vshrl.u32 %v2397, 7
        %v2399 = vsub.s32 %v2396, %v2398
        %v2400 = vrot.slane %v2378, %v2399
        %v2402 = vunpack.c.l.s4 1966171168
        %v2403 = vunpack.c.0.s8 %v2402
        %v2404 = vlaneseq
        %v2405 = vshrl.u32 %v2404, 7
        %v2406 = vsub.s32 %v2403, %v2405
        %v2407 = vrot.slane %v2379, %v2406
        %v2408 = vcombine.high %v2386, %v2386
        %v2409 = vcombine.high %v2393, %v2393
        %v2410 = vcombine.high %v2400, %v2400
        %v2411 = vcombine.high %v2407, %v2407
        %v2412 = vcombine.high %v908, %v908
        %v2414 = vunpack.c.l.s4 1966171168
        %v2415 = vunpack.c.0.s8 %v2414
        %v2416 = vlaneseq
        %v2417 = vshrl.u32 %v2416, 7
        %v2418 = vsub.s32 %v2415, %v2417
        %v2419 = vrot.slane %v908, %v2418
        %v2421 = vunpack.c.l.s4 1966171168
        %v2422 = vunpack.c.0.s8 %v2421
        %v2423 = vlaneseq
        %v2424 = vshrl.u32 %v2423, 7
        %v2425 = vsub.s32 %v2422, %v2424
        %v2426 = vrot.slane %v2412, %v2425
        %v2427 = vcombine.high %v2419, %v2419
        %v2428 = vcombine.high %v2426, %v2426
        %v2430 = vunpack.c.l.s4 1966171168
        %v2431 = vunpack.c.0.s8 %v2430
        %v2432 = vlaneseq
        %v2433 = vshrl.u32 %v2432, 7
        %v2434 = vsub.s32 %v2431, %v2433
        %v2435 = vrot.slane %v2419, %v2434
        %v2437 = vunpack.c.l.s4 1966171168
        %v2438 = vunpack.c.0.s8 %v2437
        %v2439 = vlaneseq
        %v2440 = vshrl.u32 %v2439, 7
        %v2441 = vsub.s32 %v2438, %v2440
        %v2442 = vrot.slane %v2426, %v2441
        %v2444 = vunpack.c.l.s4 1966171168
        %v2445 = vunpack.c.0.s8 %v2444
        %v2446 = vlaneseq
        %v2447 = vshrl.u32 %v2446, 7
        %v2448 = vsub.s32 %v2445, %v2447
        %v2449 = vrot.slane %v2427, %v2448
        %v2451 = vunpack.c.l.s4 1966171168
        %v2452 = vunpack.c.0.s8 %v2451
        %v2453 = vlaneseq
        %v2454 = vshrl.u32 %v2453, 7
        %v2455 = vsub.s32 %v2452, %v2454
        %v2456 = vrot.slane %v2428, %v2455
        %v2457 = vcombine.high %v2435, %v2435
        %v2458 = vcombine.high %v2442, %v2442
        %v2459 = vcombine.high %v2449, %v2449
        %v2460 = vcombine.high %v2456, %v2456
        %v2461 = vcombine.high %v909, %v909
        %v2463 = vunpack.c.l.s4 1966171168
        %v2464 = vunpack.c.0.s8 %v2463
        %v2465 = vlaneseq
        %v2466 = vshrl.u32 %v2465, 7
        %v2467 = vsub.s32 %v2464, %v2466
        %v2468 = vrot.slane %v909, %v2467
        %v2470 = vunpack.c.l.s4 1966171168
        %v2471 = vunpack.c.0.s8 %v2470
        %v2472 = vlaneseq
        %v2473 = vshrl.u32 %v2472, 7
        %v2474 = vsub.s32 %v2471, %v2473
        %v2475 = vrot.slane %v2461, %v2474
        %v2476 = vcombine.high %v2468, %v2468
        %v2477 = vcombine.high %v2475, %v2475
        %v2479 = vunpack.c.l.s4 1966171168
        %v2480 = vunpack.c.0.s8 %v2479
        %v2481 = vlaneseq
        %v2482 = vshrl.u32 %v2481, 7
        %v2483 = vsub.s32 %v2480, %v2482
        %v2484 = vrot.slane %v2468, %v2483
        %v2486 = vunpack.c.l.s4 1966171168
        %v2487 = vunpack.c.0.s8 %v2486
        %v2488 = vlaneseq
        %v2489 = vshrl.u32 %v2488, 7
        %v2490 = vsub.s32 %v2487, %v2489
        %v2491 = vrot.slane %v2475, %v2490
        %v2493 = vunpack.c.l.s4 1966171168
        %v2494 = vunpack.c.0.s8 %v2493
        %v2495 = vlaneseq
        %v2496 = vshrl.u32 %v2495, 7
        %v2497 = vsub.s32 %v2494, %v2496
        %v2498 = vrot.slane %v2476, %v2497
        %v2500 = vunpack.c.l.s4 1966171168
        %v2501 = vunpack.c.0.s8 %v2500
        %v2502 = vlaneseq
        %v2503 = vshrl.u32 %v2502, 7
        %v2504 = vsub.s32 %v2501, %v2503
        %v2505 = vrot.slane %v2477, %v2504
        %v2506 = vcombine.high %v2484, %v2484
        %v2507 = vcombine.high %v2491, %v2491
        %v2508 = vcombine.high %v2498, %v2498
        %v2509 = vcombine.high %v2505, %v2505
        %v2510 = vld [vmem:[%s362] sm:$0xff]
        %v2511 = vld [vmem:[%s362 + $0x8] sm:$0xff]
        %v2512 = vld [vmem:[%s362 + $0x10] sm:$0xff]
        %v2513 = vld [vmem:[%s362 + $0x18] sm:$0xff]
        %v2514 = vld [vmem:[%s362 + $0x20] sm:$0xff]
        %v2515 = vld [vmem:[%s362 + $0x28] sm:$0xff]
        %v2516 = vld [vmem:[%s362 + $0x30] sm:$0xff]
        %v2517 = vld [vmem:[%s362 + $0x38] sm:$0xff]
        %v2518 = vld [vmem:[%s362 + $0x40] sm:$0xff]
        %v2519 = vld [vmem:[%s362 + $0x48] sm:$0xff]
        %v2520 = vld [vmem:[%s362 + $0x50] sm:$0xff]
        %v2521 = vld [vmem:[%s362 + $0x58] sm:$0xff]
        %v2522 = vld [vmem:[%s362 + $0x60] sm:$0xff]
        %v2523 = vld [vmem:[%s362 + $0x68] sm:$0xff]
        %v2524 = vld [vmem:[%s362 + $0x70] sm:$0xff]
        %v2525 = vld [vmem:[%s362 + $0x78] sm:$0xff]
        %v2526 = vld [vmem:[%s362 + $0x80] sm:$0xff]
        %v2527 = vld [vmem:[%s362 + $0x88] sm:$0xff]
        %v2528 = vld [vmem:[%s362 + $0x90] sm:$0xff]
        %v2529 = vld [vmem:[%s362 + $0x98] sm:$0xff]
        %v2530 = vld [vmem:[%s362 + $0xa0] sm:$0xff]
        %v2531 = vld [vmem:[%s362 + $0xa8] sm:$0xff]
        %v2532 = vld [vmem:[%s362 + $0xb0] sm:$0xff]
        %v2533 = vld [vmem:[%s362 + $0xb8] sm:$0xff]
        %v2534 = vld [vmem:[%s362 + $0xc0] sm:$0xff]
        %v2535 = vld [vmem:[%s362 + $0xc8] sm:$0xff]
        %v2536 = vld [vmem:[%s362 + $0xd0] sm:$0xff]
        %v2537 = vld [vmem:[%s362 + $0xd8] sm:$0xff]
        %v2538 = vld [vmem:[%s362 + $0xe0] sm:$0xff]
        %v2539 = vld [vmem:[%s362 + $0xe8] sm:$0xff]
        %v2540 = vld [vmem:[%s362 + $0xf0] sm:$0xff]
        %v2541 = vld [vmem:[%s362 + $0xf8] sm:$0xff]
        %v2574 = vcombine.high %v2510, %v2510
        %v2576 = vunpack.c.l.s4 1966171168
        %v2577 = vunpack.c.0.s8 %v2576
        %v2578 = vlaneseq
        %v2579 = vshrl.u32 %v2578, 7
        %v2580 = vsub.s32 %v2577, %v2579
        %v2581 = vrot.slane %v2510, %v2580
        %v2583 = vunpack.c.l.s4 1966171168
        %v2584 = vunpack.c.0.s8 %v2583
        %v2585 = vlaneseq
        %v2586 = vshrl.u32 %v2585, 7
        %v2587 = vsub.s32 %v2584, %v2586
        %v2588 = vrot.slane %v2574, %v2587
        %v2589 = vcombine.high %v2581, %v2581
        %v2590 = vcombine.high %v2588, %v2588
        %v2592 = vunpack.c.l.s4 1966171168
        %v2593 = vunpack.c.0.s8 %v2592
        %v2594 = vlaneseq
        %v2595 = vshrl.u32 %v2594, 7
        %v2596 = vsub.s32 %v2593, %v2595
        %v2597 = vrot.slane %v2581, %v2596
        %v2599 = vunpack.c.l.s4 1966171168
        %v2600 = vunpack.c.0.s8 %v2599
        %v2601 = vlaneseq
        %v2602 = vshrl.u32 %v2601, 7
        %v2603 = vsub.s32 %v2600, %v2602
        %v2604 = vrot.slane %v2588, %v2603
        %v2606 = vunpack.c.l.s4 1966171168
        %v2607 = vunpack.c.0.s8 %v2606
        %v2608 = vlaneseq
        %v2609 = vshrl.u32 %v2608, 7
        %v2610 = vsub.s32 %v2607, %v2609
        %v2611 = vrot.slane %v2589, %v2610
        %v2613 = vunpack.c.l.s4 1966171168
        %v2614 = vunpack.c.0.s8 %v2613
        %v2615 = vlaneseq
        %v2616 = vshrl.u32 %v2615, 7
        %v2617 = vsub.s32 %v2614, %v2616
        %v2618 = vrot.slane %v2590, %v2617
        %v2619 = vcombine.high %v2597, %v2597
        %v2620 = vcombine.high %v2604, %v2604
        %v2621 = vcombine.high %v2611, %v2611
        %v2622 = vcombine.high %v2618, %v2618
        %v2623 = vcombine.high %v2511, %v2511
        %v2625 = vunpack.c.l.s4 1966171168
        %v2626 = vunpack.c.0.s8 %v2625
        %v2627 = vlaneseq
        %v2628 = vshrl.u32 %v2627, 7
        %v2629 = vsub.s32 %v2626, %v2628
        %v2630 = vrot.slane %v2511, %v2629
        %v2632 = vunpack.c.l.s4 1966171168
        %v2633 = vunpack.c.0.s8 %v2632
        %v2634 = vlaneseq
        %v2635 = vshrl.u32 %v2634, 7
        %v2636 = vsub.s32 %v2633, %v2635
        %v2637 = vrot.slane %v2623, %v2636
        %v2638 = vcombine.high %v2630, %v2630
        %v2639 = vcombine.high %v2637, %v2637
        %v2641 = vunpack.c.l.s4 1966171168
        %v2642 = vunpack.c.0.s8 %v2641
        %v2643 = vlaneseq
        %v2644 = vshrl.u32 %v2643, 7
        %v2645 = vsub.s32 %v2642, %v2644
        %v2646 = vrot.slane %v2630, %v2645
        %v2648 = vunpack.c.l.s4 1966171168
        %v2649 = vunpack.c.0.s8 %v2648
        %v2650 = vlaneseq
        %v2651 = vshrl.u32 %v2650, 7
        %v2652 = vsub.s32 %v2649, %v2651
        %v2653 = vrot.slane %v2637, %v2652
        %v2655 = vunpack.c.l.s4 1966171168
        %v2656 = vunpack.c.0.s8 %v2655
        %v2657 = vlaneseq
        %v2658 = vshrl.u32 %v2657, 7
        %v2659 = vsub.s32 %v2656, %v2658
        %v2660 = vrot.slane %v2638, %v2659
        %v2662 = vunpack.c.l.s4 1966171168
        %v2663 = vunpack.c.0.s8 %v2662
        %v2664 = vlaneseq
        %v2665 = vshrl.u32 %v2664, 7
        %v2666 = vsub.s32 %v2663, %v2665
        %v2667 = vrot.slane %v2639, %v2666
        %v2668 = vcombine.high %v2646, %v2646
        %v2669 = vcombine.high %v2653, %v2653
        %v2670 = vcombine.high %v2660, %v2660
        %v2671 = vcombine.high %v2667, %v2667
        %v2672 = vcombine.high %v2512, %v2512
        %v2674 = vunpack.c.l.s4 1966171168
        %v2675 = vunpack.c.0.s8 %v2674
        %v2676 = vlaneseq
        %v2677 = vshrl.u32 %v2676, 7
        %v2678 = vsub.s32 %v2675, %v2677
        %v2679 = vrot.slane %v2512, %v2678
        %v2681 = vunpack.c.l.s4 1966171168
        %v2682 = vunpack.c.0.s8 %v2681
        %v2683 = vlaneseq
        %v2684 = vshrl.u32 %v2683, 7
        %v2685 = vsub.s32 %v2682, %v2684
        %v2686 = vrot.slane %v2672, %v2685
        %v2687 = vcombine.high %v2679, %v2679
        %v2688 = vcombine.high %v2686, %v2686
        %v2690 = vunpack.c.l.s4 1966171168
        %v2691 = vunpack.c.0.s8 %v2690
        %v2692 = vlaneseq
        %v2693 = vshrl.u32 %v2692, 7
        %v2694 = vsub.s32 %v2691, %v2693
        %v2695 = vrot.slane %v2679, %v2694
        %v2697 = vunpack.c.l.s4 1966171168
        %v2698 = vunpack.c.0.s8 %v2697
        %v2699 = vlaneseq
        %v2700 = vshrl.u32 %v2699, 7
        %v2701 = vsub.s32 %v2698, %v2700
        %v2702 = vrot.slane %v2686, %v2701
        %v2704 = vunpack.c.l.s4 1966171168
        %v2705 = vunpack.c.0.s8 %v2704
        %v2706 = vlaneseq
        %v2707 = vshrl.u32 %v2706, 7
        %v2708 = vsub.s32 %v2705, %v2707
        %v2709 = vrot.slane %v2687, %v2708
        %v2711 = vunpack.c.l.s4 1966171168
        %v2712 = vunpack.c.0.s8 %v2711
        %v2713 = vlaneseq
        %v2714 = vshrl.u32 %v2713, 7
        %v2715 = vsub.s32 %v2712, %v2714
        %v2716 = vrot.slane %v2688, %v2715
        %v2717 = vcombine.high %v2695, %v2695
        %v2718 = vcombine.high %v2702, %v2702
        %v2719 = vcombine.high %v2709, %v2709
        %v2720 = vcombine.high %v2716, %v2716
        %v2721 = vcombine.high %v2513, %v2513
        %v2723 = vunpack.c.l.s4 1966171168
        %v2724 = vunpack.c.0.s8 %v2723
        %v2725 = vlaneseq
        %v2726 = vshrl.u32 %v2725, 7
        %v2727 = vsub.s32 %v2724, %v2726
        %v2728 = vrot.slane %v2513, %v2727
        %v2730 = vunpack.c.l.s4 1966171168
        %v2731 = vunpack.c.0.s8 %v2730
        %v2732 = vlaneseq
        %v2733 = vshrl.u32 %v2732, 7
        %v2734 = vsub.s32 %v2731, %v2733
        %v2735 = vrot.slane %v2721, %v2734
        %v2736 = vcombine.high %v2728, %v2728
        %v2737 = vcombine.high %v2735, %v2735
        %v2739 = vunpack.c.l.s4 1966171168
        %v2740 = vunpack.c.0.s8 %v2739
        %v2741 = vlaneseq
        %v2742 = vshrl.u32 %v2741, 7
        %v2743 = vsub.s32 %v2740, %v2742
        %v2744 = vrot.slane %v2728, %v2743
        %v2746 = vunpack.c.l.s4 1966171168
        %v2747 = vunpack.c.0.s8 %v2746
        %v2748 = vlaneseq
        %v2749 = vshrl.u32 %v2748, 7
        %v2750 = vsub.s32 %v2747, %v2749
        %v2751 = vrot.slane %v2735, %v2750
        %v2753 = vunpack.c.l.s4 1966171168
        %v2754 = vunpack.c.0.s8 %v2753
        %v2755 = vlaneseq
        %v2756 = vshrl.u32 %v2755, 7
        %v2757 = vsub.s32 %v2754, %v2756
        %v2758 = vrot.slane %v2736, %v2757
        %v2760 = vunpack.c.l.s4 1966171168
        %v2761 = vunpack.c.0.s8 %v2760
        %v2762 = vlaneseq
        %v2763 = vshrl.u32 %v2762, 7
        %v2764 = vsub.s32 %v2761, %v2763
        %v2765 = vrot.slane %v2737, %v2764
        %v2766 = vcombine.high %v2744, %v2744
        %v2767 = vcombine.high %v2751, %v2751
        %v2768 = vcombine.high %v2758, %v2758
        %v2769 = vcombine.high %v2765, %v2765
        %v2770 = vcombine.high %v2514, %v2514
        %v2772 = vunpack.c.l.s4 1966171168
        %v2773 = vunpack.c.0.s8 %v2772
        %v2774 = vlaneseq
        %v2775 = vshrl.u32 %v2774, 7
        %v2776 = vsub.s32 %v2773, %v2775
        %v2777 = vrot.slane %v2514, %v2776
        %v2779 = vunpack.c.l.s4 1966171168
        %v2780 = vunpack.c.0.s8 %v2779
        %v2781 = vlaneseq
        %v2782 = vshrl.u32 %v2781, 7
        %v2783 = vsub.s32 %v2780, %v2782
        %v2784 = vrot.slane %v2770, %v2783
        %v2785 = vcombine.high %v2777, %v2777
        %v2786 = vcombine.high %v2784, %v2784
        %v2788 = vunpack.c.l.s4 1966171168
        %v2789 = vunpack.c.0.s8 %v2788
        %v2790 = vlaneseq
        %v2791 = vshrl.u32 %v2790, 7
        %v2792 = vsub.s32 %v2789, %v2791
        %v2793 = vrot.slane %v2777, %v2792
        %v2795 = vunpack.c.l.s4 1966171168
        %v2796 = vunpack.c.0.s8 %v2795
        %v2797 = vlaneseq
        %v2798 = vshrl.u32 %v2797, 7
        %v2799 = vsub.s32 %v2796, %v2798
        %v2800 = vrot.slane %v2784, %v2799
        %v2802 = vunpack.c.l.s4 1966171168
        %v2803 = vunpack.c.0.s8 %v2802
        %v2804 = vlaneseq
        %v2805 = vshrl.u32 %v2804, 7
        %v2806 = vsub.s32 %v2803, %v2805
        %v2807 = vrot.slane %v2785, %v2806
        %v2809 = vunpack.c.l.s4 1966171168
        %v2810 = vunpack.c.0.s8 %v2809
        %v2811 = vlaneseq
        %v2812 = vshrl.u32 %v2811, 7
        %v2813 = vsub.s32 %v2810, %v2812
        %v2814 = vrot.slane %v2786, %v2813
        %v2815 = vcombine.high %v2793, %v2793
        %v2816 = vcombine.high %v2800, %v2800
        %v2817 = vcombine.high %v2807, %v2807
        %v2818 = vcombine.high %v2814, %v2814
        %v2819 = vcombine.high %v2515, %v2515
        %v2821 = vunpack.c.l.s4 1966171168
        %v2822 = vunpack.c.0.s8 %v2821
        %v2823 = vlaneseq
        %v2824 = vshrl.u32 %v2823, 7
        %v2825 = vsub.s32 %v2822, %v2824
        %v2826 = vrot.slane %v2515, %v2825
        %v2828 = vunpack.c.l.s4 1966171168
        %v2829 = vunpack.c.0.s8 %v2828
        %v2830 = vlaneseq
        %v2831 = vshrl.u32 %v2830, 7
        %v2832 = vsub.s32 %v2829, %v2831
        %v2833 = vrot.slane %v2819, %v2832
        %v2834 = vcombine.high %v2826, %v2826
        %v2835 = vcombine.high %v2833, %v2833
        %v2837 = vunpack.c.l.s4 1966171168
        %v2838 = vunpack.c.0.s8 %v2837
        %v2839 = vlaneseq
        %v2840 = vshrl.u32 %v2839, 7
        %v2841 = vsub.s32 %v2838, %v2840
        %v2842 = vrot.slane %v2826, %v2841
        %v2844 = vunpack.c.l.s4 1966171168
        %v2845 = vunpack.c.0.s8 %v2844
        %v2846 = vlaneseq
        %v2847 = vshrl.u32 %v2846, 7
        %v2848 = vsub.s32 %v2845, %v2847
        %v2849 = vrot.slane %v2833, %v2848
        %v2851 = vunpack.c.l.s4 1966171168
        %v2852 = vunpack.c.0.s8 %v2851
        %v2853 = vlaneseq
        %v2854 = vshrl.u32 %v2853, 7
        %v2855 = vsub.s32 %v2852, %v2854
        %v2856 = vrot.slane %v2834, %v2855
        %v2858 = vunpack.c.l.s4 1966171168
        %v2859 = vunpack.c.0.s8 %v2858
        %v2860 = vlaneseq
        %v2861 = vshrl.u32 %v2860, 7
        %v2862 = vsub.s32 %v2859, %v2861
        %v2863 = vrot.slane %v2835, %v2862
        %v2864 = vcombine.high %v2842, %v2842
        %v2865 = vcombine.high %v2849, %v2849
        %v2866 = vcombine.high %v2856, %v2856
        %v2867 = vcombine.high %v2863, %v2863
        %v2868 = vcombine.high %v2516, %v2516
        %v2870 = vunpack.c.l.s4 1966171168
        %v2871 = vunpack.c.0.s8 %v2870
        %v2872 = vlaneseq
        %v2873 = vshrl.u32 %v2872, 7
        %v2874 = vsub.s32 %v2871, %v2873
        %v2875 = vrot.slane %v2516, %v2874
        %v2877 = vunpack.c.l.s4 1966171168
        %v2878 = vunpack.c.0.s8 %v2877
        %v2879 = vlaneseq
        %v2880 = vshrl.u32 %v2879, 7
        %v2881 = vsub.s32 %v2878, %v2880
        %v2882 = vrot.slane %v2868, %v2881
        %v2883 = vcombine.high %v2875, %v2875
        %v2884 = vcombine.high %v2882, %v2882
        %v2886 = vunpack.c.l.s4 1966171168
        %v2887 = vunpack.c.0.s8 %v2886
        %v2888 = vlaneseq
        %v2889 = vshrl.u32 %v2888, 7
        %v2890 = vsub.s32 %v2887, %v2889
        %v2891 = vrot.slane %v2875, %v2890
        %v2893 = vunpack.c.l.s4 1966171168
        %v2894 = vunpack.c.0.s8 %v2893
        %v2895 = vlaneseq
        %v2896 = vshrl.u32 %v2895, 7
        %v2897 = vsub.s32 %v2894, %v2896
        %v2898 = vrot.slane %v2882, %v2897
        %v2900 = vunpack.c.l.s4 1966171168
        %v2901 = vunpack.c.0.s8 %v2900
        %v2902 = vlaneseq
        %v2903 = vshrl.u32 %v2902, 7
        %v2904 = vsub.s32 %v2901, %v2903
        %v2905 = vrot.slane %v2883, %v2904
        %v2907 = vunpack.c.l.s4 1966171168
        %v2908 = vunpack.c.0.s8 %v2907
        %v2909 = vlaneseq
        %v2910 = vshrl.u32 %v2909, 7
        %v2911 = vsub.s32 %v2908, %v2910
        %v2912 = vrot.slane %v2884, %v2911
        %v2913 = vcombine.high %v2891, %v2891
        %v2914 = vcombine.high %v2898, %v2898
        %v2915 = vcombine.high %v2905, %v2905
        %v2916 = vcombine.high %v2912, %v2912
        %v2917 = vcombine.high %v2517, %v2517
        %v2919 = vunpack.c.l.s4 1966171168
        %v2920 = vunpack.c.0.s8 %v2919
        %v2921 = vlaneseq
        %v2922 = vshrl.u32 %v2921, 7
        %v2923 = vsub.s32 %v2920, %v2922
        %v2924 = vrot.slane %v2517, %v2923
        %v2926 = vunpack.c.l.s4 1966171168
        %v2927 = vunpack.c.0.s8 %v2926
        %v2928 = vlaneseq
        %v2929 = vshrl.u32 %v2928, 7
        %v2930 = vsub.s32 %v2927, %v2929
        %v2931 = vrot.slane %v2917, %v2930
        %v2932 = vcombine.high %v2924, %v2924
        %v2933 = vcombine.high %v2931, %v2931
        %v2935 = vunpack.c.l.s4 1966171168
        %v2936 = vunpack.c.0.s8 %v2935
        %v2937 = vlaneseq
        %v2938 = vshrl.u32 %v2937, 7
        %v2939 = vsub.s32 %v2936, %v2938
        %v2940 = vrot.slane %v2924, %v2939
        %v2942 = vunpack.c.l.s4 1966171168
        %v2943 = vunpack.c.0.s8 %v2942
        %v2944 = vlaneseq
        %v2945 = vshrl.u32 %v2944, 7
        %v2946 = vsub.s32 %v2943, %v2945
        %v2947 = vrot.slane %v2931, %v2946
        %v2949 = vunpack.c.l.s4 1966171168
        %v2950 = vunpack.c.0.s8 %v2949
        %v2951 = vlaneseq
        %v2952 = vshrl.u32 %v2951, 7
        %v2953 = vsub.s32 %v2950, %v2952
        %v2954 = vrot.slane %v2932, %v2953
        %v2956 = vunpack.c.l.s4 1966171168
        %v2957 = vunpack.c.0.s8 %v2956
        %v2958 = vlaneseq
        %v2959 = vshrl.u32 %v2958, 7
        %v2960 = vsub.s32 %v2957, %v2959
        %v2961 = vrot.slane %v2933, %v2960
        %v2962 = vcombine.high %v2940, %v2940
        %v2963 = vcombine.high %v2947, %v2947
        %v2964 = vcombine.high %v2954, %v2954
        %v2965 = vcombine.high %v2961, %v2961
        %v2966 = vcombine.high %v2518, %v2518
        %v2968 = vunpack.c.l.s4 1966171168
        %v2969 = vunpack.c.0.s8 %v2968
        %v2970 = vlaneseq
        %v2971 = vshrl.u32 %v2970, 7
        %v2972 = vsub.s32 %v2969, %v2971
        %v2973 = vrot.slane %v2518, %v2972
        %v2975 = vunpack.c.l.s4 1966171168
        %v2976 = vunpack.c.0.s8 %v2975
        %v2977 = vlaneseq
        %v2978 = vshrl.u32 %v2977, 7
        %v2979 = vsub.s32 %v2976, %v2978
        %v2980 = vrot.slane %v2966, %v2979
        %v2981 = vcombine.high %v2973, %v2973
        %v2982 = vcombine.high %v2980, %v2980
        %v2984 = vunpack.c.l.s4 1966171168
        %v2985 = vunpack.c.0.s8 %v2984
        %v2986 = vlaneseq
        %v2987 = vshrl.u32 %v2986, 7
        %v2988 = vsub.s32 %v2985, %v2987
        %v2989 = vrot.slane %v2973, %v2988
        %v2991 = vunpack.c.l.s4 1966171168
        %v2992 = vunpack.c.0.s8 %v2991
        %v2993 = vlaneseq
        %v2994 = vshrl.u32 %v2993, 7
        %v2995 = vsub.s32 %v2992, %v2994
        %v2996 = vrot.slane %v2980, %v2995
        %v2998 = vunpack.c.l.s4 1966171168
        %v2999 = vunpack.c.0.s8 %v2998
        %v3000 = vlaneseq
        %v3001 = vshrl.u32 %v3000, 7
        %v3002 = vsub.s32 %v2999, %v3001
        %v3003 = vrot.slane %v2981, %v3002
        %v3005 = vunpack.c.l.s4 1966171168
        %v3006 = vunpack.c.0.s8 %v3005
        %v3007 = vlaneseq
        %v3008 = vshrl.u32 %v3007, 7
        %v3009 = vsub.s32 %v3006, %v3008
        %v3010 = vrot.slane %v2982, %v3009
        %v3011 = vcombine.high %v2989, %v2989
        %v3012 = vcombine.high %v2996, %v2996
        %v3013 = vcombine.high %v3003, %v3003
        %v3014 = vcombine.high %v3010, %v3010
        %v3015 = vcombine.high %v2519, %v2519
        %v3017 = vunpack.c.l.s4 1966171168
        %v3018 = vunpack.c.0.s8 %v3017
        %v3019 = vlaneseq
        %v3020 = vshrl.u32 %v3019, 7
        %v3021 = vsub.s32 %v3018, %v3020
        %v3022 = vrot.slane %v2519, %v3021
        %v3024 = vunpack.c.l.s4 1966171168
        %v3025 = vunpack.c.0.s8 %v3024
        %v3026 = vlaneseq
        %v3027 = vshrl.u32 %v3026, 7
        %v3028 = vsub.s32 %v3025, %v3027
        %v3029 = vrot.slane %v3015, %v3028
        %v3030 = vcombine.high %v3022, %v3022
        %v3031 = vcombine.high %v3029, %v3029
        %v3033 = vunpack.c.l.s4 1966171168
        %v3034 = vunpack.c.0.s8 %v3033
        %v3035 = vlaneseq
        %v3036 = vshrl.u32 %v3035, 7
        %v3037 = vsub.s32 %v3034, %v3036
        %v3038 = vrot.slane %v3022, %v3037
        %v3040 = vunpack.c.l.s4 1966171168
        %v3041 = vunpack.c.0.s8 %v3040
        %v3042 = vlaneseq
        %v3043 = vshrl.u32 %v3042, 7
        %v3044 = vsub.s32 %v3041, %v3043
        %v3045 = vrot.slane %v3029, %v3044
        %v3047 = vunpack.c.l.s4 1966171168
        %v3048 = vunpack.c.0.s8 %v3047
        %v3049 = vlaneseq
        %v3050 = vshrl.u32 %v3049, 7
        %v3051 = vsub.s32 %v3048, %v3050
        %v3052 = vrot.slane %v3030, %v3051
        %v3054 = vunpack.c.l.s4 1966171168
        %v3055 = vunpack.c.0.s8 %v3054
        %v3056 = vlaneseq
        %v3057 = vshrl.u32 %v3056, 7
        %v3058 = vsub.s32 %v3055, %v3057
        %v3059 = vrot.slane %v3031, %v3058
        %v3060 = vcombine.high %v3038, %v3038
        %v3061 = vcombine.high %v3045, %v3045
        %v3062 = vcombine.high %v3052, %v3052
        %v3063 = vcombine.high %v3059, %v3059
        %v3064 = vcombine.high %v2520, %v2520
        %v3066 = vunpack.c.l.s4 1966171168
        %v3067 = vunpack.c.0.s8 %v3066
        %v3068 = vlaneseq
        %v3069 = vshrl.u32 %v3068, 7
        %v3070 = vsub.s32 %v3067, %v3069
        %v3071 = vrot.slane %v2520, %v3070
        %v3073 = vunpack.c.l.s4 1966171168
        %v3074 = vunpack.c.0.s8 %v3073
        %v3075 = vlaneseq
        %v3076 = vshrl.u32 %v3075, 7
        %v3077 = vsub.s32 %v3074, %v3076
        %v3078 = vrot.slane %v3064, %v3077
        %v3079 = vcombine.high %v3071, %v3071
        %v3080 = vcombine.high %v3078, %v3078
        %v3082 = vunpack.c.l.s4 1966171168
        %v3083 = vunpack.c.0.s8 %v3082
        %v3084 = vlaneseq
        %v3085 = vshrl.u32 %v3084, 7
        %v3086 = vsub.s32 %v3083, %v3085
        %v3087 = vrot.slane %v3071, %v3086
        %v3089 = vunpack.c.l.s4 1966171168
        %v3090 = vunpack.c.0.s8 %v3089
        %v3091 = vlaneseq
        %v3092 = vshrl.u32 %v3091, 7
        %v3093 = vsub.s32 %v3090, %v3092
        %v3094 = vrot.slane %v3078, %v3093
        %v3096 = vunpack.c.l.s4 1966171168
        %v3097 = vunpack.c.0.s8 %v3096
        %v3098 = vlaneseq
        %v3099 = vshrl.u32 %v3098, 7
        %v3100 = vsub.s32 %v3097, %v3099
        %v3101 = vrot.slane %v3079, %v3100
        %v3103 = vunpack.c.l.s4 1966171168
        %v3104 = vunpack.c.0.s8 %v3103
        %v3105 = vlaneseq
        %v3106 = vshrl.u32 %v3105, 7
        %v3107 = vsub.s32 %v3104, %v3106
        %v3108 = vrot.slane %v3080, %v3107
        %v3109 = vcombine.high %v3087, %v3087
        %v3110 = vcombine.high %v3094, %v3094
        %v3111 = vcombine.high %v3101, %v3101
        %v3112 = vcombine.high %v3108, %v3108
        %v3113 = vcombine.high %v2521, %v2521
        %v3115 = vunpack.c.l.s4 1966171168
        %v3116 = vunpack.c.0.s8 %v3115
        %v3117 = vlaneseq
        %v3118 = vshrl.u32 %v3117, 7
        %v3119 = vsub.s32 %v3116, %v3118
        %v3120 = vrot.slane %v2521, %v3119
        %v3122 = vunpack.c.l.s4 1966171168
        %v3123 = vunpack.c.0.s8 %v3122
        %v3124 = vlaneseq
        %v3125 = vshrl.u32 %v3124, 7
        %v3126 = vsub.s32 %v3123, %v3125
        %v3127 = vrot.slane %v3113, %v3126
        %v3128 = vcombine.high %v3120, %v3120
        %v3129 = vcombine.high %v3127, %v3127
        %v3131 = vunpack.c.l.s4 1966171168
        %v3132 = vunpack.c.0.s8 %v3131
        %v3133 = vlaneseq
        %v3134 = vshrl.u32 %v3133, 7
        %v3135 = vsub.s32 %v3132, %v3134
        %v3136 = vrot.slane %v3120, %v3135
        %v3138 = vunpack.c.l.s4 1966171168
        %v3139 = vunpack.c.0.s8 %v3138
        %v3140 = vlaneseq
        %v3141 = vshrl.u32 %v3140, 7
        %v3142 = vsub.s32 %v3139, %v3141
        %v3143 = vrot.slane %v3127, %v3142
        %v3145 = vunpack.c.l.s4 1966171168
        %v3146 = vunpack.c.0.s8 %v3145
        %v3147 = vlaneseq
        %v3148 = vshrl.u32 %v3147, 7
        %v3149 = vsub.s32 %v3146, %v3148
        %v3150 = vrot.slane %v3128, %v3149
        %v3152 = vunpack.c.l.s4 1966171168
        %v3153 = vunpack.c.0.s8 %v3152
        %v3154 = vlaneseq
        %v3155 = vshrl.u32 %v3154, 7
        %v3156 = vsub.s32 %v3153, %v3155
        %v3157 = vrot.slane %v3129, %v3156
        %v3158 = vcombine.high %v3136, %v3136
        %v3159 = vcombine.high %v3143, %v3143
        %v3160 = vcombine.high %v3150, %v3150
        %v3161 = vcombine.high %v3157, %v3157
        %v3162 = vcombine.high %v2522, %v2522
        %v3164 = vunpack.c.l.s4 1966171168
        %v3165 = vunpack.c.0.s8 %v3164
        %v3166 = vlaneseq
        %v3167 = vshrl.u32 %v3166, 7
        %v3168 = vsub.s32 %v3165, %v3167
        %v3169 = vrot.slane %v2522, %v3168
        %v3171 = vunpack.c.l.s4 1966171168
        %v3172 = vunpack.c.0.s8 %v3171
        %v3173 = vlaneseq
        %v3174 = vshrl.u32 %v3173, 7
        %v3175 = vsub.s32 %v3172, %v3174
        %v3176 = vrot.slane %v3162, %v3175
        %v3177 = vcombine.high %v3169, %v3169
        %v3178 = vcombine.high %v3176, %v3176
        %v3180 = vunpack.c.l.s4 1966171168
        %v3181 = vunpack.c.0.s8 %v3180
        %v3182 = vlaneseq
        %v3183 = vshrl.u32 %v3182, 7
        %v3184 = vsub.s32 %v3181, %v3183
        %v3185 = vrot.slane %v3169, %v3184
        %v3187 = vunpack.c.l.s4 1966171168
        %v3188 = vunpack.c.0.s8 %v3187
        %v3189 = vlaneseq
        %v3190 = vshrl.u32 %v3189, 7
        %v3191 = vsub.s32 %v3188, %v3190
        %v3192 = vrot.slane %v3176, %v3191
        %v3194 = vunpack.c.l.s4 1966171168
        %v3195 = vunpack.c.0.s8 %v3194
        %v3196 = vlaneseq
        %v3197 = vshrl.u32 %v3196, 7
        %v3198 = vsub.s32 %v3195, %v3197
        %v3199 = vrot.slane %v3177, %v3198
        %v3201 = vunpack.c.l.s4 1966171168
        %v3202 = vunpack.c.0.s8 %v3201
        %v3203 = vlaneseq
        %v3204 = vshrl.u32 %v3203, 7
        %v3205 = vsub.s32 %v3202, %v3204
        %v3206 = vrot.slane %v3178, %v3205
        %v3207 = vcombine.high %v3185, %v3185
        %v3208 = vcombine.high %v3192, %v3192
        %v3209 = vcombine.high %v3199, %v3199
        %v3210 = vcombine.high %v3206, %v3206
        %v3211 = vcombine.high %v2523, %v2523
        %v3213 = vunpack.c.l.s4 1966171168
        %v3214 = vunpack.c.0.s8 %v3213
        %v3215 = vlaneseq
        %v3216 = vshrl.u32 %v3215, 7
        %v3217 = vsub.s32 %v3214, %v3216
        %v3218 = vrot.slane %v2523, %v3217
        %v3220 = vunpack.c.l.s4 1966171168
        %v3221 = vunpack.c.0.s8 %v3220
        %v3222 = vlaneseq
        %v3223 = vshrl.u32 %v3222, 7
        %v3224 = vsub.s32 %v3221, %v3223
        %v3225 = vrot.slane %v3211, %v3224
        %v3226 = vcombine.high %v3218, %v3218
        %v3227 = vcombine.high %v3225, %v3225
        %v3229 = vunpack.c.l.s4 1966171168
        %v3230 = vunpack.c.0.s8 %v3229
        %v3231 = vlaneseq
        %v3232 = vshrl.u32 %v3231, 7
        %v3233 = vsub.s32 %v3230, %v3232
        %v3234 = vrot.slane %v3218, %v3233
        %v3236 = vunpack.c.l.s4 1966171168
        %v3237 = vunpack.c.0.s8 %v3236
        %v3238 = vlaneseq
        %v3239 = vshrl.u32 %v3238, 7
        %v3240 = vsub.s32 %v3237, %v3239
        %v3241 = vrot.slane %v3225, %v3240
        %v3243 = vunpack.c.l.s4 1966171168
        %v3244 = vunpack.c.0.s8 %v3243
        %v3245 = vlaneseq
        %v3246 = vshrl.u32 %v3245, 7
        %v3247 = vsub.s32 %v3244, %v3246
        %v3248 = vrot.slane %v3226, %v3247
        %v3250 = vunpack.c.l.s4 1966171168
        %v3251 = vunpack.c.0.s8 %v3250
        %v3252 = vlaneseq
        %v3253 = vshrl.u32 %v3252, 7
        %v3254 = vsub.s32 %v3251, %v3253
        %v3255 = vrot.slane %v3227, %v3254
        %v3256 = vcombine.high %v3234, %v3234
        %v3257 = vcombine.high %v3241, %v3241
        %v3258 = vcombine.high %v3248, %v3248
        %v3259 = vcombine.high %v3255, %v3255
        %v3260 = vcombine.high %v2524, %v2524
        %v3262 = vunpack.c.l.s4 1966171168
        %v3263 = vunpack.c.0.s8 %v3262
        %v3264 = vlaneseq
        %v3265 = vshrl.u32 %v3264, 7
        %v3266 = vsub.s32 %v3263, %v3265
        %v3267 = vrot.slane %v2524, %v3266
        %v3269 = vunpack.c.l.s4 1966171168
        %v3270 = vunpack.c.0.s8 %v3269
        %v3271 = vlaneseq
        %v3272 = vshrl.u32 %v3271, 7
        %v3273 = vsub.s32 %v3270, %v3272
        %v3274 = vrot.slane %v3260, %v3273
        %v3275 = vcombine.high %v3267, %v3267
        %v3276 = vcombine.high %v3274, %v3274
        %v3278 = vunpack.c.l.s4 1966171168
        %v3279 = vunpack.c.0.s8 %v3278
        %v3280 = vlaneseq
        %v3281 = vshrl.u32 %v3280, 7
        %v3282 = vsub.s32 %v3279, %v3281
        %v3283 = vrot.slane %v3267, %v3282
        %v3285 = vunpack.c.l.s4 1966171168
        %v3286 = vunpack.c.0.s8 %v3285
        %v3287 = vlaneseq
        %v3288 = vshrl.u32 %v3287, 7
        %v3289 = vsub.s32 %v3286, %v3288
        %v3290 = vrot.slane %v3274, %v3289
        %v3292 = vunpack.c.l.s4 1966171168
        %v3293 = vunpack.c.0.s8 %v3292
        %v3294 = vlaneseq
        %v3295 = vshrl.u32 %v3294, 7
        %v3296 = vsub.s32 %v3293, %v3295
        %v3297 = vrot.slane %v3275, %v3296
        %v3299 = vunpack.c.l.s4 1966171168
        %v3300 = vunpack.c.0.s8 %v3299
        %v3301 = vlaneseq
        %v3302 = vshrl.u32 %v3301, 7
        %v3303 = vsub.s32 %v3300, %v3302
        %v3304 = vrot.slane %v3276, %v3303
        %v3305 = vcombine.high %v3283, %v3283
        %v3306 = vcombine.high %v3290, %v3290
        %v3307 = vcombine.high %v3297, %v3297
        %v3308 = vcombine.high %v3304, %v3304
        %v3309 = vcombine.high %v2525, %v2525
        %v3311 = vunpack.c.l.s4 1966171168
        %v3312 = vunpack.c.0.s8 %v3311
        %v3313 = vlaneseq
        %v3314 = vshrl.u32 %v3313, 7
        %v3315 = vsub.s32 %v3312, %v3314
        %v3316 = vrot.slane %v2525, %v3315
        %v3318 = vunpack.c.l.s4 1966171168
        %v3319 = vunpack.c.0.s8 %v3318
        %v3320 = vlaneseq
        %v3321 = vshrl.u32 %v3320, 7
        %v3322 = vsub.s32 %v3319, %v3321
        %v3323 = vrot.slane %v3309, %v3322
        %v3324 = vcombine.high %v3316, %v3316
        %v3325 = vcombine.high %v3323, %v3323
        %v3327 = vunpack.c.l.s4 1966171168
        %v3328 = vunpack.c.0.s8 %v3327
        %v3329 = vlaneseq
        %v3330 = vshrl.u32 %v3329, 7
        %v3331 = vsub.s32 %v3328, %v3330
        %v3332 = vrot.slane %v3316, %v3331
        %v3334 = vunpack.c.l.s4 1966171168
        %v3335 = vunpack.c.0.s8 %v3334
        %v3336 = vlaneseq
        %v3337 = vshrl.u32 %v3336, 7
        %v3338 = vsub.s32 %v3335, %v3337
        %v3339 = vrot.slane %v3323, %v3338
        %v3341 = vunpack.c.l.s4 1966171168
        %v3342 = vunpack.c.0.s8 %v3341
        %v3343 = vlaneseq
        %v3344 = vshrl.u32 %v3343, 7
        %v3345 = vsub.s32 %v3342, %v3344
        %v3346 = vrot.slane %v3324, %v3345
        %v3348 = vunpack.c.l.s4 1966171168
        %v3349 = vunpack.c.0.s8 %v3348
        %v3350 = vlaneseq
        %v3351 = vshrl.u32 %v3350, 7
        %v3352 = vsub.s32 %v3349, %v3351
        %v3353 = vrot.slane %v3325, %v3352
        %v3354 = vcombine.high %v3332, %v3332
        %v3355 = vcombine.high %v3339, %v3339
        %v3356 = vcombine.high %v3346, %v3346
        %v3357 = vcombine.high %v3353, %v3353
        %v3358 = vcombine.high %v2526, %v2526
        %v3360 = vunpack.c.l.s4 1966171168
        %v3361 = vunpack.c.0.s8 %v3360
        %v3362 = vlaneseq
        %v3363 = vshrl.u32 %v3362, 7
        %v3364 = vsub.s32 %v3361, %v3363
        %v3365 = vrot.slane %v2526, %v3364
        %v3367 = vunpack.c.l.s4 1966171168
        %v3368 = vunpack.c.0.s8 %v3367
        %v3369 = vlaneseq
        %v3370 = vshrl.u32 %v3369, 7
        %v3371 = vsub.s32 %v3368, %v3370
        %v3372 = vrot.slane %v3358, %v3371
        %v3373 = vcombine.high %v3365, %v3365
        %v3374 = vcombine.high %v3372, %v3372
        %v3376 = vunpack.c.l.s4 1966171168
        %v3377 = vunpack.c.0.s8 %v3376
        %v3378 = vlaneseq
        %v3379 = vshrl.u32 %v3378, 7
        %v3380 = vsub.s32 %v3377, %v3379
        %v3381 = vrot.slane %v3365, %v3380
        %v3383 = vunpack.c.l.s4 1966171168
        %v3384 = vunpack.c.0.s8 %v3383
        %v3385 = vlaneseq
        %v3386 = vshrl.u32 %v3385, 7
        %v3387 = vsub.s32 %v3384, %v3386
        %v3388 = vrot.slane %v3372, %v3387
        %v3390 = vunpack.c.l.s4 1966171168
        %v3391 = vunpack.c.0.s8 %v3390
        %v3392 = vlaneseq
        %v3393 = vshrl.u32 %v3392, 7
        %v3394 = vsub.s32 %v3391, %v3393
        %v3395 = vrot.slane %v3373, %v3394
        %v3397 = vunpack.c.l.s4 1966171168
        %v3398 = vunpack.c.0.s8 %v3397
        %v3399 = vlaneseq
        %v3400 = vshrl.u32 %v3399, 7
        %v3401 = vsub.s32 %v3398, %v3400
        %v3402 = vrot.slane %v3374, %v3401
        %v3403 = vcombine.high %v3381, %v3381
        %v3404 = vcombine.high %v3388, %v3388
        %v3405 = vcombine.high %v3395, %v3395
        %v3406 = vcombine.high %v3402, %v3402
        %v3407 = vcombine.high %v2527, %v2527
        %v3409 = vunpack.c.l.s4 1966171168
        %v3410 = vunpack.c.0.s8 %v3409
        %v3411 = vlaneseq
        %v3412 = vshrl.u32 %v3411, 7
        %v3413 = vsub.s32 %v3410, %v3412
        %v3414 = vrot.slane %v2527, %v3413
        %v3416 = vunpack.c.l.s4 1966171168
        %v3417 = vunpack.c.0.s8 %v3416
        %v3418 = vlaneseq
        %v3419 = vshrl.u32 %v3418, 7
        %v3420 = vsub.s32 %v3417, %v3419
        %v3421 = vrot.slane %v3407, %v3420
        %v3422 = vcombine.high %v3414, %v3414
        %v3423 = vcombine.high %v3421, %v3421
        %v3425 = vunpack.c.l.s4 1966171168
        %v3426 = vunpack.c.0.s8 %v3425
        %v3427 = vlaneseq
        %v3428 = vshrl.u32 %v3427, 7
        %v3429 = vsub.s32 %v3426, %v3428
        %v3430 = vrot.slane %v3414, %v3429
        %v3432 = vunpack.c.l.s4 1966171168
        %v3433 = vunpack.c.0.s8 %v3432
        %v3434 = vlaneseq
        %v3435 = vshrl.u32 %v3434, 7
        %v3436 = vsub.s32 %v3433, %v3435
        %v3437 = vrot.slane %v3421, %v3436
        %v3439 = vunpack.c.l.s4 1966171168
        %v3440 = vunpack.c.0.s8 %v3439
        %v3441 = vlaneseq
        %v3442 = vshrl.u32 %v3441, 7
        %v3443 = vsub.s32 %v3440, %v3442
        %v3444 = vrot.slane %v3422, %v3443
        %v3446 = vunpack.c.l.s4 1966171168
        %v3447 = vunpack.c.0.s8 %v3446
        %v3448 = vlaneseq
        %v3449 = vshrl.u32 %v3448, 7
        %v3450 = vsub.s32 %v3447, %v3449
        %v3451 = vrot.slane %v3423, %v3450
        %v3452 = vcombine.high %v3430, %v3430
        %v3453 = vcombine.high %v3437, %v3437
        %v3454 = vcombine.high %v3444, %v3444
        %v3455 = vcombine.high %v3451, %v3451
        %v3456 = vcombine.high %v2528, %v2528
        %v3458 = vunpack.c.l.s4 1966171168
        %v3459 = vunpack.c.0.s8 %v3458
        %v3460 = vlaneseq
        %v3461 = vshrl.u32 %v3460, 7
        %v3462 = vsub.s32 %v3459, %v3461
        %v3463 = vrot.slane %v2528, %v3462
        %v3465 = vunpack.c.l.s4 1966171168
        %v3466 = vunpack.c.0.s8 %v3465
        %v3467 = vlaneseq
        %v3468 = vshrl.u32 %v3467, 7
        %v3469 = vsub.s32 %v3466, %v3468
        %v3470 = vrot.slane %v3456, %v3469
        %v3471 = vcombine.high %v3463, %v3463
        %v3472 = vcombine.high %v3470, %v3470
        %v3474 = vunpack.c.l.s4 1966171168
        %v3475 = vunpack.c.0.s8 %v3474
        %v3476 = vlaneseq
        %v3477 = vshrl.u32 %v3476, 7
        %v3478 = vsub.s32 %v3475, %v3477
        %v3479 = vrot.slane %v3463, %v3478
        %v3481 = vunpack.c.l.s4 1966171168
        %v3482 = vunpack.c.0.s8 %v3481
        %v3483 = vlaneseq
        %v3484 = vshrl.u32 %v3483, 7
        %v3485 = vsub.s32 %v3482, %v3484
        %v3486 = vrot.slane %v3470, %v3485
        %v3488 = vunpack.c.l.s4 1966171168
        %v3489 = vunpack.c.0.s8 %v3488
        %v3490 = vlaneseq
        %v3491 = vshrl.u32 %v3490, 7
        %v3492 = vsub.s32 %v3489, %v3491
        %v3493 = vrot.slane %v3471, %v3492
        %v3495 = vunpack.c.l.s4 1966171168
        %v3496 = vunpack.c.0.s8 %v3495
        %v3497 = vlaneseq
        %v3498 = vshrl.u32 %v3497, 7
        %v3499 = vsub.s32 %v3496, %v3498
        %v3500 = vrot.slane %v3472, %v3499
        %v3501 = vcombine.high %v3479, %v3479
        %v3502 = vcombine.high %v3486, %v3486
        %v3503 = vcombine.high %v3493, %v3493
        %v3504 = vcombine.high %v3500, %v3500
        %v3505 = vcombine.high %v2529, %v2529
        %v3507 = vunpack.c.l.s4 1966171168
        %v3508 = vunpack.c.0.s8 %v3507
        %v3509 = vlaneseq
        %v3510 = vshrl.u32 %v3509, 7
        %v3511 = vsub.s32 %v3508, %v3510
        %v3512 = vrot.slane %v2529, %v3511
        %v3514 = vunpack.c.l.s4 1966171168
        %v3515 = vunpack.c.0.s8 %v3514
        %v3516 = vlaneseq
        %v3517 = vshrl.u32 %v3516, 7
        %v3518 = vsub.s32 %v3515, %v3517
        %v3519 = vrot.slane %v3505, %v3518
        %v3520 = vcombine.high %v3512, %v3512
        %v3521 = vcombine.high %v3519, %v3519
        %v3523 = vunpack.c.l.s4 1966171168
        %v3524 = vunpack.c.0.s8 %v3523
        %v3525 = vlaneseq
        %v3526 = vshrl.u32 %v3525, 7
        %v3527 = vsub.s32 %v3524, %v3526
        %v3528 = vrot.slane %v3512, %v3527
        %v3530 = vunpack.c.l.s4 1966171168
        %v3531 = vunpack.c.0.s8 %v3530
        %v3532 = vlaneseq
        %v3533 = vshrl.u32 %v3532, 7
        %v3534 = vsub.s32 %v3531, %v3533
        %v3535 = vrot.slane %v3519, %v3534
        %v3537 = vunpack.c.l.s4 1966171168
        %v3538 = vunpack.c.0.s8 %v3537
        %v3539 = vlaneseq
        %v3540 = vshrl.u32 %v3539, 7
        %v3541 = vsub.s32 %v3538, %v3540
        %v3542 = vrot.slane %v3520, %v3541
        %v3544 = vunpack.c.l.s4 1966171168
        %v3545 = vunpack.c.0.s8 %v3544
        %v3546 = vlaneseq
        %v3547 = vshrl.u32 %v3546, 7
        %v3548 = vsub.s32 %v3545, %v3547
        %v3549 = vrot.slane %v3521, %v3548
        %v3550 = vcombine.high %v3528, %v3528
        %v3551 = vcombine.high %v3535, %v3535
        %v3552 = vcombine.high %v3542, %v3542
        %v3553 = vcombine.high %v3549, %v3549
        %v3554 = vcombine.high %v2530, %v2530
        %v3556 = vunpack.c.l.s4 1966171168
        %v3557 = vunpack.c.0.s8 %v3556
        %v3558 = vlaneseq
        %v3559 = vshrl.u32 %v3558, 7
        %v3560 = vsub.s32 %v3557, %v3559
        %v3561 = vrot.slane %v2530, %v3560
        %v3563 = vunpack.c.l.s4 1966171168
        %v3564 = vunpack.c.0.s8 %v3563
        %v3565 = vlaneseq
        %v3566 = vshrl.u32 %v3565, 7
        %v3567 = vsub.s32 %v3564, %v3566
        %v3568 = vrot.slane %v3554, %v3567
        %v3569 = vcombine.high %v3561, %v3561
        %v3570 = vcombine.high %v3568, %v3568
        %v3572 = vunpack.c.l.s4 1966171168
        %v3573 = vunpack.c.0.s8 %v3572
        %v3574 = vlaneseq
        %v3575 = vshrl.u32 %v3574, 7
        %v3576 = vsub.s32 %v3573, %v3575
        %v3577 = vrot.slane %v3561, %v3576
        %v3579 = vunpack.c.l.s4 1966171168
        %v3580 = vunpack.c.0.s8 %v3579
        %v3581 = vlaneseq
        %v3582 = vshrl.u32 %v3581, 7
        %v3583 = vsub.s32 %v3580, %v3582
        %v3584 = vrot.slane %v3568, %v3583
        %v3586 = vunpack.c.l.s4 1966171168
        %v3587 = vunpack.c.0.s8 %v3586
        %v3588 = vlaneseq
        %v3589 = vshrl.u32 %v3588, 7
        %v3590 = vsub.s32 %v3587, %v3589
        %v3591 = vrot.slane %v3569, %v3590
        %v3593 = vunpack.c.l.s4 1966171168
        %v3594 = vunpack.c.0.s8 %v3593
        %v3595 = vlaneseq
        %v3596 = vshrl.u32 %v3595, 7
        %v3597 = vsub.s32 %v3594, %v3596
        %v3598 = vrot.slane %v3570, %v3597
        %v3599 = vcombine.high %v3577, %v3577
        %v3600 = vcombine.high %v3584, %v3584
        %v3601 = vcombine.high %v3591, %v3591
        %v3602 = vcombine.high %v3598, %v3598
        %v3603 = vcombine.high %v2531, %v2531
        %v3605 = vunpack.c.l.s4 1966171168
        %v3606 = vunpack.c.0.s8 %v3605
        %v3607 = vlaneseq
        %v3608 = vshrl.u32 %v3607, 7
        %v3609 = vsub.s32 %v3606, %v3608
        %v3610 = vrot.slane %v2531, %v3609
        %v3612 = vunpack.c.l.s4 1966171168
        %v3613 = vunpack.c.0.s8 %v3612
        %v3614 = vlaneseq
        %v3615 = vshrl.u32 %v3614, 7
        %v3616 = vsub.s32 %v3613, %v3615
        %v3617 = vrot.slane %v3603, %v3616
        %v3618 = vcombine.high %v3610, %v3610
        %v3619 = vcombine.high %v3617, %v3617
        %v3621 = vunpack.c.l.s4 1966171168
        %v3622 = vunpack.c.0.s8 %v3621
        %v3623 = vlaneseq
        %v3624 = vshrl.u32 %v3623, 7
        %v3625 = vsub.s32 %v3622, %v3624
        %v3626 = vrot.slane %v3610, %v3625
        %v3628 = vunpack.c.l.s4 1966171168
        %v3629 = vunpack.c.0.s8 %v3628
        %v3630 = vlaneseq
        %v3631 = vshrl.u32 %v3630, 7
        %v3632 = vsub.s32 %v3629, %v3631
        %v3633 = vrot.slane %v3617, %v3632
        %v3635 = vunpack.c.l.s4 1966171168
        %v3636 = vunpack.c.0.s8 %v3635
        %v3637 = vlaneseq
        %v3638 = vshrl.u32 %v3637, 7
        %v3639 = vsub.s32 %v3636, %v3638
        %v3640 = vrot.slane %v3618, %v3639
        %v3642 = vunpack.c.l.s4 1966171168
        %v3643 = vunpack.c.0.s8 %v3642
        %v3644 = vlaneseq
        %v3645 = vshrl.u32 %v3644, 7
        %v3646 = vsub.s32 %v3643, %v3645
        %v3647 = vrot.slane %v3619, %v3646
        %v3648 = vcombine.high %v3626, %v3626
        %v3649 = vcombine.high %v3633, %v3633
        %v3650 = vcombine.high %v3640, %v3640
        %v3651 = vcombine.high %v3647, %v3647
        %v3652 = vcombine.high %v2532, %v2532
        %v3654 = vunpack.c.l.s4 1966171168
        %v3655 = vunpack.c.0.s8 %v3654
        %v3656 = vlaneseq
        %v3657 = vshrl.u32 %v3656, 7
        %v3658 = vsub.s32 %v3655, %v3657
        %v3659 = vrot.slane %v2532, %v3658
        %v3661 = vunpack.c.l.s4 1966171168
        %v3662 = vunpack.c.0.s8 %v3661
        %v3663 = vlaneseq
        %v3664 = vshrl.u32 %v3663, 7
        %v3665 = vsub.s32 %v3662, %v3664
        %v3666 = vrot.slane %v3652, %v3665
        %v3667 = vcombine.high %v3659, %v3659
        %v3668 = vcombine.high %v3666, %v3666
        %v3670 = vunpack.c.l.s4 1966171168
        %v3671 = vunpack.c.0.s8 %v3670
        %v3672 = vlaneseq
        %v3673 = vshrl.u32 %v3672, 7
        %v3674 = vsub.s32 %v3671, %v3673
        %v3675 = vrot.slane %v3659, %v3674
        %v3677 = vunpack.c.l.s4 1966171168
        %v3678 = vunpack.c.0.s8 %v3677
        %v3679 = vlaneseq
        %v3680 = vshrl.u32 %v3679, 7
        %v3681 = vsub.s32 %v3678, %v3680
        %v3682 = vrot.slane %v3666, %v3681
        %v3684 = vunpack.c.l.s4 1966171168
        %v3685 = vunpack.c.0.s8 %v3684
        %v3686 = vlaneseq
        %v3687 = vshrl.u32 %v3686, 7
        %v3688 = vsub.s32 %v3685, %v3687
        %v3689 = vrot.slane %v3667, %v3688
        %v3691 = vunpack.c.l.s4 1966171168
        %v3692 = vunpack.c.0.s8 %v3691
        %v3693 = vlaneseq
        %v3694 = vshrl.u32 %v3693, 7
        %v3695 = vsub.s32 %v3692, %v3694
        %v3696 = vrot.slane %v3668, %v3695
        %v3697 = vcombine.high %v3675, %v3675
        %v3698 = vcombine.high %v3682, %v3682
        %v3699 = vcombine.high %v3689, %v3689
        %v3700 = vcombine.high %v3696, %v3696
        %v3701 = vcombine.high %v2533, %v2533
        %v3703 = vunpack.c.l.s4 1966171168
        %v3704 = vunpack.c.0.s8 %v3703
        %v3705 = vlaneseq
        %v3706 = vshrl.u32 %v3705, 7
        %v3707 = vsub.s32 %v3704, %v3706
        %v3708 = vrot.slane %v2533, %v3707
        %v3710 = vunpack.c.l.s4 1966171168
        %v3711 = vunpack.c.0.s8 %v3710
        %v3712 = vlaneseq
        %v3713 = vshrl.u32 %v3712, 7
        %v3714 = vsub.s32 %v3711, %v3713
        %v3715 = vrot.slane %v3701, %v3714
        %v3716 = vcombine.high %v3708, %v3708
        %v3717 = vcombine.high %v3715, %v3715
        %v3719 = vunpack.c.l.s4 1966171168
        %v3720 = vunpack.c.0.s8 %v3719
        %v3721 = vlaneseq
        %v3722 = vshrl.u32 %v3721, 7
        %v3723 = vsub.s32 %v3720, %v3722
        %v3724 = vrot.slane %v3708, %v3723
        %v3726 = vunpack.c.l.s4 1966171168
        %v3727 = vunpack.c.0.s8 %v3726
        %v3728 = vlaneseq
        %v3729 = vshrl.u32 %v3728, 7
        %v3730 = vsub.s32 %v3727, %v3729
        %v3731 = vrot.slane %v3715, %v3730
        %v3733 = vunpack.c.l.s4 1966171168
        %v3734 = vunpack.c.0.s8 %v3733
        %v3735 = vlaneseq
        %v3736 = vshrl.u32 %v3735, 7
        %v3737 = vsub.s32 %v3734, %v3736
        %v3738 = vrot.slane %v3716, %v3737
        %v3740 = vunpack.c.l.s4 1966171168
        %v3741 = vunpack.c.0.s8 %v3740
        %v3742 = vlaneseq
        %v3743 = vshrl.u32 %v3742, 7
        %v3744 = vsub.s32 %v3741, %v3743
        %v3745 = vrot.slane %v3717, %v3744
        %v3746 = vcombine.high %v3724, %v3724
        %v3747 = vcombine.high %v3731, %v3731
        %v3748 = vcombine.high %v3738, %v3738
        %v3749 = vcombine.high %v3745, %v3745
        %v3750 = vcombine.high %v2534, %v2534
        %v3752 = vunpack.c.l.s4 1966171168
        %v3753 = vunpack.c.0.s8 %v3752
        %v3754 = vlaneseq
        %v3755 = vshrl.u32 %v3754, 7
        %v3756 = vsub.s32 %v3753, %v3755
        %v3757 = vrot.slane %v2534, %v3756
        %v3759 = vunpack.c.l.s4 1966171168
        %v3760 = vunpack.c.0.s8 %v3759
        %v3761 = vlaneseq
        %v3762 = vshrl.u32 %v3761, 7
        %v3763 = vsub.s32 %v3760, %v3762
        %v3764 = vrot.slane %v3750, %v3763
        %v3765 = vcombine.high %v3757, %v3757
        %v3766 = vcombine.high %v3764, %v3764
        %v3768 = vunpack.c.l.s4 1966171168
        %v3769 = vunpack.c.0.s8 %v3768
        %v3770 = vlaneseq
        %v3771 = vshrl.u32 %v3770, 7
        %v3772 = vsub.s32 %v3769, %v3771
        %v3773 = vrot.slane %v3757, %v3772
        %v3775 = vunpack.c.l.s4 1966171168
        %v3776 = vunpack.c.0.s8 %v3775
        %v3777 = vlaneseq
        %v3778 = vshrl.u32 %v3777, 7
        %v3779 = vsub.s32 %v3776, %v3778
        %v3780 = vrot.slane %v3764, %v3779
        %v3782 = vunpack.c.l.s4 1966171168
        %v3783 = vunpack.c.0.s8 %v3782
        %v3784 = vlaneseq
        %v3785 = vshrl.u32 %v3784, 7
        %v3786 = vsub.s32 %v3783, %v3785
        %v3787 = vrot.slane %v3765, %v3786
        %v3789 = vunpack.c.l.s4 1966171168
        %v3790 = vunpack.c.0.s8 %v3789
        %v3791 = vlaneseq
        %v3792 = vshrl.u32 %v3791, 7
        %v3793 = vsub.s32 %v3790, %v3792
        %v3794 = vrot.slane %v3766, %v3793
        %v3795 = vcombine.high %v3773, %v3773
        %v3796 = vcombine.high %v3780, %v3780
        %v3797 = vcombine.high %v3787, %v3787
        %v3798 = vcombine.high %v3794, %v3794
        %v3799 = vcombine.high %v2535, %v2535
        %v3801 = vunpack.c.l.s4 1966171168
        %v3802 = vunpack.c.0.s8 %v3801
        %v3803 = vlaneseq
        %v3804 = vshrl.u32 %v3803, 7
        %v3805 = vsub.s32 %v3802, %v3804
        %v3806 = vrot.slane %v2535, %v3805
        %v3808 = vunpack.c.l.s4 1966171168
        %v3809 = vunpack.c.0.s8 %v3808
        %v3810 = vlaneseq
        %v3811 = vshrl.u32 %v3810, 7
        %v3812 = vsub.s32 %v3809, %v3811
        %v3813 = vrot.slane %v3799, %v3812
        %v3814 = vcombine.high %v3806, %v3806
        %v3815 = vcombine.high %v3813, %v3813
        %v3817 = vunpack.c.l.s4 1966171168
        %v3818 = vunpack.c.0.s8 %v3817
        %v3819 = vlaneseq
        %v3820 = vshrl.u32 %v3819, 7
        %v3821 = vsub.s32 %v3818, %v3820
        %v3822 = vrot.slane %v3806, %v3821
        %v3824 = vunpack.c.l.s4 1966171168
        %v3825 = vunpack.c.0.s8 %v3824
        %v3826 = vlaneseq
        %v3827 = vshrl.u32 %v3826, 7
        %v3828 = vsub.s32 %v3825, %v3827
        %v3829 = vrot.slane %v3813, %v3828
        %v3831 = vunpack.c.l.s4 1966171168
        %v3832 = vunpack.c.0.s8 %v3831
        %v3833 = vlaneseq
        %v3834 = vshrl.u32 %v3833, 7
        %v3835 = vsub.s32 %v3832, %v3834
        %v3836 = vrot.slane %v3814, %v3835
        %v3838 = vunpack.c.l.s4 1966171168
        %v3839 = vunpack.c.0.s8 %v3838
        %v3840 = vlaneseq
        %v3841 = vshrl.u32 %v3840, 7
        %v3842 = vsub.s32 %v3839, %v3841
        %v3843 = vrot.slane %v3815, %v3842
        %v3844 = vcombine.high %v3822, %v3822
        %v3845 = vcombine.high %v3829, %v3829
        %v3846 = vcombine.high %v3836, %v3836
        %v3847 = vcombine.high %v3843, %v3843
        %v3848 = vcombine.high %v2536, %v2536
        %v3850 = vunpack.c.l.s4 1966171168
        %v3851 = vunpack.c.0.s8 %v3850
        %v3852 = vlaneseq
        %v3853 = vshrl.u32 %v3852, 7
        %v3854 = vsub.s32 %v3851, %v3853
        %v3855 = vrot.slane %v2536, %v3854
        %v3857 = vunpack.c.l.s4 1966171168
        %v3858 = vunpack.c.0.s8 %v3857
        %v3859 = vlaneseq
        %v3860 = vshrl.u32 %v3859, 7
        %v3861 = vsub.s32 %v3858, %v3860
        %v3862 = vrot.slane %v3848, %v3861
        %v3863 = vcombine.high %v3855, %v3855
        %v3864 = vcombine.high %v3862, %v3862
        %v3866 = vunpack.c.l.s4 1966171168
        %v3867 = vunpack.c.0.s8 %v3866
        %v3868 = vlaneseq
        %v3869 = vshrl.u32 %v3868, 7
        %v3870 = vsub.s32 %v3867, %v3869
        %v3871 = vrot.slane %v3855, %v3870
        %v3873 = vunpack.c.l.s4 1966171168
        %v3874 = vunpack.c.0.s8 %v3873
        %v3875 = vlaneseq
        %v3876 = vshrl.u32 %v3875, 7
        %v3877 = vsub.s32 %v3874, %v3876
        %v3878 = vrot.slane %v3862, %v3877
        %v3880 = vunpack.c.l.s4 1966171168
        %v3881 = vunpack.c.0.s8 %v3880
        %v3882 = vlaneseq
        %v3883 = vshrl.u32 %v3882, 7
        %v3884 = vsub.s32 %v3881, %v3883
        %v3885 = vrot.slane %v3863, %v3884
        %v3887 = vunpack.c.l.s4 1966171168
        %v3888 = vunpack.c.0.s8 %v3887
        %v3889 = vlaneseq
        %v3890 = vshrl.u32 %v3889, 7
        %v3891 = vsub.s32 %v3888, %v3890
        %v3892 = vrot.slane %v3864, %v3891
        %v3893 = vcombine.high %v3871, %v3871
        %v3894 = vcombine.high %v3878, %v3878
        %v3895 = vcombine.high %v3885, %v3885
        %v3896 = vcombine.high %v3892, %v3892
        %v3897 = vcombine.high %v2537, %v2537
        %v3899 = vunpack.c.l.s4 1966171168
        %v3900 = vunpack.c.0.s8 %v3899
        %v3901 = vlaneseq
        %v3902 = vshrl.u32 %v3901, 7
        %v3903 = vsub.s32 %v3900, %v3902
        %v3904 = vrot.slane %v2537, %v3903
        %v3906 = vunpack.c.l.s4 1966171168
        %v3907 = vunpack.c.0.s8 %v3906
        %v3908 = vlaneseq
        %v3909 = vshrl.u32 %v3908, 7
        %v3910 = vsub.s32 %v3907, %v3909
        %v3911 = vrot.slane %v3897, %v3910
        %v3912 = vcombine.high %v3904, %v3904
        %v3913 = vcombine.high %v3911, %v3911
        %v3915 = vunpack.c.l.s4 1966171168
        %v3916 = vunpack.c.0.s8 %v3915
        %v3917 = vlaneseq
        %v3918 = vshrl.u32 %v3917, 7
        %v3919 = vsub.s32 %v3916, %v3918
        %v3920 = vrot.slane %v3904, %v3919
        %v3922 = vunpack.c.l.s4 1966171168
        %v3923 = vunpack.c.0.s8 %v3922
        %v3924 = vlaneseq
        %v3925 = vshrl.u32 %v3924, 7
        %v3926 = vsub.s32 %v3923, %v3925
        %v3927 = vrot.slane %v3911, %v3926
        %v3929 = vunpack.c.l.s4 1966171168
        %v3930 = vunpack.c.0.s8 %v3929
        %v3931 = vlaneseq
        %v3932 = vshrl.u32 %v3931, 7
        %v3933 = vsub.s32 %v3930, %v3932
        %v3934 = vrot.slane %v3912, %v3933
        %v3936 = vunpack.c.l.s4 1966171168
        %v3937 = vunpack.c.0.s8 %v3936
        %v3938 = vlaneseq
        %v3939 = vshrl.u32 %v3938, 7
        %v3940 = vsub.s32 %v3937, %v3939
        %v3941 = vrot.slane %v3913, %v3940
        %v3942 = vcombine.high %v3920, %v3920
        %v3943 = vcombine.high %v3927, %v3927
        %v3944 = vcombine.high %v3934, %v3934
        %v3945 = vcombine.high %v3941, %v3941
        %v3946 = vcombine.high %v2538, %v2538
        %v3948 = vunpack.c.l.s4 1966171168
        %v3949 = vunpack.c.0.s8 %v3948
        %v3950 = vlaneseq
        %v3951 = vshrl.u32 %v3950, 7
        %v3952 = vsub.s32 %v3949, %v3951
        %v3953 = vrot.slane %v2538, %v3952
        %v3955 = vunpack.c.l.s4 1966171168
        %v3956 = vunpack.c.0.s8 %v3955
        %v3957 = vlaneseq
        %v3958 = vshrl.u32 %v3957, 7
        %v3959 = vsub.s32 %v3956, %v3958
        %v3960 = vrot.slane %v3946, %v3959
        %v3961 = vcombine.high %v3953, %v3953
        %v3962 = vcombine.high %v3960, %v3960
        %v3964 = vunpack.c.l.s4 1966171168
        %v3965 = vunpack.c.0.s8 %v3964
        %v3966 = vlaneseq
        %v3967 = vshrl.u32 %v3966, 7
        %v3968 = vsub.s32 %v3965, %v3967
        %v3969 = vrot.slane %v3953, %v3968
        %v3971 = vunpack.c.l.s4 1966171168
        %v3972 = vunpack.c.0.s8 %v3971
        %v3973 = vlaneseq
        %v3974 = vshrl.u32 %v3973, 7
        %v3975 = vsub.s32 %v3972, %v3974
        %v3976 = vrot.slane %v3960, %v3975
        %v3978 = vunpack.c.l.s4 1966171168
        %v3979 = vunpack.c.0.s8 %v3978
        %v3980 = vlaneseq
        %v3981 = vshrl.u32 %v3980, 7
        %v3982 = vsub.s32 %v3979, %v3981
        %v3983 = vrot.slane %v3961, %v3982
        %v3985 = vunpack.c.l.s4 1966171168
        %v3986 = vunpack.c.0.s8 %v3985
        %v3987 = vlaneseq
        %v3988 = vshrl.u32 %v3987, 7
        %v3989 = vsub.s32 %v3986, %v3988
        %v3990 = vrot.slane %v3962, %v3989
        %v3991 = vcombine.high %v3969, %v3969
        %v3992 = vcombine.high %v3976, %v3976
        %v3993 = vcombine.high %v3983, %v3983
        %v3994 = vcombine.high %v3990, %v3990
        %v3995 = vcombine.high %v2539, %v2539
        %v3997 = vunpack.c.l.s4 1966171168
        %v3998 = vunpack.c.0.s8 %v3997
        %v3999 = vlaneseq
        %v4000 = vshrl.u32 %v3999, 7
        %v4001 = vsub.s32 %v3998, %v4000
        %v4002 = vrot.slane %v2539, %v4001
        %v4004 = vunpack.c.l.s4 1966171168
        %v4005 = vunpack.c.0.s8 %v4004
        %v4006 = vlaneseq
        %v4007 = vshrl.u32 %v4006, 7
        %v4008 = vsub.s32 %v4005, %v4007
        %v4009 = vrot.slane %v3995, %v4008
        %v4010 = vcombine.high %v4002, %v4002
        %v4011 = vcombine.high %v4009, %v4009
        %v4013 = vunpack.c.l.s4 1966171168
        %v4014 = vunpack.c.0.s8 %v4013
        %v4015 = vlaneseq
        %v4016 = vshrl.u32 %v4015, 7
        %v4017 = vsub.s32 %v4014, %v4016
        %v4018 = vrot.slane %v4002, %v4017
        %v4020 = vunpack.c.l.s4 1966171168
        %v4021 = vunpack.c.0.s8 %v4020
        %v4022 = vlaneseq
        %v4023 = vshrl.u32 %v4022, 7
        %v4024 = vsub.s32 %v4021, %v4023
        %v4025 = vrot.slane %v4009, %v4024
        %v4027 = vunpack.c.l.s4 1966171168
        %v4028 = vunpack.c.0.s8 %v4027
        %v4029 = vlaneseq
        %v4030 = vshrl.u32 %v4029, 7
        %v4031 = vsub.s32 %v4028, %v4030
        %v4032 = vrot.slane %v4010, %v4031
        %v4034 = vunpack.c.l.s4 1966171168
        %v4035 = vunpack.c.0.s8 %v4034
        %v4036 = vlaneseq
        %v4037 = vshrl.u32 %v4036, 7
        %v4038 = vsub.s32 %v4035, %v4037
        %v4039 = vrot.slane %v4011, %v4038
        %v4040 = vcombine.high %v4018, %v4018
        %v4041 = vcombine.high %v4025, %v4025
        %v4042 = vcombine.high %v4032, %v4032
        %v4043 = vcombine.high %v4039, %v4039
        %v4044 = vcombine.high %v2540, %v2540
        %v4046 = vunpack.c.l.s4 1966171168
        %v4047 = vunpack.c.0.s8 %v4046
        %v4048 = vlaneseq
        %v4049 = vshrl.u32 %v4048, 7
        %v4050 = vsub.s32 %v4047, %v4049
        %v4051 = vrot.slane %v2540, %v4050
        %v4053 = vunpack.c.l.s4 1966171168
        %v4054 = vunpack.c.0.s8 %v4053
        %v4055 = vlaneseq
        %v4056 = vshrl.u32 %v4055, 7
        %v4057 = vsub.s32 %v4054, %v4056
        %v4058 = vrot.slane %v4044, %v4057
        %v4059 = vcombine.high %v4051, %v4051
        %v4060 = vcombine.high %v4058, %v4058
        %v4062 = vunpack.c.l.s4 1966171168
        %v4063 = vunpack.c.0.s8 %v4062
        %v4064 = vlaneseq
        %v4065 = vshrl.u32 %v4064, 7
        %v4066 = vsub.s32 %v4063, %v4065
        %v4067 = vrot.slane %v4051, %v4066
        %v4069 = vunpack.c.l.s4 1966171168
        %v4070 = vunpack.c.0.s8 %v4069
        %v4071 = vlaneseq
        %v4072 = vshrl.u32 %v4071, 7
        %v4073 = vsub.s32 %v4070, %v4072
        %v4074 = vrot.slane %v4058, %v4073
        %v4076 = vunpack.c.l.s4 1966171168
        %v4077 = vunpack.c.0.s8 %v4076
        %v4078 = vlaneseq
        %v4079 = vshrl.u32 %v4078, 7
        %v4080 = vsub.s32 %v4077, %v4079
        %v4081 = vrot.slane %v4059, %v4080
        %v4083 = vunpack.c.l.s4 1966171168
        %v4084 = vunpack.c.0.s8 %v4083
        %v4085 = vlaneseq
        %v4086 = vshrl.u32 %v4085, 7
        %v4087 = vsub.s32 %v4084, %v4086
        %v4088 = vrot.slane %v4060, %v4087
        %v4089 = vcombine.high %v4067, %v4067
        %v4090 = vcombine.high %v4074, %v4074
        %v4091 = vcombine.high %v4081, %v4081
        %v4092 = vcombine.high %v4088, %v4088
        %v4093 = vcombine.high %v2541, %v2541
        %v4095 = vunpack.c.l.s4 1966171168
        %v4096 = vunpack.c.0.s8 %v4095
        %v4097 = vlaneseq
        %v4098 = vshrl.u32 %v4097, 7
        %v4099 = vsub.s32 %v4096, %v4098
        %v4100 = vrot.slane %v2541, %v4099
        %v4102 = vunpack.c.l.s4 1966171168
        %v4103 = vunpack.c.0.s8 %v4102
        %v4104 = vlaneseq
        %v4105 = vshrl.u32 %v4104, 7
        %v4106 = vsub.s32 %v4103, %v4105
        %v4107 = vrot.slane %v4093, %v4106
        %v4108 = vcombine.high %v4100, %v4100
        %v4109 = vcombine.high %v4107, %v4107
        %v4111 = vunpack.c.l.s4 1966171168
        %v4112 = vunpack.c.0.s8 %v4111
        %v4113 = vlaneseq
        %v4114 = vshrl.u32 %v4113, 7
        %v4115 = vsub.s32 %v4112, %v4114
        %v4116 = vrot.slane %v4100, %v4115
        %v4118 = vunpack.c.l.s4 1966171168
        %v4119 = vunpack.c.0.s8 %v4118
        %v4120 = vlaneseq
        %v4121 = vshrl.u32 %v4120, 7
        %v4122 = vsub.s32 %v4119, %v4121
        %v4123 = vrot.slane %v4107, %v4122
        %v4125 = vunpack.c.l.s4 1966171168
        %v4126 = vunpack.c.0.s8 %v4125
        %v4127 = vlaneseq
        %v4128 = vshrl.u32 %v4127, 7
        %v4129 = vsub.s32 %v4126, %v4128
        %v4130 = vrot.slane %v4108, %v4129
        %v4132 = vunpack.c.l.s4 1966171168
        %v4133 = vunpack.c.0.s8 %v4132
        %v4134 = vlaneseq
        %v4135 = vshrl.u32 %v4134, 7
        %v4136 = vsub.s32 %v4133, %v4135
        %v4137 = vrot.slane %v4109, %v4136
        %v4138 = vcombine.high %v4116, %v4116
        %v4139 = vcombine.high %v4123, %v4123
        %v4140 = vcombine.high %v4130, %v4130
        %v4141 = vcombine.high %v4137, %v4137
        %4142 = vrot.lane.b32.xlu0 %v366, 64
        %v4143 = vpop.permute.xlu0 %4142
        %4144 = vrot.lane.b32.xlu0 %v367, 64
        %v4145 = vpop.permute.xlu0 %4144
        %4146 = vrot.lane.b32.xlu0 %v368, 64
        %v4147 = vpop.permute.xlu0 %4146
        %4148 = vrot.lane.b32.xlu0 %v369, 64
        %v4149 = vpop.permute.xlu0 %4148
        %4150 = vrot.lane.b32.xlu0 %v370, 64
        %v4151 = vpop.permute.xlu0 %4150
        %4152 = vrot.lane.b32.xlu0 %v371, 64
        %v4153 = vpop.permute.xlu0 %4152
        %4154 = vrot.lane.b32.xlu0 %v372, 64
        %v4155 = vpop.permute.xlu0 %4154
        %4156 = vrot.lane.b32.xlu0 %v373, 64
        %v4157 = vpop.permute.xlu0 %4156
        %4158 = vrot.lane.b32.xlu0 %v374, 64
        %v4159 = vpop.permute.xlu0 %4158
        %4160 = vrot.lane.b32.xlu0 %v375, 64
        %v4161 = vpop.permute.xlu0 %4160
        %4162 = vrot.lane.b32.xlu0 %v376, 64
        %v4163 = vpop.permute.xlu0 %4162
        %4164 = vrot.lane.b32.xlu0 %v377, 64
        %v4165 = vpop.permute.xlu0 %4164
        %4166 = vrot.lane.b32.xlu0 %v378, 64
        %v4167 = vpop.permute.xlu0 %4166
        %4168 = vrot.lane.b32.xlu0 %v379, 64
        %v4169 = vpop.permute.xlu0 %4168
        %4170 = vrot.lane.b32.xlu0 %v380, 64
        %v4171 = vpop.permute.xlu0 %4170
        %4172 = vrot.lane.b32.xlu0 %v381, 64
        %v4173 = vpop.permute.xlu0 %4172
        %4174 = vrot.lane.b32.xlu0 %v382, 64
        %v4175 = vpop.permute.xlu0 %4174
        %4176 = vrot.lane.b32.xlu0 %v383, 64
        %v4177 = vpop.permute.xlu0 %4176
        %4178 = vrot.lane.b32.xlu0 %v384, 64
        %v4179 = vpop.permute.xlu0 %4178
        %4180 = vrot.lane.b32.xlu0 %v385, 64
        %v4181 = vpop.permute.xlu0 %4180
        %4182 = vrot.lane.b32.xlu0 %v386, 64
        %v4183 = vpop.permute.xlu0 %4182
        %4184 = vrot.lane.b32.xlu0 %v387, 64
        %v4185 = vpop.permute.xlu0 %4184
        %4186 = vrot.lane.b32.xlu0 %v388, 64
        %v4187 = vpop.permute.xlu0 %4186
        %4188 = vrot.lane.b32.xlu0 %v389, 64
        %v4189 = vpop.permute.xlu0 %4188
        %4190 = vrot.lane.b32.xlu0 %v390, 64
        %v4191 = vpop.permute.xlu0 %4190
        %4192 = vrot.lane.b32.xlu0 %v391, 64
        %v4193 = vpop.permute.xlu0 %4192
        %4194 = vrot.lane.b32.xlu0 %v392, 64
        %v4195 = vpop.permute.xlu0 %4194
        %4196 = vrot.lane.b32.xlu0 %v393, 64
        %v4197 = vpop.permute.xlu0 %4196
        %4198 = vrot.lane.b32.xlu0 %v394, 64
        %v4199 = vpop.permute.xlu0 %4198
        %4200 = vrot.lane.b32.xlu0 %v395, 64
        %v4201 = vpop.permute.xlu0 %4200
        %4202 = vrot.lane.b32.xlu0 %v396, 64
        %v4203 = vpop.permute.xlu0 %4202
        %4204 = vrot.lane.b32.xlu0 %v397, 64
        %v4205 = vpop.permute.xlu0 %4204
        %4206 = vrot.lane.b32.xlu0 %v398, 64
        %v4207 = vpop.permute.xlu0 %4206
        %4208 = vrot.lane.b32.xlu0 %v399, 64
        %v4209 = vpop.permute.xlu0 %4208
        %4210 = vrot.lane.b32.xlu0 %v400, 64
        %v4211 = vpop.permute.xlu0 %4210
        %4212 = vrot.lane.b32.xlu0 %v401, 64
        %v4213 = vpop.permute.xlu0 %4212
        %4214 = vrot.lane.b32.xlu0 %v402, 64
        %v4215 = vpop.permute.xlu0 %4214
        %4216 = vrot.lane.b32.xlu0 %v403, 64
        %v4217 = vpop.permute.xlu0 %4216
        %4218 = vrot.lane.b32.xlu0 %v404, 64
        %v4219 = vpop.permute.xlu0 %4218
        %4220 = vrot.lane.b32.xlu0 %v405, 64
        %v4221 = vpop.permute.xlu0 %4220
        %4222 = vrot.lane.b32.xlu0 %v406, 64
        %v4223 = vpop.permute.xlu0 %4222
        %4224 = vrot.lane.b32.xlu0 %v407, 64
        %v4225 = vpop.permute.xlu0 %4224
        %4226 = vrot.lane.b32.xlu0 %v408, 64
        %v4227 = vpop.permute.xlu0 %4226
        %4228 = vrot.lane.b32.xlu0 %v409, 64
        %v4229 = vpop.permute.xlu0 %4228
        %4230 = vrot.lane.b32.xlu0 %v410, 64
        %v4231 = vpop.permute.xlu0 %4230
        %4232 = vrot.lane.b32.xlu0 %v411, 64
        %v4233 = vpop.permute.xlu0 %4232
        %4234 = vrot.lane.b32.xlu0 %v412, 64
        %v4235 = vpop.permute.xlu0 %4234
        %4236 = vrot.lane.b32.xlu0 %v413, 64
        %v4237 = vpop.permute.xlu0 %4236
        %4238 = vrot.lane.b32.xlu0 %v414, 64
        %v4239 = vpop.permute.xlu0 %4238
        %4240 = vrot.lane.b32.xlu0 %v415, 64
        %v4241 = vpop.permute.xlu0 %4240
        %4242 = vrot.lane.b32.xlu0 %v416, 64
        %v4243 = vpop.permute.xlu0 %4242
        %4244 = vrot.lane.b32.xlu0 %v417, 64
        %v4245 = vpop.permute.xlu0 %4244
        %4246 = vrot.lane.b32.xlu0 %v418, 64
        %v4247 = vpop.permute.xlu0 %4246
        %4248 = vrot.lane.b32.xlu0 %v419, 64
        %v4249 = vpop.permute.xlu0 %4248
        %4250 = vrot.lane.b32.xlu0 %v420, 64
        %v4251 = vpop.permute.xlu0 %4250
        %4252 = vrot.lane.b32.xlu0 %v421, 64
        %v4253 = vpop.permute.xlu0 %4252
        %4254 = vrot.lane.b32.xlu0 %v422, 64
        %v4255 = vpop.permute.xlu0 %4254
        %4256 = vrot.lane.b32.xlu0 %v423, 64
        %v4257 = vpop.permute.xlu0 %4256
        %4258 = vrot.lane.b32.xlu0 %v424, 64
        %v4259 = vpop.permute.xlu0 %4258
        %4260 = vrot.lane.b32.xlu0 %v425, 64
        %v4261 = vpop.permute.xlu0 %4260
        %4262 = vrot.lane.b32.xlu0 %v426, 64
        %v4263 = vpop.permute.xlu0 %4262
        %4264 = vrot.lane.b32.xlu0 %v427, 64
        %v4265 = vpop.permute.xlu0 %4264
        %4266 = vrot.lane.b32.xlu0 %v428, 64
        %v4267 = vpop.permute.xlu0 %4266
        %4268 = vrot.lane.b32.xlu0 %v429, 64
        %v4269 = vpop.permute.xlu0 %4268
        %4270 = vrot.lane.b32.xlu0 %v430, 64
        %v4271 = vpop.permute.xlu0 %4270
        %4272 = vrot.lane.b32.xlu0 %v431, 64
        %v4273 = vpop.permute.xlu0 %4272
        %4274 = vrot.lane.b32.xlu0 %v432, 64
        %v4275 = vpop.permute.xlu0 %4274
        %4276 = vrot.lane.b32.xlu0 %v433, 64
        %v4277 = vpop.permute.xlu0 %4276
        %4278 = vrot.lane.b32.xlu0 %v434, 64
        %v4279 = vpop.permute.xlu0 %4278
        %4280 = vrot.lane.b32.xlu0 %v435, 64
        %v4281 = vpop.permute.xlu0 %4280
        %4282 = vrot.lane.b32.xlu0 %v436, 64
        %v4283 = vpop.permute.xlu0 %4282
        %4284 = vrot.lane.b32.xlu0 %v437, 64
        %v4285 = vpop.permute.xlu0 %4284
        %4286 = vrot.lane.b32.xlu0 %v438, 64
        %v4287 = vpop.permute.xlu0 %4286
        %4288 = vrot.lane.b32.xlu0 %v439, 64
        %v4289 = vpop.permute.xlu0 %4288
        %4290 = vrot.lane.b32.xlu0 %v440, 64
        %v4291 = vpop.permute.xlu0 %4290
        %4292 = vrot.lane.b32.xlu0 %v441, 64
        %v4293 = vpop.permute.xlu0 %4292
        %4294 = vrot.lane.b32.xlu0 %v442, 64
        %v4295 = vpop.permute.xlu0 %4294
        %4296 = vrot.lane.b32.xlu0 %v443, 64
        %v4297 = vpop.permute.xlu0 %4296
        %4298 = vrot.lane.b32.xlu0 %v444, 64
        %v4299 = vpop.permute.xlu0 %4298
        %4300 = vrot.lane.b32.xlu0 %v445, 64
        %v4301 = vpop.permute.xlu0 %4300
        %4302 = vrot.lane.b32.xlu0 %v446, 64
        %v4303 = vpop.permute.xlu0 %4302
        %4304 = vrot.lane.b32.xlu0 %v447, 64
        %v4305 = vpop.permute.xlu0 %4304
        %4306 = vrot.lane.b32.xlu0 %v448, 64
        %v4307 = vpop.permute.xlu0 %4306
        %4308 = vrot.lane.b32.xlu0 %v449, 64
        %v4309 = vpop.permute.xlu0 %4308
        %4310 = vrot.lane.b32.xlu0 %v450, 64
        %v4311 = vpop.permute.xlu0 %4310
        %4312 = vrot.lane.b32.xlu0 %v451, 64
        %v4313 = vpop.permute.xlu0 %4312
        %4314 = vrot.lane.b32.xlu0 %v452, 64
        %v4315 = vpop.permute.xlu0 %4314
        %4316 = vrot.lane.b32.xlu0 %v453, 64
        %v4317 = vpop.permute.xlu0 %4316
        %4318 = vrot.lane.b32.xlu0 %v454, 64
        %v4319 = vpop.permute.xlu0 %4318
        %4320 = vrot.lane.b32.xlu0 %v455, 64
        %v4321 = vpop.permute.xlu0 %4320
        %4322 = vrot.lane.b32.xlu0 %v456, 64
        %v4323 = vpop.permute.xlu0 %4322
        %4324 = vrot.lane.b32.xlu0 %v457, 64
        %v4325 = vpop.permute.xlu0 %4324
        %4326 = vrot.lane.b32.xlu0 %v458, 64
        %v4327 = vpop.permute.xlu0 %4326
        %4328 = vrot.lane.b32.xlu0 %v459, 64
        %v4329 = vpop.permute.xlu0 %4328
        %4330 = vrot.lane.b32.xlu0 %v460, 64
        %v4331 = vpop.permute.xlu0 %4330
        %4332 = vrot.lane.b32.xlu0 %v461, 64
        %v4333 = vpop.permute.xlu0 %4332
        %4334 = vrot.lane.b32.xlu0 %v462, 64
        %v4335 = vpop.permute.xlu0 %4334
        %4336 = vrot.lane.b32.xlu0 %v463, 64
        %v4337 = vpop.permute.xlu0 %4336
        %4338 = vrot.lane.b32.xlu0 %v464, 64
        %v4339 = vpop.permute.xlu0 %4338
        %4340 = vrot.lane.b32.xlu0 %v465, 64
        %v4341 = vpop.permute.xlu0 %4340
        %4342 = vrot.lane.b32.xlu0 %v466, 64
        %v4343 = vpop.permute.xlu0 %4342
        %4344 = vrot.lane.b32.xlu0 %v467, 64
        %v4345 = vpop.permute.xlu0 %4344
        %4346 = vrot.lane.b32.xlu0 %v468, 64
        %v4347 = vpop.permute.xlu0 %4346
        %4348 = vrot.lane.b32.xlu0 %v469, 64
        %v4349 = vpop.permute.xlu0 %4348
        %4350 = vrot.lane.b32.xlu0 %v470, 64
        %v4351 = vpop.permute.xlu0 %4350
        %4352 = vrot.lane.b32.xlu0 %v471, 64
        %v4353 = vpop.permute.xlu0 %4352
        %4354 = vrot.lane.b32.xlu0 %v472, 64
        %v4355 = vpop.permute.xlu0 %4354
        %4356 = vrot.lane.b32.xlu0 %v473, 64
        %v4357 = vpop.permute.xlu0 %4356
        %4358 = vrot.lane.b32.xlu0 %v474, 64
        %v4359 = vpop.permute.xlu0 %4358
        %4360 = vrot.lane.b32.xlu0 %v475, 64
        %v4361 = vpop.permute.xlu0 %4360
        %4362 = vrot.lane.b32.xlu0 %v476, 64
        %v4363 = vpop.permute.xlu0 %4362
        %4364 = vrot.lane.b32.xlu0 %v477, 64
        %v4365 = vpop.permute.xlu0 %4364
        %4366 = vrot.lane.b32.xlu0 %v478, 64
        %v4367 = vpop.permute.xlu0 %4366
        %4368 = vrot.lane.b32.xlu0 %v479, 64
        %v4369 = vpop.permute.xlu0 %4368
        %4370 = vrot.lane.b32.xlu0 %v480, 64
        %v4371 = vpop.permute.xlu0 %4370
        %4372 = vrot.lane.b32.xlu0 %v481, 64
        %v4373 = vpop.permute.xlu0 %4372
        %4374 = vrot.lane.b32.xlu0 %v482, 64
        %v4375 = vpop.permute.xlu0 %4374
        %4376 = vrot.lane.b32.xlu0 %v483, 64
        %v4377 = vpop.permute.xlu0 %4376
        %4378 = vrot.lane.b32.xlu0 %v484, 64
        %v4379 = vpop.permute.xlu0 %4378
        %4380 = vrot.lane.b32.xlu0 %v485, 64
        %v4381 = vpop.permute.xlu0 %4380
        %4382 = vrot.lane.b32.xlu0 %v486, 64
        %v4383 = vpop.permute.xlu0 %4382
        %4384 = vrot.lane.b32.xlu0 %v487, 64
        %v4385 = vpop.permute.xlu0 %4384
        %4386 = vrot.lane.b32.xlu0 %v488, 64
        %v4387 = vpop.permute.xlu0 %4386
        %4388 = vrot.lane.b32.xlu0 %v489, 64
        %v4389 = vpop.permute.xlu0 %4388
        %4390 = vrot.lane.b32.xlu0 %v490, 64
        %v4391 = vpop.permute.xlu0 %4390
        %4392 = vrot.lane.b32.xlu0 %v491, 64
        %v4393 = vpop.permute.xlu0 %4392
        %4394 = vrot.lane.b32.xlu0 %v492, 64
        %v4395 = vpop.permute.xlu0 %4394
        %4396 = vrot.lane.b32.xlu0 %v493, 64
        %v4397 = vpop.permute.xlu0 %4396
        %4398 = vrot.lane.b32.xlu0 %v494, 64
        %v4399 = vpop.permute.xlu0 %4398
        %4400 = vrot.lane.b32.xlu0 %v495, 64
        %v4401 = vpop.permute.xlu0 %4400
        %4402 = vrot.lane.b32.xlu0 %v496, 64
        %v4403 = vpop.permute.xlu0 %4402
        %4404 = vrot.lane.b32.xlu0 %v497, 64
        %v4405 = vpop.permute.xlu0 %4404
        %4406 = vrot.lane.b32.xlu0 %v498, 64
        %v4407 = vpop.permute.xlu0 %4406
        %4408 = vrot.lane.b32.xlu0 %v499, 64
        %v4409 = vpop.permute.xlu0 %4408
        %4410 = vrot.lane.b32.xlu0 %v500, 64
        %v4411 = vpop.permute.xlu0 %4410
        %4412 = vrot.lane.b32.xlu0 %v501, 64
        %v4413 = vpop.permute.xlu0 %4412
        %4414 = vrot.lane.b32.xlu0 %v502, 64
        %v4415 = vpop.permute.xlu0 %4414
        %4416 = vrot.lane.b32.xlu0 %v503, 64
        %v4417 = vpop.permute.xlu0 %4416
        %4418 = vrot.lane.b32.xlu0 %v504, 64
        %v4419 = vpop.permute.xlu0 %4418
        %4420 = vrot.lane.b32.xlu0 %v505, 64
        %v4421 = vpop.permute.xlu0 %4420
        %4422 = vrot.lane.b32.xlu0 %v506, 64
        %v4423 = vpop.permute.xlu0 %4422
        %4424 = vrot.lane.b32.xlu0 %v507, 64
        %v4425 = vpop.permute.xlu0 %4424
        %4426 = vrot.lane.b32.xlu0 %v508, 64
        %v4427 = vpop.permute.xlu0 %4426
        %4428 = vrot.lane.b32.xlu0 %v509, 64
        %v4429 = vpop.permute.xlu0 %4428
        %4430 = vrot.lane.b32.xlu0 %v510, 64
        %v4431 = vpop.permute.xlu0 %4430
        %4432 = vrot.lane.b32.xlu0 %v511, 64
        %v4433 = vpop.permute.xlu0 %4432
        %4434 = vrot.lane.b32.xlu0 %v512, 64
        %v4435 = vpop.permute.xlu0 %4434
        %4436 = vrot.lane.b32.xlu0 %v513, 64
        %v4437 = vpop.permute.xlu0 %4436
        %4438 = vrot.lane.b32.xlu0 %v514, 64
        %v4439 = vpop.permute.xlu0 %4438
        %4440 = vrot.lane.b32.xlu0 %v515, 64
        %v4441 = vpop.permute.xlu0 %4440
        %4442 = vrot.lane.b32.xlu0 %v516, 64
        %v4443 = vpop.permute.xlu0 %4442
        %4444 = vrot.lane.b32.xlu0 %v517, 64
        %v4445 = vpop.permute.xlu0 %4444
        %4446 = vrot.lane.b32.xlu0 %v518, 64
        %v4447 = vpop.permute.xlu0 %4446
        %4448 = vrot.lane.b32.xlu0 %v519, 64
        %v4449 = vpop.permute.xlu0 %4448
        %4450 = vrot.lane.b32.xlu0 %v520, 64
        %v4451 = vpop.permute.xlu0 %4450
        %4452 = vrot.lane.b32.xlu0 %v521, 64
        %v4453 = vpop.permute.xlu0 %4452
        %4454 = vrot.lane.b32.xlu0 %v522, 64
        %v4455 = vpop.permute.xlu0 %4454
        %4456 = vrot.lane.b32.xlu0 %v523, 64
        %v4457 = vpop.permute.xlu0 %4456
        %4458 = vrot.lane.b32.xlu0 %v524, 64
        %v4459 = vpop.permute.xlu0 %4458
        %4460 = vrot.lane.b32.xlu0 %v525, 64
        %v4461 = vpop.permute.xlu0 %4460
        %4462 = vrot.lane.b32.xlu0 %v526, 64
        %v4463 = vpop.permute.xlu0 %4462
        %4464 = vrot.lane.b32.xlu0 %v527, 64
        %v4465 = vpop.permute.xlu0 %4464
        %4466 = vrot.lane.b32.xlu0 %v528, 64
        %v4467 = vpop.permute.xlu0 %4466
        %4468 = vrot.lane.b32.xlu0 %v529, 64
        %v4469 = vpop.permute.xlu0 %4468
        %4470 = vrot.lane.b32.xlu0 %v530, 64
        %v4471 = vpop.permute.xlu0 %4470
        %4472 = vrot.lane.b32.xlu0 %v531, 64
        %v4473 = vpop.permute.xlu0 %4472
        %4474 = vrot.lane.b32.xlu0 %v532, 64
        %v4475 = vpop.permute.xlu0 %4474
        %4476 = vrot.lane.b32.xlu0 %v533, 64
        %v4477 = vpop.permute.xlu0 %4476
        %4478 = vrot.lane.b32.xlu0 %v534, 64
        %v4479 = vpop.permute.xlu0 %4478
        %4480 = vrot.lane.b32.xlu0 %v535, 64
        %v4481 = vpop.permute.xlu0 %4480
        %4482 = vrot.lane.b32.xlu0 %v536, 64
        %v4483 = vpop.permute.xlu0 %4482
        %4484 = vrot.lane.b32.xlu0 %v537, 64
        %v4485 = vpop.permute.xlu0 %4484
        %4486 = vrot.lane.b32.xlu0 %v538, 64
        %v4487 = vpop.permute.xlu0 %4486
        %4488 = vrot.lane.b32.xlu0 %v539, 64
        %v4489 = vpop.permute.xlu0 %4488
        %4490 = vrot.lane.b32.xlu0 %v540, 64
        %v4491 = vpop.permute.xlu0 %4490
        %4492 = vrot.lane.b32.xlu0 %v541, 64
        %v4493 = vpop.permute.xlu0 %4492
        %4494 = vrot.lane.b32.xlu0 %v542, 64
        %v4495 = vpop.permute.xlu0 %4494
        %4496 = vrot.lane.b32.xlu0 %v543, 64
        %v4497 = vpop.permute.xlu0 %4496
        %4498 = vrot.lane.b32.xlu0 %v544, 64
        %v4499 = vpop.permute.xlu0 %4498
        %4500 = vrot.lane.b32.xlu0 %v545, 64
        %v4501 = vpop.permute.xlu0 %4500
        %4502 = vrot.lane.b32.xlu0 %v546, 64
        %v4503 = vpop.permute.xlu0 %4502
        %4504 = vrot.lane.b32.xlu0 %v547, 64
        %v4505 = vpop.permute.xlu0 %4504
        %4506 = vrot.lane.b32.xlu0 %v548, 64
        %v4507 = vpop.permute.xlu0 %4506
        %4508 = vrot.lane.b32.xlu0 %v549, 64
        %v4509 = vpop.permute.xlu0 %4508
        %4510 = vrot.lane.b32.xlu0 %v550, 64
        %v4511 = vpop.permute.xlu0 %4510
        %4512 = vrot.lane.b32.xlu0 %v551, 64
        %v4513 = vpop.permute.xlu0 %4512
        %4514 = vrot.lane.b32.xlu0 %v552, 64
        %v4515 = vpop.permute.xlu0 %4514
        %4516 = vrot.lane.b32.xlu0 %v553, 64
        %v4517 = vpop.permute.xlu0 %4516
        %4518 = vrot.lane.b32.xlu0 %v554, 64
        %v4519 = vpop.permute.xlu0 %4518
        %4520 = vrot.lane.b32.xlu0 %v555, 64
        %v4521 = vpop.permute.xlu0 %4520
        %4522 = vrot.lane.b32.xlu0 %v556, 64
        %v4523 = vpop.permute.xlu0 %4522
        %4524 = vrot.lane.b32.xlu0 %v557, 64
        %v4525 = vpop.permute.xlu0 %4524
        %4526 = vrot.lane.b32.xlu0 %v558, 64
        %v4527 = vpop.permute.xlu0 %4526
        %4528 = vrot.lane.b32.xlu0 %v559, 64
        %v4529 = vpop.permute.xlu0 %4528
        %4530 = vrot.lane.b32.xlu0 %v560, 64
        %v4531 = vpop.permute.xlu0 %4530
        %4532 = vrot.lane.b32.xlu0 %v561, 64
        %v4533 = vpop.permute.xlu0 %4532
        %4534 = vrot.lane.b32.xlu0 %v562, 64
        %v4535 = vpop.permute.xlu0 %4534
        %4536 = vrot.lane.b32.xlu0 %v563, 64
        %v4537 = vpop.permute.xlu0 %4536
        %4538 = vrot.lane.b32.xlu0 %v564, 64
        %v4539 = vpop.permute.xlu0 %4538
        %4540 = vrot.lane.b32.xlu0 %v565, 64
        %v4541 = vpop.permute.xlu0 %4540
        %4542 = vrot.lane.b32.xlu0 %v566, 64
        %v4543 = vpop.permute.xlu0 %4542
        %4544 = vrot.lane.b32.xlu0 %v567, 64
        %v4545 = vpop.permute.xlu0 %4544
        %4546 = vrot.lane.b32.xlu0 %v568, 64
        %v4547 = vpop.permute.xlu0 %4546
        %4548 = vrot.lane.b32.xlu0 %v569, 64
        %v4549 = vpop.permute.xlu0 %4548
        %4550 = vrot.lane.b32.xlu0 %v570, 64
        %v4551 = vpop.permute.xlu0 %4550
        %4552 = vrot.lane.b32.xlu0 %v571, 64
        %v4553 = vpop.permute.xlu0 %4552
        %4554 = vrot.lane.b32.xlu0 %v572, 64
        %v4555 = vpop.permute.xlu0 %4554
        %4556 = vrot.lane.b32.xlu0 %v573, 64
        %v4557 = vpop.permute.xlu0 %4556
        %4558 = vrot.lane.b32.xlu0 %v574, 64
        %v4559 = vpop.permute.xlu0 %4558
        %4560 = vrot.lane.b32.xlu0 %v575, 64
        %v4561 = vpop.permute.xlu0 %4560
        %4562 = vrot.lane.b32.xlu0 %v576, 64
        %v4563 = vpop.permute.xlu0 %4562
        %4564 = vrot.lane.b32.xlu0 %v577, 64
        %v4565 = vpop.permute.xlu0 %4564
        %4566 = vrot.lane.b32.xlu0 %v578, 64
        %v4567 = vpop.permute.xlu0 %4566
        %4568 = vrot.lane.b32.xlu0 %v579, 64
        %v4569 = vpop.permute.xlu0 %4568
        %4570 = vrot.lane.b32.xlu0 %v580, 64
        %v4571 = vpop.permute.xlu0 %4570
        %4572 = vrot.lane.b32.xlu0 %v581, 64
        %v4573 = vpop.permute.xlu0 %4572
        %4574 = vrot.lane.b32.xlu0 %v582, 64
        %v4575 = vpop.permute.xlu0 %4574
        %4576 = vrot.lane.b32.xlu0 %v583, 64
        %v4577 = vpop.permute.xlu0 %4576
        %4578 = vrot.lane.b32.xlu0 %v584, 64
        %v4579 = vpop.permute.xlu0 %4578
        %4580 = vrot.lane.b32.xlu0 %v585, 64
        %v4581 = vpop.permute.xlu0 %4580
        %4582 = vrot.lane.b32.xlu0 %v586, 64
        %v4583 = vpop.permute.xlu0 %4582
        %4584 = vrot.lane.b32.xlu0 %v587, 64
        %v4585 = vpop.permute.xlu0 %4584
        %4586 = vrot.lane.b32.xlu0 %v588, 64
        %v4587 = vpop.permute.xlu0 %4586
        %4588 = vrot.lane.b32.xlu0 %v589, 64
        %v4589 = vpop.permute.xlu0 %4588
        %4590 = vrot.lane.b32.xlu0 %v590, 64
        %v4591 = vpop.permute.xlu0 %4590
        %4592 = vrot.lane.b32.xlu0 %v591, 64
        %v4593 = vpop.permute.xlu0 %4592
        %4594 = vrot.lane.b32.xlu0 %v592, 64
        %v4595 = vpop.permute.xlu0 %4594
        %4596 = vrot.lane.b32.xlu0 %v593, 64
        %v4597 = vpop.permute.xlu0 %4596
        %4598 = vrot.lane.b32.xlu0 %v594, 64
        %v4599 = vpop.permute.xlu0 %4598
        %4600 = vrot.lane.b32.xlu0 %v595, 64
        %v4601 = vpop.permute.xlu0 %4600
        %4602 = vrot.lane.b32.xlu0 %v596, 64
        %v4603 = vpop.permute.xlu0 %4602
        %4604 = vrot.lane.b32.xlu0 %v597, 64
        %v4605 = vpop.permute.xlu0 %4604
        %4606 = vrot.lane.b32.xlu0 %v598, 64
        %v4607 = vpop.permute.xlu0 %4606
        %4608 = vrot.lane.b32.xlu0 %v599, 64
        %v4609 = vpop.permute.xlu0 %4608
        %4610 = vrot.lane.b32.xlu0 %v600, 64
        %v4611 = vpop.permute.xlu0 %4610
        %4612 = vrot.lane.b32.xlu0 %v601, 64
        %v4613 = vpop.permute.xlu0 %4612
        %4614 = vrot.lane.b32.xlu0 %v602, 64
        %v4615 = vpop.permute.xlu0 %4614
        %4616 = vrot.lane.b32.xlu0 %v603, 64
        %v4617 = vpop.permute.xlu0 %4616
        %4618 = vrot.lane.b32.xlu0 %v604, 64
        %v4619 = vpop.permute.xlu0 %4618
        %4620 = vrot.lane.b32.xlu0 %v605, 64
        %v4621 = vpop.permute.xlu0 %4620
        %4622 = vrot.lane.b32.xlu0 %v606, 64
        %v4623 = vpop.permute.xlu0 %4622
        %4624 = vrot.lane.b32.xlu0 %v607, 64
        %v4625 = vpop.permute.xlu0 %4624
        %4626 = vrot.lane.b32.xlu0 %v608, 64
        %v4627 = vpop.permute.xlu0 %4626
        %4628 = vrot.lane.b32.xlu0 %v609, 64
        %v4629 = vpop.permute.xlu0 %4628
        %4630 = vrot.lane.b32.xlu0 %v610, 64
        %v4631 = vpop.permute.xlu0 %4630
        %4632 = vrot.lane.b32.xlu0 %v611, 64
        %v4633 = vpop.permute.xlu0 %4632
        %4634 = vrot.lane.b32.xlu0 %v612, 64
        %v4635 = vpop.permute.xlu0 %4634
        %4636 = vrot.lane.b32.xlu0 %v613, 64
        %v4637 = vpop.permute.xlu0 %4636
        %4638 = vrot.lane.b32.xlu0 %v614, 64
        %v4639 = vpop.permute.xlu0 %4638
        %4640 = vrot.lane.b32.xlu0 %v615, 64
        %v4641 = vpop.permute.xlu0 %4640
        %4642 = vrot.lane.b32.xlu0 %v616, 64
        %v4643 = vpop.permute.xlu0 %4642
        %4644 = vrot.lane.b32.xlu0 %v617, 64
        %v4645 = vpop.permute.xlu0 %4644
        %4646 = vrot.lane.b32.xlu0 %v618, 64
        %v4647 = vpop.permute.xlu0 %4646
        %4648 = vrot.lane.b32.xlu0 %v619, 64
        %v4649 = vpop.permute.xlu0 %4648
        %4650 = vrot.lane.b32.xlu0 %v620, 64
        %v4651 = vpop.permute.xlu0 %4650
        %4652 = vrot.lane.b32.xlu0 %v621, 64
        %v4653 = vpop.permute.xlu0 %4652
        %4654 = vrot.lane.b32.xlu0 %v622, 64
        %v4655 = vpop.permute.xlu0 %4654
        %4656 = vrot.lane.b32.xlu0 %v623, 64
        %v4657 = vpop.permute.xlu0 %4656
        %4658 = vrot.lane.b32.xlu0 %v624, 64
        %v4659 = vpop.permute.xlu0 %4658
        %4660 = vrot.lane.b32.xlu0 %v625, 64
        %v4661 = vpop.permute.xlu0 %4660
        %4662 = vrot.lane.b32.xlu0 %v626, 64
        %v4663 = vpop.permute.xlu0 %4662
        %4664 = vrot.lane.b32.xlu0 %v627, 64
        %v4665 = vpop.permute.xlu0 %4664
        %4666 = vrot.lane.b32.xlu0 %v628, 64
        %v4667 = vpop.permute.xlu0 %4666
        %4668 = vrot.lane.b32.xlu0 %v629, 64
        %v4669 = vpop.permute.xlu0 %4668
        %4670 = vrot.lane.b32.xlu0 %v630, 64
        %v4671 = vpop.permute.xlu0 %4670
        %4672 = vrot.lane.b32.xlu0 %v631, 64
        %v4673 = vpop.permute.xlu0 %4672
        %4674 = vrot.lane.b32.xlu0 %v632, 64
        %v4675 = vpop.permute.xlu0 %4674
        %4676 = vrot.lane.b32.xlu0 %v633, 64
        %v4677 = vpop.permute.xlu0 %4676
        %4678 = vrot.lane.b32.xlu0 %v634, 64
        %v4679 = vpop.permute.xlu0 %4678
        %4680 = vrot.lane.b32.xlu0 %v635, 64
        %v4681 = vpop.permute.xlu0 %4680
        %4682 = vrot.lane.b32.xlu0 %v636, 64
        %v4683 = vpop.permute.xlu0 %4682
        %4684 = vrot.lane.b32.xlu0 %v637, 64
        %v4685 = vpop.permute.xlu0 %4684
        %4686 = vrot.lane.b32.xlu0 %v638, 64
        %v4687 = vpop.permute.xlu0 %4686
        %4688 = vrot.lane.b32.xlu0 %v639, 64
        %v4689 = vpop.permute.xlu0 %4688
        %4690 = vrot.lane.b32.xlu0 %v640, 64
        %v4691 = vpop.permute.xlu0 %4690
        %4692 = vrot.lane.b32.xlu0 %v641, 64
        %v4693 = vpop.permute.xlu0 %4692
        %4694 = vrot.lane.b32.xlu0 %v642, 64
        %v4695 = vpop.permute.xlu0 %4694
        %4696 = vrot.lane.b32.xlu0 %v643, 64
        %v4697 = vpop.permute.xlu0 %4696
        %4698 = vrot.lane.b32.xlu0 %v644, 64
        %v4699 = vpop.permute.xlu0 %4698
        %4700 = vrot.lane.b32.xlu0 %v645, 64
        %v4701 = vpop.permute.xlu0 %4700
        %4702 = vrot.lane.b32.xlu0 %v646, 64
        %v4703 = vpop.permute.xlu0 %4702
        %4704 = vrot.lane.b32.xlu0 %v647, 64
        %v4705 = vpop.permute.xlu0 %4704
        %4706 = vrot.lane.b32.xlu0 %v648, 64
        %v4707 = vpop.permute.xlu0 %4706
        %4708 = vrot.lane.b32.xlu0 %v649, 64
        %v4709 = vpop.permute.xlu0 %4708
        %4710 = vrot.lane.b32.xlu0 %v650, 64
        %v4711 = vpop.permute.xlu0 %4710
        %4712 = vrot.lane.b32.xlu0 %v651, 64
        %v4713 = vpop.permute.xlu0 %4712
        %4714 = vrot.lane.b32.xlu0 %v652, 64
        %v4715 = vpop.permute.xlu0 %4714
        %4716 = vrot.lane.b32.xlu0 %v653, 64
        %v4717 = vpop.permute.xlu0 %4716
        %4718 = vrot.lane.b32.xlu0 %v654, 64
        %v4719 = vpop.permute.xlu0 %4718
        %4720 = vrot.lane.b32.xlu0 %v655, 64
        %v4721 = vpop.permute.xlu0 %4720
        %4722 = vrot.lane.b32.xlu0 %v656, 64
        %v4723 = vpop.permute.xlu0 %4722
        %4724 = vrot.lane.b32.xlu0 %v657, 64
        %v4725 = vpop.permute.xlu0 %4724
        %4726 = vrot.lane.b32.xlu0 %v658, 64
        %v4727 = vpop.permute.xlu0 %4726
        %4728 = vrot.lane.b32.xlu0 %v659, 64
        %v4729 = vpop.permute.xlu0 %4728
        %4730 = vrot.lane.b32.xlu0 %v660, 64
        %v4731 = vpop.permute.xlu0 %4730
        %4732 = vrot.lane.b32.xlu0 %v661, 64
        %v4733 = vpop.permute.xlu0 %4732
        %4734 = vrot.lane.b32.xlu0 %v662, 64
        %v4735 = vpop.permute.xlu0 %4734
        %4736 = vrot.lane.b32.xlu0 %v663, 64
        %v4737 = vpop.permute.xlu0 %4736
        %4738 = vrot.lane.b32.xlu0 %v664, 64
        %v4739 = vpop.permute.xlu0 %4738
        %4740 = vrot.lane.b32.xlu0 %v665, 64
        %v4741 = vpop.permute.xlu0 %4740
        %4742 = vrot.lane.b32.xlu0 %v666, 64
        %v4743 = vpop.permute.xlu0 %4742
        %4744 = vrot.lane.b32.xlu0 %v667, 64
        %v4745 = vpop.permute.xlu0 %4744
        %4746 = vrot.lane.b32.xlu0 %v668, 64
        %v4747 = vpop.permute.xlu0 %4746
        %4748 = vrot.lane.b32.xlu0 %v669, 64
        %v4749 = vpop.permute.xlu0 %4748
        %4750 = vrot.lane.b32.xlu0 %v670, 64
        %v4751 = vpop.permute.xlu0 %4750
        %4752 = vrot.lane.b32.xlu0 %v671, 64
        %v4753 = vpop.permute.xlu0 %4752
        %4754 = vrot.lane.b32.xlu0 %v672, 64
        %v4755 = vpop.permute.xlu0 %4754
        %4756 = vrot.lane.b32.xlu0 %v673, 64
        %v4757 = vpop.permute.xlu0 %4756
        %4758 = vrot.lane.b32.xlu0 %v674, 64
        %v4759 = vpop.permute.xlu0 %4758
        %4760 = vrot.lane.b32.xlu0 %v675, 64
        %v4761 = vpop.permute.xlu0 %4760
        %4762 = vrot.lane.b32.xlu0 %v676, 64
        %v4763 = vpop.permute.xlu0 %4762
        %4764 = vrot.lane.b32.xlu0 %v677, 64
        %v4765 = vpop.permute.xlu0 %4764
        %4766 = vrot.lane.b32.xlu0 %v678, 64
        %v4767 = vpop.permute.xlu0 %4766
        %4768 = vrot.lane.b32.xlu0 %v679, 64
        %v4769 = vpop.permute.xlu0 %4768
        %4770 = vrot.lane.b32.xlu0 %v680, 64
        %v4771 = vpop.permute.xlu0 %4770
        %4772 = vrot.lane.b32.xlu0 %v681, 64
        %v4773 = vpop.permute.xlu0 %4772
        %4774 = vrot.lane.b32.xlu0 %v682, 64
        %v4775 = vpop.permute.xlu0 %4774
        %4776 = vrot.lane.b32.xlu0 %v683, 64
        %v4777 = vpop.permute.xlu0 %4776
        %4778 = vrot.lane.b32.xlu0 %v684, 64
        %v4779 = vpop.permute.xlu0 %4778
        %4780 = vrot.lane.b32.xlu0 %v685, 64
        %v4781 = vpop.permute.xlu0 %4780
        %4782 = vrot.lane.b32.xlu0 %v686, 64
        %v4783 = vpop.permute.xlu0 %4782
        %4784 = vrot.lane.b32.xlu0 %v687, 64
        %v4785 = vpop.permute.xlu0 %4784
        %4786 = vrot.lane.b32.xlu0 %v688, 64
        %v4787 = vpop.permute.xlu0 %4786
        %4788 = vrot.lane.b32.xlu0 %v689, 64
        %v4789 = vpop.permute.xlu0 %4788
        %4790 = vrot.lane.b32.xlu0 %v690, 64
        %v4791 = vpop.permute.xlu0 %4790
        %4792 = vrot.lane.b32.xlu0 %v691, 64
        %v4793 = vpop.permute.xlu0 %4792
        %4794 = vrot.lane.b32.xlu0 %v692, 64
        %v4795 = vpop.permute.xlu0 %4794
        %4796 = vrot.lane.b32.xlu0 %v693, 64
        %v4797 = vpop.permute.xlu0 %4796
        %4798 = vrot.lane.b32.xlu0 %v694, 64
        %v4799 = vpop.permute.xlu0 %4798
        %4800 = vrot.lane.b32.xlu0 %v695, 64
        %v4801 = vpop.permute.xlu0 %4800
        %4802 = vrot.lane.b32.xlu0 %v696, 64
        %v4803 = vpop.permute.xlu0 %4802
        %4804 = vrot.lane.b32.xlu0 %v697, 64
        %v4805 = vpop.permute.xlu0 %4804
        %4806 = vrot.lane.b32.xlu0 %v698, 64
        %v4807 = vpop.permute.xlu0 %4806
        %4808 = vrot.lane.b32.xlu0 %v699, 64
        %v4809 = vpop.permute.xlu0 %4808
        %4810 = vrot.lane.b32.xlu0 %v700, 64
        %v4811 = vpop.permute.xlu0 %4810
        %4812 = vrot.lane.b32.xlu0 %v701, 64
        %v4813 = vpop.permute.xlu0 %4812
        %4814 = vrot.lane.b32.xlu0 %v702, 64
        %v4815 = vpop.permute.xlu0 %4814
        %4816 = vrot.lane.b32.xlu0 %v703, 64
        %v4817 = vpop.permute.xlu0 %4816
        %4818 = vrot.lane.b32.xlu0 %v704, 64
        %v4819 = vpop.permute.xlu0 %4818
        %4820 = vrot.lane.b32.xlu0 %v705, 64
        %v4821 = vpop.permute.xlu0 %4820
        %4822 = vrot.lane.b32.xlu0 %v706, 64
        %v4823 = vpop.permute.xlu0 %4822
        %4824 = vrot.lane.b32.xlu0 %v707, 64
        %v4825 = vpop.permute.xlu0 %4824
        %4826 = vrot.lane.b32.xlu0 %v708, 64
        %v4827 = vpop.permute.xlu0 %4826
        %4828 = vrot.lane.b32.xlu0 %v709, 64
        %v4829 = vpop.permute.xlu0 %4828
        %4830 = vrot.lane.b32.xlu0 %v710, 64
        %v4831 = vpop.permute.xlu0 %4830
        %4832 = vrot.lane.b32.xlu0 %v711, 64
        %v4833 = vpop.permute.xlu0 %4832
        %4834 = vrot.lane.b32.xlu0 %v712, 64
        %v4835 = vpop.permute.xlu0 %4834
        %4836 = vrot.lane.b32.xlu0 %v713, 64
        %v4837 = vpop.permute.xlu0 %4836
        %4838 = vrot.lane.b32.xlu0 %v714, 64
        %v4839 = vpop.permute.xlu0 %4838
        %4840 = vrot.lane.b32.xlu0 %v715, 64
        %v4841 = vpop.permute.xlu0 %4840
        %4842 = vrot.lane.b32.xlu0 %v716, 64
        %v4843 = vpop.permute.xlu0 %4842
        %4844 = vrot.lane.b32.xlu0 %v717, 64
        %v4845 = vpop.permute.xlu0 %4844
        %4846 = vrot.lane.b32.xlu0 %v718, 64
        %v4847 = vpop.permute.xlu0 %4846
        %4848 = vrot.lane.b32.xlu0 %v719, 64
        %v4849 = vpop.permute.xlu0 %4848
        %4850 = vrot.lane.b32.xlu0 %v720, 64
        %v4851 = vpop.permute.xlu0 %4850
        %4852 = vrot.lane.b32.xlu0 %v721, 64
        %v4853 = vpop.permute.xlu0 %4852
        %4854 = vrot.lane.b32.xlu0 %v722, 64
        %v4855 = vpop.permute.xlu0 %4854
        %4856 = vrot.lane.b32.xlu0 %v723, 64
        %v4857 = vpop.permute.xlu0 %4856
        %4858 = vrot.lane.b32.xlu0 %v724, 64
        %v4859 = vpop.permute.xlu0 %4858
        %4860 = vrot.lane.b32.xlu0 %v725, 64
        %v4861 = vpop.permute.xlu0 %4860
        %4862 = vrot.lane.b32.xlu0 %v726, 64
        %v4863 = vpop.permute.xlu0 %4862
        %4864 = vrot.lane.b32.xlu0 %v727, 64
        %v4865 = vpop.permute.xlu0 %4864
        %4866 = vrot.lane.b32.xlu0 %v728, 64
        %v4867 = vpop.permute.xlu0 %4866
        %4868 = vrot.lane.b32.xlu0 %v729, 64
        %v4869 = vpop.permute.xlu0 %4868
        %4870 = vrot.lane.b32.xlu0 %v730, 64
        %v4871 = vpop.permute.xlu0 %4870
        %4872 = vrot.lane.b32.xlu0 %v731, 64
        %v4873 = vpop.permute.xlu0 %4872
        %4874 = vrot.lane.b32.xlu0 %v732, 64
        %v4875 = vpop.permute.xlu0 %4874
        %4876 = vrot.lane.b32.xlu0 %v733, 64
        %v4877 = vpop.permute.xlu0 %4876
        %4878 = vrot.lane.b32.xlu0 %v734, 64
        %v4879 = vpop.permute.xlu0 %4878
        %4880 = vrot.lane.b32.xlu0 %v735, 64
        %v4881 = vpop.permute.xlu0 %4880
        %4882 = vrot.lane.b32.xlu0 %v736, 64
        %v4883 = vpop.permute.xlu0 %4882
        %4884 = vrot.lane.b32.xlu0 %v737, 64
        %v4885 = vpop.permute.xlu0 %4884
        %4886 = vrot.lane.b32.xlu0 %v738, 64
        %v4887 = vpop.permute.xlu0 %4886
        %4888 = vrot.lane.b32.xlu0 %v739, 64
        %v4889 = vpop.permute.xlu0 %4888
        %4890 = vrot.lane.b32.xlu0 %v740, 64
        %v4891 = vpop.permute.xlu0 %4890
        %4892 = vrot.lane.b32.xlu0 %v741, 64
        %v4893 = vpop.permute.xlu0 %4892
        %4894 = vrot.lane.b32.xlu0 %v742, 64
        %v4895 = vpop.permute.xlu0 %4894
        %4896 = vrot.lane.b32.xlu0 %v743, 64
        %v4897 = vpop.permute.xlu0 %4896
        %4898 = vrot.lane.b32.xlu0 %v744, 64
        %v4899 = vpop.permute.xlu0 %4898
        %4900 = vrot.lane.b32.xlu0 %v745, 64
        %v4901 = vpop.permute.xlu0 %4900
        %4902 = vrot.lane.b32.xlu0 %v746, 64
        %v4903 = vpop.permute.xlu0 %4902
        %4904 = vrot.lane.b32.xlu0 %v747, 64
        %v4905 = vpop.permute.xlu0 %4904
        %4906 = vrot.lane.b32.xlu0 %v748, 64
        %v4907 = vpop.permute.xlu0 %4906
        %4908 = vrot.lane.b32.xlu0 %v749, 64
        %v4909 = vpop.permute.xlu0 %4908
        %4910 = vrot.lane.b32.xlu0 %v750, 64
        %v4911 = vpop.permute.xlu0 %4910
        %4912 = vrot.lane.b32.xlu0 %v751, 64
        %v4913 = vpop.permute.xlu0 %4912
        %4914 = vrot.lane.b32.xlu0 %v752, 64
        %v4915 = vpop.permute.xlu0 %4914
        %4916 = vrot.lane.b32.xlu0 %v753, 64
        %v4917 = vpop.permute.xlu0 %4916
        %4918 = vrot.lane.b32.xlu0 %v754, 64
        %v4919 = vpop.permute.xlu0 %4918
        %4920 = vrot.lane.b32.xlu0 %v755, 64
        %v4921 = vpop.permute.xlu0 %4920
        %4922 = vrot.lane.b32.xlu0 %v756, 64
        %v4923 = vpop.permute.xlu0 %4922
        %4924 = vrot.lane.b32.xlu0 %v757, 64
        %v4925 = vpop.permute.xlu0 %4924
        %4926 = vrot.lane.b32.xlu0 %v758, 64
        %v4927 = vpop.permute.xlu0 %4926
        %4928 = vrot.lane.b32.xlu0 %v759, 64
        %v4929 = vpop.permute.xlu0 %4928
        %4930 = vrot.lane.b32.xlu0 %v760, 64
        %v4931 = vpop.permute.xlu0 %4930
        %4932 = vrot.lane.b32.xlu0 %v761, 64
        %v4933 = vpop.permute.xlu0 %4932
        %4934 = vrot.lane.b32.xlu0 %v762, 64
        %v4935 = vpop.permute.xlu0 %4934
        %4936 = vrot.lane.b32.xlu0 %v763, 64
        %v4937 = vpop.permute.xlu0 %4936
        %4938 = vrot.lane.b32.xlu0 %v764, 64
        %v4939 = vpop.permute.xlu0 %4938
        %4940 = vrot.lane.b32.xlu0 %v765, 64
        %v4941 = vpop.permute.xlu0 %4940
        %4942 = vrot.lane.b32.xlu0 %v766, 64
        %v4943 = vpop.permute.xlu0 %4942
        %4944 = vrot.lane.b32.xlu0 %v767, 64
        %v4945 = vpop.permute.xlu0 %4944
        %4946 = vrot.lane.b32.xlu0 %v768, 64
        %v4947 = vpop.permute.xlu0 %4946
        %4948 = vrot.lane.b32.xlu0 %v769, 64
        %v4949 = vpop.permute.xlu0 %4948
        %4950 = vrot.lane.b32.xlu0 %v770, 64
        %v4951 = vpop.permute.xlu0 %4950
        %4952 = vrot.lane.b32.xlu0 %v771, 64
        %v4953 = vpop.permute.xlu0 %4952
        %4954 = vrot.lane.b32.xlu0 %v772, 64
        %v4955 = vpop.permute.xlu0 %4954
        %4956 = vrot.lane.b32.xlu0 %v773, 64
        %v4957 = vpop.permute.xlu0 %4956
        %4958 = vrot.lane.b32.xlu0 %v774, 64
        %v4959 = vpop.permute.xlu0 %4958
        %4960 = vrot.lane.b32.xlu0 %v775, 64
        %v4961 = vpop.permute.xlu0 %4960
        %4962 = vrot.lane.b32.xlu0 %v776, 64
        %v4963 = vpop.permute.xlu0 %4962
        %4964 = vrot.lane.b32.xlu0 %v777, 64
        %v4965 = vpop.permute.xlu0 %4964
        %4966 = vrot.lane.b32.xlu0 %v778, 64
        %v4967 = vpop.permute.xlu0 %4966
        %4968 = vrot.lane.b32.xlu0 %v779, 64
        %v4969 = vpop.permute.xlu0 %4968
        %4970 = vrot.lane.b32.xlu0 %v780, 64
        %v4971 = vpop.permute.xlu0 %4970
        %4972 = vrot.lane.b32.xlu0 %v781, 64
        %v4973 = vpop.permute.xlu0 %4972
        %4974 = vrot.lane.b32.xlu0 %v782, 64
        %v4975 = vpop.permute.xlu0 %4974
        %4976 = vrot.lane.b32.xlu0 %v783, 64
        %v4977 = vpop.permute.xlu0 %4976
        %4978 = vrot.lane.b32.xlu0 %v784, 64
        %v4979 = vpop.permute.xlu0 %4978
        %4980 = vrot.lane.b32.xlu0 %v785, 64
        %v4981 = vpop.permute.xlu0 %4980
        %4982 = vrot.lane.b32.xlu0 %v786, 64
        %v4983 = vpop.permute.xlu0 %4982
        %4984 = vrot.lane.b32.xlu0 %v787, 64
        %v4985 = vpop.permute.xlu0 %4984
        %4986 = vrot.lane.b32.xlu0 %v788, 64
        %v4987 = vpop.permute.xlu0 %4986
        %4988 = vrot.lane.b32.xlu0 %v789, 64
        %v4989 = vpop.permute.xlu0 %4988
        %4990 = vrot.lane.b32.xlu0 %v790, 64
        %v4991 = vpop.permute.xlu0 %4990
        %4992 = vrot.lane.b32.xlu0 %v791, 64
        %v4993 = vpop.permute.xlu0 %4992
        %4994 = vrot.lane.b32.xlu0 %v792, 64
        %v4995 = vpop.permute.xlu0 %4994
        %4996 = vrot.lane.b32.xlu0 %v793, 64
        %v4997 = vpop.permute.xlu0 %4996
        %4998 = vrot.lane.b32.xlu0 %v794, 64
        %v4999 = vpop.permute.xlu0 %4998
        %5000 = vrot.lane.b32.xlu0 %v795, 64
        %v5001 = vpop.permute.xlu0 %5000
        %5002 = vrot.lane.b32.xlu0 %v796, 64
        %v5003 = vpop.permute.xlu0 %5002
        %5004 = vrot.lane.b32.xlu0 %v797, 64
        %v5005 = vpop.permute.xlu0 %5004
        %5006 = vrot.lane.b32.xlu0 %v798, 64
        %v5007 = vpop.permute.xlu0 %5006
        %5008 = vrot.lane.b32.xlu0 %v799, 64
        %v5009 = vpop.permute.xlu0 %5008
        %5010 = vrot.lane.b32.xlu0 %v800, 64
        %v5011 = vpop.permute.xlu0 %5010
        %5012 = vrot.lane.b32.xlu0 %v801, 64
        %v5013 = vpop.permute.xlu0 %5012
        %5014 = vrot.lane.b32.xlu0 %v802, 64
        %v5015 = vpop.permute.xlu0 %5014
        %5016 = vrot.lane.b32.xlu0 %v803, 64
        %v5017 = vpop.permute.xlu0 %5016
        %5018 = vrot.lane.b32.xlu0 %v804, 64
        %v5019 = vpop.permute.xlu0 %5018
        %5020 = vrot.lane.b32.xlu0 %v805, 64
        %v5021 = vpop.permute.xlu0 %5020
        %5022 = vrot.lane.b32.xlu0 %v806, 64
        %v5023 = vpop.permute.xlu0 %5022
        %5024 = vrot.lane.b32.xlu0 %v807, 64
        %v5025 = vpop.permute.xlu0 %5024
        %5026 = vrot.lane.b32.xlu0 %v808, 64
        %v5027 = vpop.permute.xlu0 %5026
        %5028 = vrot.lane.b32.xlu0 %v809, 64
        %v5029 = vpop.permute.xlu0 %5028
        %5030 = vrot.lane.b32.xlu0 %v810, 64
        %v5031 = vpop.permute.xlu0 %5030
        %5032 = vrot.lane.b32.xlu0 %v811, 64
        %v5033 = vpop.permute.xlu0 %5032
        %5034 = vrot.lane.b32.xlu0 %v812, 64
        %v5035 = vpop.permute.xlu0 %5034
        %5036 = vrot.lane.b32.xlu0 %v813, 64
        %v5037 = vpop.permute.xlu0 %5036
        %5038 = vrot.lane.b32.xlu0 %v814, 64
        %v5039 = vpop.permute.xlu0 %5038
        %5040 = vrot.lane.b32.xlu0 %v815, 64
        %v5041 = vpop.permute.xlu0 %5040
        %5042 = vrot.lane.b32.xlu0 %v816, 64
        %v5043 = vpop.permute.xlu0 %5042
        %5044 = vrot.lane.b32.xlu0 %v817, 64
        %v5045 = vpop.permute.xlu0 %5044
        %5046 = vrot.lane.b32.xlu0 %v818, 64
        %v5047 = vpop.permute.xlu0 %5046
        %5048 = vrot.lane.b32.xlu0 %v819, 64
        %v5049 = vpop.permute.xlu0 %5048
        %5050 = vrot.lane.b32.xlu0 %v820, 64
        %v5051 = vpop.permute.xlu0 %5050
        %5052 = vrot.lane.b32.xlu0 %v821, 64
        %v5053 = vpop.permute.xlu0 %5052
        %5054 = vrot.lane.b32.xlu0 %v822, 64
        %v5055 = vpop.permute.xlu0 %5054
        %5056 = vrot.lane.b32.xlu0 %v823, 64
        %v5057 = vpop.permute.xlu0 %5056
        %5058 = vrot.lane.b32.xlu0 %v824, 64
        %v5059 = vpop.permute.xlu0 %5058
        %5060 = vrot.lane.b32.xlu0 %v825, 64
        %v5061 = vpop.permute.xlu0 %5060
        %5062 = vrot.lane.b32.xlu0 %v826, 64
        %v5063 = vpop.permute.xlu0 %5062
        %5064 = vrot.lane.b32.xlu0 %v827, 64
        %v5065 = vpop.permute.xlu0 %5064
        %5066 = vrot.lane.b32.xlu0 %v828, 64
        %v5067 = vpop.permute.xlu0 %5066
        %5068 = vrot.lane.b32.xlu0 %v829, 64
        %v5069 = vpop.permute.xlu0 %5068
        %5070 = vrot.lane.b32.xlu0 %v830, 64
        %v5071 = vpop.permute.xlu0 %5070
        %5072 = vrot.lane.b32.xlu0 %v831, 64
        %v5073 = vpop.permute.xlu0 %5072
        %5074 = vrot.lane.b32.xlu0 %v832, 64
        %v5075 = vpop.permute.xlu0 %5074
        %5076 = vrot.lane.b32.xlu0 %v833, 64
        %v5077 = vpop.permute.xlu0 %5076
        %5078 = vrot.lane.b32.xlu0 %v834, 64
        %v5079 = vpop.permute.xlu0 %5078
        %5080 = vrot.lane.b32.xlu0 %v835, 64
        %v5081 = vpop.permute.xlu0 %5080
        %5082 = vrot.lane.b32.xlu0 %v836, 64
        %v5083 = vpop.permute.xlu0 %5082
        %5084 = vrot.lane.b32.xlu0 %v837, 64
        %v5085 = vpop.permute.xlu0 %5084
        %5086 = vrot.lane.b32.xlu0 %v838, 64
        %v5087 = vpop.permute.xlu0 %5086
        %5088 = vrot.lane.b32.xlu0 %v839, 64
        %v5089 = vpop.permute.xlu0 %5088
        %5090 = vrot.lane.b32.xlu0 %v840, 64
        %v5091 = vpop.permute.xlu0 %5090
        %5092 = vrot.lane.b32.xlu0 %v841, 64
        %v5093 = vpop.permute.xlu0 %5092
        %5094 = vrot.lane.b32.xlu0 %v842, 64
        %v5095 = vpop.permute.xlu0 %5094
        %5096 = vrot.lane.b32.xlu0 %v843, 64
        %v5097 = vpop.permute.xlu0 %5096
        %5098 = vrot.lane.b32.xlu0 %v844, 64
        %v5099 = vpop.permute.xlu0 %5098
        %5100 = vrot.lane.b32.xlu0 %v845, 64
        %v5101 = vpop.permute.xlu0 %5100
        %5102 = vrot.lane.b32.xlu0 %v846, 64
        %v5103 = vpop.permute.xlu0 %5102
        %5104 = vrot.lane.b32.xlu0 %v847, 64
        %v5105 = vpop.permute.xlu0 %5104
        %5106 = vrot.lane.b32.xlu0 %v848, 64
        %v5107 = vpop.permute.xlu0 %5106
        %5108 = vrot.lane.b32.xlu0 %v849, 64
        %v5109 = vpop.permute.xlu0 %5108
        %5110 = vrot.lane.b32.xlu0 %v850, 64
        %v5111 = vpop.permute.xlu0 %5110
        %5112 = vrot.lane.b32.xlu0 %v851, 64
        %v5113 = vpop.permute.xlu0 %5112
        %5114 = vrot.lane.b32.xlu0 %v852, 64
        %v5115 = vpop.permute.xlu0 %5114
        %5116 = vrot.lane.b32.xlu0 %v853, 64
        %v5117 = vpop.permute.xlu0 %5116
        %5118 = vrot.lane.b32.xlu0 %v854, 64
        %v5119 = vpop.permute.xlu0 %5118
        %5120 = vrot.lane.b32.xlu0 %v855, 64
        %v5121 = vpop.permute.xlu0 %5120
        %5122 = vrot.lane.b32.xlu0 %v856, 64
        %v5123 = vpop.permute.xlu0 %5122
        %5124 = vrot.lane.b32.xlu0 %v857, 64
        %v5125 = vpop.permute.xlu0 %5124
        %5126 = vrot.lane.b32.xlu0 %v858, 64
        %v5127 = vpop.permute.xlu0 %5126
        %5128 = vrot.lane.b32.xlu0 %v859, 64
        %v5129 = vpop.permute.xlu0 %5128
        %5130 = vrot.lane.b32.xlu0 %v860, 64
        %v5131 = vpop.permute.xlu0 %5130
        %5132 = vrot.lane.b32.xlu0 %v861, 64
        %v5133 = vpop.permute.xlu0 %5132
        %5134 = vrot.lane.b32.xlu0 %v862, 64
        %v5135 = vpop.permute.xlu0 %5134
        %5136 = vrot.lane.b32.xlu0 %v863, 64
        %v5137 = vpop.permute.xlu0 %5136
        %5138 = vrot.lane.b32.xlu0 %v864, 64
        %v5139 = vpop.permute.xlu0 %5138
        %5140 = vrot.lane.b32.xlu0 %v865, 64
        %v5141 = vpop.permute.xlu0 %5140
        %5142 = vrot.lane.b32.xlu0 %v866, 64
        %v5143 = vpop.permute.xlu0 %5142
        %5144 = vrot.lane.b32.xlu0 %v867, 64
        %v5145 = vpop.permute.xlu0 %5144
        %5146 = vrot.lane.b32.xlu0 %v868, 64
        %v5147 = vpop.permute.xlu0 %5146
        %5148 = vrot.lane.b32.xlu0 %v869, 64
        %v5149 = vpop.permute.xlu0 %5148
        %5150 = vrot.lane.b32.xlu0 %v870, 64
        %v5151 = vpop.permute.xlu0 %5150
        %5152 = vrot.lane.b32.xlu0 %v871, 64
        %v5153 = vpop.permute.xlu0 %5152
        %5154 = vrot.lane.b32.xlu0 %v872, 64
        %v5155 = vpop.permute.xlu0 %5154
        %5156 = vrot.lane.b32.xlu0 %v873, 64
        %v5157 = vpop.permute.xlu0 %5156
        %5158 = vrot.lane.b32.xlu0 %v874, 64
        %v5159 = vpop.permute.xlu0 %5158
        %5160 = vrot.lane.b32.xlu0 %v875, 64
        %v5161 = vpop.permute.xlu0 %5160
        %5162 = vrot.lane.b32.xlu0 %v876, 64
        %v5163 = vpop.permute.xlu0 %5162
        %5164 = vrot.lane.b32.xlu0 %v877, 64
        %v5165 = vpop.permute.xlu0 %5164
        %v5166 = vlaneseq
        %v5167 = vshrl.u32 %v5166, 7
        %v5168 = vsub.s32 0, %v5167
        %v5169 = vrot.slane %v965, %v5168
        %v5170 = vlaneseq
        %v5171 = vshrl.u32 %v5170, 7
        %v5172 = vsub.s32 0, %v5171
        %v5173 = vrot.slane %v979, %v5172
        %v5174 = vlaneseq
        %v5175 = vshrl.u32 %v5174, 7
        %v5176 = vsub.s32 0, %v5175
        %v5177 = vrot.slane %v987, %v5176
        %v5178 = vlaneseq
        %v5179 = vshrl.u32 %v5178, 7
        %v5180 = vsub.s32 0, %v5179
        %v5181 = vrot.slane %v989, %v5180
        %v5182 = vlaneseq
        %v5183 = vshrl.u32 %v5182, 7
        %v5184 = vsub.s32 0, %v5183
        %v5185 = vrot.slane %v972, %v5184
        %v5186 = vlaneseq
        %v5187 = vshrl.u32 %v5186, 7
        %v5188 = vsub.s32 0, %v5187
        %v5189 = vrot.slane %v986, %v5188
        %v5190 = vlaneseq
        %v5191 = vshrl.u32 %v5190, 7
        %v5192 = vsub.s32 0, %v5191
        %v5193 = vrot.slane %v988, %v5192
        %v5194 = vlaneseq
        %v5195 = vshrl.u32 %v5194, 7
        %v5196 = vsub.s32 0, %v5195
        %v5197 = vrot.slane %v990, %v5196
        %v5198 = vlaneseq
        %v5199 = vshrl.u32 %v5198, 7
        %v5200 = vsub.s32 0, %v5199
        %v5201 = vrot.slane %v1014, %v5200
        %v5202 = vlaneseq
        %v5203 = vshrl.u32 %v5202, 7
        %v5204 = vsub.s32 0, %v5203
        %v5205 = vrot.slane %v1028, %v5204
        %v5206 = vlaneseq
        %v5207 = vshrl.u32 %v5206, 7
        %v5208 = vsub.s32 0, %v5207
        %v5209 = vrot.slane %v1036, %v5208
        %v5210 = vlaneseq
        %v5211 = vshrl.u32 %v5210, 7
        %v5212 = vsub.s32 0, %v5211
        %v5213 = vrot.slane %v1038, %v5212
        %v5214 = vlaneseq
        %v5215 = vshrl.u32 %v5214, 7
        %v5216 = vsub.s32 0, %v5215
        %v5217 = vrot.slane %v1021, %v5216
        %v5218 = vlaneseq
        %v5219 = vshrl.u32 %v5218, 7
        %v5220 = vsub.s32 0, %v5219
        %v5221 = vrot.slane %v1035, %v5220
        %v5222 = vlaneseq
        %v5223 = vshrl.u32 %v5222, 7
        %v5224 = vsub.s32 0, %v5223
        %v5225 = vrot.slane %v1037, %v5224
        %v5226 = vlaneseq
        %v5227 = vshrl.u32 %v5226, 7
        %v5228 = vsub.s32 0, %v5227
        %v5229 = vrot.slane %v1039, %v5228
        %v5230 = vlaneseq
        %v5231 = vshrl.u32 %v5230, 7
        %v5232 = vsub.s32 0, %v5231
        %v5233 = vrot.slane %v1063, %v5232
        %v5234 = vlaneseq
        %v5235 = vshrl.u32 %v5234, 7
        %v5236 = vsub.s32 0, %v5235
        %v5237 = vrot.slane %v1077, %v5236
        %v5238 = vlaneseq
        %v5239 = vshrl.u32 %v5238, 7
        %v5240 = vsub.s32 0, %v5239
        %v5241 = vrot.slane %v1085, %v5240
        %v5242 = vlaneseq
        %v5243 = vshrl.u32 %v5242, 7
        %v5244 = vsub.s32 0, %v5243
        %v5245 = vrot.slane %v1087, %v5244
        %v5246 = vlaneseq
        %v5247 = vshrl.u32 %v5246, 7
        %v5248 = vsub.s32 0, %v5247
        %v5249 = vrot.slane %v1070, %v5248
        %v5250 = vlaneseq
        %v5251 = vshrl.u32 %v5250, 7
        %v5252 = vsub.s32 0, %v5251
        %v5253 = vrot.slane %v1084, %v5252
        %v5254 = vlaneseq
        %v5255 = vshrl.u32 %v5254, 7
        %v5256 = vsub.s32 0, %v5255
        %v5257 = vrot.slane %v1086, %v5256
        %v5258 = vlaneseq
        %v5259 = vshrl.u32 %v5258, 7
        %v5260 = vsub.s32 0, %v5259
        %v5261 = vrot.slane %v1088, %v5260
        %v5262 = vlaneseq
        %v5263 = vshrl.u32 %v5262, 7
        %v5264 = vsub.s32 0, %v5263
        %v5265 = vrot.slane %v1112, %v5264
        %v5266 = vlaneseq
        %v5267 = vshrl.u32 %v5266, 7
        %v5268 = vsub.s32 0, %v5267
        %v5269 = vrot.slane %v1126, %v5268
        %v5270 = vlaneseq
        %v5271 = vshrl.u32 %v5270, 7
        %v5272 = vsub.s32 0, %v5271
        %v5273 = vrot.slane %v1134, %v5272
        %v5274 = vlaneseq
        %v5275 = vshrl.u32 %v5274, 7
        %v5276 = vsub.s32 0, %v5275
        %v5277 = vrot.slane %v1136, %v5276
        %v5278 = vlaneseq
        %v5279 = vshrl.u32 %v5278, 7
        %v5280 = vsub.s32 0, %v5279
        %v5281 = vrot.slane %v1119, %v5280
        %v5282 = vlaneseq
        %v5283 = vshrl.u32 %v5282, 7
        %v5284 = vsub.s32 0, %v5283
        %v5285 = vrot.slane %v1133, %v5284
        %v5286 = vlaneseq
        %v5287 = vshrl.u32 %v5286, 7
        %v5288 = vsub.s32 0, %v5287
        %v5289 = vrot.slane %v1135, %v5288
        %v5290 = vlaneseq
        %v5291 = vshrl.u32 %v5290, 7
        %v5292 = vsub.s32 0, %v5291
        %v5293 = vrot.slane %v1137, %v5292
        %v5294 = vlaneseq
        %v5295 = vshrl.u32 %v5294, 7
        %v5296 = vsub.s32 0, %v5295
        %v5297 = vrot.slane %v1161, %v5296
        %v5298 = vlaneseq
        %v5299 = vshrl.u32 %v5298, 7
        %v5300 = vsub.s32 0, %v5299
        %v5301 = vrot.slane %v1175, %v5300
        %v5302 = vlaneseq
        %v5303 = vshrl.u32 %v5302, 7
        %v5304 = vsub.s32 0, %v5303
        %v5305 = vrot.slane %v1183, %v5304
        %v5306 = vlaneseq
        %v5307 = vshrl.u32 %v5306, 7
        %v5308 = vsub.s32 0, %v5307
        %v5309 = vrot.slane %v1185, %v5308
        %v5310 = vlaneseq
        %v5311 = vshrl.u32 %v5310, 7
        %v5312 = vsub.s32 0, %v5311
        %v5313 = vrot.slane %v1168, %v5312
        %v5314 = vlaneseq
        %v5315 = vshrl.u32 %v5314, 7
        %v5316 = vsub.s32 0, %v5315
        %v5317 = vrot.slane %v1182, %v5316
        %v5318 = vlaneseq
        %v5319 = vshrl.u32 %v5318, 7
        %v5320 = vsub.s32 0, %v5319
        %v5321 = vrot.slane %v1184, %v5320
        %v5322 = vlaneseq
        %v5323 = vshrl.u32 %v5322, 7
        %v5324 = vsub.s32 0, %v5323
        %v5325 = vrot.slane %v1186, %v5324
        %v5326 = vlaneseq
        %v5327 = vshrl.u32 %v5326, 7
        %v5328 = vsub.s32 0, %v5327
        %v5329 = vrot.slane %v1210, %v5328
        %v5330 = vlaneseq
        %v5331 = vshrl.u32 %v5330, 7
        %v5332 = vsub.s32 0, %v5331
        %v5333 = vrot.slane %v1224, %v5332
        %v5334 = vlaneseq
        %v5335 = vshrl.u32 %v5334, 7
        %v5336 = vsub.s32 0, %v5335
        %v5337 = vrot.slane %v1232, %v5336
        %v5338 = vlaneseq
        %v5339 = vshrl.u32 %v5338, 7
        %v5340 = vsub.s32 0, %v5339
        %v5341 = vrot.slane %v1234, %v5340
        %v5342 = vlaneseq
        %v5343 = vshrl.u32 %v5342, 7
        %v5344 = vsub.s32 0, %v5343
        %v5345 = vrot.slane %v1217, %v5344
        %v5346 = vlaneseq
        %v5347 = vshrl.u32 %v5346, 7
        %v5348 = vsub.s32 0, %v5347
        %v5349 = vrot.slane %v1231, %v5348
        %v5350 = vlaneseq
        %v5351 = vshrl.u32 %v5350, 7
        %v5352 = vsub.s32 0, %v5351
        %v5353 = vrot.slane %v1233, %v5352
        %v5354 = vlaneseq
        %v5355 = vshrl.u32 %v5354, 7
        %v5356 = vsub.s32 0, %v5355
        %v5357 = vrot.slane %v1235, %v5356
        %v5358 = vlaneseq
        %v5359 = vshrl.u32 %v5358, 7
        %v5360 = vsub.s32 0, %v5359
        %v5361 = vrot.slane %v1259, %v5360
        %v5362 = vlaneseq
        %v5363 = vshrl.u32 %v5362, 7
        %v5364 = vsub.s32 0, %v5363
        %v5365 = vrot.slane %v1273, %v5364
        %v5366 = vlaneseq
        %v5367 = vshrl.u32 %v5366, 7
        %v5368 = vsub.s32 0, %v5367
        %v5369 = vrot.slane %v1281, %v5368
        %v5370 = vlaneseq
        %v5371 = vshrl.u32 %v5370, 7
        %v5372 = vsub.s32 0, %v5371
        %v5373 = vrot.slane %v1283, %v5372
        %v5374 = vlaneseq
        %v5375 = vshrl.u32 %v5374, 7
        %v5376 = vsub.s32 0, %v5375
        %v5377 = vrot.slane %v1266, %v5376
        %v5378 = vlaneseq
        %v5379 = vshrl.u32 %v5378, 7
        %v5380 = vsub.s32 0, %v5379
        %v5381 = vrot.slane %v1280, %v5380
        %v5382 = vlaneseq
        %v5383 = vshrl.u32 %v5382, 7
        %v5384 = vsub.s32 0, %v5383
        %v5385 = vrot.slane %v1282, %v5384
        %v5386 = vlaneseq
        %v5387 = vshrl.u32 %v5386, 7
        %v5388 = vsub.s32 0, %v5387
        %v5389 = vrot.slane %v1284, %v5388
        %v5390 = vlaneseq
        %v5391 = vshrl.u32 %v5390, 7
        %v5392 = vsub.s32 0, %v5391
        %v5393 = vrot.slane %v1308, %v5392
        %v5394 = vlaneseq
        %v5395 = vshrl.u32 %v5394, 7
        %v5396 = vsub.s32 0, %v5395
        %v5397 = vrot.slane %v1322, %v5396
        %v5398 = vlaneseq
        %v5399 = vshrl.u32 %v5398, 7
        %v5400 = vsub.s32 0, %v5399
        %v5401 = vrot.slane %v1330, %v5400
        %v5402 = vlaneseq
        %v5403 = vshrl.u32 %v5402, 7
        %v5404 = vsub.s32 0, %v5403
        %v5405 = vrot.slane %v1332, %v5404
        %v5406 = vlaneseq
        %v5407 = vshrl.u32 %v5406, 7
        %v5408 = vsub.s32 0, %v5407
        %v5409 = vrot.slane %v1315, %v5408
        %v5410 = vlaneseq
        %v5411 = vshrl.u32 %v5410, 7
        %v5412 = vsub.s32 0, %v5411
        %v5413 = vrot.slane %v1329, %v5412
        %v5414 = vlaneseq
        %v5415 = vshrl.u32 %v5414, 7
        %v5416 = vsub.s32 0, %v5415
        %v5417 = vrot.slane %v1331, %v5416
        %v5418 = vlaneseq
        %v5419 = vshrl.u32 %v5418, 7
        %v5420 = vsub.s32 0, %v5419
        %v5421 = vrot.slane %v1333, %v5420
        %v5422 = vlaneseq
        %v5423 = vshrl.u32 %v5422, 7
        %v5424 = vsub.s32 0, %v5423
        %v5425 = vrot.slane %v1357, %v5424
        %v5426 = vlaneseq
        %v5427 = vshrl.u32 %v5426, 7
        %v5428 = vsub.s32 0, %v5427
        %v5429 = vrot.slane %v1371, %v5428
        %v5430 = vlaneseq
        %v5431 = vshrl.u32 %v5430, 7
        %v5432 = vsub.s32 0, %v5431
        %v5433 = vrot.slane %v1379, %v5432
        %v5434 = vlaneseq
        %v5435 = vshrl.u32 %v5434, 7
        %v5436 = vsub.s32 0, %v5435
        %v5437 = vrot.slane %v1381, %v5436
        %v5438 = vlaneseq
        %v5439 = vshrl.u32 %v5438, 7
        %v5440 = vsub.s32 0, %v5439
        %v5441 = vrot.slane %v1364, %v5440
        %v5442 = vlaneseq
        %v5443 = vshrl.u32 %v5442, 7
        %v5444 = vsub.s32 0, %v5443
        %v5445 = vrot.slane %v1378, %v5444
        %v5446 = vlaneseq
        %v5447 = vshrl.u32 %v5446, 7
        %v5448 = vsub.s32 0, %v5447
        %v5449 = vrot.slane %v1380, %v5448
        %v5450 = vlaneseq
        %v5451 = vshrl.u32 %v5450, 7
        %v5452 = vsub.s32 0, %v5451
        %v5453 = vrot.slane %v1382, %v5452
        %v5454 = vlaneseq
        %v5455 = vshrl.u32 %v5454, 7
        %v5456 = vsub.s32 0, %v5455
        %v5457 = vrot.slane %v1406, %v5456
        %v5458 = vlaneseq
        %v5459 = vshrl.u32 %v5458, 7
        %v5460 = vsub.s32 0, %v5459
        %v5461 = vrot.slane %v1420, %v5460
        %v5462 = vlaneseq
        %v5463 = vshrl.u32 %v5462, 7
        %v5464 = vsub.s32 0, %v5463
        %v5465 = vrot.slane %v1428, %v5464
        %v5466 = vlaneseq
        %v5467 = vshrl.u32 %v5466, 7
        %v5468 = vsub.s32 0, %v5467
        %v5469 = vrot.slane %v1430, %v5468
        %v5470 = vlaneseq
        %v5471 = vshrl.u32 %v5470, 7
        %v5472 = vsub.s32 0, %v5471
        %v5473 = vrot.slane %v1413, %v5472
        %v5474 = vlaneseq
        %v5475 = vshrl.u32 %v5474, 7
        %v5476 = vsub.s32 0, %v5475
        %v5477 = vrot.slane %v1427, %v5476
        %v5478 = vlaneseq
        %v5479 = vshrl.u32 %v5478, 7
        %v5480 = vsub.s32 0, %v5479
        %v5481 = vrot.slane %v1429, %v5480
        %v5482 = vlaneseq
        %v5483 = vshrl.u32 %v5482, 7
        %v5484 = vsub.s32 0, %v5483
        %v5485 = vrot.slane %v1431, %v5484
        %v5486 = vlaneseq
        %v5487 = vshrl.u32 %v5486, 7
        %v5488 = vsub.s32 0, %v5487
        %v5489 = vrot.slane %v1455, %v5488
        %v5490 = vlaneseq
        %v5491 = vshrl.u32 %v5490, 7
        %v5492 = vsub.s32 0, %v5491
        %v5493 = vrot.slane %v1469, %v5492
        %v5494 = vlaneseq
        %v5495 = vshrl.u32 %v5494, 7
        %v5496 = vsub.s32 0, %v5495
        %v5497 = vrot.slane %v1477, %v5496
        %v5498 = vlaneseq
        %v5499 = vshrl.u32 %v5498, 7
        %v5500 = vsub.s32 0, %v5499
        %v5501 = vrot.slane %v1479, %v5500
        %v5502 = vlaneseq
        %v5503 = vshrl.u32 %v5502, 7
        %v5504 = vsub.s32 0, %v5503
        %v5505 = vrot.slane %v1462, %v5504
        %v5506 = vlaneseq
        %v5507 = vshrl.u32 %v5506, 7
        %v5508 = vsub.s32 0, %v5507
        %v5509 = vrot.slane %v1476, %v5508
        %v5510 = vlaneseq
        %v5511 = vshrl.u32 %v5510, 7
        %v5512 = vsub.s32 0, %v5511
        %v5513 = vrot.slane %v1478, %v5512
        %v5514 = vlaneseq
        %v5515 = vshrl.u32 %v5514, 7
        %v5516 = vsub.s32 0, %v5515
        %v5517 = vrot.slane %v1480, %v5516
        %v5518 = vlaneseq
        %v5519 = vshrl.u32 %v5518, 7
        %v5520 = vsub.s32 0, %v5519
        %v5521 = vrot.slane %v1504, %v5520
        %v5522 = vlaneseq
        %v5523 = vshrl.u32 %v5522, 7
        %v5524 = vsub.s32 0, %v5523
        %v5525 = vrot.slane %v1518, %v5524
        %v5526 = vlaneseq
        %v5527 = vshrl.u32 %v5526, 7
        %v5528 = vsub.s32 0, %v5527
        %v5529 = vrot.slane %v1526, %v5528
        %v5530 = vlaneseq
        %v5531 = vshrl.u32 %v5530, 7
        %v5532 = vsub.s32 0, %v5531
        %v5533 = vrot.slane %v1528, %v5532
        %v5534 = vlaneseq
        %v5535 = vshrl.u32 %v5534, 7
        %v5536 = vsub.s32 0, %v5535
        %v5537 = vrot.slane %v1511, %v5536
        %v5538 = vlaneseq
        %v5539 = vshrl.u32 %v5538, 7
        %v5540 = vsub.s32 0, %v5539
        %v5541 = vrot.slane %v1525, %v5540
        %v5542 = vlaneseq
        %v5543 = vshrl.u32 %v5542, 7
        %v5544 = vsub.s32 0, %v5543
        %v5545 = vrot.slane %v1527, %v5544
        %v5546 = vlaneseq
        %v5547 = vshrl.u32 %v5546, 7
        %v5548 = vsub.s32 0, %v5547
        %v5549 = vrot.slane %v1529, %v5548
        %v5550 = vlaneseq
        %v5551 = vshrl.u32 %v5550, 7
        %v5552 = vsub.s32 0, %v5551
        %v5553 = vrot.slane %v1553, %v5552
        %v5554 = vlaneseq
        %v5555 = vshrl.u32 %v5554, 7
        %v5556 = vsub.s32 0, %v5555
        %v5557 = vrot.slane %v1567, %v5556
        %v5558 = vlaneseq
        %v5559 = vshrl.u32 %v5558, 7
        %v5560 = vsub.s32 0, %v5559
        %v5561 = vrot.slane %v1575, %v5560
        %v5562 = vlaneseq
        %v5563 = vshrl.u32 %v5562, 7
        %v5564 = vsub.s32 0, %v5563
        %v5565 = vrot.slane %v1577, %v5564
        %v5566 = vlaneseq
        %v5567 = vshrl.u32 %v5566, 7
        %v5568 = vsub.s32 0, %v5567
        %v5569 = vrot.slane %v1560, %v5568
        %v5570 = vlaneseq
        %v5571 = vshrl.u32 %v5570, 7
        %v5572 = vsub.s32 0, %v5571
        %v5573 = vrot.slane %v1574, %v5572
        %v5574 = vlaneseq
        %v5575 = vshrl.u32 %v5574, 7
        %v5576 = vsub.s32 0, %v5575
        %v5577 = vrot.slane %v1576, %v5576
        %v5578 = vlaneseq
        %v5579 = vshrl.u32 %v5578, 7
        %v5580 = vsub.s32 0, %v5579
        %v5581 = vrot.slane %v1578, %v5580
        %v5582 = vlaneseq
        %v5583 = vshrl.u32 %v5582, 7
        %v5584 = vsub.s32 0, %v5583
        %v5585 = vrot.slane %v1602, %v5584
        %v5586 = vlaneseq
        %v5587 = vshrl.u32 %v5586, 7
        %v5588 = vsub.s32 0, %v5587
        %v5589 = vrot.slane %v1616, %v5588
        %v5590 = vlaneseq
        %v5591 = vshrl.u32 %v5590, 7
        %v5592 = vsub.s32 0, %v5591
        %v5593 = vrot.slane %v1624, %v5592
        %v5594 = vlaneseq
        %v5595 = vshrl.u32 %v5594, 7
        %v5596 = vsub.s32 0, %v5595
        %v5597 = vrot.slane %v1626, %v5596
        %v5598 = vlaneseq
        %v5599 = vshrl.u32 %v5598, 7
        %v5600 = vsub.s32 0, %v5599
        %v5601 = vrot.slane %v1609, %v5600
        %v5602 = vlaneseq
        %v5603 = vshrl.u32 %v5602, 7
        %v5604 = vsub.s32 0, %v5603
        %v5605 = vrot.slane %v1623, %v5604
        %v5606 = vlaneseq
        %v5607 = vshrl.u32 %v5606, 7
        %v5608 = vsub.s32 0, %v5607
        %v5609 = vrot.slane %v1625, %v5608
        %v5610 = vlaneseq
        %v5611 = vshrl.u32 %v5610, 7
        %v5612 = vsub.s32 0, %v5611
        %v5613 = vrot.slane %v1627, %v5612
        %v5614 = vlaneseq
        %v5615 = vshrl.u32 %v5614, 7
        %v5616 = vsub.s32 0, %v5615
        %v5617 = vrot.slane %v1651, %v5616
        %v5618 = vlaneseq
        %v5619 = vshrl.u32 %v5618, 7
        %v5620 = vsub.s32 0, %v5619
        %v5621 = vrot.slane %v1665, %v5620
        %v5622 = vlaneseq
        %v5623 = vshrl.u32 %v5622, 7
        %v5624 = vsub.s32 0, %v5623
        %v5625 = vrot.slane %v1673, %v5624
        %v5626 = vlaneseq
        %v5627 = vshrl.u32 %v5626, 7
        %v5628 = vsub.s32 0, %v5627
        %v5629 = vrot.slane %v1675, %v5628
        %v5630 = vlaneseq
        %v5631 = vshrl.u32 %v5630, 7
        %v5632 = vsub.s32 0, %v5631
        %v5633 = vrot.slane %v1658, %v5632
        %v5634 = vlaneseq
        %v5635 = vshrl.u32 %v5634, 7
        %v5636 = vsub.s32 0, %v5635
        %v5637 = vrot.slane %v1672, %v5636
        %v5638 = vlaneseq
        %v5639 = vshrl.u32 %v5638, 7
        %v5640 = vsub.s32 0, %v5639
        %v5641 = vrot.slane %v1674, %v5640
        %v5642 = vlaneseq
        %v5643 = vshrl.u32 %v5642, 7
        %v5644 = vsub.s32 0, %v5643
        %v5645 = vrot.slane %v1676, %v5644
        %v5646 = vlaneseq
        %v5647 = vshrl.u32 %v5646, 7
        %v5648 = vsub.s32 0, %v5647
        %v5649 = vrot.slane %v1700, %v5648
        %v5650 = vlaneseq
        %v5651 = vshrl.u32 %v5650, 7
        %v5652 = vsub.s32 0, %v5651
        %v5653 = vrot.slane %v1714, %v5652
        %v5654 = vlaneseq
        %v5655 = vshrl.u32 %v5654, 7
        %v5656 = vsub.s32 0, %v5655
        %v5657 = vrot.slane %v1722, %v5656
        %v5658 = vlaneseq
        %v5659 = vshrl.u32 %v5658, 7
        %v5660 = vsub.s32 0, %v5659
        %v5661 = vrot.slane %v1724, %v5660
        %v5662 = vlaneseq
        %v5663 = vshrl.u32 %v5662, 7
        %v5664 = vsub.s32 0, %v5663
        %v5665 = vrot.slane %v1707, %v5664
        %v5666 = vlaneseq
        %v5667 = vshrl.u32 %v5666, 7
        %v5668 = vsub.s32 0, %v5667
        %v5669 = vrot.slane %v1721, %v5668
        %v5670 = vlaneseq
        %v5671 = vshrl.u32 %v5670, 7
        %v5672 = vsub.s32 0, %v5671
        %v5673 = vrot.slane %v1723, %v5672
        %v5674 = vlaneseq
        %v5675 = vshrl.u32 %v5674, 7
        %v5676 = vsub.s32 0, %v5675
        %v5677 = vrot.slane %v1725, %v5676
        %v5678 = vlaneseq
        %v5679 = vshrl.u32 %v5678, 7
        %v5680 = vsub.s32 0, %v5679
        %v5681 = vrot.slane %v1749, %v5680
        %v5682 = vlaneseq
        %v5683 = vshrl.u32 %v5682, 7
        %v5684 = vsub.s32 0, %v5683
        %v5685 = vrot.slane %v1763, %v5684
        %v5686 = vlaneseq
        %v5687 = vshrl.u32 %v5686, 7
        %v5688 = vsub.s32 0, %v5687
        %v5689 = vrot.slane %v1771, %v5688
        %v5690 = vlaneseq
        %v5691 = vshrl.u32 %v5690, 7
        %v5692 = vsub.s32 0, %v5691
        %v5693 = vrot.slane %v1773, %v5692
        %v5694 = vlaneseq
        %v5695 = vshrl.u32 %v5694, 7
        %v5696 = vsub.s32 0, %v5695
        %v5697 = vrot.slane %v1756, %v5696
        %v5698 = vlaneseq
        %v5699 = vshrl.u32 %v5698, 7
        %v5700 = vsub.s32 0, %v5699
        %v5701 = vrot.slane %v1770, %v5700
        %v5702 = vlaneseq
        %v5703 = vshrl.u32 %v5702, 7
        %v5704 = vsub.s32 0, %v5703
        %v5705 = vrot.slane %v1772, %v5704
        %v5706 = vlaneseq
        %v5707 = vshrl.u32 %v5706, 7
        %v5708 = vsub.s32 0, %v5707
        %v5709 = vrot.slane %v1774, %v5708
        %v5710 = vlaneseq
        %v5711 = vshrl.u32 %v5710, 7
        %v5712 = vsub.s32 0, %v5711
        %v5713 = vrot.slane %v1798, %v5712
        %v5714 = vlaneseq
        %v5715 = vshrl.u32 %v5714, 7
        %v5716 = vsub.s32 0, %v5715
        %v5717 = vrot.slane %v1812, %v5716
        %v5718 = vlaneseq
        %v5719 = vshrl.u32 %v5718, 7
        %v5720 = vsub.s32 0, %v5719
        %v5721 = vrot.slane %v1820, %v5720
        %v5722 = vlaneseq
        %v5723 = vshrl.u32 %v5722, 7
        %v5724 = vsub.s32 0, %v5723
        %v5725 = vrot.slane %v1822, %v5724
        %v5726 = vlaneseq
        %v5727 = vshrl.u32 %v5726, 7
        %v5728 = vsub.s32 0, %v5727
        %v5729 = vrot.slane %v1805, %v5728
        %v5730 = vlaneseq
        %v5731 = vshrl.u32 %v5730, 7
        %v5732 = vsub.s32 0, %v5731
        %v5733 = vrot.slane %v1819, %v5732
        %v5734 = vlaneseq
        %v5735 = vshrl.u32 %v5734, 7
        %v5736 = vsub.s32 0, %v5735
        %v5737 = vrot.slane %v1821, %v5736
        %v5738 = vlaneseq
        %v5739 = vshrl.u32 %v5738, 7
        %v5740 = vsub.s32 0, %v5739
        %v5741 = vrot.slane %v1823, %v5740
        %v5742 = vlaneseq
        %v5743 = vshrl.u32 %v5742, 7
        %v5744 = vsub.s32 0, %v5743
        %v5745 = vrot.slane %v1847, %v5744
        %v5746 = vlaneseq
        %v5747 = vshrl.u32 %v5746, 7
        %v5748 = vsub.s32 0, %v5747
        %v5749 = vrot.slane %v1861, %v5748
        %v5750 = vlaneseq
        %v5751 = vshrl.u32 %v5750, 7
        %v5752 = vsub.s32 0, %v5751
        %v5753 = vrot.slane %v1869, %v5752
        %v5754 = vlaneseq
        %v5755 = vshrl.u32 %v5754, 7
        %v5756 = vsub.s32 0, %v5755
        %v5757 = vrot.slane %v1871, %v5756
        %v5758 = vlaneseq
        %v5759 = vshrl.u32 %v5758, 7
        %v5760 = vsub.s32 0, %v5759
        %v5761 = vrot.slane %v1854, %v5760
        %v5762 = vlaneseq
        %v5763 = vshrl.u32 %v5762, 7
        %v5764 = vsub.s32 0, %v5763
        %v5765 = vrot.slane %v1868, %v5764
        %v5766 = vlaneseq
        %v5767 = vshrl.u32 %v5766, 7
        %v5768 = vsub.s32 0, %v5767
        %v5769 = vrot.slane %v1870, %v5768
        %v5770 = vlaneseq
        %v5771 = vshrl.u32 %v5770, 7
        %v5772 = vsub.s32 0, %v5771
        %v5773 = vrot.slane %v1872, %v5772
        %v5774 = vlaneseq
        %v5775 = vshrl.u32 %v5774, 7
        %v5776 = vsub.s32 0, %v5775
        %v5777 = vrot.slane %v1896, %v5776
        %v5778 = vlaneseq
        %v5779 = vshrl.u32 %v5778, 7
        %v5780 = vsub.s32 0, %v5779
        %v5781 = vrot.slane %v1910, %v5780
        %v5782 = vlaneseq
        %v5783 = vshrl.u32 %v5782, 7
        %v5784 = vsub.s32 0, %v5783
        %v5785 = vrot.slane %v1918, %v5784
        %v5786 = vlaneseq
        %v5787 = vshrl.u32 %v5786, 7
        %v5788 = vsub.s32 0, %v5787
        %v5789 = vrot.slane %v1920, %v5788
        %v5790 = vlaneseq
        %v5791 = vshrl.u32 %v5790, 7
        %v5792 = vsub.s32 0, %v5791
        %v5793 = vrot.slane %v1903, %v5792
        %v5794 = vlaneseq
        %v5795 = vshrl.u32 %v5794, 7
        %v5796 = vsub.s32 0, %v5795
        %v5797 = vrot.slane %v1917, %v5796
        %v5798 = vlaneseq
        %v5799 = vshrl.u32 %v5798, 7
        %v5800 = vsub.s32 0, %v5799
        %v5801 = vrot.slane %v1919, %v5800
        %v5802 = vlaneseq
        %v5803 = vshrl.u32 %v5802, 7
        %v5804 = vsub.s32 0, %v5803
        %v5805 = vrot.slane %v1921, %v5804
        %v5806 = vlaneseq
        %v5807 = vshrl.u32 %v5806, 7
        %v5808 = vsub.s32 0, %v5807
        %v5809 = vrot.slane %v1945, %v5808
        %v5810 = vlaneseq
        %v5811 = vshrl.u32 %v5810, 7
        %v5812 = vsub.s32 0, %v5811
        %v5813 = vrot.slane %v1959, %v5812
        %v5814 = vlaneseq
        %v5815 = vshrl.u32 %v5814, 7
        %v5816 = vsub.s32 0, %v5815
        %v5817 = vrot.slane %v1967, %v5816
        %v5818 = vlaneseq
        %v5819 = vshrl.u32 %v5818, 7
        %v5820 = vsub.s32 0, %v5819
        %v5821 = vrot.slane %v1969, %v5820
        %v5822 = vlaneseq
        %v5823 = vshrl.u32 %v5822, 7
        %v5824 = vsub.s32 0, %v5823
        %v5825 = vrot.slane %v1952, %v5824
        %v5826 = vlaneseq
        %v5827 = vshrl.u32 %v5826, 7
        %v5828 = vsub.s32 0, %v5827
        %v5829 = vrot.slane %v1966, %v5828
        %v5830 = vlaneseq
        %v5831 = vshrl.u32 %v5830, 7
        %v5832 = vsub.s32 0, %v5831
        %v5833 = vrot.slane %v1968, %v5832
        %v5834 = vlaneseq
        %v5835 = vshrl.u32 %v5834, 7
        %v5836 = vsub.s32 0, %v5835
        %v5837 = vrot.slane %v1970, %v5836
        %v5838 = vlaneseq
        %v5839 = vshrl.u32 %v5838, 7
        %v5840 = vsub.s32 0, %v5839
        %v5841 = vrot.slane %v1994, %v5840
        %v5842 = vlaneseq
        %v5843 = vshrl.u32 %v5842, 7
        %v5844 = vsub.s32 0, %v5843
        %v5845 = vrot.slane %v2008, %v5844
        %v5846 = vlaneseq
        %v5847 = vshrl.u32 %v5846, 7
        %v5848 = vsub.s32 0, %v5847
        %v5849 = vrot.slane %v2016, %v5848
        %v5850 = vlaneseq
        %v5851 = vshrl.u32 %v5850, 7
        %v5852 = vsub.s32 0, %v5851
        %v5853 = vrot.slane %v2018, %v5852
        %v5854 = vlaneseq
        %v5855 = vshrl.u32 %v5854, 7
        %v5856 = vsub.s32 0, %v5855
        %v5857 = vrot.slane %v2001, %v5856
        %v5858 = vlaneseq
        %v5859 = vshrl.u32 %v5858, 7
        %v5860 = vsub.s32 0, %v5859
        %v5861 = vrot.slane %v2015, %v5860
        %v5862 = vlaneseq
        %v5863 = vshrl.u32 %v5862, 7
        %v5864 = vsub.s32 0, %v5863
        %v5865 = vrot.slane %v2017, %v5864
        %v5866 = vlaneseq
        %v5867 = vshrl.u32 %v5866, 7
        %v5868 = vsub.s32 0, %v5867
        %v5869 = vrot.slane %v2019, %v5868
        %v5870 = vlaneseq
        %v5871 = vshrl.u32 %v5870, 7
        %v5872 = vsub.s32 0, %v5871
        %v5873 = vrot.slane %v2043, %v5872
        %v5874 = vlaneseq
        %v5875 = vshrl.u32 %v5874, 7
        %v5876 = vsub.s32 0, %v5875
        %v5877 = vrot.slane %v2057, %v5876
        %v5878 = vlaneseq
        %v5879 = vshrl.u32 %v5878, 7
        %v5880 = vsub.s32 0, %v5879
        %v5881 = vrot.slane %v2065, %v5880
        %v5882 = vlaneseq
        %v5883 = vshrl.u32 %v5882, 7
        %v5884 = vsub.s32 0, %v5883
        %v5885 = vrot.slane %v2067, %v5884
        %v5886 = vlaneseq
        %v5887 = vshrl.u32 %v5886, 7
        %v5888 = vsub.s32 0, %v5887
        %v5889 = vrot.slane %v2050, %v5888
        %v5890 = vlaneseq
        %v5891 = vshrl.u32 %v5890, 7
        %v5892 = vsub.s32 0, %v5891
        %v5893 = vrot.slane %v2064, %v5892
        %v5894 = vlaneseq
        %v5895 = vshrl.u32 %v5894, 7
        %v5896 = vsub.s32 0, %v5895
        %v5897 = vrot.slane %v2066, %v5896
        %v5898 = vlaneseq
        %v5899 = vshrl.u32 %v5898, 7
        %v5900 = vsub.s32 0, %v5899
        %v5901 = vrot.slane %v2068, %v5900
        %v5902 = vlaneseq
        %v5903 = vshrl.u32 %v5902, 7
        %v5904 = vsub.s32 0, %v5903
        %v5905 = vrot.slane %v2092, %v5904
        %v5906 = vlaneseq
        %v5907 = vshrl.u32 %v5906, 7
        %v5908 = vsub.s32 0, %v5907
        %v5909 = vrot.slane %v2106, %v5908
        %v5910 = vlaneseq
        %v5911 = vshrl.u32 %v5910, 7
        %v5912 = vsub.s32 0, %v5911
        %v5913 = vrot.slane %v2114, %v5912
        %v5914 = vlaneseq
        %v5915 = vshrl.u32 %v5914, 7
        %v5916 = vsub.s32 0, %v5915
        %v5917 = vrot.slane %v2116, %v5916
        %v5918 = vlaneseq
        %v5919 = vshrl.u32 %v5918, 7
        %v5920 = vsub.s32 0, %v5919
        %v5921 = vrot.slane %v2099, %v5920
        %v5922 = vlaneseq
        %v5923 = vshrl.u32 %v5922, 7
        %v5924 = vsub.s32 0, %v5923
        %v5925 = vrot.slane %v2113, %v5924
        %v5926 = vlaneseq
        %v5927 = vshrl.u32 %v5926, 7
        %v5928 = vsub.s32 0, %v5927
        %v5929 = vrot.slane %v2115, %v5928
        %v5930 = vlaneseq
        %v5931 = vshrl.u32 %v5930, 7
        %v5932 = vsub.s32 0, %v5931
        %v5933 = vrot.slane %v2117, %v5932
        %v5934 = vlaneseq
        %v5935 = vshrl.u32 %v5934, 7
        %v5936 = vsub.s32 0, %v5935
        %v5937 = vrot.slane %v2141, %v5936
        %v5938 = vlaneseq
        %v5939 = vshrl.u32 %v5938, 7
        %v5940 = vsub.s32 0, %v5939
        %v5941 = vrot.slane %v2155, %v5940
        %v5942 = vlaneseq
        %v5943 = vshrl.u32 %v5942, 7
        %v5944 = vsub.s32 0, %v5943
        %v5945 = vrot.slane %v2163, %v5944
        %v5946 = vlaneseq
        %v5947 = vshrl.u32 %v5946, 7
        %v5948 = vsub.s32 0, %v5947
        %v5949 = vrot.slane %v2165, %v5948
        %v5950 = vlaneseq
        %v5951 = vshrl.u32 %v5950, 7
        %v5952 = vsub.s32 0, %v5951
        %v5953 = vrot.slane %v2148, %v5952
        %v5954 = vlaneseq
        %v5955 = vshrl.u32 %v5954, 7
        %v5956 = vsub.s32 0, %v5955
        %v5957 = vrot.slane %v2162, %v5956
        %v5958 = vlaneseq
        %v5959 = vshrl.u32 %v5958, 7
        %v5960 = vsub.s32 0, %v5959
        %v5961 = vrot.slane %v2164, %v5960
        %v5962 = vlaneseq
        %v5963 = vshrl.u32 %v5962, 7
        %v5964 = vsub.s32 0, %v5963
        %v5965 = vrot.slane %v2166, %v5964
        %v5966 = vlaneseq
        %v5967 = vshrl.u32 %v5966, 7
        %v5968 = vsub.s32 0, %v5967
        %v5969 = vrot.slane %v2190, %v5968
        %v5970 = vlaneseq
        %v5971 = vshrl.u32 %v5970, 7
        %v5972 = vsub.s32 0, %v5971
        %v5973 = vrot.slane %v2204, %v5972
        %v5974 = vlaneseq
        %v5975 = vshrl.u32 %v5974, 7
        %v5976 = vsub.s32 0, %v5975
        %v5977 = vrot.slane %v2212, %v5976
        %v5978 = vlaneseq
        %v5979 = vshrl.u32 %v5978, 7
        %v5980 = vsub.s32 0, %v5979
        %v5981 = vrot.slane %v2214, %v5980
        %v5982 = vlaneseq
        %v5983 = vshrl.u32 %v5982, 7
        %v5984 = vsub.s32 0, %v5983
        %v5985 = vrot.slane %v2197, %v5984
        %v5986 = vlaneseq
        %v5987 = vshrl.u32 %v5986, 7
        %v5988 = vsub.s32 0, %v5987
        %v5989 = vrot.slane %v2211, %v5988
        %v5990 = vlaneseq
        %v5991 = vshrl.u32 %v5990, 7
        %v5992 = vsub.s32 0, %v5991
        %v5993 = vrot.slane %v2213, %v5992
        %v5994 = vlaneseq
        %v5995 = vshrl.u32 %v5994, 7
        %v5996 = vsub.s32 0, %v5995
        %v5997 = vrot.slane %v2215, %v5996
        %v5998 = vlaneseq
        %v5999 = vshrl.u32 %v5998, 7
        %v6000 = vsub.s32 0, %v5999
        %v6001 = vrot.slane %v2239, %v6000
        %v6002 = vlaneseq
        %v6003 = vshrl.u32 %v6002, 7
        %v6004 = vsub.s32 0, %v6003
        %v6005 = vrot.slane %v2253, %v6004
        %v6006 = vlaneseq
        %v6007 = vshrl.u32 %v6006, 7
        %v6008 = vsub.s32 0, %v6007
        %v6009 = vrot.slane %v2261, %v6008
        %v6010 = vlaneseq
        %v6011 = vshrl.u32 %v6010, 7
        %v6012 = vsub.s32 0, %v6011
        %v6013 = vrot.slane %v2263, %v6012
        %v6014 = vlaneseq
        %v6015 = vshrl.u32 %v6014, 7
        %v6016 = vsub.s32 0, %v6015
        %v6017 = vrot.slane %v2246, %v6016
        %v6018 = vlaneseq
        %v6019 = vshrl.u32 %v6018, 7
        %v6020 = vsub.s32 0, %v6019
        %v6021 = vrot.slane %v2260, %v6020
        %v6022 = vlaneseq
        %v6023 = vshrl.u32 %v6022, 7
        %v6024 = vsub.s32 0, %v6023
        %v6025 = vrot.slane %v2262, %v6024
        %v6026 = vlaneseq
        %v6027 = vshrl.u32 %v6026, 7
        %v6028 = vsub.s32 0, %v6027
        %v6029 = vrot.slane %v2264, %v6028
        %v6030 = vlaneseq
        %v6031 = vshrl.u32 %v6030, 7
        %v6032 = vsub.s32 0, %v6031
        %v6033 = vrot.slane %v2288, %v6032
        %v6034 = vlaneseq
        %v6035 = vshrl.u32 %v6034, 7
        %v6036 = vsub.s32 0, %v6035
        %v6037 = vrot.slane %v2302, %v6036
        %v6038 = vlaneseq
        %v6039 = vshrl.u32 %v6038, 7
        %v6040 = vsub.s32 0, %v6039
        %v6041 = vrot.slane %v2310, %v6040
        %v6042 = vlaneseq
        %v6043 = vshrl.u32 %v6042, 7
        %v6044 = vsub.s32 0, %v6043
        %v6045 = vrot.slane %v2312, %v6044
        %v6046 = vlaneseq
        %v6047 = vshrl.u32 %v6046, 7
        %v6048 = vsub.s32 0, %v6047
        %v6049 = vrot.slane %v2295, %v6048
        %v6050 = vlaneseq
        %v6051 = vshrl.u32 %v6050, 7
        %v6052 = vsub.s32 0, %v6051
        %v6053 = vrot.slane %v2309, %v6052
        %v6054 = vlaneseq
        %v6055 = vshrl.u32 %v6054, 7
        %v6056 = vsub.s32 0, %v6055
        %v6057 = vrot.slane %v2311, %v6056
        %v6058 = vlaneseq
        %v6059 = vshrl.u32 %v6058, 7
        %v6060 = vsub.s32 0, %v6059
        %v6061 = vrot.slane %v2313, %v6060
        %v6062 = vlaneseq
        %v6063 = vshrl.u32 %v6062, 7
        %v6064 = vsub.s32 0, %v6063
        %v6065 = vrot.slane %v2337, %v6064
        %v6066 = vlaneseq
        %v6067 = vshrl.u32 %v6066, 7
        %v6068 = vsub.s32 0, %v6067
        %v6069 = vrot.slane %v2351, %v6068
        %v6070 = vlaneseq
        %v6071 = vshrl.u32 %v6070, 7
        %v6072 = vsub.s32 0, %v6071
        %v6073 = vrot.slane %v2359, %v6072
        %v6074 = vlaneseq
        %v6075 = vshrl.u32 %v6074, 7
        %v6076 = vsub.s32 0, %v6075
        %v6077 = vrot.slane %v2361, %v6076
        %v6078 = vlaneseq
        %v6079 = vshrl.u32 %v6078, 7
        %v6080 = vsub.s32 0, %v6079
        %v6081 = vrot.slane %v2344, %v6080
        %v6082 = vlaneseq
        %v6083 = vshrl.u32 %v6082, 7
        %v6084 = vsub.s32 0, %v6083
        %v6085 = vrot.slane %v2358, %v6084
        %v6086 = vlaneseq
        %v6087 = vshrl.u32 %v6086, 7
        %v6088 = vsub.s32 0, %v6087
        %v6089 = vrot.slane %v2360, %v6088
        %v6090 = vlaneseq
        %v6091 = vshrl.u32 %v6090, 7
        %v6092 = vsub.s32 0, %v6091
        %v6093 = vrot.slane %v2362, %v6092
        %v6094 = vlaneseq
        %v6095 = vshrl.u32 %v6094, 7
        %v6096 = vsub.s32 0, %v6095
        %v6097 = vrot.slane %v2386, %v6096
        %v6098 = vlaneseq
        %v6099 = vshrl.u32 %v6098, 7
        %v6100 = vsub.s32 0, %v6099
        %v6101 = vrot.slane %v2400, %v6100
        %v6102 = vlaneseq
        %v6103 = vshrl.u32 %v6102, 7
        %v6104 = vsub.s32 0, %v6103
        %v6105 = vrot.slane %v2408, %v6104
        %v6106 = vlaneseq
        %v6107 = vshrl.u32 %v6106, 7
        %v6108 = vsub.s32 0, %v6107
        %v6109 = vrot.slane %v2410, %v6108
        %v6110 = vlaneseq
        %v6111 = vshrl.u32 %v6110, 7
        %v6112 = vsub.s32 0, %v6111
        %v6113 = vrot.slane %v2393, %v6112
        %v6114 = vlaneseq
        %v6115 = vshrl.u32 %v6114, 7
        %v6116 = vsub.s32 0, %v6115
        %v6117 = vrot.slane %v2407, %v6116
        %v6118 = vlaneseq
        %v6119 = vshrl.u32 %v6118, 7
        %v6120 = vsub.s32 0, %v6119
        %v6121 = vrot.slane %v2409, %v6120
        %v6122 = vlaneseq
        %v6123 = vshrl.u32 %v6122, 7
        %v6124 = vsub.s32 0, %v6123
        %v6125 = vrot.slane %v2411, %v6124
        %v6126 = vlaneseq
        %v6127 = vshrl.u32 %v6126, 7
        %v6128 = vsub.s32 0, %v6127
        %v6129 = vrot.slane %v2435, %v6128
        %v6130 = vlaneseq
        %v6131 = vshrl.u32 %v6130, 7
        %v6132 = vsub.s32 0, %v6131
        %v6133 = vrot.slane %v2449, %v6132
        %v6134 = vlaneseq
        %v6135 = vshrl.u32 %v6134, 7
        %v6136 = vsub.s32 0, %v6135
        %v6137 = vrot.slane %v2457, %v6136
        %v6138 = vlaneseq
        %v6139 = vshrl.u32 %v6138, 7
        %v6140 = vsub.s32 0, %v6139
        %v6141 = vrot.slane %v2459, %v6140
        %v6142 = vlaneseq
        %v6143 = vshrl.u32 %v6142, 7
        %v6144 = vsub.s32 0, %v6143
        %v6145 = vrot.slane %v2442, %v6144
        %v6146 = vlaneseq
        %v6147 = vshrl.u32 %v6146, 7
        %v6148 = vsub.s32 0, %v6147
        %v6149 = vrot.slane %v2456, %v6148
        %v6150 = vlaneseq
        %v6151 = vshrl.u32 %v6150, 7
        %v6152 = vsub.s32 0, %v6151
        %v6153 = vrot.slane %v2458, %v6152
        %v6154 = vlaneseq
        %v6155 = vshrl.u32 %v6154, 7
        %v6156 = vsub.s32 0, %v6155
        %v6157 = vrot.slane %v2460, %v6156
        %v6158 = vlaneseq
        %v6159 = vshrl.u32 %v6158, 7
        %v6160 = vsub.s32 0, %v6159
        %v6161 = vrot.slane %v2484, %v6160
        %v6162 = vlaneseq
        %v6163 = vshrl.u32 %v6162, 7
        %v6164 = vsub.s32 0, %v6163
        %v6165 = vrot.slane %v2498, %v6164
        %v6166 = vlaneseq
        %v6167 = vshrl.u32 %v6166, 7
        %v6168 = vsub.s32 0, %v6167
        %v6169 = vrot.slane %v2506, %v6168
        %v6170 = vlaneseq
        %v6171 = vshrl.u32 %v6170, 7
        %v6172 = vsub.s32 0, %v6171
        %v6173 = vrot.slane %v2508, %v6172
        %v6174 = vlaneseq
        %v6175 = vshrl.u32 %v6174, 7
        %v6176 = vsub.s32 0, %v6175
        %v6177 = vrot.slane %v2491, %v6176
        %v6178 = vlaneseq
        %v6179 = vshrl.u32 %v6178, 7
        %v6180 = vsub.s32 0, %v6179
        %v6181 = vrot.slane %v2505, %v6180
        %v6182 = vlaneseq
        %v6183 = vshrl.u32 %v6182, 7
        %v6184 = vsub.s32 0, %v6183
        %v6185 = vrot.slane %v2507, %v6184
        %v6186 = vlaneseq
        %v6187 = vshrl.u32 %v6186, 7
        %v6188 = vsub.s32 0, %v6187
        %v6189 = vrot.slane %v2509, %v6188
        %v6446 = vmul.f32 %v366, %v5169
        %v6447 = vmul.f32 %v367, %v5173
        %v6448 = vmul.f32 %v368, %v5177
        %v6449 = vmul.f32 %v369, %v5181
        %v6450 = vmul.f32 %v370, %v5185
        %v6451 = vmul.f32 %v371, %v5189
        %v6452 = vmul.f32 %v372, %v5193
        %v6453 = vmul.f32 %v373, %v5197
        %v6454 = vmul.f32 %v374, %v5201
        %v6455 = vmul.f32 %v375, %v5205
        %v6456 = vmul.f32 %v376, %v5209
        %v6457 = vmul.f32 %v377, %v5213
        %v6458 = vmul.f32 %v378, %v5217
        %v6459 = vmul.f32 %v379, %v5221
        %v6460 = vmul.f32 %v380, %v5225
        %v6461 = vmul.f32 %v381, %v5229
        %v6462 = vmul.f32 %v382, %v5233
        %v6463 = vmul.f32 %v383, %v5237
        %v6464 = vmul.f32 %v384, %v5241
        %v6465 = vmul.f32 %v385, %v5245
        %v6466 = vmul.f32 %v386, %v5249
        %v6467 = vmul.f32 %v387, %v5253
        %v6468 = vmul.f32 %v388, %v5257
        %v6469 = vmul.f32 %v389, %v5261
        %v6470 = vmul.f32 %v390, %v5265
        %v6471 = vmul.f32 %v391, %v5269
        %v6472 = vmul.f32 %v392, %v5273
        %v6473 = vmul.f32 %v393, %v5277
        %v6474 = vmul.f32 %v394, %v5281
        %v6475 = vmul.f32 %v395, %v5285
        %v6476 = vmul.f32 %v396, %v5289
        %v6477 = vmul.f32 %v397, %v5293
        %v6478 = vmul.f32 %v398, %v5297
        %v6479 = vmul.f32 %v399, %v5301
        %v6480 = vmul.f32 %v400, %v5305
        %v6481 = vmul.f32 %v401, %v5309
        %v6482 = vmul.f32 %v402, %v5313
        %v6483 = vmul.f32 %v403, %v5317
        %v6484 = vmul.f32 %v404, %v5321
        %v6485 = vmul.f32 %v405, %v5325
        %v6486 = vmul.f32 %v406, %v5329
        %v6487 = vmul.f32 %v407, %v5333
        %v6488 = vmul.f32 %v408, %v5337
        %v6489 = vmul.f32 %v409, %v5341
        %v6490 = vmul.f32 %v410, %v5345
        %v6491 = vmul.f32 %v411, %v5349
        %v6492 = vmul.f32 %v412, %v5353
        %v6493 = vmul.f32 %v413, %v5357
        %v6494 = vmul.f32 %v414, %v5361
        %v6495 = vmul.f32 %v415, %v5365
        %v6496 = vmul.f32 %v416, %v5369
        %v6497 = vmul.f32 %v417, %v5373
        %v6498 = vmul.f32 %v418, %v5377
        %v6499 = vmul.f32 %v419, %v5381
        %v6500 = vmul.f32 %v420, %v5385
        %v6501 = vmul.f32 %v421, %v5389
        %v6502 = vmul.f32 %v422, %v5393
        %v6503 = vmul.f32 %v423, %v5397
        %v6504 = vmul.f32 %v424, %v5401
        %v6505 = vmul.f32 %v425, %v5405
        %v6506 = vmul.f32 %v426, %v5409
        %v6507 = vmul.f32 %v427, %v5413
        %v6508 = vmul.f32 %v428, %v5417
        %v6509 = vmul.f32 %v429, %v5421
        %v6510 = vmul.f32 %v430, %v5425
        %v6511 = vmul.f32 %v431, %v5429
        %v6512 = vmul.f32 %v432, %v5433
        %v6513 = vmul.f32 %v433, %v5437
        %v6514 = vmul.f32 %v434, %v5441
        %v6515 = vmul.f32 %v435, %v5445
        %v6516 = vmul.f32 %v436, %v5449
        %v6517 = vmul.f32 %v437, %v5453
        %v6518 = vmul.f32 %v438, %v5457
        %v6519 = vmul.f32 %v439, %v5461
        %v6520 = vmul.f32 %v440, %v5465
        %v6521 = vmul.f32 %v441, %v5469
        %v6522 = vmul.f32 %v442, %v5473
        %v6523 = vmul.f32 %v443, %v5477
        %v6524 = vmul.f32 %v444, %v5481
        %v6525 = vmul.f32 %v445, %v5485
        %v6526 = vmul.f32 %v446, %v5489
        %v6527 = vmul.f32 %v447, %v5493
        %v6528 = vmul.f32 %v448, %v5497
        %v6529 = vmul.f32 %v449, %v5501
        %v6530 = vmul.f32 %v450, %v5505
        %v6531 = vmul.f32 %v451, %v5509
        %v6532 = vmul.f32 %v452, %v5513
        %v6533 = vmul.f32 %v453, %v5517
        %v6534 = vmul.f32 %v454, %v5521
        %v6535 = vmul.f32 %v455, %v5525
        %v6536 = vmul.f32 %v456, %v5529
        %v6537 = vmul.f32 %v457, %v5533
        %v6538 = vmul.f32 %v458, %v5537
        %v6539 = vmul.f32 %v459, %v5541
        %v6540 = vmul.f32 %v460, %v5545
        %v6541 = vmul.f32 %v461, %v5549
        %v6542 = vmul.f32 %v462, %v5553
        %v6543 = vmul.f32 %v463, %v5557
        %v6544 = vmul.f32 %v464, %v5561
        %v6545 = vmul.f32 %v465, %v5565
        %v6546 = vmul.f32 %v466, %v5569
        %v6547 = vmul.f32 %v467, %v5573
        %v6548 = vmul.f32 %v468, %v5577
        %v6549 = vmul.f32 %v469, %v5581
        %v6550 = vmul.f32 %v470, %v5585
        %v6551 = vmul.f32 %v471, %v5589
        %v6552 = vmul.f32 %v472, %v5593
        %v6553 = vmul.f32 %v473, %v5597
        %v6554 = vmul.f32 %v474, %v5601
        %v6555 = vmul.f32 %v475, %v5605
        %v6556 = vmul.f32 %v476, %v5609
        %v6557 = vmul.f32 %v477, %v5613
        %v6558 = vmul.f32 %v478, %v5617
        %v6559 = vmul.f32 %v479, %v5621
        %v6560 = vmul.f32 %v480, %v5625
        %v6561 = vmul.f32 %v481, %v5629
        %v6562 = vmul.f32 %v482, %v5633
        %v6563 = vmul.f32 %v483, %v5637
        %v6564 = vmul.f32 %v484, %v5641
        %v6565 = vmul.f32 %v485, %v5645
        %v6566 = vmul.f32 %v486, %v5649
        %v6567 = vmul.f32 %v487, %v5653
        %v6568 = vmul.f32 %v488, %v5657
        %v6569 = vmul.f32 %v489, %v5661
        %v6570 = vmul.f32 %v490, %v5665
        %v6571 = vmul.f32 %v491, %v5669
        %v6572 = vmul.f32 %v492, %v5673
        %v6573 = vmul.f32 %v493, %v5677
        %v6574 = vmul.f32 %v494, %v5681
        %v6575 = vmul.f32 %v495, %v5685
        %v6576 = vmul.f32 %v496, %v5689
        %v6577 = vmul.f32 %v497, %v5693
        %v6578 = vmul.f32 %v498, %v5697
        %v6579 = vmul.f32 %v499, %v5701
        %v6580 = vmul.f32 %v500, %v5705
        %v6581 = vmul.f32 %v501, %v5709
        %v6582 = vmul.f32 %v502, %v5713
        %v6583 = vmul.f32 %v503, %v5717
        %v6584 = vmul.f32 %v504, %v5721
        %v6585 = vmul.f32 %v505, %v5725
        %v6586 = vmul.f32 %v506, %v5729
        %v6587 = vmul.f32 %v507, %v5733
        %v6588 = vmul.f32 %v508, %v5737
        %v6589 = vmul.f32 %v509, %v5741
        %v6590 = vmul.f32 %v510, %v5745
        %v6591 = vmul.f32 %v511, %v5749
        %v6592 = vmul.f32 %v512, %v5753
        %v6593 = vmul.f32 %v513, %v5757
        %v6594 = vmul.f32 %v514, %v5761
        %v6595 = vmul.f32 %v515, %v5765
        %v6596 = vmul.f32 %v516, %v5769
        %v6597 = vmul.f32 %v517, %v5773
        %v6598 = vmul.f32 %v518, %v5777
        %v6599 = vmul.f32 %v519, %v5781
        %v6600 = vmul.f32 %v520, %v5785
        %v6601 = vmul.f32 %v521, %v5789
        %v6602 = vmul.f32 %v522, %v5793
        %v6603 = vmul.f32 %v523, %v5797
        %v6604 = vmul.f32 %v524, %v5801
        %v6605 = vmul.f32 %v525, %v5805
        %v6606 = vmul.f32 %v526, %v5809
        %v6607 = vmul.f32 %v527, %v5813
        %v6608 = vmul.f32 %v528, %v5817
        %v6609 = vmul.f32 %v529, %v5821
        %v6610 = vmul.f32 %v530, %v5825
        %v6611 = vmul.f32 %v531, %v5829
        %v6612 = vmul.f32 %v532, %v5833
        %v6613 = vmul.f32 %v533, %v5837
        %v6614 = vmul.f32 %v534, %v5841
        %v6615 = vmul.f32 %v535, %v5845
        %v6616 = vmul.f32 %v536, %v5849
        %v6617 = vmul.f32 %v537, %v5853
        %v6618 = vmul.f32 %v538, %v5857
        %v6619 = vmul.f32 %v539, %v5861
        %v6620 = vmul.f32 %v540, %v5865
        %v6621 = vmul.f32 %v541, %v5869
        %v6622 = vmul.f32 %v542, %v5873
        %v6623 = vmul.f32 %v543, %v5877
        %v6624 = vmul.f32 %v544, %v5881
        %v6625 = vmul.f32 %v545, %v5885
        %v6626 = vmul.f32 %v546, %v5889
        %v6627 = vmul.f32 %v547, %v5893
        %v6628 = vmul.f32 %v548, %v5897
        %v6629 = vmul.f32 %v549, %v5901
        %v6630 = vmul.f32 %v550, %v5905
        %v6631 = vmul.f32 %v551, %v5909
        %v6632 = vmul.f32 %v552, %v5913
        %v6633 = vmul.f32 %v553, %v5917
        %v6634 = vmul.f32 %v554, %v5921
        %v6635 = vmul.f32 %v555, %v5925
        %v6636 = vmul.f32 %v556, %v5929
        %v6637 = vmul.f32 %v557, %v5933
        %v6638 = vmul.f32 %v558, %v5937
        %v6639 = vmul.f32 %v559, %v5941
        %v6640 = vmul.f32 %v560, %v5945
        %v6641 = vmul.f32 %v561, %v5949
        %v6642 = vmul.f32 %v562, %v5953
        %v6643 = vmul.f32 %v563, %v5957
        %v6644 = vmul.f32 %v564, %v5961
        %v6645 = vmul.f32 %v565, %v5965
        %v6646 = vmul.f32 %v566, %v5969
        %v6647 = vmul.f32 %v567, %v5973
        %v6648 = vmul.f32 %v568, %v5977
        %v6649 = vmul.f32 %v569, %v5981
        %v6650 = vmul.f32 %v570, %v5985
        %v6651 = vmul.f32 %v571, %v5989
        %v6652 = vmul.f32 %v572, %v5993
        %v6653 = vmul.f32 %v573, %v5997
        %v6654 = vmul.f32 %v574, %v6001
        %v6655 = vmul.f32 %v575, %v6005
        %v6656 = vmul.f32 %v576, %v6009
        %v6657 = vmul.f32 %v577, %v6013
        %v6658 = vmul.f32 %v578, %v6017
        %v6659 = vmul.f32 %v579, %v6021
        %v6660 = vmul.f32 %v580, %v6025
        %v6661 = vmul.f32 %v581, %v6029
        %v6662 = vmul.f32 %v582, %v6033
        %v6663 = vmul.f32 %v583, %v6037
        %v6664 = vmul.f32 %v584, %v6041
        %v6665 = vmul.f32 %v585, %v6045
        %v6666 = vmul.f32 %v586, %v6049
        %v6667 = vmul.f32 %v587, %v6053
        %v6668 = vmul.f32 %v588, %v6057
        %v6669 = vmul.f32 %v589, %v6061
        %v6670 = vmul.f32 %v590, %v6065
        %v6671 = vmul.f32 %v591, %v6069
        %v6672 = vmul.f32 %v592, %v6073
        %v6673 = vmul.f32 %v593, %v6077
        %v6674 = vmul.f32 %v594, %v6081
        %v6675 = vmul.f32 %v595, %v6085
        %v6676 = vmul.f32 %v596, %v6089
        %v6677 = vmul.f32 %v597, %v6093
        %v6678 = vmul.f32 %v598, %v6097
        %v6679 = vmul.f32 %v599, %v6101
        %v6680 = vmul.f32 %v600, %v6105
        %v6681 = vmul.f32 %v601, %v6109
        %v6682 = vmul.f32 %v602, %v6113
        %v6683 = vmul.f32 %v603, %v6117
        %v6684 = vmul.f32 %v604, %v6121
        %v6685 = vmul.f32 %v605, %v6125
        %v6686 = vmul.f32 %v606, %v6129
        %v6687 = vmul.f32 %v607, %v6133
        %v6688 = vmul.f32 %v608, %v6137
        %v6689 = vmul.f32 %v609, %v6141
        %v6690 = vmul.f32 %v610, %v6145
        %v6691 = vmul.f32 %v611, %v6149
        %v6692 = vmul.f32 %v612, %v6153
        %v6693 = vmul.f32 %v613, %v6157
        %v6694 = vmul.f32 %v614, %v6161
        %v6695 = vmul.f32 %v615, %v6165
        %v6696 = vmul.f32 %v616, %v6169
        %v6697 = vmul.f32 %v617, %v6173
        %v6698 = vmul.f32 %v618, %v6177
        %v6699 = vmul.f32 %v619, %v6181
        %v6700 = vmul.f32 %v620, %v6185
        %v6701 = vmul.f32 %v621, %v6189
        %v6702 = vlaneseq
        %v6703 = vshrl.u32 %v6702, 7
        %v6704 = vsub.s32 0, %v6703
        %v6705 = vrot.slane %v2597, %v6704
        %v6706 = vlaneseq
        %v6707 = vshrl.u32 %v6706, 7
        %v6708 = vsub.s32 0, %v6707
        %v6709 = vrot.slane %v2611, %v6708
        %v6710 = vlaneseq
        %v6711 = vshrl.u32 %v6710, 7
        %v6712 = vsub.s32 0, %v6711
        %v6713 = vrot.slane %v2619, %v6712
        %v6714 = vlaneseq
        %v6715 = vshrl.u32 %v6714, 7
        %v6716 = vsub.s32 0, %v6715
        %v6717 = vrot.slane %v2621, %v6716
        %v6718 = vlaneseq
        %v6719 = vshrl.u32 %v6718, 7
        %v6720 = vsub.s32 0, %v6719
        %v6721 = vrot.slane %v2604, %v6720
        %v6722 = vlaneseq
        %v6723 = vshrl.u32 %v6722, 7
        %v6724 = vsub.s32 0, %v6723
        %v6725 = vrot.slane %v2618, %v6724
        %v6726 = vlaneseq
        %v6727 = vshrl.u32 %v6726, 7
        %v6728 = vsub.s32 0, %v6727
        %v6729 = vrot.slane %v2620, %v6728
        %v6730 = vlaneseq
        %v6731 = vshrl.u32 %v6730, 7
        %v6732 = vsub.s32 0, %v6731
        %v6733 = vrot.slane %v2622, %v6732
        %v6734 = vlaneseq
        %v6735 = vshrl.u32 %v6734, 7
        %v6736 = vsub.s32 0, %v6735
        %v6737 = vrot.slane %v2646, %v6736
        %v6738 = vlaneseq
        %v6739 = vshrl.u32 %v6738, 7
        %v6740 = vsub.s32 0, %v6739
        %v6741 = vrot.slane %v2660, %v6740
        %v6742 = vlaneseq
        %v6743 = vshrl.u32 %v6742, 7
        %v6744 = vsub.s32 0, %v6743
        %v6745 = vrot.slane %v2668, %v6744
        %v6746 = vlaneseq
        %v6747 = vshrl.u32 %v6746, 7
        %v6748 = vsub.s32 0, %v6747
        %v6749 = vrot.slane %v2670, %v6748
        %v6750 = vlaneseq
        %v6751 = vshrl.u32 %v6750, 7
        %v6752 = vsub.s32 0, %v6751
        %v6753 = vrot.slane %v2653, %v6752
        %v6754 = vlaneseq
        %v6755 = vshrl.u32 %v6754, 7
        %v6756 = vsub.s32 0, %v6755
        %v6757 = vrot.slane %v2667, %v6756
        %v6758 = vlaneseq
        %v6759 = vshrl.u32 %v6758, 7
        %v6760 = vsub.s32 0, %v6759
        %v6761 = vrot.slane %v2669, %v6760
        %v6762 = vlaneseq
        %v6763 = vshrl.u32 %v6762, 7
        %v6764 = vsub.s32 0, %v6763
        %v6765 = vrot.slane %v2671, %v6764
        %v6766 = vlaneseq
        %v6767 = vshrl.u32 %v6766, 7
        %v6768 = vsub.s32 0, %v6767
        %v6769 = vrot.slane %v2695, %v6768
        %v6770 = vlaneseq
        %v6771 = vshrl.u32 %v6770, 7
        %v6772 = vsub.s32 0, %v6771
        %v6773 = vrot.slane %v2709, %v6772
        %v6774 = vlaneseq
        %v6775 = vshrl.u32 %v6774, 7
        %v6776 = vsub.s32 0, %v6775
        %v6777 = vrot.slane %v2717, %v6776
        %v6778 = vlaneseq
        %v6779 = vshrl.u32 %v6778, 7
        %v6780 = vsub.s32 0, %v6779
        %v6781 = vrot.slane %v2719, %v6780
        %v6782 = vlaneseq
        %v6783 = vshrl.u32 %v6782, 7
        %v6784 = vsub.s32 0, %v6783
        %v6785 = vrot.slane %v2702, %v6784
        %v6786 = vlaneseq
        %v6787 = vshrl.u32 %v6786, 7
        %v6788 = vsub.s32 0, %v6787
        %v6789 = vrot.slane %v2716, %v6788
        %v6790 = vlaneseq
        %v6791 = vshrl.u32 %v6790, 7
        %v6792 = vsub.s32 0, %v6791
        %v6793 = vrot.slane %v2718, %v6792
        %v6794 = vlaneseq
        %v6795 = vshrl.u32 %v6794, 7
        %v6796 = vsub.s32 0, %v6795
        %v6797 = vrot.slane %v2720, %v6796
        %v6798 = vlaneseq
        %v6799 = vshrl.u32 %v6798, 7
        %v6800 = vsub.s32 0, %v6799
        %v6801 = vrot.slane %v2744, %v6800
        %v6802 = vlaneseq
        %v6803 = vshrl.u32 %v6802, 7
        %v6804 = vsub.s32 0, %v6803
        %v6805 = vrot.slane %v2758, %v6804
        %v6806 = vlaneseq
        %v6807 = vshrl.u32 %v6806, 7
        %v6808 = vsub.s32 0, %v6807
        %v6809 = vrot.slane %v2766, %v6808
        %v6810 = vlaneseq
        %v6811 = vshrl.u32 %v6810, 7
        %v6812 = vsub.s32 0, %v6811
        %v6813 = vrot.slane %v2768, %v6812
        %v6814 = vlaneseq
        %v6815 = vshrl.u32 %v6814, 7
        %v6816 = vsub.s32 0, %v6815
        %v6817 = vrot.slane %v2751, %v6816
        %v6818 = vlaneseq
        %v6819 = vshrl.u32 %v6818, 7
        %v6820 = vsub.s32 0, %v6819
        %v6821 = vrot.slane %v2765, %v6820
        %v6822 = vlaneseq
        %v6823 = vshrl.u32 %v6822, 7
        %v6824 = vsub.s32 0, %v6823
        %v6825 = vrot.slane %v2767, %v6824
        %v6826 = vlaneseq
        %v6827 = vshrl.u32 %v6826, 7
        %v6828 = vsub.s32 0, %v6827
        %v6829 = vrot.slane %v2769, %v6828
        %v6830 = vlaneseq
        %v6831 = vshrl.u32 %v6830, 7
        %v6832 = vsub.s32 0, %v6831
        %v6833 = vrot.slane %v2793, %v6832
        %v6834 = vlaneseq
        %v6835 = vshrl.u32 %v6834, 7
        %v6836 = vsub.s32 0, %v6835
        %v6837 = vrot.slane %v2807, %v6836
        %v6838 = vlaneseq
        %v6839 = vshrl.u32 %v6838, 7
        %v6840 = vsub.s32 0, %v6839
        %v6841 = vrot.slane %v2815, %v6840
        %v6842 = vlaneseq
        %v6843 = vshrl.u32 %v6842, 7
        %v6844 = vsub.s32 0, %v6843
        %v6845 = vrot.slane %v2817, %v6844
        %v6846 = vlaneseq
        %v6847 = vshrl.u32 %v6846, 7
        %v6848 = vsub.s32 0, %v6847
        %v6849 = vrot.slane %v2800, %v6848
        %v6850 = vlaneseq
        %v6851 = vshrl.u32 %v6850, 7
        %v6852 = vsub.s32 0, %v6851
        %v6853 = vrot.slane %v2814, %v6852
        %v6854 = vlaneseq
        %v6855 = vshrl.u32 %v6854, 7
        %v6856 = vsub.s32 0, %v6855
        %v6857 = vrot.slane %v2816, %v6856
        %v6858 = vlaneseq
        %v6859 = vshrl.u32 %v6858, 7
        %v6860 = vsub.s32 0, %v6859
        %v6861 = vrot.slane %v2818, %v6860
        %v6862 = vlaneseq
        %v6863 = vshrl.u32 %v6862, 7
        %v6864 = vsub.s32 0, %v6863
        %v6865 = vrot.slane %v2842, %v6864
        %v6866 = vlaneseq
        %v6867 = vshrl.u32 %v6866, 7
        %v6868 = vsub.s32 0, %v6867
        %v6869 = vrot.slane %v2856, %v6868
        %v6870 = vlaneseq
        %v6871 = vshrl.u32 %v6870, 7
        %v6872 = vsub.s32 0, %v6871
        %v6873 = vrot.slane %v2864, %v6872
        %v6874 = vlaneseq
        %v6875 = vshrl.u32 %v6874, 7
        %v6876 = vsub.s32 0, %v6875
        %v6877 = vrot.slane %v2866, %v6876
        %v6878 = vlaneseq
        %v6879 = vshrl.u32 %v6878, 7
        %v6880 = vsub.s32 0, %v6879
        %v6881 = vrot.slane %v2849, %v6880
        %v6882 = vlaneseq
        %v6883 = vshrl.u32 %v6882, 7
        %v6884 = vsub.s32 0, %v6883
        %v6885 = vrot.slane %v2863, %v6884
        %v6886 = vlaneseq
        %v6887 = vshrl.u32 %v6886, 7
        %v6888 = vsub.s32 0, %v6887
        %v6889 = vrot.slane %v2865, %v6888
        %v6890 = vlaneseq
        %v6891 = vshrl.u32 %v6890, 7
        %v6892 = vsub.s32 0, %v6891
        %v6893 = vrot.slane %v2867, %v6892
        %v6894 = vlaneseq
        %v6895 = vshrl.u32 %v6894, 7
        %v6896 = vsub.s32 0, %v6895
        %v6897 = vrot.slane %v2891, %v6896
        %v6898 = vlaneseq
        %v6899 = vshrl.u32 %v6898, 7
        %v6900 = vsub.s32 0, %v6899
        %v6901 = vrot.slane %v2905, %v6900
        %v6902 = vlaneseq
        %v6903 = vshrl.u32 %v6902, 7
        %v6904 = vsub.s32 0, %v6903
        %v6905 = vrot.slane %v2913, %v6904
        %v6906 = vlaneseq
        %v6907 = vshrl.u32 %v6906, 7
        %v6908 = vsub.s32 0, %v6907
        %v6909 = vrot.slane %v2915, %v6908
        %v6910 = vlaneseq
        %v6911 = vshrl.u32 %v6910, 7
        %v6912 = vsub.s32 0, %v6911
        %v6913 = vrot.slane %v2898, %v6912
        %v6914 = vlaneseq
        %v6915 = vshrl.u32 %v6914, 7
        %v6916 = vsub.s32 0, %v6915
        %v6917 = vrot.slane %v2912, %v6916
        %v6918 = vlaneseq
        %v6919 = vshrl.u32 %v6918, 7
        %v6920 = vsub.s32 0, %v6919
        %v6921 = vrot.slane %v2914, %v6920
        %v6922 = vlaneseq
        %v6923 = vshrl.u32 %v6922, 7
        %v6924 = vsub.s32 0, %v6923
        %v6925 = vrot.slane %v2916, %v6924
        %v6926 = vlaneseq
        %v6927 = vshrl.u32 %v6926, 7
        %v6928 = vsub.s32 0, %v6927
        %v6929 = vrot.slane %v2940, %v6928
        %v6930 = vlaneseq
        %v6931 = vshrl.u32 %v6930, 7
        %v6932 = vsub.s32 0, %v6931
        %v6933 = vrot.slane %v2954, %v6932
        %v6934 = vlaneseq
        %v6935 = vshrl.u32 %v6934, 7
        %v6936 = vsub.s32 0, %v6935
        %v6937 = vrot.slane %v2962, %v6936
        %v6938 = vlaneseq
        %v6939 = vshrl.u32 %v6938, 7
        %v6940 = vsub.s32 0, %v6939
        %v6941 = vrot.slane %v2964, %v6940
        %v6942 = vlaneseq
        %v6943 = vshrl.u32 %v6942, 7
        %v6944 = vsub.s32 0, %v6943
        %v6945 = vrot.slane %v2947, %v6944
        %v6946 = vlaneseq
        %v6947 = vshrl.u32 %v6946, 7
        %v6948 = vsub.s32 0, %v6947
        %v6949 = vrot.slane %v2961, %v6948
        %v6950 = vlaneseq
        %v6951 = vshrl.u32 %v6950, 7
        %v6952 = vsub.s32 0, %v6951
        %v6953 = vrot.slane %v2963, %v6952
        %v6954 = vlaneseq
        %v6955 = vshrl.u32 %v6954, 7
        %v6956 = vsub.s32 0, %v6955
        %v6957 = vrot.slane %v2965, %v6956
        %v6958 = vlaneseq
        %v6959 = vshrl.u32 %v6958, 7
        %v6960 = vsub.s32 0, %v6959
        %v6961 = vrot.slane %v2989, %v6960
        %v6962 = vlaneseq
        %v6963 = vshrl.u32 %v6962, 7
        %v6964 = vsub.s32 0, %v6963
        %v6965 = vrot.slane %v3003, %v6964
        %v6966 = vlaneseq
        %v6967 = vshrl.u32 %v6966, 7
        %v6968 = vsub.s32 0, %v6967
        %v6969 = vrot.slane %v3011, %v6968
        %v6970 = vlaneseq
        %v6971 = vshrl.u32 %v6970, 7
        %v6972 = vsub.s32 0, %v6971
        %v6973 = vrot.slane %v3013, %v6972
        %v6974 = vlaneseq
        %v6975 = vshrl.u32 %v6974, 7
        %v6976 = vsub.s32 0, %v6975
        %v6977 = vrot.slane %v2996, %v6976
        %v6978 = vlaneseq
        %v6979 = vshrl.u32 %v6978, 7
        %v6980 = vsub.s32 0, %v6979
        %v6981 = vrot.slane %v3010, %v6980
        %v6982 = vlaneseq
        %v6983 = vshrl.u32 %v6982, 7
        %v6984 = vsub.s32 0, %v6983
        %v6985 = vrot.slane %v3012, %v6984
        %v6986 = vlaneseq
        %v6987 = vshrl.u32 %v6986, 7
        %v6988 = vsub.s32 0, %v6987
        %v6989 = vrot.slane %v3014, %v6988
        %v6990 = vlaneseq
        %v6991 = vshrl.u32 %v6990, 7
        %v6992 = vsub.s32 0, %v6991
        %v6993 = vrot.slane %v3038, %v6992
        %v6994 = vlaneseq
        %v6995 = vshrl.u32 %v6994, 7
        %v6996 = vsub.s32 0, %v6995
        %v6997 = vrot.slane %v3052, %v6996
        %v6998 = vlaneseq
        %v6999 = vshrl.u32 %v6998, 7
        %v7000 = vsub.s32 0, %v6999
        %v7001 = vrot.slane %v3060, %v7000
        %v7002 = vlaneseq
        %v7003 = vshrl.u32 %v7002, 7
        %v7004 = vsub.s32 0, %v7003
        %v7005 = vrot.slane %v3062, %v7004
        %v7006 = vlaneseq
        %v7007 = vshrl.u32 %v7006, 7
        %v7008 = vsub.s32 0, %v7007
        %v7009 = vrot.slane %v3045, %v7008
        %v7010 = vlaneseq
        %v7011 = vshrl.u32 %v7010, 7
        %v7012 = vsub.s32 0, %v7011
        %v7013 = vrot.slane %v3059, %v7012
        %v7014 = vlaneseq
        %v7015 = vshrl.u32 %v7014, 7
        %v7016 = vsub.s32 0, %v7015
        %v7017 = vrot.slane %v3061, %v7016
        %v7018 = vlaneseq
        %v7019 = vshrl.u32 %v7018, 7
        %v7020 = vsub.s32 0, %v7019
        %v7021 = vrot.slane %v3063, %v7020
        %v7022 = vlaneseq
        %v7023 = vshrl.u32 %v7022, 7
        %v7024 = vsub.s32 0, %v7023
        %v7025 = vrot.slane %v3087, %v7024
        %v7026 = vlaneseq
        %v7027 = vshrl.u32 %v7026, 7
        %v7028 = vsub.s32 0, %v7027
        %v7029 = vrot.slane %v3101, %v7028
        %v7030 = vlaneseq
        %v7031 = vshrl.u32 %v7030, 7
        %v7032 = vsub.s32 0, %v7031
        %v7033 = vrot.slane %v3109, %v7032
        %v7034 = vlaneseq
        %v7035 = vshrl.u32 %v7034, 7
        %v7036 = vsub.s32 0, %v7035
        %v7037 = vrot.slane %v3111, %v7036
        %v7038 = vlaneseq
        %v7039 = vshrl.u32 %v7038, 7
        %v7040 = vsub.s32 0, %v7039
        %v7041 = vrot.slane %v3094, %v7040
        %v7042 = vlaneseq
        %v7043 = vshrl.u32 %v7042, 7
        %v7044 = vsub.s32 0, %v7043
        %v7045 = vrot.slane %v3108, %v7044
        %v7046 = vlaneseq
        %v7047 = vshrl.u32 %v7046, 7
        %v7048 = vsub.s32 0, %v7047
        %v7049 = vrot.slane %v3110, %v7048
        %v7050 = vlaneseq
        %v7051 = vshrl.u32 %v7050, 7
        %v7052 = vsub.s32 0, %v7051
        %v7053 = vrot.slane %v3112, %v7052
        %v7054 = vlaneseq
        %v7055 = vshrl.u32 %v7054, 7
        %v7056 = vsub.s32 0, %v7055
        %v7057 = vrot.slane %v3136, %v7056
        %v7058 = vlaneseq
        %v7059 = vshrl.u32 %v7058, 7
        %v7060 = vsub.s32 0, %v7059
        %v7061 = vrot.slane %v3150, %v7060
        %v7062 = vlaneseq
        %v7063 = vshrl.u32 %v7062, 7
        %v7064 = vsub.s32 0, %v7063
        %v7065 = vrot.slane %v3158, %v7064
        %v7066 = vlaneseq
        %v7067 = vshrl.u32 %v7066, 7
        %v7068 = vsub.s32 0, %v7067
        %v7069 = vrot.slane %v3160, %v7068
        %v7070 = vlaneseq
        %v7071 = vshrl.u32 %v7070, 7
        %v7072 = vsub.s32 0, %v7071
        %v7073 = vrot.slane %v3143, %v7072
        %v7074 = vlaneseq
        %v7075 = vshrl.u32 %v7074, 7
        %v7076 = vsub.s32 0, %v7075
        %v7077 = vrot.slane %v3157, %v7076
        %v7078 = vlaneseq
        %v7079 = vshrl.u32 %v7078, 7
        %v7080 = vsub.s32 0, %v7079
        %v7081 = vrot.slane %v3159, %v7080
        %v7082 = vlaneseq
        %v7083 = vshrl.u32 %v7082, 7
        %v7084 = vsub.s32 0, %v7083
        %v7085 = vrot.slane %v3161, %v7084
        %v7086 = vlaneseq
        %v7087 = vshrl.u32 %v7086, 7
        %v7088 = vsub.s32 0, %v7087
        %v7089 = vrot.slane %v3185, %v7088
        %v7090 = vlaneseq
        %v7091 = vshrl.u32 %v7090, 7
        %v7092 = vsub.s32 0, %v7091
        %v7093 = vrot.slane %v3199, %v7092
        %v7094 = vlaneseq
        %v7095 = vshrl.u32 %v7094, 7
        %v7096 = vsub.s32 0, %v7095
        %v7097 = vrot.slane %v3207, %v7096
        %v7098 = vlaneseq
        %v7099 = vshrl.u32 %v7098, 7
        %v7100 = vsub.s32 0, %v7099
        %v7101 = vrot.slane %v3209, %v7100
        %v7102 = vlaneseq
        %v7103 = vshrl.u32 %v7102, 7
        %v7104 = vsub.s32 0, %v7103
        %v7105 = vrot.slane %v3192, %v7104
        %v7106 = vlaneseq
        %v7107 = vshrl.u32 %v7106, 7
        %v7108 = vsub.s32 0, %v7107
        %v7109 = vrot.slane %v3206, %v7108
        %v7110 = vlaneseq
        %v7111 = vshrl.u32 %v7110, 7
        %v7112 = vsub.s32 0, %v7111
        %v7113 = vrot.slane %v3208, %v7112
        %v7114 = vlaneseq
        %v7115 = vshrl.u32 %v7114, 7
        %v7116 = vsub.s32 0, %v7115
        %v7117 = vrot.slane %v3210, %v7116
        %v7118 = vlaneseq
        %v7119 = vshrl.u32 %v7118, 7
        %v7120 = vsub.s32 0, %v7119
        %v7121 = vrot.slane %v3234, %v7120
        %v7122 = vlaneseq
        %v7123 = vshrl.u32 %v7122, 7
        %v7124 = vsub.s32 0, %v7123
        %v7125 = vrot.slane %v3248, %v7124
        %v7126 = vlaneseq
        %v7127 = vshrl.u32 %v7126, 7
        %v7128 = vsub.s32 0, %v7127
        %v7129 = vrot.slane %v3256, %v7128
        %v7130 = vlaneseq
        %v7131 = vshrl.u32 %v7130, 7
        %v7132 = vsub.s32 0, %v7131
        %v7133 = vrot.slane %v3258, %v7132
        %v7134 = vlaneseq
        %v7135 = vshrl.u32 %v7134, 7
        %v7136 = vsub.s32 0, %v7135
        %v7137 = vrot.slane %v3241, %v7136
        %v7138 = vlaneseq
        %v7139 = vshrl.u32 %v7138, 7
        %v7140 = vsub.s32 0, %v7139
        %v7141 = vrot.slane %v3255, %v7140
        %v7142 = vlaneseq
        %v7143 = vshrl.u32 %v7142, 7
        %v7144 = vsub.s32 0, %v7143
        %v7145 = vrot.slane %v3257, %v7144
        %v7146 = vlaneseq
        %v7147 = vshrl.u32 %v7146, 7
        %v7148 = vsub.s32 0, %v7147
        %v7149 = vrot.slane %v3259, %v7148
        %v7150 = vlaneseq
        %v7151 = vshrl.u32 %v7150, 7
        %v7152 = vsub.s32 0, %v7151
        %v7153 = vrot.slane %v3283, %v7152
        %v7154 = vlaneseq
        %v7155 = vshrl.u32 %v7154, 7
        %v7156 = vsub.s32 0, %v7155
        %v7157 = vrot.slane %v3297, %v7156
        %v7158 = vlaneseq
        %v7159 = vshrl.u32 %v7158, 7
        %v7160 = vsub.s32 0, %v7159
        %v7161 = vrot.slane %v3305, %v7160
        %v7162 = vlaneseq
        %v7163 = vshrl.u32 %v7162, 7
        %v7164 = vsub.s32 0, %v7163
        %v7165 = vrot.slane %v3307, %v7164
        %v7166 = vlaneseq
        %v7167 = vshrl.u32 %v7166, 7
        %v7168 = vsub.s32 0, %v7167
        %v7169 = vrot.slane %v3290, %v7168
        %v7170 = vlaneseq
        %v7171 = vshrl.u32 %v7170, 7
        %v7172 = vsub.s32 0, %v7171
        %v7173 = vrot.slane %v3304, %v7172
        %v7174 = vlaneseq
        %v7175 = vshrl.u32 %v7174, 7
        %v7176 = vsub.s32 0, %v7175
        %v7177 = vrot.slane %v3306, %v7176
        %v7178 = vlaneseq
        %v7179 = vshrl.u32 %v7178, 7
        %v7180 = vsub.s32 0, %v7179
        %v7181 = vrot.slane %v3308, %v7180
        %v7182 = vlaneseq
        %v7183 = vshrl.u32 %v7182, 7
        %v7184 = vsub.s32 0, %v7183
        %v7185 = vrot.slane %v3332, %v7184
        %v7186 = vlaneseq
        %v7187 = vshrl.u32 %v7186, 7
        %v7188 = vsub.s32 0, %v7187
        %v7189 = vrot.slane %v3346, %v7188
        %v7190 = vlaneseq
        %v7191 = vshrl.u32 %v7190, 7
        %v7192 = vsub.s32 0, %v7191
        %v7193 = vrot.slane %v3354, %v7192
        %v7194 = vlaneseq
        %v7195 = vshrl.u32 %v7194, 7
        %v7196 = vsub.s32 0, %v7195
        %v7197 = vrot.slane %v3356, %v7196
        %v7198 = vlaneseq
        %v7199 = vshrl.u32 %v7198, 7
        %v7200 = vsub.s32 0, %v7199
        %v7201 = vrot.slane %v3339, %v7200
        %v7202 = vlaneseq
        %v7203 = vshrl.u32 %v7202, 7
        %v7204 = vsub.s32 0, %v7203
        %v7205 = vrot.slane %v3353, %v7204
        %v7206 = vlaneseq
        %v7207 = vshrl.u32 %v7206, 7
        %v7208 = vsub.s32 0, %v7207
        %v7209 = vrot.slane %v3355, %v7208
        %v7210 = vlaneseq
        %v7211 = vshrl.u32 %v7210, 7
        %v7212 = vsub.s32 0, %v7211
        %v7213 = vrot.slane %v3357, %v7212
        %v7214 = vlaneseq
        %v7215 = vshrl.u32 %v7214, 7
        %v7216 = vsub.s32 0, %v7215
        %v7217 = vrot.slane %v3381, %v7216
        %v7218 = vlaneseq
        %v7219 = vshrl.u32 %v7218, 7
        %v7220 = vsub.s32 0, %v7219
        %v7221 = vrot.slane %v3395, %v7220
        %v7222 = vlaneseq
        %v7223 = vshrl.u32 %v7222, 7
        %v7224 = vsub.s32 0, %v7223
        %v7225 = vrot.slane %v3403, %v7224
        %v7226 = vlaneseq
        %v7227 = vshrl.u32 %v7226, 7
        %v7228 = vsub.s32 0, %v7227
        %v7229 = vrot.slane %v3405, %v7228
        %v7230 = vlaneseq
        %v7231 = vshrl.u32 %v7230, 7
        %v7232 = vsub.s32 0, %v7231
        %v7233 = vrot.slane %v3388, %v7232
        %v7234 = vlaneseq
        %v7235 = vshrl.u32 %v7234, 7
        %v7236 = vsub.s32 0, %v7235
        %v7237 = vrot.slane %v3402, %v7236
        %v7238 = vlaneseq
        %v7239 = vshrl.u32 %v7238, 7
        %v7240 = vsub.s32 0, %v7239
        %v7241 = vrot.slane %v3404, %v7240
        %v7242 = vlaneseq
        %v7243 = vshrl.u32 %v7242, 7
        %v7244 = vsub.s32 0, %v7243
        %v7245 = vrot.slane %v3406, %v7244
        %v7246 = vlaneseq
        %v7247 = vshrl.u32 %v7246, 7
        %v7248 = vsub.s32 0, %v7247
        %v7249 = vrot.slane %v3430, %v7248
        %v7250 = vlaneseq
        %v7251 = vshrl.u32 %v7250, 7
        %v7252 = vsub.s32 0, %v7251
        %v7253 = vrot.slane %v3444, %v7252
        %v7254 = vlaneseq
        %v7255 = vshrl.u32 %v7254, 7
        %v7256 = vsub.s32 0, %v7255
        %v7257 = vrot.slane %v3452, %v7256
        %v7258 = vlaneseq
        %v7259 = vshrl.u32 %v7258, 7
        %v7260 = vsub.s32 0, %v7259
        %v7261 = vrot.slane %v3454, %v7260
        %v7262 = vlaneseq
        %v7263 = vshrl.u32 %v7262, 7
        %v7264 = vsub.s32 0, %v7263
        %v7265 = vrot.slane %v3437, %v7264
        %v7266 = vlaneseq
        %v7267 = vshrl.u32 %v7266, 7
        %v7268 = vsub.s32 0, %v7267
        %v7269 = vrot.slane %v3451, %v7268
        %v7270 = vlaneseq
        %v7271 = vshrl.u32 %v7270, 7
        %v7272 = vsub.s32 0, %v7271
        %v7273 = vrot.slane %v3453, %v7272
        %v7274 = vlaneseq
        %v7275 = vshrl.u32 %v7274, 7
        %v7276 = vsub.s32 0, %v7275
        %v7277 = vrot.slane %v3455, %v7276
        %v7278 = vlaneseq
        %v7279 = vshrl.u32 %v7278, 7
        %v7280 = vsub.s32 0, %v7279
        %v7281 = vrot.slane %v3479, %v7280
        %v7282 = vlaneseq
        %v7283 = vshrl.u32 %v7282, 7
        %v7284 = vsub.s32 0, %v7283
        %v7285 = vrot.slane %v3493, %v7284
        %v7286 = vlaneseq
        %v7287 = vshrl.u32 %v7286, 7
        %v7288 = vsub.s32 0, %v7287
        %v7289 = vrot.slane %v3501, %v7288
        %v7290 = vlaneseq
        %v7291 = vshrl.u32 %v7290, 7
        %v7292 = vsub.s32 0, %v7291
        %v7293 = vrot.slane %v3503, %v7292
        %v7294 = vlaneseq
        %v7295 = vshrl.u32 %v7294, 7
        %v7296 = vsub.s32 0, %v7295
        %v7297 = vrot.slane %v3486, %v7296
        %v7298 = vlaneseq
        %v7299 = vshrl.u32 %v7298, 7
        %v7300 = vsub.s32 0, %v7299
        %v7301 = vrot.slane %v3500, %v7300
        %v7302 = vlaneseq
        %v7303 = vshrl.u32 %v7302, 7
        %v7304 = vsub.s32 0, %v7303
        %v7305 = vrot.slane %v3502, %v7304
        %v7306 = vlaneseq
        %v7307 = vshrl.u32 %v7306, 7
        %v7308 = vsub.s32 0, %v7307
        %v7309 = vrot.slane %v3504, %v7308
        %v7310 = vlaneseq
        %v7311 = vshrl.u32 %v7310, 7
        %v7312 = vsub.s32 0, %v7311
        %v7313 = vrot.slane %v3528, %v7312
        %v7314 = vlaneseq
        %v7315 = vshrl.u32 %v7314, 7
        %v7316 = vsub.s32 0, %v7315
        %v7317 = vrot.slane %v3542, %v7316
        %v7318 = vlaneseq
        %v7319 = vshrl.u32 %v7318, 7
        %v7320 = vsub.s32 0, %v7319
        %v7321 = vrot.slane %v3550, %v7320
        %v7322 = vlaneseq
        %v7323 = vshrl.u32 %v7322, 7
        %v7324 = vsub.s32 0, %v7323
        %v7325 = vrot.slane %v3552, %v7324
        %v7326 = vlaneseq
        %v7327 = vshrl.u32 %v7326, 7
        %v7328 = vsub.s32 0, %v7327
        %v7329 = vrot.slane %v3535, %v7328
        %v7330 = vlaneseq
        %v7331 = vshrl.u32 %v7330, 7
        %v7332 = vsub.s32 0, %v7331
        %v7333 = vrot.slane %v3549, %v7332
        %v7334 = vlaneseq
        %v7335 = vshrl.u32 %v7334, 7
        %v7336 = vsub.s32 0, %v7335
        %v7337 = vrot.slane %v3551, %v7336
        %v7338 = vlaneseq
        %v7339 = vshrl.u32 %v7338, 7
        %v7340 = vsub.s32 0, %v7339
        %v7341 = vrot.slane %v3553, %v7340
        %v7342 = vlaneseq
        %v7343 = vshrl.u32 %v7342, 7
        %v7344 = vsub.s32 0, %v7343
        %v7345 = vrot.slane %v3577, %v7344
        %v7346 = vlaneseq
        %v7347 = vshrl.u32 %v7346, 7
        %v7348 = vsub.s32 0, %v7347
        %v7349 = vrot.slane %v3591, %v7348
        %v7350 = vlaneseq
        %v7351 = vshrl.u32 %v7350, 7
        %v7352 = vsub.s32 0, %v7351
        %v7353 = vrot.slane %v3599, %v7352
        %v7354 = vlaneseq
        %v7355 = vshrl.u32 %v7354, 7
        %v7356 = vsub.s32 0, %v7355
        %v7357 = vrot.slane %v3601, %v7356
        %v7358 = vlaneseq
        %v7359 = vshrl.u32 %v7358, 7
        %v7360 = vsub.s32 0, %v7359
        %v7361 = vrot.slane %v3584, %v7360
        %v7362 = vlaneseq
        %v7363 = vshrl.u32 %v7362, 7
        %v7364 = vsub.s32 0, %v7363
        %v7365 = vrot.slane %v3598, %v7364
        %v7366 = vlaneseq
        %v7367 = vshrl.u32 %v7366, 7
        %v7368 = vsub.s32 0, %v7367
        %v7369 = vrot.slane %v3600, %v7368
        %v7370 = vlaneseq
        %v7371 = vshrl.u32 %v7370, 7
        %v7372 = vsub.s32 0, %v7371
        %v7373 = vrot.slane %v3602, %v7372
        %v7374 = vlaneseq
        %v7375 = vshrl.u32 %v7374, 7
        %v7376 = vsub.s32 0, %v7375
        %v7377 = vrot.slane %v3626, %v7376
        %v7378 = vlaneseq
        %v7379 = vshrl.u32 %v7378, 7
        %v7380 = vsub.s32 0, %v7379
        %v7381 = vrot.slane %v3640, %v7380
        %v7382 = vlaneseq
        %v7383 = vshrl.u32 %v7382, 7
        %v7384 = vsub.s32 0, %v7383
        %v7385 = vrot.slane %v3648, %v7384
        %v7386 = vlaneseq
        %v7387 = vshrl.u32 %v7386, 7
        %v7388 = vsub.s32 0, %v7387
        %v7389 = vrot.slane %v3650, %v7388
        %v7390 = vlaneseq
        %v7391 = vshrl.u32 %v7390, 7
        %v7392 = vsub.s32 0, %v7391
        %v7393 = vrot.slane %v3633, %v7392
        %v7394 = vlaneseq
        %v7395 = vshrl.u32 %v7394, 7
        %v7396 = vsub.s32 0, %v7395
        %v7397 = vrot.slane %v3647, %v7396
        %v7398 = vlaneseq
        %v7399 = vshrl.u32 %v7398, 7
        %v7400 = vsub.s32 0, %v7399
        %v7401 = vrot.slane %v3649, %v7400
        %v7402 = vlaneseq
        %v7403 = vshrl.u32 %v7402, 7
        %v7404 = vsub.s32 0, %v7403
        %v7405 = vrot.slane %v3651, %v7404
        %v7406 = vlaneseq
        %v7407 = vshrl.u32 %v7406, 7
        %v7408 = vsub.s32 0, %v7407
        %v7409 = vrot.slane %v3675, %v7408
        %v7410 = vlaneseq
        %v7411 = vshrl.u32 %v7410, 7
        %v7412 = vsub.s32 0, %v7411
        %v7413 = vrot.slane %v3689, %v7412
        %v7414 = vlaneseq
        %v7415 = vshrl.u32 %v7414, 7
        %v7416 = vsub.s32 0, %v7415
        %v7417 = vrot.slane %v3697, %v7416
        %v7418 = vlaneseq
        %v7419 = vshrl.u32 %v7418, 7
        %v7420 = vsub.s32 0, %v7419
        %v7421 = vrot.slane %v3699, %v7420
        %v7422 = vlaneseq
        %v7423 = vshrl.u32 %v7422, 7
        %v7424 = vsub.s32 0, %v7423
        %v7425 = vrot.slane %v3682, %v7424
        %v7426 = vlaneseq
        %v7427 = vshrl.u32 %v7426, 7
        %v7428 = vsub.s32 0, %v7427
        %v7429 = vrot.slane %v3696, %v7428
        %v7430 = vlaneseq
        %v7431 = vshrl.u32 %v7430, 7
        %v7432 = vsub.s32 0, %v7431
        %v7433 = vrot.slane %v3698, %v7432
        %v7434 = vlaneseq
        %v7435 = vshrl.u32 %v7434, 7
        %v7436 = vsub.s32 0, %v7435
        %v7437 = vrot.slane %v3700, %v7436
        %v7438 = vlaneseq
        %v7439 = vshrl.u32 %v7438, 7
        %v7440 = vsub.s32 0, %v7439
        %v7441 = vrot.slane %v3724, %v7440
        %v7442 = vlaneseq
        %v7443 = vshrl.u32 %v7442, 7
        %v7444 = vsub.s32 0, %v7443
        %v7445 = vrot.slane %v3738, %v7444
        %v7446 = vlaneseq
        %v7447 = vshrl.u32 %v7446, 7
        %v7448 = vsub.s32 0, %v7447
        %v7449 = vrot.slane %v3746, %v7448
        %v7450 = vlaneseq
        %v7451 = vshrl.u32 %v7450, 7
        %v7452 = vsub.s32 0, %v7451
        %v7453 = vrot.slane %v3748, %v7452
        %v7454 = vlaneseq
        %v7455 = vshrl.u32 %v7454, 7
        %v7456 = vsub.s32 0, %v7455
        %v7457 = vrot.slane %v3731, %v7456
        %v7458 = vlaneseq
        %v7459 = vshrl.u32 %v7458, 7
        %v7460 = vsub.s32 0, %v7459
        %v7461 = vrot.slane %v3745, %v7460
        %v7462 = vlaneseq
        %v7463 = vshrl.u32 %v7462, 7
        %v7464 = vsub.s32 0, %v7463
        %v7465 = vrot.slane %v3747, %v7464
        %v7466 = vlaneseq
        %v7467 = vshrl.u32 %v7466, 7
        %v7468 = vsub.s32 0, %v7467
        %v7469 = vrot.slane %v3749, %v7468
        %v7470 = vlaneseq
        %v7471 = vshrl.u32 %v7470, 7
        %v7472 = vsub.s32 0, %v7471
        %v7473 = vrot.slane %v3773, %v7472
        %v7474 = vlaneseq
        %v7475 = vshrl.u32 %v7474, 7
        %v7476 = vsub.s32 0, %v7475
        %v7477 = vrot.slane %v3787, %v7476
        %v7478 = vlaneseq
        %v7479 = vshrl.u32 %v7478, 7
        %v7480 = vsub.s32 0, %v7479
        %v7481 = vrot.slane %v3795, %v7480
        %v7482 = vlaneseq
        %v7483 = vshrl.u32 %v7482, 7
        %v7484 = vsub.s32 0, %v7483
        %v7485 = vrot.slane %v3797, %v7484
        %v7486 = vlaneseq
        %v7487 = vshrl.u32 %v7486, 7
        %v7488 = vsub.s32 0, %v7487
        %v7489 = vrot.slane %v3780, %v7488
        %v7490 = vlaneseq
        %v7491 = vshrl.u32 %v7490, 7
        %v7492 = vsub.s32 0, %v7491
        %v7493 = vrot.slane %v3794, %v7492
        %v7494 = vlaneseq
        %v7495 = vshrl.u32 %v7494, 7
        %v7496 = vsub.s32 0, %v7495
        %v7497 = vrot.slane %v3796, %v7496
        %v7498 = vlaneseq
        %v7499 = vshrl.u32 %v7498, 7
        %v7500 = vsub.s32 0, %v7499
        %v7501 = vrot.slane %v3798, %v7500
        %v7502 = vlaneseq
        %v7503 = vshrl.u32 %v7502, 7
        %v7504 = vsub.s32 0, %v7503
        %v7505 = vrot.slane %v3822, %v7504
        %v7506 = vlaneseq
        %v7507 = vshrl.u32 %v7506, 7
        %v7508 = vsub.s32 0, %v7507
        %v7509 = vrot.slane %v3836, %v7508
        %v7510 = vlaneseq
        %v7511 = vshrl.u32 %v7510, 7
        %v7512 = vsub.s32 0, %v7511
        %v7513 = vrot.slane %v3844, %v7512
        %v7514 = vlaneseq
        %v7515 = vshrl.u32 %v7514, 7
        %v7516 = vsub.s32 0, %v7515
        %v7517 = vrot.slane %v3846, %v7516
        %v7518 = vlaneseq
        %v7519 = vshrl.u32 %v7518, 7
        %v7520 = vsub.s32 0, %v7519
        %v7521 = vrot.slane %v3829, %v7520
        %v7522 = vlaneseq
        %v7523 = vshrl.u32 %v7522, 7
        %v7524 = vsub.s32 0, %v7523
        %v7525 = vrot.slane %v3843, %v7524
        %v7526 = vlaneseq
        %v7527 = vshrl.u32 %v7526, 7
        %v7528 = vsub.s32 0, %v7527
        %v7529 = vrot.slane %v3845, %v7528
        %v7530 = vlaneseq
        %v7531 = vshrl.u32 %v7530, 7
        %v7532 = vsub.s32 0, %v7531
        %v7533 = vrot.slane %v3847, %v7532
        %v7534 = vlaneseq
        %v7535 = vshrl.u32 %v7534, 7
        %v7536 = vsub.s32 0, %v7535
        %v7537 = vrot.slane %v3871, %v7536
        %v7538 = vlaneseq
        %v7539 = vshrl.u32 %v7538, 7
        %v7540 = vsub.s32 0, %v7539
        %v7541 = vrot.slane %v3885, %v7540
        %v7542 = vlaneseq
        %v7543 = vshrl.u32 %v7542, 7
        %v7544 = vsub.s32 0, %v7543
        %v7545 = vrot.slane %v3893, %v7544
        %v7546 = vlaneseq
        %v7547 = vshrl.u32 %v7546, 7
        %v7548 = vsub.s32 0, %v7547
        %v7549 = vrot.slane %v3895, %v7548
        %v7550 = vlaneseq
        %v7551 = vshrl.u32 %v7550, 7
        %v7552 = vsub.s32 0, %v7551
        %v7553 = vrot.slane %v3878, %v7552
        %v7554 = vlaneseq
        %v7555 = vshrl.u32 %v7554, 7
        %v7556 = vsub.s32 0, %v7555
        %v7557 = vrot.slane %v3892, %v7556
        %v7558 = vlaneseq
        %v7559 = vshrl.u32 %v7558, 7
        %v7560 = vsub.s32 0, %v7559
        %v7561 = vrot.slane %v3894, %v7560
        %v7562 = vlaneseq
        %v7563 = vshrl.u32 %v7562, 7
        %v7564 = vsub.s32 0, %v7563
        %v7565 = vrot.slane %v3896, %v7564
        %v7566 = vlaneseq
        %v7567 = vshrl.u32 %v7566, 7
        %v7568 = vsub.s32 0, %v7567
        %v7569 = vrot.slane %v3920, %v7568
        %v7570 = vlaneseq
        %v7571 = vshrl.u32 %v7570, 7
        %v7572 = vsub.s32 0, %v7571
        %v7573 = vrot.slane %v3934, %v7572
        %v7574 = vlaneseq
        %v7575 = vshrl.u32 %v7574, 7
        %v7576 = vsub.s32 0, %v7575
        %v7577 = vrot.slane %v3942, %v7576
        %v7578 = vlaneseq
        %v7579 = vshrl.u32 %v7578, 7
        %v7580 = vsub.s32 0, %v7579
        %v7581 = vrot.slane %v3944, %v7580
        %v7582 = vlaneseq
        %v7583 = vshrl.u32 %v7582, 7
        %v7584 = vsub.s32 0, %v7583
        %v7585 = vrot.slane %v3927, %v7584
        %v7586 = vlaneseq
        %v7587 = vshrl.u32 %v7586, 7
        %v7588 = vsub.s32 0, %v7587
        %v7589 = vrot.slane %v3941, %v7588
        %v7590 = vlaneseq
        %v7591 = vshrl.u32 %v7590, 7
        %v7592 = vsub.s32 0, %v7591
        %v7593 = vrot.slane %v3943, %v7592
        %v7594 = vlaneseq
        %v7595 = vshrl.u32 %v7594, 7
        %v7596 = vsub.s32 0, %v7595
        %v7597 = vrot.slane %v3945, %v7596
        %v7598 = vlaneseq
        %v7599 = vshrl.u32 %v7598, 7
        %v7600 = vsub.s32 0, %v7599
        %v7601 = vrot.slane %v3969, %v7600
        %v7602 = vlaneseq
        %v7603 = vshrl.u32 %v7602, 7
        %v7604 = vsub.s32 0, %v7603
        %v7605 = vrot.slane %v3983, %v7604
        %v7606 = vlaneseq
        %v7607 = vshrl.u32 %v7606, 7
        %v7608 = vsub.s32 0, %v7607
        %v7609 = vrot.slane %v3991, %v7608
        %v7610 = vlaneseq
        %v7611 = vshrl.u32 %v7610, 7
        %v7612 = vsub.s32 0, %v7611
        %v7613 = vrot.slane %v3993, %v7612
        %v7614 = vlaneseq
        %v7615 = vshrl.u32 %v7614, 7
        %v7616 = vsub.s32 0, %v7615
        %v7617 = vrot.slane %v3976, %v7616
        %v7618 = vlaneseq
        %v7619 = vshrl.u32 %v7618, 7
        %v7620 = vsub.s32 0, %v7619
        %v7621 = vrot.slane %v3990, %v7620
        %v7622 = vlaneseq
        %v7623 = vshrl.u32 %v7622, 7
        %v7624 = vsub.s32 0, %v7623
        %v7625 = vrot.slane %v3992, %v7624
        %v7626 = vlaneseq
        %v7627 = vshrl.u32 %v7626, 7
        %v7628 = vsub.s32 0, %v7627
        %v7629 = vrot.slane %v3994, %v7628
        %v7630 = vlaneseq
        %v7631 = vshrl.u32 %v7630, 7
        %v7632 = vsub.s32 0, %v7631
        %v7633 = vrot.slane %v4018, %v7632
        %v7634 = vlaneseq
        %v7635 = vshrl.u32 %v7634, 7
        %v7636 = vsub.s32 0, %v7635
        %v7637 = vrot.slane %v4032, %v7636
        %v7638 = vlaneseq
        %v7639 = vshrl.u32 %v7638, 7
        %v7640 = vsub.s32 0, %v7639
        %v7641 = vrot.slane %v4040, %v7640
        %v7642 = vlaneseq
        %v7643 = vshrl.u32 %v7642, 7
        %v7644 = vsub.s32 0, %v7643
        %v7645 = vrot.slane %v4042, %v7644
        %v7646 = vlaneseq
        %v7647 = vshrl.u32 %v7646, 7
        %v7648 = vsub.s32 0, %v7647
        %v7649 = vrot.slane %v4025, %v7648
        %v7650 = vlaneseq
        %v7651 = vshrl.u32 %v7650, 7
        %v7652 = vsub.s32 0, %v7651
        %v7653 = vrot.slane %v4039, %v7652
        %v7654 = vlaneseq
        %v7655 = vshrl.u32 %v7654, 7
        %v7656 = vsub.s32 0, %v7655
        %v7657 = vrot.slane %v4041, %v7656
        %v7658 = vlaneseq
        %v7659 = vshrl.u32 %v7658, 7
        %v7660 = vsub.s32 0, %v7659
        %v7661 = vrot.slane %v4043, %v7660
        %v7662 = vlaneseq
        %v7663 = vshrl.u32 %v7662, 7
        %v7664 = vsub.s32 0, %v7663
        %v7665 = vrot.slane %v4067, %v7664
        %v7666 = vlaneseq
        %v7667 = vshrl.u32 %v7666, 7
        %v7668 = vsub.s32 0, %v7667
        %v7669 = vrot.slane %v4081, %v7668
        %v7670 = vlaneseq
        %v7671 = vshrl.u32 %v7670, 7
        %v7672 = vsub.s32 0, %v7671
        %v7673 = vrot.slane %v4089, %v7672
        %v7674 = vlaneseq
        %v7675 = vshrl.u32 %v7674, 7
        %v7676 = vsub.s32 0, %v7675
        %v7677 = vrot.slane %v4091, %v7676
        %v7678 = vlaneseq
        %v7679 = vshrl.u32 %v7678, 7
        %v7680 = vsub.s32 0, %v7679
        %v7681 = vrot.slane %v4074, %v7680
        %v7682 = vlaneseq
        %v7683 = vshrl.u32 %v7682, 7
        %v7684 = vsub.s32 0, %v7683
        %v7685 = vrot.slane %v4088, %v7684
        %v7686 = vlaneseq
        %v7687 = vshrl.u32 %v7686, 7
        %v7688 = vsub.s32 0, %v7687
        %v7689 = vrot.slane %v4090, %v7688
        %v7690 = vlaneseq
        %v7691 = vshrl.u32 %v7690, 7
        %v7692 = vsub.s32 0, %v7691
        %v7693 = vrot.slane %v4092, %v7692
        %v7694 = vlaneseq
        %v7695 = vshrl.u32 %v7694, 7
        %v7696 = vsub.s32 0, %v7695
        %v7697 = vrot.slane %v4116, %v7696
        %v7698 = vlaneseq
        %v7699 = vshrl.u32 %v7698, 7
        %v7700 = vsub.s32 0, %v7699
        %v7701 = vrot.slane %v4130, %v7700
        %v7702 = vlaneseq
        %v7703 = vshrl.u32 %v7702, 7
        %v7704 = vsub.s32 0, %v7703
        %v7705 = vrot.slane %v4138, %v7704
        %v7706 = vlaneseq
        %v7707 = vshrl.u32 %v7706, 7
        %v7708 = vsub.s32 0, %v7707
        %v7709 = vrot.slane %v4140, %v7708
        %v7710 = vlaneseq
        %v7711 = vshrl.u32 %v7710, 7
        %v7712 = vsub.s32 0, %v7711
        %v7713 = vrot.slane %v4123, %v7712
        %v7714 = vlaneseq
        %v7715 = vshrl.u32 %v7714, 7
        %v7716 = vsub.s32 0, %v7715
        %v7717 = vrot.slane %v4137, %v7716
        %v7718 = vlaneseq
        %v7719 = vshrl.u32 %v7718, 7
        %v7720 = vsub.s32 0, %v7719
        %v7721 = vrot.slane %v4139, %v7720
        %v7722 = vlaneseq
        %v7723 = vshrl.u32 %v7722, 7
        %v7724 = vsub.s32 0, %v7723
        %v7725 = vrot.slane %v4141, %v7724
        %v7982 = vmul.f32 %v4143, %v6705
        %v7983 = vmul.f32 %v4145, %v6709
        %v7984 = vmul.f32 %v4147, %v6713
        %v7985 = vmul.f32 %v4149, %v6717
        %v7986 = vmul.f32 %v4151, %v6721
        %v7987 = vmul.f32 %v4153, %v6725
        %v7988 = vmul.f32 %v4155, %v6729
        %v7989 = vmul.f32 %v4157, %v6733
        %v7990 = vmul.f32 %v4159, %v6737
        %v7991 = vmul.f32 %v4161, %v6741
        %v7992 = vmul.f32 %v4163, %v6745
        %v7993 = vmul.f32 %v4165, %v6749
        %v7994 = vmul.f32 %v4167, %v6753
        %v7995 = vmul.f32 %v4169, %v6757
        %v7996 = vmul.f32 %v4171, %v6761
        %v7997 = vmul.f32 %v4173, %v6765
        %v7998 = vmul.f32 %v4175, %v6769
        %v7999 = vmul.f32 %v4177, %v6773
        %v8000 = vmul.f32 %v4179, %v6777
        %v8001 = vmul.f32 %v4181, %v6781
        %v8002 = vmul.f32 %v4183, %v6785
        %v8003 = vmul.f32 %v4185, %v6789
        %v8004 = vmul.f32 %v4187, %v6793
        %v8005 = vmul.f32 %v4189, %v6797
        %v8006 = vmul.f32 %v4191, %v6801
        %v8007 = vmul.f32 %v4193, %v6805
        %v8008 = vmul.f32 %v4195, %v6809
        %v8009 = vmul.f32 %v4197, %v6813
        %v8010 = vmul.f32 %v4199, %v6817
        %v8011 = vmul.f32 %v4201, %v6821
        %v8012 = vmul.f32 %v4203, %v6825
        %v8013 = vmul.f32 %v4205, %v6829
        %v8014 = vmul.f32 %v4207, %v6833
        %v8015 = vmul.f32 %v4209, %v6837
        %v8016 = vmul.f32 %v4211, %v6841
        %v8017 = vmul.f32 %v4213, %v6845
        %v8018 = vmul.f32 %v4215, %v6849
        %v8019 = vmul.f32 %v4217, %v6853
        %v8020 = vmul.f32 %v4219, %v6857
        %v8021 = vmul.f32 %v4221, %v6861
        %v8022 = vmul.f32 %v4223, %v6865
        %v8023 = vmul.f32 %v4225, %v6869
        %v8024 = vmul.f32 %v4227, %v6873
        %v8025 = vmul.f32 %v4229, %v6877
        %v8026 = vmul.f32 %v4231, %v6881
        %v8027 = vmul.f32 %v4233, %v6885
        %v8028 = vmul.f32 %v4235, %v6889
        %v8029 = vmul.f32 %v4237, %v6893
        %v8030 = vmul.f32 %v4239, %v6897
        %v8031 = vmul.f32 %v4241, %v6901
        %v8032 = vmul.f32 %v4243, %v6905
        %v8033 = vmul.f32 %v4245, %v6909
        %v8034 = vmul.f32 %v4247, %v6913
        %v8035 = vmul.f32 %v4249, %v6917
        %v8036 = vmul.f32 %v4251, %v6921
        %v8037 = vmul.f32 %v4253, %v6925
        %v8038 = vmul.f32 %v4255, %v6929
        %v8039 = vmul.f32 %v4257, %v6933
        %v8040 = vmul.f32 %v4259, %v6937
        %v8041 = vmul.f32 %v4261, %v6941
        %v8042 = vmul.f32 %v4263, %v6945
        %v8043 = vmul.f32 %v4265, %v6949
        %v8044 = vmul.f32 %v4267, %v6953
        %v8045 = vmul.f32 %v4269, %v6957
        %v8046 = vmul.f32 %v4271, %v6961
        %v8047 = vmul.f32 %v4273, %v6965
        %v8048 = vmul.f32 %v4275, %v6969
        %v8049 = vmul.f32 %v4277, %v6973
        %v8050 = vmul.f32 %v4279, %v6977
        %v8051 = vmul.f32 %v4281, %v6981
        %v8052 = vmul.f32 %v4283, %v6985
        %v8053 = vmul.f32 %v4285, %v6989
        %v8054 = vmul.f32 %v4287, %v6993
        %v8055 = vmul.f32 %v4289, %v6997
        %v8056 = vmul.f32 %v4291, %v7001
        %v8057 = vmul.f32 %v4293, %v7005
        %v8058 = vmul.f32 %v4295, %v7009
        %v8059 = vmul.f32 %v4297, %v7013
        %v8060 = vmul.f32 %v4299, %v7017
        %v8061 = vmul.f32 %v4301, %v7021
        %v8062 = vmul.f32 %v4303, %v7025
        %v8063 = vmul.f32 %v4305, %v7029
        %v8064 = vmul.f32 %v4307, %v7033
        %v8065 = vmul.f32 %v4309, %v7037
        %v8066 = vmul.f32 %v4311, %v7041
        %v8067 = vmul.f32 %v4313, %v7045
        %v8068 = vmul.f32 %v4315, %v7049
        %v8069 = vmul.f32 %v4317, %v7053
        %v8070 = vmul.f32 %v4319, %v7057
        %v8071 = vmul.f32 %v4321, %v7061
        %v8072 = vmul.f32 %v4323, %v7065
        %v8073 = vmul.f32 %v4325, %v7069
        %v8074 = vmul.f32 %v4327, %v7073
        %v8075 = vmul.f32 %v4329, %v7077
        %v8076 = vmul.f32 %v4331, %v7081
        %v8077 = vmul.f32 %v4333, %v7085
        %v8078 = vmul.f32 %v4335, %v7089
        %v8079 = vmul.f32 %v4337, %v7093
        %v8080 = vmul.f32 %v4339, %v7097
        %v8081 = vmul.f32 %v4341, %v7101
        %v8082 = vmul.f32 %v4343, %v7105
        %v8083 = vmul.f32 %v4345, %v7109
        %v8084 = vmul.f32 %v4347, %v7113
        %v8085 = vmul.f32 %v4349, %v7117
        %v8086 = vmul.f32 %v4351, %v7121
        %v8087 = vmul.f32 %v4353, %v7125
        %v8088 = vmul.f32 %v4355, %v7129
        %v8089 = vmul.f32 %v4357, %v7133
        %v8090 = vmul.f32 %v4359, %v7137
        %v8091 = vmul.f32 %v4361, %v7141
        %v8092 = vmul.f32 %v4363, %v7145
        %v8093 = vmul.f32 %v4365, %v7149
        %v8094 = vmul.f32 %v4367, %v7153
        %v8095 = vmul.f32 %v4369, %v7157
        %v8096 = vmul.f32 %v4371, %v7161
        %v8097 = vmul.f32 %v4373, %v7165
        %v8098 = vmul.f32 %v4375, %v7169
        %v8099 = vmul.f32 %v4377, %v7173
        %v8100 = vmul.f32 %v4379, %v7177
        %v8101 = vmul.f32 %v4381, %v7181
        %v8102 = vmul.f32 %v4383, %v7185
        %v8103 = vmul.f32 %v4385, %v7189
        %v8104 = vmul.f32 %v4387, %v7193
        %v8105 = vmul.f32 %v4389, %v7197
        %v8106 = vmul.f32 %v4391, %v7201
        %v8107 = vmul.f32 %v4393, %v7205
        %v8108 = vmul.f32 %v4395, %v7209
        %v8109 = vmul.f32 %v4397, %v7213
        %v8110 = vmul.f32 %v4399, %v7217
        %v8111 = vmul.f32 %v4401, %v7221
        %v8112 = vmul.f32 %v4403, %v7225
        %v8113 = vmul.f32 %v4405, %v7229
        %v8114 = vmul.f32 %v4407, %v7233
        %v8115 = vmul.f32 %v4409, %v7237
        %v8116 = vmul.f32 %v4411, %v7241
        %v8117 = vmul.f32 %v4413, %v7245
        %v8118 = vmul.f32 %v4415, %v7249
        %v8119 = vmul.f32 %v4417, %v7253
        %v8120 = vmul.f32 %v4419, %v7257
        %v8121 = vmul.f32 %v4421, %v7261
        %v8122 = vmul.f32 %v4423, %v7265
        %v8123 = vmul.f32 %v4425, %v7269
        %v8124 = vmul.f32 %v4427, %v7273
        %v8125 = vmul.f32 %v4429, %v7277
        %v8126 = vmul.f32 %v4431, %v7281
        %v8127 = vmul.f32 %v4433, %v7285
        %v8128 = vmul.f32 %v4435, %v7289
        %v8129 = vmul.f32 %v4437, %v7293
        %v8130 = vmul.f32 %v4439, %v7297
        %v8131 = vmul.f32 %v4441, %v7301
        %v8132 = vmul.f32 %v4443, %v7305
        %v8133 = vmul.f32 %v4445, %v7309
        %v8134 = vmul.f32 %v4447, %v7313
        %v8135 = vmul.f32 %v4449, %v7317
        %v8136 = vmul.f32 %v4451, %v7321
        %v8137 = vmul.f32 %v4453, %v7325
        %v8138 = vmul.f32 %v4455, %v7329
        %v8139 = vmul.f32 %v4457, %v7333
        %v8140 = vmul.f32 %v4459, %v7337
        %v8141 = vmul.f32 %v4461, %v7341
        %v8142 = vmul.f32 %v4463, %v7345
        %v8143 = vmul.f32 %v4465, %v7349
        %v8144 = vmul.f32 %v4467, %v7353
        %v8145 = vmul.f32 %v4469, %v7357
        %v8146 = vmul.f32 %v4471, %v7361
        %v8147 = vmul.f32 %v4473, %v7365
        %v8148 = vmul.f32 %v4475, %v7369
        %v8149 = vmul.f32 %v4477, %v7373
        %v8150 = vmul.f32 %v4479, %v7377
        %v8151 = vmul.f32 %v4481, %v7381
        %v8152 = vmul.f32 %v4483, %v7385
        %v8153 = vmul.f32 %v4485, %v7389
        %v8154 = vmul.f32 %v4487, %v7393
        %v8155 = vmul.f32 %v4489, %v7397
        %v8156 = vmul.f32 %v4491, %v7401
        %v8157 = vmul.f32 %v4493, %v7405
        %v8158 = vmul.f32 %v4495, %v7409
        %v8159 = vmul.f32 %v4497, %v7413
        %v8160 = vmul.f32 %v4499, %v7417
        %v8161 = vmul.f32 %v4501, %v7421
        %v8162 = vmul.f32 %v4503, %v7425
        %v8163 = vmul.f32 %v4505, %v7429
        %v8164 = vmul.f32 %v4507, %v7433
        %v8165 = vmul.f32 %v4509, %v7437
        %v8166 = vmul.f32 %v4511, %v7441
        %v8167 = vmul.f32 %v4513, %v7445
        %v8168 = vmul.f32 %v4515, %v7449
        %v8169 = vmul.f32 %v4517, %v7453
        %v8170 = vmul.f32 %v4519, %v7457
        %v8171 = vmul.f32 %v4521, %v7461
        %v8172 = vmul.f32 %v4523, %v7465
        %v8173 = vmul.f32 %v4525, %v7469
        %v8174 = vmul.f32 %v4527, %v7473
        %v8175 = vmul.f32 %v4529, %v7477
        %v8176 = vmul.f32 %v4531, %v7481
        %v8177 = vmul.f32 %v4533, %v7485
        %v8178 = vmul.f32 %v4535, %v7489
        %v8179 = vmul.f32 %v4537, %v7493
        %v8180 = vmul.f32 %v4539, %v7497
        %v8181 = vmul.f32 %v4541, %v7501
        %v8182 = vmul.f32 %v4543, %v7505
        %v8183 = vmul.f32 %v4545, %v7509
        %v8184 = vmul.f32 %v4547, %v7513
        %v8185 = vmul.f32 %v4549, %v7517
        %v8186 = vmul.f32 %v4551, %v7521
        %v8187 = vmul.f32 %v4553, %v7525
        %v8188 = vmul.f32 %v4555, %v7529
        %v8189 = vmul.f32 %v4557, %v7533
        %v8190 = vmul.f32 %v4559, %v7537
        %v8191 = vmul.f32 %v4561, %v7541
        %v8192 = vmul.f32 %v4563, %v7545
        %v8193 = vmul.f32 %v4565, %v7549
        %v8194 = vmul.f32 %v4567, %v7553
        %v8195 = vmul.f32 %v4569, %v7557
        %v8196 = vmul.f32 %v4571, %v7561
        %v8197 = vmul.f32 %v4573, %v7565
        %v8198 = vmul.f32 %v4575, %v7569
        %v8199 = vmul.f32 %v4577, %v7573
        %v8200 = vmul.f32 %v4579, %v7577
        %v8201 = vmul.f32 %v4581, %v7581
        %v8202 = vmul.f32 %v4583, %v7585
        %v8203 = vmul.f32 %v4585, %v7589
        %v8204 = vmul.f32 %v4587, %v7593
        %v8205 = vmul.f32 %v4589, %v7597
        %v8206 = vmul.f32 %v4591, %v7601
        %v8207 = vmul.f32 %v4593, %v7605
        %v8208 = vmul.f32 %v4595, %v7609
        %v8209 = vmul.f32 %v4597, %v7613
        %v8210 = vmul.f32 %v4599, %v7617
        %v8211 = vmul.f32 %v4601, %v7621
        %v8212 = vmul.f32 %v4603, %v7625
        %v8213 = vmul.f32 %v4605, %v7629
        %v8214 = vmul.f32 %v4607, %v7633
        %v8215 = vmul.f32 %v4609, %v7637
        %v8216 = vmul.f32 %v4611, %v7641
        %v8217 = vmul.f32 %v4613, %v7645
        %v8218 = vmul.f32 %v4615, %v7649
        %v8219 = vmul.f32 %v4617, %v7653
        %v8220 = vmul.f32 %v4619, %v7657
        %v8221 = vmul.f32 %v4621, %v7661
        %v8222 = vmul.f32 %v4623, %v7665
        %v8223 = vmul.f32 %v4625, %v7669
        %v8224 = vmul.f32 %v4627, %v7673
        %v8225 = vmul.f32 %v4629, %v7677
        %v8226 = vmul.f32 %v4631, %v7681
        %v8227 = vmul.f32 %v4633, %v7685
        %v8228 = vmul.f32 %v4635, %v7689
        %v8229 = vmul.f32 %v4637, %v7693
        %v8230 = vmul.f32 %v4639, %v7697
        %v8231 = vmul.f32 %v4641, %v7701
        %v8232 = vmul.f32 %v4643, %v7705
        %v8233 = vmul.f32 %v4645, %v7709
        %v8234 = vmul.f32 %v4647, %v7713
        %v8235 = vmul.f32 %v4649, %v7717
        %v8236 = vmul.f32 %v4651, %v7721
        %v8237 = vmul.f32 %v4653, %v7725
        %v8238 = vadd.f32 %v6446, %v7982
        %v8239 = vadd.f32 %v6447, %v7983
        %v8240 = vadd.f32 %v6448, %v7984
        %v8241 = vadd.f32 %v6449, %v7985
        %v8242 = vadd.f32 %v6450, %v7986
        %v8243 = vadd.f32 %v6451, %v7987
        %v8244 = vadd.f32 %v6452, %v7988
        %v8245 = vadd.f32 %v6453, %v7989
        %v8246 = vadd.f32 %v6454, %v7990
        %v8247 = vadd.f32 %v6455, %v7991
        %v8248 = vadd.f32 %v6456, %v7992
        %v8249 = vadd.f32 %v6457, %v7993
        %v8250 = vadd.f32 %v6458, %v7994
        %v8251 = vadd.f32 %v6459, %v7995
        %v8252 = vadd.f32 %v6460, %v7996
        %v8253 = vadd.f32 %v6461, %v7997
        %v8254 = vadd.f32 %v6462, %v7998
        %v8255 = vadd.f32 %v6463, %v7999
        %v8256 = vadd.f32 %v6464, %v8000
        %v8257 = vadd.f32 %v6465, %v8001
        %v8258 = vadd.f32 %v6466, %v8002
        %v8259 = vadd.f32 %v6467, %v8003
        %v8260 = vadd.f32 %v6468, %v8004
        %v8261 = vadd.f32 %v6469, %v8005
        %v8262 = vadd.f32 %v6470, %v8006
        %v8263 = vadd.f32 %v6471, %v8007
        %v8264 = vadd.f32 %v6472, %v8008
        %v8265 = vadd.f32 %v6473, %v8009
        %v8266 = vadd.f32 %v6474, %v8010
        %v8267 = vadd.f32 %v6475, %v8011
        %v8268 = vadd.f32 %v6476, %v8012
        %v8269 = vadd.f32 %v6477, %v8013
        %v8270 = vadd.f32 %v6478, %v8014
        %v8271 = vadd.f32 %v6479, %v8015
        %v8272 = vadd.f32 %v6480, %v8016
        %v8273 = vadd.f32 %v6481, %v8017
        %v8274 = vadd.f32 %v6482, %v8018
        %v8275 = vadd.f32 %v6483, %v8019
        %v8276 = vadd.f32 %v6484, %v8020
        %v8277 = vadd.f32 %v6485, %v8021
        %v8278 = vadd.f32 %v6486, %v8022
        %v8279 = vadd.f32 %v6487, %v8023
        %v8280 = vadd.f32 %v6488, %v8024
        %v8281 = vadd.f32 %v6489, %v8025
        %v8282 = vadd.f32 %v6490, %v8026
        %v8283 = vadd.f32 %v6491, %v8027
        %v8284 = vadd.f32 %v6492, %v8028
        %v8285 = vadd.f32 %v6493, %v8029
        %v8286 = vadd.f32 %v6494, %v8030
        %v8287 = vadd.f32 %v6495, %v8031
        %v8288 = vadd.f32 %v6496, %v8032
        %v8289 = vadd.f32 %v6497, %v8033
        %v8290 = vadd.f32 %v6498, %v8034
        %v8291 = vadd.f32 %v6499, %v8035
        %v8292 = vadd.f32 %v6500, %v8036
        %v8293 = vadd.f32 %v6501, %v8037
        %v8294 = vadd.f32 %v6502, %v8038
        %v8295 = vadd.f32 %v6503, %v8039
        %v8296 = vadd.f32 %v6504, %v8040
        %v8297 = vadd.f32 %v6505, %v8041
        %v8298 = vadd.f32 %v6506, %v8042
        %v8299 = vadd.f32 %v6507, %v8043
        %v8300 = vadd.f32 %v6508, %v8044
        %v8301 = vadd.f32 %v6509, %v8045
        %v8302 = vadd.f32 %v6510, %v8046
        %v8303 = vadd.f32 %v6511, %v8047
        %v8304 = vadd.f32 %v6512, %v8048
        %v8305 = vadd.f32 %v6513, %v8049
        %v8306 = vadd.f32 %v6514, %v8050
        %v8307 = vadd.f32 %v6515, %v8051
        %v8308 = vadd.f32 %v6516, %v8052
        %v8309 = vadd.f32 %v6517, %v8053
        %v8310 = vadd.f32 %v6518, %v8054
        %v8311 = vadd.f32 %v6519, %v8055
        %v8312 = vadd.f32 %v6520, %v8056
        %v8313 = vadd.f32 %v6521, %v8057
        %v8314 = vadd.f32 %v6522, %v8058
        %v8315 = vadd.f32 %v6523, %v8059
        %v8316 = vadd.f32 %v6524, %v8060
        %v8317 = vadd.f32 %v6525, %v8061
        %v8318 = vadd.f32 %v6526, %v8062
        %v8319 = vadd.f32 %v6527, %v8063
        %v8320 = vadd.f32 %v6528, %v8064
        %v8321 = vadd.f32 %v6529, %v8065
        %v8322 = vadd.f32 %v6530, %v8066
        %v8323 = vadd.f32 %v6531, %v8067
        %v8324 = vadd.f32 %v6532, %v8068
        %v8325 = vadd.f32 %v6533, %v8069
        %v8326 = vadd.f32 %v6534, %v8070
        %v8327 = vadd.f32 %v6535, %v8071
        %v8328 = vadd.f32 %v6536, %v8072
        %v8329 = vadd.f32 %v6537, %v8073
        %v8330 = vadd.f32 %v6538, %v8074
        %v8331 = vadd.f32 %v6539, %v8075
        %v8332 = vadd.f32 %v6540, %v8076
        %v8333 = vadd.f32 %v6541, %v8077
        %v8334 = vadd.f32 %v6542, %v8078
        %v8335 = vadd.f32 %v6543, %v8079
        %v8336 = vadd.f32 %v6544, %v8080
        %v8337 = vadd.f32 %v6545, %v8081
        %v8338 = vadd.f32 %v6546, %v8082
        %v8339 = vadd.f32 %v6547, %v8083
        %v8340 = vadd.f32 %v6548, %v8084
        %v8341 = vadd.f32 %v6549, %v8085
        %v8342 = vadd.f32 %v6550, %v8086
        %v8343 = vadd.f32 %v6551, %v8087
        %v8344 = vadd.f32 %v6552, %v8088
        %v8345 = vadd.f32 %v6553, %v8089
        %v8346 = vadd.f32 %v6554, %v8090
        %v8347 = vadd.f32 %v6555, %v8091
        %v8348 = vadd.f32 %v6556, %v8092
        %v8349 = vadd.f32 %v6557, %v8093
        %v8350 = vadd.f32 %v6558, %v8094
        %v8351 = vadd.f32 %v6559, %v8095
        %v8352 = vadd.f32 %v6560, %v8096
        %v8353 = vadd.f32 %v6561, %v8097
        %v8354 = vadd.f32 %v6562, %v8098
        %v8355 = vadd.f32 %v6563, %v8099
        %v8356 = vadd.f32 %v6564, %v8100
        %v8357 = vadd.f32 %v6565, %v8101
        %v8358 = vadd.f32 %v6566, %v8102
        %v8359 = vadd.f32 %v6567, %v8103
        %v8360 = vadd.f32 %v6568, %v8104
        %v8361 = vadd.f32 %v6569, %v8105
        %v8362 = vadd.f32 %v6570, %v8106
        %v8363 = vadd.f32 %v6571, %v8107
        %v8364 = vadd.f32 %v6572, %v8108
        %v8365 = vadd.f32 %v6573, %v8109
        %v8366 = vadd.f32 %v6574, %v8110
        %v8367 = vadd.f32 %v6575, %v8111
        %v8368 = vadd.f32 %v6576, %v8112
        %v8369 = vadd.f32 %v6577, %v8113
        %v8370 = vadd.f32 %v6578, %v8114
        %v8371 = vadd.f32 %v6579, %v8115
        %v8372 = vadd.f32 %v6580, %v8116
        %v8373 = vadd.f32 %v6581, %v8117
        %v8374 = vadd.f32 %v6582, %v8118
        %v8375 = vadd.f32 %v6583, %v8119
        %v8376 = vadd.f32 %v6584, %v8120
        %v8377 = vadd.f32 %v6585, %v8121
        %v8378 = vadd.f32 %v6586, %v8122
        %v8379 = vadd.f32 %v6587, %v8123
        %v8380 = vadd.f32 %v6588, %v8124
        %v8381 = vadd.f32 %v6589, %v8125
        %v8382 = vadd.f32 %v6590, %v8126
        %v8383 = vadd.f32 %v6591, %v8127
        %v8384 = vadd.f32 %v6592, %v8128
        %v8385 = vadd.f32 %v6593, %v8129
        %v8386 = vadd.f32 %v6594, %v8130
        %v8387 = vadd.f32 %v6595, %v8131
        %v8388 = vadd.f32 %v6596, %v8132
        %v8389 = vadd.f32 %v6597, %v8133
        %v8390 = vadd.f32 %v6598, %v8134
        %v8391 = vadd.f32 %v6599, %v8135
        %v8392 = vadd.f32 %v6600, %v8136
        %v8393 = vadd.f32 %v6601, %v8137
        %v8394 = vadd.f32 %v6602, %v8138
        %v8395 = vadd.f32 %v6603, %v8139
        %v8396 = vadd.f32 %v6604, %v8140
        %v8397 = vadd.f32 %v6605, %v8141
        %v8398 = vadd.f32 %v6606, %v8142
        %v8399 = vadd.f32 %v6607, %v8143
        %v8400 = vadd.f32 %v6608, %v8144
        %v8401 = vadd.f32 %v6609, %v8145
        %v8402 = vadd.f32 %v6610, %v8146
        %v8403 = vadd.f32 %v6611, %v8147
        %v8404 = vadd.f32 %v6612, %v8148
        %v8405 = vadd.f32 %v6613, %v8149
        %v8406 = vadd.f32 %v6614, %v8150
        %v8407 = vadd.f32 %v6615, %v8151
        %v8408 = vadd.f32 %v6616, %v8152
        %v8409 = vadd.f32 %v6617, %v8153
        %v8410 = vadd.f32 %v6618, %v8154
        %v8411 = vadd.f32 %v6619, %v8155
        %v8412 = vadd.f32 %v6620, %v8156
        %v8413 = vadd.f32 %v6621, %v8157
        %v8414 = vadd.f32 %v6622, %v8158
        %v8415 = vadd.f32 %v6623, %v8159
        %v8416 = vadd.f32 %v6624, %v8160
        %v8417 = vadd.f32 %v6625, %v8161
        %v8418 = vadd.f32 %v6626, %v8162
        %v8419 = vadd.f32 %v6627, %v8163
        %v8420 = vadd.f32 %v6628, %v8164
        %v8421 = vadd.f32 %v6629, %v8165
        %v8422 = vadd.f32 %v6630, %v8166
        %v8423 = vadd.f32 %v6631, %v8167
        %v8424 = vadd.f32 %v6632, %v8168
        %v8425 = vadd.f32 %v6633, %v8169
        %v8426 = vadd.f32 %v6634, %v8170
        %v8427 = vadd.f32 %v6635, %v8171
        %v8428 = vadd.f32 %v6636, %v8172
        %v8429 = vadd.f32 %v6637, %v8173
        %v8430 = vadd.f32 %v6638, %v8174
        %v8431 = vadd.f32 %v6639, %v8175
        %v8432 = vadd.f32 %v6640, %v8176
        %v8433 = vadd.f32 %v6641, %v8177
        %v8434 = vadd.f32 %v6642, %v8178
        %v8435 = vadd.f32 %v6643, %v8179
        %v8436 = vadd.f32 %v6644, %v8180
        %v8437 = vadd.f32 %v6645, %v8181
        %v8438 = vadd.f32 %v6646, %v8182
        %v8439 = vadd.f32 %v6647, %v8183
        %v8440 = vadd.f32 %v6648, %v8184
        %v8441 = vadd.f32 %v6649, %v8185
        %v8442 = vadd.f32 %v6650, %v8186
        %v8443 = vadd.f32 %v6651, %v8187
        %v8444 = vadd.f32 %v6652, %v8188
        %v8445 = vadd.f32 %v6653, %v8189
        %v8446 = vadd.f32 %v6654, %v8190
        %v8447 = vadd.f32 %v6655, %v8191
        %v8448 = vadd.f32 %v6656, %v8192
        %v8449 = vadd.f32 %v6657, %v8193
        %v8450 = vadd.f32 %v6658, %v8194
        %v8451 = vadd.f32 %v6659, %v8195
        %v8452 = vadd.f32 %v6660, %v8196
        %v8453 = vadd.f32 %v6661, %v8197
        %v8454 = vadd.f32 %v6662, %v8198
        %v8455 = vadd.f32 %v6663, %v8199
        %v8456 = vadd.f32 %v6664, %v8200
        %v8457 = vadd.f32 %v6665, %v8201
        %v8458 = vadd.f32 %v6666, %v8202
        %v8459 = vadd.f32 %v6667, %v8203
        %v8460 = vadd.f32 %v6668, %v8204
        %v8461 = vadd.f32 %v6669, %v8205
        %v8462 = vadd.f32 %v6670, %v8206
        %v8463 = vadd.f32 %v6671, %v8207
        %v8464 = vadd.f32 %v6672, %v8208
        %v8465 = vadd.f32 %v6673, %v8209
        %v8466 = vadd.f32 %v6674, %v8210
        %v8467 = vadd.f32 %v6675, %v8211
        %v8468 = vadd.f32 %v6676, %v8212
        %v8469 = vadd.f32 %v6677, %v8213
        %v8470 = vadd.f32 %v6678, %v8214
        %v8471 = vadd.f32 %v6679, %v8215
        %v8472 = vadd.f32 %v6680, %v8216
        %v8473 = vadd.f32 %v6681, %v8217
        %v8474 = vadd.f32 %v6682, %v8218
        %v8475 = vadd.f32 %v6683, %v8219
        %v8476 = vadd.f32 %v6684, %v8220
        %v8477 = vadd.f32 %v6685, %v8221
        %v8478 = vadd.f32 %v6686, %v8222
        %v8479 = vadd.f32 %v6687, %v8223
        %v8480 = vadd.f32 %v6688, %v8224
        %v8481 = vadd.f32 %v6689, %v8225
        %v8482 = vadd.f32 %v6690, %v8226
        %v8483 = vadd.f32 %v6691, %v8227
        %v8484 = vadd.f32 %v6692, %v8228
        %v8485 = vadd.f32 %v6693, %v8229
        %v8486 = vadd.f32 %v6694, %v8230
        %v8487 = vadd.f32 %v6695, %v8231
        %v8488 = vadd.f32 %v6696, %v8232
        %v8489 = vadd.f32 %v6697, %v8233
        %v8490 = vadd.f32 %v6698, %v8234
        %v8491 = vadd.f32 %v6699, %v8235
        %v8492 = vadd.f32 %v6700, %v8236
        %v8493 = vadd.f32 %v6701, %v8237
        %8494 = vst [vmem:[%s342] sm:$0xff] %v8238
        %8495 = vst [vmem:[%s342 + $0x8] sm:$0xff] %v8239
        %8496 = vst [vmem:[%s342 + $0x10] sm:$0xff] %v8240
        %8497 = vst [vmem:[%s342 + $0x18] sm:$0xff] %v8241
        %8498 = vst [vmem:[%s342 + $0x20] sm:$0xff] %v8242
        %8499 = vst [vmem:[%s342 + $0x28] sm:$0xff] %v8243
        %8500 = vst [vmem:[%s342 + $0x30] sm:$0xff] %v8244
        %8501 = vst [vmem:[%s342 + $0x38] sm:$0xff] %v8245
        %8502 = vst [vmem:[%s342 + $0x40] sm:$0xff] %v8246
        %8503 = vst [vmem:[%s342 + $0x48] sm:$0xff] %v8247
        %8504 = vst [vmem:[%s342 + $0x50] sm:$0xff] %v8248
        %8505 = vst [vmem:[%s342 + $0x58] sm:$0xff] %v8249
        %8506 = vst [vmem:[%s342 + $0x60] sm:$0xff] %v8250
        %8507 = vst [vmem:[%s342 + $0x68] sm:$0xff] %v8251
        %8508 = vst [vmem:[%s342 + $0x70] sm:$0xff] %v8252
        %8509 = vst [vmem:[%s342 + $0x78] sm:$0xff] %v8253
        %8510 = vst [vmem:[%s342 + $0x80] sm:$0xff] %v8254
        %8511 = vst [vmem:[%s342 + $0x88] sm:$0xff] %v8255
        %8512 = vst [vmem:[%s342 + $0x90] sm:$0xff] %v8256
        %8513 = vst [vmem:[%s342 + $0x98] sm:$0xff] %v8257
        %8514 = vst [vmem:[%s342 + $0xa0] sm:$0xff] %v8258
        %8515 = vst [vmem:[%s342 + $0xa8] sm:$0xff] %v8259
        %8516 = vst [vmem:[%s342 + $0xb0] sm:$0xff] %v8260
        %8517 = vst [vmem:[%s342 + $0xb8] sm:$0xff] %v8261
        %8518 = vst [vmem:[%s342 + $0xc0] sm:$0xff] %v8262
        %8519 = vst [vmem:[%s342 + $0xc8] sm:$0xff] %v8263
        %8520 = vst [vmem:[%s342 + $0xd0] sm:$0xff] %v8264
        %8521 = vst [vmem:[%s342 + $0xd8] sm:$0xff] %v8265
        %8522 = vst [vmem:[%s342 + $0xe0] sm:$0xff] %v8266
        %8523 = vst [vmem:[%s342 + $0xe8] sm:$0xff] %v8267
        %8524 = vst [vmem:[%s342 + $0xf0] sm:$0xff] %v8268
        %8525 = vst [vmem:[%s342 + $0xf8] sm:$0xff] %v8269
        %8526 = vst [vmem:[%s342 + $0x100] sm:$0xff] %v8270
        %8527 = vst [vmem:[%s342 + $0x108] sm:$0xff] %v8271
        %8528 = vst [vmem:[%s342 + $0x110] sm:$0xff] %v8272
        %8529 = vst [vmem:[%s342 + $0x118] sm:$0xff] %v8273
        %8530 = vst [vmem:[%s342 + $0x120] sm:$0xff] %v8274
        %8531 = vst [vmem:[%s342 + $0x128] sm:$0xff] %v8275
        %8532 = vst [vmem:[%s342 + $0x130] sm:$0xff] %v8276
        %8533 = vst [vmem:[%s342 + $0x138] sm:$0xff] %v8277
        %8534 = vst [vmem:[%s342 + $0x140] sm:$0xff] %v8278
        %8535 = vst [vmem:[%s342 + $0x148] sm:$0xff] %v8279
        %8536 = vst [vmem:[%s342 + $0x150] sm:$0xff] %v8280
        %8537 = vst [vmem:[%s342 + $0x158] sm:$0xff] %v8281
        %8538 = vst [vmem:[%s342 + $0x160] sm:$0xff] %v8282
        %8539 = vst [vmem:[%s342 + $0x168] sm:$0xff] %v8283
        %8540 = vst [vmem:[%s342 + $0x170] sm:$0xff] %v8284
        %8541 = vst [vmem:[%s342 + $0x178] sm:$0xff] %v8285
        %8542 = vst [vmem:[%s342 + $0x180] sm:$0xff] %v8286
        %8543 = vst [vmem:[%s342 + $0x188] sm:$0xff] %v8287
        %8544 = vst [vmem:[%s342 + $0x190] sm:$0xff] %v8288
        %8545 = vst [vmem:[%s342 + $0x198] sm:$0xff] %v8289
        %8546 = vst [vmem:[%s342 + $0x1a0] sm:$0xff] %v8290
        %8547 = vst [vmem:[%s342 + $0x1a8] sm:$0xff] %v8291
        %8548 = vst [vmem:[%s342 + $0x1b0] sm:$0xff] %v8292
        %8549 = vst [vmem:[%s342 + $0x1b8] sm:$0xff] %v8293
        %8550 = vst [vmem:[%s342 + $0x1c0] sm:$0xff] %v8294
        %8551 = vst [vmem:[%s342 + $0x1c8] sm:$0xff] %v8295
        %8552 = vst [vmem:[%s342 + $0x1d0] sm:$0xff] %v8296
        %8553 = vst [vmem:[%s342 + $0x1d8] sm:$0xff] %v8297
        %8554 = vst [vmem:[%s342 + $0x1e0] sm:$0xff] %v8298
        %8555 = vst [vmem:[%s342 + $0x1e8] sm:$0xff] %v8299
        %8556 = vst [vmem:[%s342 + $0x1f0] sm:$0xff] %v8300
        %8557 = vst [vmem:[%s342 + $0x1f8] sm:$0xff] %v8301
        %8558 = vst [vmem:[%s342 + $0x200] sm:$0xff] %v8302
        %8559 = vst [vmem:[%s342 + $0x208] sm:$0xff] %v8303
        %8560 = vst [vmem:[%s342 + $0x210] sm:$0xff] %v8304
        %8561 = vst [vmem:[%s342 + $0x218] sm:$0xff] %v8305
        %8562 = vst [vmem:[%s342 + $0x220] sm:$0xff] %v8306
        %8563 = vst [vmem:[%s342 + $0x228] sm:$0xff] %v8307
        %8564 = vst [vmem:[%s342 + $0x230] sm:$0xff] %v8308
        %8565 = vst [vmem:[%s342 + $0x238] sm:$0xff] %v8309
        %8566 = vst [vmem:[%s342 + $0x240] sm:$0xff] %v8310
        %8567 = vst [vmem:[%s342 + $0x248] sm:$0xff] %v8311
        %8568 = vst [vmem:[%s342 + $0x250] sm:$0xff] %v8312
        %8569 = vst [vmem:[%s342 + $0x258] sm:$0xff] %v8313
        %8570 = vst [vmem:[%s342 + $0x260] sm:$0xff] %v8314
        %8571 = vst [vmem:[%s342 + $0x268] sm:$0xff] %v8315
        %8572 = vst [vmem:[%s342 + $0x270] sm:$0xff] %v8316
        %8573 = vst [vmem:[%s342 + $0x278] sm:$0xff] %v8317
        %8574 = vst [vmem:[%s342 + $0x280] sm:$0xff] %v8318
        %8575 = vst [vmem:[%s342 + $0x288] sm:$0xff] %v8319
        %8576 = vst [vmem:[%s342 + $0x290] sm:$0xff] %v8320
        %8577 = vst [vmem:[%s342 + $0x298] sm:$0xff] %v8321
        %8578 = vst [vmem:[%s342 + $0x2a0] sm:$0xff] %v8322
        %8579 = vst [vmem:[%s342 + $0x2a8] sm:$0xff] %v8323
        %8580 = vst [vmem:[%s342 + $0x2b0] sm:$0xff] %v8324
        %8581 = vst [vmem:[%s342 + $0x2b8] sm:$0xff] %v8325
        %8582 = vst [vmem:[%s342 + $0x2c0] sm:$0xff] %v8326
        %8583 = vst [vmem:[%s342 + $0x2c8] sm:$0xff] %v8327
        %8584 = vst [vmem:[%s342 + $0x2d0] sm:$0xff] %v8328
        %8585 = vst [vmem:[%s342 + $0x2d8] sm:$0xff] %v8329
        %8586 = vst [vmem:[%s342 + $0x2e0] sm:$0xff] %v8330
        %8587 = vst [vmem:[%s342 + $0x2e8] sm:$0xff] %v8331
        %8588 = vst [vmem:[%s342 + $0x2f0] sm:$0xff] %v8332
        %8589 = vst [vmem:[%s342 + $0x2f8] sm:$0xff] %v8333
        %8590 = vst [vmem:[%s342 + $0x300] sm:$0xff] %v8334
        %8591 = vst [vmem:[%s342 + $0x308] sm:$0xff] %v8335
        %8592 = vst [vmem:[%s342 + $0x310] sm:$0xff] %v8336
        %8593 = vst [vmem:[%s342 + $0x318] sm:$0xff] %v8337
        %8594 = vst [vmem:[%s342 + $0x320] sm:$0xff] %v8338
        %8595 = vst [vmem:[%s342 + $0x328] sm:$0xff] %v8339
        %8596 = vst [vmem:[%s342 + $0x330] sm:$0xff] %v8340
        %8597 = vst [vmem:[%s342 + $0x338] sm:$0xff] %v8341
        %8598 = vst [vmem:[%s342 + $0x340] sm:$0xff] %v8342
        %8599 = vst [vmem:[%s342 + $0x348] sm:$0xff] %v8343
        %8600 = vst [vmem:[%s342 + $0x350] sm:$0xff] %v8344
        %8601 = vst [vmem:[%s342 + $0x358] sm:$0xff] %v8345
        %8602 = vst [vmem:[%s342 + $0x360] sm:$0xff] %v8346
        %8603 = vst [vmem:[%s342 + $0x368] sm:$0xff] %v8347
        %8604 = vst [vmem:[%s342 + $0x370] sm:$0xff] %v8348
        %8605 = vst [vmem:[%s342 + $0x378] sm:$0xff] %v8349
        %8606 = vst [vmem:[%s342 + $0x380] sm:$0xff] %v8350
        %8607 = vst [vmem:[%s342 + $0x388] sm:$0xff] %v8351
        %8608 = vst [vmem:[%s342 + $0x390] sm:$0xff] %v8352
        %8609 = vst [vmem:[%s342 + $0x398] sm:$0xff] %v8353
        %8610 = vst [vmem:[%s342 + $0x3a0] sm:$0xff] %v8354
        %8611 = vst [vmem:[%s342 + $0x3a8] sm:$0xff] %v8355
        %8612 = vst [vmem:[%s342 + $0x3b0] sm:$0xff] %v8356
        %8613 = vst [vmem:[%s342 + $0x3b8] sm:$0xff] %v8357
        %8614 = vst [vmem:[%s342 + $0x3c0] sm:$0xff] %v8358
        %8615 = vst [vmem:[%s342 + $0x3c8] sm:$0xff] %v8359
        %8616 = vst [vmem:[%s342 + $0x3d0] sm:$0xff] %v8360
        %8617 = vst [vmem:[%s342 + $0x3d8] sm:$0xff] %v8361
        %8618 = vst [vmem:[%s342 + $0x3e0] sm:$0xff] %v8362
        %8619 = vst [vmem:[%s342 + $0x3e8] sm:$0xff] %v8363
        %8620 = vst [vmem:[%s342 + $0x3f0] sm:$0xff] %v8364
        %8621 = vst [vmem:[%s342 + $0x3f8] sm:$0xff] %v8365
        %8622 = vst [vmem:[%s342 + $0x400] sm:$0xff] %v8366
        %8623 = vst [vmem:[%s342 + $0x408] sm:$0xff] %v8367
        %8624 = vst [vmem:[%s342 + $0x410] sm:$0xff] %v8368
        %8625 = vst [vmem:[%s342 + $0x418] sm:$0xff] %v8369
        %8626 = vst [vmem:[%s342 + $0x420] sm:$0xff] %v8370
        %8627 = vst [vmem:[%s342 + $0x428] sm:$0xff] %v8371
        %8628 = vst [vmem:[%s342 + $0x430] sm:$0xff] %v8372
        %8629 = vst [vmem:[%s342 + $0x438] sm:$0xff] %v8373
        %8630 = vst [vmem:[%s342 + $0x440] sm:$0xff] %v8374
        %8631 = vst [vmem:[%s342 + $0x448] sm:$0xff] %v8375
        %8632 = vst [vmem:[%s342 + $0x450] sm:$0xff] %v8376
        %8633 = vst [vmem:[%s342 + $0x458] sm:$0xff] %v8377
        %8634 = vst [vmem:[%s342 + $0x460] sm:$0xff] %v8378
        %8635 = vst [vmem:[%s342 + $0x468] sm:$0xff] %v8379
        %8636 = vst [vmem:[%s342 + $0x470] sm:$0xff] %v8380
        %8637 = vst [vmem:[%s342 + $0x478] sm:$0xff] %v8381
        %8638 = vst [vmem:[%s342 + $0x480] sm:$0xff] %v8382
        %8639 = vst [vmem:[%s342 + $0x488] sm:$0xff] %v8383
        %8640 = vst [vmem:[%s342 + $0x490] sm:$0xff] %v8384
        %8641 = vst [vmem:[%s342 + $0x498] sm:$0xff] %v8385
        %8642 = vst [vmem:[%s342 + $0x4a0] sm:$0xff] %v8386
        %8643 = vst [vmem:[%s342 + $0x4a8] sm:$0xff] %v8387
        %8644 = vst [vmem:[%s342 + $0x4b0] sm:$0xff] %v8388
        %8645 = vst [vmem:[%s342 + $0x4b8] sm:$0xff] %v8389
        %8646 = vst [vmem:[%s342 + $0x4c0] sm:$0xff] %v8390
        %8647 = vst [vmem:[%s342 + $0x4c8] sm:$0xff] %v8391
        %8648 = vst [vmem:[%s342 + $0x4d0] sm:$0xff] %v8392
        %8649 = vst [vmem:[%s342 + $0x4d8] sm:$0xff] %v8393
        %8650 = vst [vmem:[%s342 + $0x4e0] sm:$0xff] %v8394
        %8651 = vst [vmem:[%s342 + $0x4e8] sm:$0xff] %v8395
        %8652 = vst [vmem:[%s342 + $0x4f0] sm:$0xff] %v8396
        %8653 = vst [vmem:[%s342 + $0x4f8] sm:$0xff] %v8397
        %8654 = vst [vmem:[%s342 + $0x500] sm:$0xff] %v8398
        %8655 = vst [vmem:[%s342 + $0x508] sm:$0xff] %v8399
        %8656 = vst [vmem:[%s342 + $0x510] sm:$0xff] %v8400
        %8657 = vst [vmem:[%s342 + $0x518] sm:$0xff] %v8401
        %8658 = vst [vmem:[%s342 + $0x520] sm:$0xff] %v8402
        %8659 = vst [vmem:[%s342 + $0x528] sm:$0xff] %v8403
        %8660 = vst [vmem:[%s342 + $0x530] sm:$0xff] %v8404
        %8661 = vst [vmem:[%s342 + $0x538] sm:$0xff] %v8405
        %8662 = vst [vmem:[%s342 + $0x540] sm:$0xff] %v8406
        %8663 = vst [vmem:[%s342 + $0x548] sm:$0xff] %v8407
        %8664 = vst [vmem:[%s342 + $0x550] sm:$0xff] %v8408
        %8665 = vst [vmem:[%s342 + $0x558] sm:$0xff] %v8409
        %8666 = vst [vmem:[%s342 + $0x560] sm:$0xff] %v8410
        %8667 = vst [vmem:[%s342 + $0x568] sm:$0xff] %v8411
        %8668 = vst [vmem:[%s342 + $0x570] sm:$0xff] %v8412
        %8669 = vst [vmem:[%s342 + $0x578] sm:$0xff] %v8413
        %8670 = vst [vmem:[%s342 + $0x580] sm:$0xff] %v8414
        %8671 = vst [vmem:[%s342 + $0x588] sm:$0xff] %v8415
        %8672 = vst [vmem:[%s342 + $0x590] sm:$0xff] %v8416
        %8673 = vst [vmem:[%s342 + $0x598] sm:$0xff] %v8417
        %8674 = vst [vmem:[%s342 + $0x5a0] sm:$0xff] %v8418
        %8675 = vst [vmem:[%s342 + $0x5a8] sm:$0xff] %v8419
        %8676 = vst [vmem:[%s342 + $0x5b0] sm:$0xff] %v8420
        %8677 = vst [vmem:[%s342 + $0x5b8] sm:$0xff] %v8421
        %8678 = vst [vmem:[%s342 + $0x5c0] sm:$0xff] %v8422
        %8679 = vst [vmem:[%s342 + $0x5c8] sm:$0xff] %v8423
        %8680 = vst [vmem:[%s342 + $0x5d0] sm:$0xff] %v8424
        %8681 = vst [vmem:[%s342 + $0x5d8] sm:$0xff] %v8425
        %8682 = vst [vmem:[%s342 + $0x5e0] sm:$0xff] %v8426
        %8683 = vst [vmem:[%s342 + $0x5e8] sm:$0xff] %v8427
        %8684 = vst [vmem:[%s342 + $0x5f0] sm:$0xff] %v8428
        %8685 = vst [vmem:[%s342 + $0x5f8] sm:$0xff] %v8429
        %8686 = vst [vmem:[%s342 + $0x600] sm:$0xff] %v8430
        %8687 = vst [vmem:[%s342 + $0x608] sm:$0xff] %v8431
        %8688 = vst [vmem:[%s342 + $0x610] sm:$0xff] %v8432
        %8689 = vst [vmem:[%s342 + $0x618] sm:$0xff] %v8433
        %8690 = vst [vmem:[%s342 + $0x620] sm:$0xff] %v8434
        %8691 = vst [vmem:[%s342 + $0x628] sm:$0xff] %v8435
        %8692 = vst [vmem:[%s342 + $0x630] sm:$0xff] %v8436
        %8693 = vst [vmem:[%s342 + $0x638] sm:$0xff] %v8437
        %8694 = vst [vmem:[%s342 + $0x640] sm:$0xff] %v8438
        %8695 = vst [vmem:[%s342 + $0x648] sm:$0xff] %v8439
        %8696 = vst [vmem:[%s342 + $0x650] sm:$0xff] %v8440
        %8697 = vst [vmem:[%s342 + $0x658] sm:$0xff] %v8441
        %8698 = vst [vmem:[%s342 + $0x660] sm:$0xff] %v8442
        %8699 = vst [vmem:[%s342 + $0x668] sm:$0xff] %v8443
        %8700 = vst [vmem:[%s342 + $0x670] sm:$0xff] %v8444
        %8701 = vst [vmem:[%s342 + $0x678] sm:$0xff] %v8445
        %8702 = vst [vmem:[%s342 + $0x680] sm:$0xff] %v8446
        %8703 = vst [vmem:[%s342 + $0x688] sm:$0xff] %v8447
        %8704 = vst [vmem:[%s342 + $0x690] sm:$0xff] %v8448
        %8705 = vst [vmem:[%s342 + $0x698] sm:$0xff] %v8449
        %8706 = vst [vmem:[%s342 + $0x6a0] sm:$0xff] %v8450
        %8707 = vst [vmem:[%s342 + $0x6a8] sm:$0xff] %v8451
        %8708 = vst [vmem:[%s342 + $0x6b0] sm:$0xff] %v8452
        %8709 = vst [vmem:[%s342 + $0x6b8] sm:$0xff] %v8453
        %8710 = vst [vmem:[%s342 + $0x6c0] sm:$0xff] %v8454
        %8711 = vst [vmem:[%s342 + $0x6c8] sm:$0xff] %v8455
        %8712 = vst [vmem:[%s342 + $0x6d0] sm:$0xff] %v8456
        %8713 = vst [vmem:[%s342 + $0x6d8] sm:$0xff] %v8457
        %8714 = vst [vmem:[%s342 + $0x6e0] sm:$0xff] %v8458
        %8715 = vst [vmem:[%s342 + $0x6e8] sm:$0xff] %v8459
        %8716 = vst [vmem:[%s342 + $0x6f0] sm:$0xff] %v8460
        %8717 = vst [vmem:[%s342 + $0x6f8] sm:$0xff] %v8461
        %8718 = vst [vmem:[%s342 + $0x700] sm:$0xff] %v8462
        %8719 = vst [vmem:[%s342 + $0x708] sm:$0xff] %v8463
        %8720 = vst [vmem:[%s342 + $0x710] sm:$0xff] %v8464
        %8721 = vst [vmem:[%s342 + $0x718] sm:$0xff] %v8465
        %8722 = vst [vmem:[%s342 + $0x720] sm:$0xff] %v8466
        %8723 = vst [vmem:[%s342 + $0x728] sm:$0xff] %v8467
        %8724 = vst [vmem:[%s342 + $0x730] sm:$0xff] %v8468
        %8725 = vst [vmem:[%s342 + $0x738] sm:$0xff] %v8469
        %8726 = vst [vmem:[%s342 + $0x740] sm:$0xff] %v8470
        %8727 = vst [vmem:[%s342 + $0x748] sm:$0xff] %v8471
        %8728 = vst [vmem:[%s342 + $0x750] sm:$0xff] %v8472
        %8729 = vst [vmem:[%s342 + $0x758] sm:$0xff] %v8473
        %8730 = vst [vmem:[%s342 + $0x760] sm:$0xff] %v8474
        %8731 = vst [vmem:[%s342 + $0x768] sm:$0xff] %v8475
        %8732 = vst [vmem:[%s342 + $0x770] sm:$0xff] %v8476
        %8733 = vst [vmem:[%s342 + $0x778] sm:$0xff] %v8477
        %8734 = vst [vmem:[%s342 + $0x780] sm:$0xff] %v8478
        %8735 = vst [vmem:[%s342 + $0x788] sm:$0xff] %v8479
        %8736 = vst [vmem:[%s342 + $0x790] sm:$0xff] %v8480
        %8737 = vst [vmem:[%s342 + $0x798] sm:$0xff] %v8481
        %8738 = vst [vmem:[%s342 + $0x7a0] sm:$0xff] %v8482
        %8739 = vst [vmem:[%s342 + $0x7a8] sm:$0xff] %v8483
        %8740 = vst [vmem:[%s342 + $0x7b0] sm:$0xff] %v8484
        %8741 = vst [vmem:[%s342 + $0x7b8] sm:$0xff] %v8485
        %8742 = vst [vmem:[%s342 + $0x7c0] sm:$0xff] %v8486
        %8743 = vst [vmem:[%s342 + $0x7c8] sm:$0xff] %v8487
        %8744 = vst [vmem:[%s342 + $0x7d0] sm:$0xff] %v8488
        %8745 = vst [vmem:[%s342 + $0x7d8] sm:$0xff] %v8489
        %8746 = vst [vmem:[%s342 + $0x7e0] sm:$0xff] %v8490
        %8747 = vst [vmem:[%s342 + $0x7e8] sm:$0xff] %v8491
        %8748 = vst [vmem:[%s342 + $0x7f0] sm:$0xff] %v8492
        %8749 = vst [vmem:[%s342 + $0x7f8] sm:$0xff] %v8493
        %v8750 = vmul.f32 %v622, %v5169
        %v8751 = vmul.f32 %v623, %v5173
        %v8752 = vmul.f32 %v624, %v5177
        %v8753 = vmul.f32 %v625, %v5181
        %v8754 = vmul.f32 %v626, %v5185
        %v8755 = vmul.f32 %v627, %v5189
        %v8756 = vmul.f32 %v628, %v5193
        %v8757 = vmul.f32 %v629, %v5197
        %v8758 = vmul.f32 %v630, %v5201
        %v8759 = vmul.f32 %v631, %v5205
        %v8760 = vmul.f32 %v632, %v5209
        %v8761 = vmul.f32 %v633, %v5213
        %v8762 = vmul.f32 %v634, %v5217
        %v8763 = vmul.f32 %v635, %v5221
        %v8764 = vmul.f32 %v636, %v5225
        %v8765 = vmul.f32 %v637, %v5229
        %v8766 = vmul.f32 %v638, %v5233
        %v8767 = vmul.f32 %v639, %v5237
        %v8768 = vmul.f32 %v640, %v5241
        %v8769 = vmul.f32 %v641, %v5245
        %v8770 = vmul.f32 %v642, %v5249
        %v8771 = vmul.f32 %v643, %v5253
        %v8772 = vmul.f32 %v644, %v5257
        %v8773 = vmul.f32 %v645, %v5261
        %v8774 = vmul.f32 %v646, %v5265
        %v8775 = vmul.f32 %v647, %v5269
        %v8776 = vmul.f32 %v648, %v5273
        %v8777 = vmul.f32 %v649, %v5277
        %v8778 = vmul.f32 %v650, %v5281
        %v8779 = vmul.f32 %v651, %v5285
        %v8780 = vmul.f32 %v652, %v5289
        %v8781 = vmul.f32 %v653, %v5293
        %v8782 = vmul.f32 %v654, %v5297
        %v8783 = vmul.f32 %v655, %v5301
        %v8784 = vmul.f32 %v656, %v5305
        %v8785 = vmul.f32 %v657, %v5309
        %v8786 = vmul.f32 %v658, %v5313
        %v8787 = vmul.f32 %v659, %v5317
        %v8788 = vmul.f32 %v660, %v5321
        %v8789 = vmul.f32 %v661, %v5325
        %v8790 = vmul.f32 %v662, %v5329
        %v8791 = vmul.f32 %v663, %v5333
        %v8792 = vmul.f32 %v664, %v5337
        %v8793 = vmul.f32 %v665, %v5341
        %v8794 = vmul.f32 %v666, %v5345
        %v8795 = vmul.f32 %v667, %v5349
        %v8796 = vmul.f32 %v668, %v5353
        %v8797 = vmul.f32 %v669, %v5357
        %v8798 = vmul.f32 %v670, %v5361
        %v8799 = vmul.f32 %v671, %v5365
        %v8800 = vmul.f32 %v672, %v5369
        %v8801 = vmul.f32 %v673, %v5373
        %v8802 = vmul.f32 %v674, %v5377
        %v8803 = vmul.f32 %v675, %v5381
        %v8804 = vmul.f32 %v676, %v5385
        %v8805 = vmul.f32 %v677, %v5389
        %v8806 = vmul.f32 %v678, %v5393
        %v8807 = vmul.f32 %v679, %v5397
        %v8808 = vmul.f32 %v680, %v5401
        %v8809 = vmul.f32 %v681, %v5405
        %v8810 = vmul.f32 %v682, %v5409
        %v8811 = vmul.f32 %v683, %v5413
        %v8812 = vmul.f32 %v684, %v5417
        %v8813 = vmul.f32 %v685, %v5421
        %v8814 = vmul.f32 %v686, %v5425
        %v8815 = vmul.f32 %v687, %v5429
        %v8816 = vmul.f32 %v688, %v5433
        %v8817 = vmul.f32 %v689, %v5437
        %v8818 = vmul.f32 %v690, %v5441
        %v8819 = vmul.f32 %v691, %v5445
        %v8820 = vmul.f32 %v692, %v5449
        %v8821 = vmul.f32 %v693, %v5453
        %v8822 = vmul.f32 %v694, %v5457
        %v8823 = vmul.f32 %v695, %v5461
        %v8824 = vmul.f32 %v696, %v5465
        %v8825 = vmul.f32 %v697, %v5469
        %v8826 = vmul.f32 %v698, %v5473
        %v8827 = vmul.f32 %v699, %v5477
        %v8828 = vmul.f32 %v700, %v5481
        %v8829 = vmul.f32 %v701, %v5485
        %v8830 = vmul.f32 %v702, %v5489
        %v8831 = vmul.f32 %v703, %v5493
        %v8832 = vmul.f32 %v704, %v5497
        %v8833 = vmul.f32 %v705, %v5501
        %v8834 = vmul.f32 %v706, %v5505
        %v8835 = vmul.f32 %v707, %v5509
        %v8836 = vmul.f32 %v708, %v5513
        %v8837 = vmul.f32 %v709, %v5517
        %v8838 = vmul.f32 %v710, %v5521
        %v8839 = vmul.f32 %v711, %v5525
        %v8840 = vmul.f32 %v712, %v5529
        %v8841 = vmul.f32 %v713, %v5533
        %v8842 = vmul.f32 %v714, %v5537
        %v8843 = vmul.f32 %v715, %v5541
        %v8844 = vmul.f32 %v716, %v5545
        %v8845 = vmul.f32 %v717, %v5549
        %v8846 = vmul.f32 %v718, %v5553
        %v8847 = vmul.f32 %v719, %v5557
        %v8848 = vmul.f32 %v720, %v5561
        %v8849 = vmul.f32 %v721, %v5565
        %v8850 = vmul.f32 %v722, %v5569
        %v8851 = vmul.f32 %v723, %v5573
        %v8852 = vmul.f32 %v724, %v5577
        %v8853 = vmul.f32 %v725, %v5581
        %v8854 = vmul.f32 %v726, %v5585
        %v8855 = vmul.f32 %v727, %v5589
        %v8856 = vmul.f32 %v728, %v5593
        %v8857 = vmul.f32 %v729, %v5597
        %v8858 = vmul.f32 %v730, %v5601
        %v8859 = vmul.f32 %v731, %v5605
        %v8860 = vmul.f32 %v732, %v5609
        %v8861 = vmul.f32 %v733, %v5613
        %v8862 = vmul.f32 %v734, %v5617
        %v8863 = vmul.f32 %v735, %v5621
        %v8864 = vmul.f32 %v736, %v5625
        %v8865 = vmul.f32 %v737, %v5629
        %v8866 = vmul.f32 %v738, %v5633
        %v8867 = vmul.f32 %v739, %v5637
        %v8868 = vmul.f32 %v740, %v5641
        %v8869 = vmul.f32 %v741, %v5645
        %v8870 = vmul.f32 %v742, %v5649
        %v8871 = vmul.f32 %v743, %v5653
        %v8872 = vmul.f32 %v744, %v5657
        %v8873 = vmul.f32 %v745, %v5661
        %v8874 = vmul.f32 %v746, %v5665
        %v8875 = vmul.f32 %v747, %v5669
        %v8876 = vmul.f32 %v748, %v5673
        %v8877 = vmul.f32 %v749, %v5677
        %v8878 = vmul.f32 %v750, %v5681
        %v8879 = vmul.f32 %v751, %v5685
        %v8880 = vmul.f32 %v752, %v5689
        %v8881 = vmul.f32 %v753, %v5693
        %v8882 = vmul.f32 %v754, %v5697
        %v8883 = vmul.f32 %v755, %v5701
        %v8884 = vmul.f32 %v756, %v5705
        %v8885 = vmul.f32 %v757, %v5709
        %v8886 = vmul.f32 %v758, %v5713
        %v8887 = vmul.f32 %v759, %v5717
        %v8888 = vmul.f32 %v760, %v5721
        %v8889 = vmul.f32 %v761, %v5725
        %v8890 = vmul.f32 %v762, %v5729
        %v8891 = vmul.f32 %v763, %v5733
        %v8892 = vmul.f32 %v764, %v5737
        %v8893 = vmul.f32 %v765, %v5741
        %v8894 = vmul.f32 %v766, %v5745
        %v8895 = vmul.f32 %v767, %v5749
        %v8896 = vmul.f32 %v768, %v5753
        %v8897 = vmul.f32 %v769, %v5757
        %v8898 = vmul.f32 %v770, %v5761
        %v8899 = vmul.f32 %v771, %v5765
        %v8900 = vmul.f32 %v772, %v5769
        %v8901 = vmul.f32 %v773, %v5773
        %v8902 = vmul.f32 %v774, %v5777
        %v8903 = vmul.f32 %v775, %v5781
        %v8904 = vmul.f32 %v776, %v5785
        %v8905 = vmul.f32 %v777, %v5789
        %v8906 = vmul.f32 %v778, %v5793
        %v8907 = vmul.f32 %v779, %v5797
        %v8908 = vmul.f32 %v780, %v5801
        %v8909 = vmul.f32 %v781, %v5805
        %v8910 = vmul.f32 %v782, %v5809
        %v8911 = vmul.f32 %v783, %v5813
        %v8912 = vmul.f32 %v784, %v5817
        %v8913 = vmul.f32 %v785, %v5821
        %v8914 = vmul.f32 %v786, %v5825
        %v8915 = vmul.f32 %v787, %v5829
        %v8916 = vmul.f32 %v788, %v5833
        %v8917 = vmul.f32 %v789, %v5837
        %v8918 = vmul.f32 %v790, %v5841
        %v8919 = vmul.f32 %v791, %v5845
        %v8920 = vmul.f32 %v792, %v5849
        %v8921 = vmul.f32 %v793, %v5853
        %v8922 = vmul.f32 %v794, %v5857
        %v8923 = vmul.f32 %v795, %v5861
        %v8924 = vmul.f32 %v796, %v5865
        %v8925 = vmul.f32 %v797, %v5869
        %v8926 = vmul.f32 %v798, %v5873
        %v8927 = vmul.f32 %v799, %v5877
        %v8928 = vmul.f32 %v800, %v5881
        %v8929 = vmul.f32 %v801, %v5885
        %v8930 = vmul.f32 %v802, %v5889
        %v8931 = vmul.f32 %v803, %v5893
        %v8932 = vmul.f32 %v804, %v5897
        %v8933 = vmul.f32 %v805, %v5901
        %v8934 = vmul.f32 %v806, %v5905
        %v8935 = vmul.f32 %v807, %v5909
        %v8936 = vmul.f32 %v808, %v5913
        %v8937 = vmul.f32 %v809, %v5917
        %v8938 = vmul.f32 %v810, %v5921
        %v8939 = vmul.f32 %v811, %v5925
        %v8940 = vmul.f32 %v812, %v5929
        %v8941 = vmul.f32 %v813, %v5933
        %v8942 = vmul.f32 %v814, %v5937
        %v8943 = vmul.f32 %v815, %v5941
        %v8944 = vmul.f32 %v816, %v5945
        %v8945 = vmul.f32 %v817, %v5949
        %v8946 = vmul.f32 %v818, %v5953
        %v8947 = vmul.f32 %v819, %v5957
        %v8948 = vmul.f32 %v820, %v5961
        %v8949 = vmul.f32 %v821, %v5965
        %v8950 = vmul.f32 %v822, %v5969
        %v8951 = vmul.f32 %v823, %v5973
        %v8952 = vmul.f32 %v824, %v5977
        %v8953 = vmul.f32 %v825, %v5981
        %v8954 = vmul.f32 %v826, %v5985
        %v8955 = vmul.f32 %v827, %v5989
        %v8956 = vmul.f32 %v828, %v5993
        %v8957 = vmul.f32 %v829, %v5997
        %v8958 = vmul.f32 %v830, %v6001
        %v8959 = vmul.f32 %v831, %v6005
        %v8960 = vmul.f32 %v832, %v6009
        %v8961 = vmul.f32 %v833, %v6013
        %v8962 = vmul.f32 %v834, %v6017
        %v8963 = vmul.f32 %v835, %v6021
        %v8964 = vmul.f32 %v836, %v6025
        %v8965 = vmul.f32 %v837, %v6029
        %v8966 = vmul.f32 %v838, %v6033
        %v8967 = vmul.f32 %v839, %v6037
        %v8968 = vmul.f32 %v840, %v6041
        %v8969 = vmul.f32 %v841, %v6045
        %v8970 = vmul.f32 %v842, %v6049
        %v8971 = vmul.f32 %v843, %v6053
        %v8972 = vmul.f32 %v844, %v6057
        %v8973 = vmul.f32 %v845, %v6061
        %v8974 = vmul.f32 %v846, %v6065
        %v8975 = vmul.f32 %v847, %v6069
        %v8976 = vmul.f32 %v848, %v6073
        %v8977 = vmul.f32 %v849, %v6077
        %v8978 = vmul.f32 %v850, %v6081
        %v8979 = vmul.f32 %v851, %v6085
        %v8980 = vmul.f32 %v852, %v6089
        %v8981 = vmul.f32 %v853, %v6093
        %v8982 = vmul.f32 %v854, %v6097
        %v8983 = vmul.f32 %v855, %v6101
        %v8984 = vmul.f32 %v856, %v6105
        %v8985 = vmul.f32 %v857, %v6109
        %v8986 = vmul.f32 %v858, %v6113
        %v8987 = vmul.f32 %v859, %v6117
        %v8988 = vmul.f32 %v860, %v6121
        %v8989 = vmul.f32 %v861, %v6125
        %v8990 = vmul.f32 %v862, %v6129
        %v8991 = vmul.f32 %v863, %v6133
        %v8992 = vmul.f32 %v864, %v6137
        %v8993 = vmul.f32 %v865, %v6141
        %v8994 = vmul.f32 %v866, %v6145
        %v8995 = vmul.f32 %v867, %v6149
        %v8996 = vmul.f32 %v868, %v6153
        %v8997 = vmul.f32 %v869, %v6157
        %v8998 = vmul.f32 %v870, %v6161
        %v8999 = vmul.f32 %v871, %v6165
        %v9000 = vmul.f32 %v872, %v6169
        %v9001 = vmul.f32 %v873, %v6173
        %v9002 = vmul.f32 %v874, %v6177
        %v9003 = vmul.f32 %v875, %v6181
        %v9004 = vmul.f32 %v876, %v6185
        %v9005 = vmul.f32 %v877, %v6189
        %v9006 = vmul.f32 %v4655, %v6705
        %v9007 = vmul.f32 %v4657, %v6709
        %v9008 = vmul.f32 %v4659, %v6713
        %v9009 = vmul.f32 %v4661, %v6717
        %v9010 = vmul.f32 %v4663, %v6721
        %v9011 = vmul.f32 %v4665, %v6725
        %v9012 = vmul.f32 %v4667, %v6729
        %v9013 = vmul.f32 %v4669, %v6733
        %v9014 = vmul.f32 %v4671, %v6737
        %v9015 = vmul.f32 %v4673, %v6741
        %v9016 = vmul.f32 %v4675, %v6745
        %v9017 = vmul.f32 %v4677, %v6749
        %v9018 = vmul.f32 %v4679, %v6753
        %v9019 = vmul.f32 %v4681, %v6757
        %v9020 = vmul.f32 %v4683, %v6761
        %v9021 = vmul.f32 %v4685, %v6765
        %v9022 = vmul.f32 %v4687, %v6769
        %v9023 = vmul.f32 %v4689, %v6773
        %v9024 = vmul.f32 %v4691, %v6777
        %v9025 = vmul.f32 %v4693, %v6781
        %v9026 = vmul.f32 %v4695, %v6785
        %v9027 = vmul.f32 %v4697, %v6789
        %v9028 = vmul.f32 %v4699, %v6793
        %v9029 = vmul.f32 %v4701, %v6797
        %v9030 = vmul.f32 %v4703, %v6801
        %v9031 = vmul.f32 %v4705, %v6805
        %v9032 = vmul.f32 %v4707, %v6809
        %v9033 = vmul.f32 %v4709, %v6813
        %v9034 = vmul.f32 %v4711, %v6817
        %v9035 = vmul.f32 %v4713, %v6821
        %v9036 = vmul.f32 %v4715, %v6825
        %v9037 = vmul.f32 %v4717, %v6829
        %v9038 = vmul.f32 %v4719, %v6833
        %v9039 = vmul.f32 %v4721, %v6837
        %v9040 = vmul.f32 %v4723, %v6841
        %v9041 = vmul.f32 %v4725, %v6845
        %v9042 = vmul.f32 %v4727, %v6849
        %v9043 = vmul.f32 %v4729, %v6853
        %v9044 = vmul.f32 %v4731, %v6857
        %v9045 = vmul.f32 %v4733, %v6861
        %v9046 = vmul.f32 %v4735, %v6865
        %v9047 = vmul.f32 %v4737, %v6869
        %v9048 = vmul.f32 %v4739, %v6873
        %v9049 = vmul.f32 %v4741, %v6877
        %v9050 = vmul.f32 %v4743, %v6881
        %v9051 = vmul.f32 %v4745, %v6885
        %v9052 = vmul.f32 %v4747, %v6889
        %v9053 = vmul.f32 %v4749, %v6893
        %v9054 = vmul.f32 %v4751, %v6897
        %v9055 = vmul.f32 %v4753, %v6901
        %v9056 = vmul.f32 %v4755, %v6905
        %v9057 = vmul.f32 %v4757, %v6909
        %v9058 = vmul.f32 %v4759, %v6913
        %v9059 = vmul.f32 %v4761, %v6917
        %v9060 = vmul.f32 %v4763, %v6921
        %v9061 = vmul.f32 %v4765, %v6925
        %v9062 = vmul.f32 %v4767, %v6929
        %v9063 = vmul.f32 %v4769, %v6933
        %v9064 = vmul.f32 %v4771, %v6937
        %v9065 = vmul.f32 %v4773, %v6941
        %v9066 = vmul.f32 %v4775, %v6945
        %v9067 = vmul.f32 %v4777, %v6949
        %v9068 = vmul.f32 %v4779, %v6953
        %v9069 = vmul.f32 %v4781, %v6957
        %v9070 = vmul.f32 %v4783, %v6961
        %v9071 = vmul.f32 %v4785, %v6965
        %v9072 = vmul.f32 %v4787, %v6969
        %v9073 = vmul.f32 %v4789, %v6973
        %v9074 = vmul.f32 %v4791, %v6977
        %v9075 = vmul.f32 %v4793, %v6981
        %v9076 = vmul.f32 %v4795, %v6985
        %v9077 = vmul.f32 %v4797, %v6989
        %v9078 = vmul.f32 %v4799, %v6993
        %v9079 = vmul.f32 %v4801, %v6997
        %v9080 = vmul.f32 %v4803, %v7001
        %v9081 = vmul.f32 %v4805, %v7005
        %v9082 = vmul.f32 %v4807, %v7009
        %v9083 = vmul.f32 %v4809, %v7013
        %v9084 = vmul.f32 %v4811, %v7017
        %v9085 = vmul.f32 %v4813, %v7021
        %v9086 = vmul.f32 %v4815, %v7025
        %v9087 = vmul.f32 %v4817, %v7029
        %v9088 = vmul.f32 %v4819, %v7033
        %v9089 = vmul.f32 %v4821, %v7037
        %v9090 = vmul.f32 %v4823, %v7041
        %v9091 = vmul.f32 %v4825, %v7045
        %v9092 = vmul.f32 %v4827, %v7049
        %v9093 = vmul.f32 %v4829, %v7053
        %v9094 = vmul.f32 %v4831, %v7057
        %v9095 = vmul.f32 %v4833, %v7061
        %v9096 = vmul.f32 %v4835, %v7065
        %v9097 = vmul.f32 %v4837, %v7069
        %v9098 = vmul.f32 %v4839, %v7073
        %v9099 = vmul.f32 %v4841, %v7077
        %v9100 = vmul.f32 %v4843, %v7081
        %v9101 = vmul.f32 %v4845, %v7085
        %v9102 = vmul.f32 %v4847, %v7089
        %v9103 = vmul.f32 %v4849, %v7093
        %v9104 = vmul.f32 %v4851, %v7097
        %v9105 = vmul.f32 %v4853, %v7101
        %v9106 = vmul.f32 %v4855, %v7105
        %v9107 = vmul.f32 %v4857, %v7109
        %v9108 = vmul.f32 %v4859, %v7113
        %v9109 = vmul.f32 %v4861, %v7117
        %v9110 = vmul.f32 %v4863, %v7121
        %v9111 = vmul.f32 %v4865, %v7125
        %v9112 = vmul.f32 %v4867, %v7129
        %v9113 = vmul.f32 %v4869, %v7133
        %v9114 = vmul.f32 %v4871, %v7137
        %v9115 = vmul.f32 %v4873, %v7141
        %v9116 = vmul.f32 %v4875, %v7145
        %v9117 = vmul.f32 %v4877, %v7149
        %v9118 = vmul.f32 %v4879, %v7153
        %v9119 = vmul.f32 %v4881, %v7157
        %v9120 = vmul.f32 %v4883, %v7161
        %v9121 = vmul.f32 %v4885, %v7165
        %v9122 = vmul.f32 %v4887, %v7169
        %v9123 = vmul.f32 %v4889, %v7173
        %v9124 = vmul.f32 %v4891, %v7177
        %v9125 = vmul.f32 %v4893, %v7181
        %v9126 = vmul.f32 %v4895, %v7185
        %v9127 = vmul.f32 %v4897, %v7189
        %v9128 = vmul.f32 %v4899, %v7193
        %v9129 = vmul.f32 %v4901, %v7197
        %v9130 = vmul.f32 %v4903, %v7201
        %v9131 = vmul.f32 %v4905, %v7205
        %v9132 = vmul.f32 %v4907, %v7209
        %v9133 = vmul.f32 %v4909, %v7213
        %v9134 = vmul.f32 %v4911, %v7217
        %v9135 = vmul.f32 %v4913, %v7221
        %v9136 = vmul.f32 %v4915, %v7225
        %v9137 = vmul.f32 %v4917, %v7229
        %v9138 = vmul.f32 %v4919, %v7233
        %v9139 = vmul.f32 %v4921, %v7237
        %v9140 = vmul.f32 %v4923, %v7241
        %v9141 = vmul.f32 %v4925, %v7245
        %v9142 = vmul.f32 %v4927, %v7249
        %v9143 = vmul.f32 %v4929, %v7253
        %v9144 = vmul.f32 %v4931, %v7257
        %v9145 = vmul.f32 %v4933, %v7261
        %v9146 = vmul.f32 %v4935, %v7265
        %v9147 = vmul.f32 %v4937, %v7269
        %v9148 = vmul.f32 %v4939, %v7273
        %v9149 = vmul.f32 %v4941, %v7277
        %v9150 = vmul.f32 %v4943, %v7281
        %v9151 = vmul.f32 %v4945, %v7285
        %v9152 = vmul.f32 %v4947, %v7289
        %v9153 = vmul.f32 %v4949, %v7293
        %v9154 = vmul.f32 %v4951, %v7297
        %v9155 = vmul.f32 %v4953, %v7301
        %v9156 = vmul.f32 %v4955, %v7305
        %v9157 = vmul.f32 %v4957, %v7309
        %v9158 = vmul.f32 %v4959, %v7313
        %v9159 = vmul.f32 %v4961, %v7317
        %v9160 = vmul.f32 %v4963, %v7321
        %v9161 = vmul.f32 %v4965, %v7325
        %v9162 = vmul.f32 %v4967, %v7329
        %v9163 = vmul.f32 %v4969, %v7333
        %v9164 = vmul.f32 %v4971, %v7337
        %v9165 = vmul.f32 %v4973, %v7341
        %v9166 = vmul.f32 %v4975, %v7345
        %v9167 = vmul.f32 %v4977, %v7349
        %v9168 = vmul.f32 %v4979, %v7353
        %v9169 = vmul.f32 %v4981, %v7357
        %v9170 = vmul.f32 %v4983, %v7361
        %v9171 = vmul.f32 %v4985, %v7365
        %v9172 = vmul.f32 %v4987, %v7369
        %v9173 = vmul.f32 %v4989, %v7373
        %v9174 = vmul.f32 %v4991, %v7377
        %v9175 = vmul.f32 %v4993, %v7381
        %v9176 = vmul.f32 %v4995, %v7385
        %v9177 = vmul.f32 %v4997, %v7389
        %v9178 = vmul.f32 %v4999, %v7393
        %v9179 = vmul.f32 %v5001, %v7397
        %v9180 = vmul.f32 %v5003, %v7401
        %v9181 = vmul.f32 %v5005, %v7405
        %v9182 = vmul.f32 %v5007, %v7409
        %v9183 = vmul.f32 %v5009, %v7413
        %v9184 = vmul.f32 %v5011, %v7417
        %v9185 = vmul.f32 %v5013, %v7421
        %v9186 = vmul.f32 %v5015, %v7425
        %v9187 = vmul.f32 %v5017, %v7429
        %v9188 = vmul.f32 %v5019, %v7433
        %v9189 = vmul.f32 %v5021, %v7437
        %v9190 = vmul.f32 %v5023, %v7441
        %v9191 = vmul.f32 %v5025, %v7445
        %v9192 = vmul.f32 %v5027, %v7449
        %v9193 = vmul.f32 %v5029, %v7453
        %v9194 = vmul.f32 %v5031, %v7457
        %v9195 = vmul.f32 %v5033, %v7461
        %v9196 = vmul.f32 %v5035, %v7465
        %v9197 = vmul.f32 %v5037, %v7469
        %v9198 = vmul.f32 %v5039, %v7473
        %v9199 = vmul.f32 %v5041, %v7477
        %v9200 = vmul.f32 %v5043, %v7481
        %v9201 = vmul.f32 %v5045, %v7485
        %v9202 = vmul.f32 %v5047, %v7489
        %v9203 = vmul.f32 %v5049, %v7493
        %v9204 = vmul.f32 %v5051, %v7497
        %v9205 = vmul.f32 %v5053, %v7501
        %v9206 = vmul.f32 %v5055, %v7505
        %v9207 = vmul.f32 %v5057, %v7509
        %v9208 = vmul.f32 %v5059, %v7513
        %v9209 = vmul.f32 %v5061, %v7517
        %v9210 = vmul.f32 %v5063, %v7521
        %v9211 = vmul.f32 %v5065, %v7525
        %v9212 = vmul.f32 %v5067, %v7529
        %v9213 = vmul.f32 %v5069, %v7533
        %v9214 = vmul.f32 %v5071, %v7537
        %v9215 = vmul.f32 %v5073, %v7541
        %v9216 = vmul.f32 %v5075, %v7545
        %v9217 = vmul.f32 %v5077, %v7549
        %v9218 = vmul.f32 %v5079, %v7553
        %v9219 = vmul.f32 %v5081, %v7557
        %v9220 = vmul.f32 %v5083, %v7561
        %v9221 = vmul.f32 %v5085, %v7565
        %v9222 = vmul.f32 %v5087, %v7569
        %v9223 = vmul.f32 %v5089, %v7573
        %v9224 = vmul.f32 %v5091, %v7577
        %v9225 = vmul.f32 %v5093, %v7581
        %v9226 = vmul.f32 %v5095, %v7585
        %v9227 = vmul.f32 %v5097, %v7589
        %v9228 = vmul.f32 %v5099, %v7593
        %v9229 = vmul.f32 %v5101, %v7597
        %v9230 = vmul.f32 %v5103, %v7601
        %v9231 = vmul.f32 %v5105, %v7605
        %v9232 = vmul.f32 %v5107, %v7609
        %v9233 = vmul.f32 %v5109, %v7613
        %v9234 = vmul.f32 %v5111, %v7617
        %v9235 = vmul.f32 %v5113, %v7621
        %v9236 = vmul.f32 %v5115, %v7625
        %v9237 = vmul.f32 %v5117, %v7629
        %v9238 = vmul.f32 %v5119, %v7633
        %v9239 = vmul.f32 %v5121, %v7637
        %v9240 = vmul.f32 %v5123, %v7641
        %v9241 = vmul.f32 %v5125, %v7645
        %v9242 = vmul.f32 %v5127, %v7649
        %v9243 = vmul.f32 %v5129, %v7653
        %v9244 = vmul.f32 %v5131, %v7657
        %v9245 = vmul.f32 %v5133, %v7661
        %v9246 = vmul.f32 %v5135, %v7665
        %v9247 = vmul.f32 %v5137, %v7669
        %v9248 = vmul.f32 %v5139, %v7673
        %v9249 = vmul.f32 %v5141, %v7677
        %v9250 = vmul.f32 %v5143, %v7681
        %v9251 = vmul.f32 %v5145, %v7685
        %v9252 = vmul.f32 %v5147, %v7689
        %v9253 = vmul.f32 %v5149, %v7693
        %v9254 = vmul.f32 %v5151, %v7697
        %v9255 = vmul.f32 %v5153, %v7701
        %v9256 = vmul.f32 %v5155, %v7705
        %v9257 = vmul.f32 %v5157, %v7709
        %v9258 = vmul.f32 %v5159, %v7713
        %v9259 = vmul.f32 %v5161, %v7717
        %v9260 = vmul.f32 %v5163, %v7721
        %v9261 = vmul.f32 %v5165, %v7725
        %v9262 = vadd.f32 %v8750, %v9006
        %v9263 = vadd.f32 %v8751, %v9007
        %v9264 = vadd.f32 %v8752, %v9008
        %v9265 = vadd.f32 %v8753, %v9009
        %v9266 = vadd.f32 %v8754, %v9010
        %v9267 = vadd.f32 %v8755, %v9011
        %v9268 = vadd.f32 %v8756, %v9012
        %v9269 = vadd.f32 %v8757, %v9013
        %v9270 = vadd.f32 %v8758, %v9014
        %v9271 = vadd.f32 %v8759, %v9015
        %v9272 = vadd.f32 %v8760, %v9016
        %v9273 = vadd.f32 %v8761, %v9017
        %v9274 = vadd.f32 %v8762, %v9018
        %v9275 = vadd.f32 %v8763, %v9019
        %v9276 = vadd.f32 %v8764, %v9020
        %v9277 = vadd.f32 %v8765, %v9021
        %v9278 = vadd.f32 %v8766, %v9022
        %v9279 = vadd.f32 %v8767, %v9023
        %v9280 = vadd.f32 %v8768, %v9024
        %v9281 = vadd.f32 %v8769, %v9025
        %v9282 = vadd.f32 %v8770, %v9026
        %v9283 = vadd.f32 %v8771, %v9027
        %v9284 = vadd.f32 %v8772, %v9028
        %v9285 = vadd.f32 %v8773, %v9029
        %v9286 = vadd.f32 %v8774, %v9030
        %v9287 = vadd.f32 %v8775, %v9031
        %v9288 = vadd.f32 %v8776, %v9032
        %v9289 = vadd.f32 %v8777, %v9033
        %v9290 = vadd.f32 %v8778, %v9034
        %v9291 = vadd.f32 %v8779, %v9035
        %v9292 = vadd.f32 %v8780, %v9036
        %v9293 = vadd.f32 %v8781, %v9037
        %v9294 = vadd.f32 %v8782, %v9038
        %v9295 = vadd.f32 %v8783, %v9039
        %v9296 = vadd.f32 %v8784, %v9040
        %v9297 = vadd.f32 %v8785, %v9041
        %v9298 = vadd.f32 %v8786, %v9042
        %v9299 = vadd.f32 %v8787, %v9043
        %v9300 = vadd.f32 %v8788, %v9044
        %v9301 = vadd.f32 %v8789, %v9045
        %v9302 = vadd.f32 %v8790, %v9046
        %v9303 = vadd.f32 %v8791, %v9047
        %v9304 = vadd.f32 %v8792, %v9048
        %v9305 = vadd.f32 %v8793, %v9049
        %v9306 = vadd.f32 %v8794, %v9050
        %v9307 = vadd.f32 %v8795, %v9051
        %v9308 = vadd.f32 %v8796, %v9052
        %v9309 = vadd.f32 %v8797, %v9053
        %v9310 = vadd.f32 %v8798, %v9054
        %v9311 = vadd.f32 %v8799, %v9055
        %v9312 = vadd.f32 %v8800, %v9056
        %v9313 = vadd.f32 %v8801, %v9057
        %v9314 = vadd.f32 %v8802, %v9058
        %v9315 = vadd.f32 %v8803, %v9059
        %v9316 = vadd.f32 %v8804, %v9060
        %v9317 = vadd.f32 %v8805, %v9061
        %v9318 = vadd.f32 %v8806, %v9062
        %v9319 = vadd.f32 %v8807, %v9063
        %v9320 = vadd.f32 %v8808, %v9064
        %v9321 = vadd.f32 %v8809, %v9065
        %v9322 = vadd.f32 %v8810, %v9066
        %v9323 = vadd.f32 %v8811, %v9067
        %v9324 = vadd.f32 %v8812, %v9068
        %v9325 = vadd.f32 %v8813, %v9069
        %v9326 = vadd.f32 %v8814, %v9070
        %v9327 = vadd.f32 %v8815, %v9071
        %v9328 = vadd.f32 %v8816, %v9072
        %v9329 = vadd.f32 %v8817, %v9073
        %v9330 = vadd.f32 %v8818, %v9074
        %v9331 = vadd.f32 %v8819, %v9075
        %v9332 = vadd.f32 %v8820, %v9076
        %v9333 = vadd.f32 %v8821, %v9077
        %v9334 = vadd.f32 %v8822, %v9078
        %v9335 = vadd.f32 %v8823, %v9079
        %v9336 = vadd.f32 %v8824, %v9080
        %v9337 = vadd.f32 %v8825, %v9081
        %v9338 = vadd.f32 %v8826, %v9082
        %v9339 = vadd.f32 %v8827, %v9083
        %v9340 = vadd.f32 %v8828, %v9084
        %v9341 = vadd.f32 %v8829, %v9085
        %v9342 = vadd.f32 %v8830, %v9086
        %v9343 = vadd.f32 %v8831, %v9087
        %v9344 = vadd.f32 %v8832, %v9088
        %v9345 = vadd.f32 %v8833, %v9089
        %v9346 = vadd.f32 %v8834, %v9090
        %v9347 = vadd.f32 %v8835, %v9091
        %v9348 = vadd.f32 %v8836, %v9092
        %v9349 = vadd.f32 %v8837, %v9093
        %v9350 = vadd.f32 %v8838, %v9094
        %v9351 = vadd.f32 %v8839, %v9095
        %v9352 = vadd.f32 %v8840, %v9096
        %v9353 = vadd.f32 %v8841, %v9097
        %v9354 = vadd.f32 %v8842, %v9098
        %v9355 = vadd.f32 %v8843, %v9099
        %v9356 = vadd.f32 %v8844, %v9100
        %v9357 = vadd.f32 %v8845, %v9101
        %v9358 = vadd.f32 %v8846, %v9102
        %v9359 = vadd.f32 %v8847, %v9103
        %v9360 = vadd.f32 %v8848, %v9104
        %v9361 = vadd.f32 %v8849, %v9105
        %v9362 = vadd.f32 %v8850, %v9106
        %v9363 = vadd.f32 %v8851, %v9107
        %v9364 = vadd.f32 %v8852, %v9108
        %v9365 = vadd.f32 %v8853, %v9109
        %v9366 = vadd.f32 %v8854, %v9110
        %v9367 = vadd.f32 %v8855, %v9111
        %v9368 = vadd.f32 %v8856, %v9112
        %v9369 = vadd.f32 %v8857, %v9113
        %v9370 = vadd.f32 %v8858, %v9114
        %v9371 = vadd.f32 %v8859, %v9115
        %v9372 = vadd.f32 %v8860, %v9116
        %v9373 = vadd.f32 %v8861, %v9117
        %v9374 = vadd.f32 %v8862, %v9118
        %v9375 = vadd.f32 %v8863, %v9119
        %v9376 = vadd.f32 %v8864, %v9120
        %v9377 = vadd.f32 %v8865, %v9121
        %v9378 = vadd.f32 %v8866, %v9122
        %v9379 = vadd.f32 %v8867, %v9123
        %v9380 = vadd.f32 %v8868, %v9124
        %v9381 = vadd.f32 %v8869, %v9125
        %v9382 = vadd.f32 %v8870, %v9126
        %v9383 = vadd.f32 %v8871, %v9127
        %v9384 = vadd.f32 %v8872, %v9128
        %v9385 = vadd.f32 %v8873, %v9129
        %v9386 = vadd.f32 %v8874, %v9130
        %v9387 = vadd.f32 %v8875, %v9131
        %v9388 = vadd.f32 %v8876, %v9132
        %v9389 = vadd.f32 %v8877, %v9133
        %v9390 = vadd.f32 %v8878, %v9134
        %v9391 = vadd.f32 %v8879, %v9135
        %v9392 = vadd.f32 %v8880, %v9136
        %v9393 = vadd.f32 %v8881, %v9137
        %v9394 = vadd.f32 %v8882, %v9138
        %v9395 = vadd.f32 %v8883, %v9139
        %v9396 = vadd.f32 %v8884, %v9140
        %v9397 = vadd.f32 %v8885, %v9141
        %v9398 = vadd.f32 %v8886, %v9142
        %v9399 = vadd.f32 %v8887, %v9143
        %v9400 = vadd.f32 %v8888, %v9144
        %v9401 = vadd.f32 %v8889, %v9145
        %v9402 = vadd.f32 %v8890, %v9146
        %v9403 = vadd.f32 %v8891, %v9147
        %v9404 = vadd.f32 %v8892, %v9148
        %v9405 = vadd.f32 %v8893, %v9149
        %v9406 = vadd.f32 %v8894, %v9150
        %v9407 = vadd.f32 %v8895, %v9151
        %v9408 = vadd.f32 %v8896, %v9152
        %v9409 = vadd.f32 %v8897, %v9153
        %v9410 = vadd.f32 %v8898, %v9154
        %v9411 = vadd.f32 %v8899, %v9155
        %v9412 = vadd.f32 %v8900, %v9156
        %v9413 = vadd.f32 %v8901, %v9157
        %v9414 = vadd.f32 %v8902, %v9158
        %v9415 = vadd.f32 %v8903, %v9159
        %v9416 = vadd.f32 %v8904, %v9160
        %v9417 = vadd.f32 %v8905, %v9161
        %v9418 = vadd.f32 %v8906, %v9162
        %v9419 = vadd.f32 %v8907, %v9163
        %v9420 = vadd.f32 %v8908, %v9164
        %v9421 = vadd.f32 %v8909, %v9165
        %v9422 = vadd.f32 %v8910, %v9166
        %v9423 = vadd.f32 %v8911, %v9167
        %v9424 = vadd.f32 %v8912, %v9168
        %v9425 = vadd.f32 %v8913, %v9169
        %v9426 = vadd.f32 %v8914, %v9170
        %v9427 = vadd.f32 %v8915, %v9171
        %v9428 = vadd.f32 %v8916, %v9172
        %v9429 = vadd.f32 %v8917, %v9173
        %v9430 = vadd.f32 %v8918, %v9174
        %v9431 = vadd.f32 %v8919, %v9175
        %v9432 = vadd.f32 %v8920, %v9176
        %v9433 = vadd.f32 %v8921, %v9177
        %v9434 = vadd.f32 %v8922, %v9178
        %v9435 = vadd.f32 %v8923, %v9179
        %v9436 = vadd.f32 %v8924, %v9180
        %v9437 = vadd.f32 %v8925, %v9181
        %v9438 = vadd.f32 %v8926, %v9182
        %v9439 = vadd.f32 %v8927, %v9183
        %v9440 = vadd.f32 %v8928, %v9184
        %v9441 = vadd.f32 %v8929, %v9185
        %v9442 = vadd.f32 %v8930, %v9186
        %v9443 = vadd.f32 %v8931, %v9187
        %v9444 = vadd.f32 %v8932, %v9188
        %v9445 = vadd.f32 %v8933, %v9189
        %v9446 = vadd.f32 %v8934, %v9190
        %v9447 = vadd.f32 %v8935, %v9191
        %v9448 = vadd.f32 %v8936, %v9192
        %v9449 = vadd.f32 %v8937, %v9193
        %v9450 = vadd.f32 %v8938, %v9194
        %v9451 = vadd.f32 %v8939, %v9195
        %v9452 = vadd.f32 %v8940, %v9196
        %v9453 = vadd.f32 %v8941, %v9197
        %v9454 = vadd.f32 %v8942, %v9198
        %v9455 = vadd.f32 %v8943, %v9199
        %v9456 = vadd.f32 %v8944, %v9200
        %v9457 = vadd.f32 %v8945, %v9201
        %v9458 = vadd.f32 %v8946, %v9202
        %v9459 = vadd.f32 %v8947, %v9203
        %v9460 = vadd.f32 %v8948, %v9204
        %v9461 = vadd.f32 %v8949, %v9205
        %v9462 = vadd.f32 %v8950, %v9206
        %v9463 = vadd.f32 %v8951, %v9207
        %v9464 = vadd.f32 %v8952, %v9208
        %v9465 = vadd.f32 %v8953, %v9209
        %v9466 = vadd.f32 %v8954, %v9210
        %v9467 = vadd.f32 %v8955, %v9211
        %v9468 = vadd.f32 %v8956, %v9212
        %v9469 = vadd.f32 %v8957, %v9213
        %v9470 = vadd.f32 %v8958, %v9214
        %v9471 = vadd.f32 %v8959, %v9215
        %v9472 = vadd.f32 %v8960, %v9216
        %v9473 = vadd.f32 %v8961, %v9217
        %v9474 = vadd.f32 %v8962, %v9218
        %v9475 = vadd.f32 %v8963, %v9219
        %v9476 = vadd.f32 %v8964, %v9220
        %v9477 = vadd.f32 %v8965, %v9221
        %v9478 = vadd.f32 %v8966, %v9222
        %v9479 = vadd.f32 %v8967, %v9223
        %v9480 = vadd.f32 %v8968, %v9224
        %v9481 = vadd.f32 %v8969, %v9225
        %v9482 = vadd.f32 %v8970, %v9226
        %v9483 = vadd.f32 %v8971, %v9227
        %v9484 = vadd.f32 %v8972, %v9228
        %v9485 = vadd.f32 %v8973, %v9229
        %v9486 = vadd.f32 %v8974, %v9230
        %v9487 = vadd.f32 %v8975, %v9231
        %v9488 = vadd.f32 %v8976, %v9232
        %v9489 = vadd.f32 %v8977, %v9233
        %v9490 = vadd.f32 %v8978, %v9234
        %v9491 = vadd.f32 %v8979, %v9235
        %v9492 = vadd.f32 %v8980, %v9236
        %v9493 = vadd.f32 %v8981, %v9237
        %v9494 = vadd.f32 %v8982, %v9238
        %v9495 = vadd.f32 %v8983, %v9239
        %v9496 = vadd.f32 %v8984, %v9240
        %v9497 = vadd.f32 %v8985, %v9241
        %v9498 = vadd.f32 %v8986, %v9242
        %v9499 = vadd.f32 %v8987, %v9243
        %v9500 = vadd.f32 %v8988, %v9244
        %v9501 = vadd.f32 %v8989, %v9245
        %v9502 = vadd.f32 %v8990, %v9246
        %v9503 = vadd.f32 %v8991, %v9247
        %v9504 = vadd.f32 %v8992, %v9248
        %v9505 = vadd.f32 %v8993, %v9249
        %v9506 = vadd.f32 %v8994, %v9250
        %v9507 = vadd.f32 %v8995, %v9251
        %v9508 = vadd.f32 %v8996, %v9252
        %v9509 = vadd.f32 %v8997, %v9253
        %v9510 = vadd.f32 %v8998, %v9254
        %v9511 = vadd.f32 %v8999, %v9255
        %v9512 = vadd.f32 %v9000, %v9256
        %v9513 = vadd.f32 %v9001, %v9257
        %v9514 = vadd.f32 %v9002, %v9258
        %v9515 = vadd.f32 %v9003, %v9259
        %v9516 = vadd.f32 %v9004, %v9260
        %v9517 = vadd.f32 %v9005, %v9261
        %9518 = vst [vmem:[%s349] sm:$0xff] %v9262
        %9519 = vst [vmem:[%s349 + $0x8] sm:$0xff] %v9263
        %9520 = vst [vmem:[%s349 + $0x10] sm:$0xff] %v9264
        %9521 = vst [vmem:[%s349 + $0x18] sm:$0xff] %v9265
        %9522 = vst [vmem:[%s349 + $0x20] sm:$0xff] %v9266
        %9523 = vst [vmem:[%s349 + $0x28] sm:$0xff] %v9267
        %9524 = vst [vmem:[%s349 + $0x30] sm:$0xff] %v9268
        %9525 = vst [vmem:[%s349 + $0x38] sm:$0xff] %v9269
        %9526 = vst [vmem:[%s349 + $0x40] sm:$0xff] %v9270
        %9527 = vst [vmem:[%s349 + $0x48] sm:$0xff] %v9271
        %9528 = vst [vmem:[%s349 + $0x50] sm:$0xff] %v9272
        %9529 = vst [vmem:[%s349 + $0x58] sm:$0xff] %v9273
        %9530 = vst [vmem:[%s349 + $0x60] sm:$0xff] %v9274
        %9531 = vst [vmem:[%s349 + $0x68] sm:$0xff] %v9275
        %9532 = vst [vmem:[%s349 + $0x70] sm:$0xff] %v9276
        %9533 = vst [vmem:[%s349 + $0x78] sm:$0xff] %v9277
        %9534 = vst [vmem:[%s349 + $0x80] sm:$0xff] %v9278
        %9535 = vst [vmem:[%s349 + $0x88] sm:$0xff] %v9279
        %9536 = vst [vmem:[%s349 + $0x90] sm:$0xff] %v9280
        %9537 = vst [vmem:[%s349 + $0x98] sm:$0xff] %v9281
        %9538 = vst [vmem:[%s349 + $0xa0] sm:$0xff] %v9282
        %9539 = vst [vmem:[%s349 + $0xa8] sm:$0xff] %v9283
        %9540 = vst [vmem:[%s349 + $0xb0] sm:$0xff] %v9284
        %9541 = vst [vmem:[%s349 + $0xb8] sm:$0xff] %v9285
        %9542 = vst [vmem:[%s349 + $0xc0] sm:$0xff] %v9286
        %9543 = vst [vmem:[%s349 + $0xc8] sm:$0xff] %v9287
        %9544 = vst [vmem:[%s349 + $0xd0] sm:$0xff] %v9288
        %9545 = vst [vmem:[%s349 + $0xd8] sm:$0xff] %v9289
        %9546 = vst [vmem:[%s349 + $0xe0] sm:$0xff] %v9290
        %9547 = vst [vmem:[%s349 + $0xe8] sm:$0xff] %v9291
        %9548 = vst [vmem:[%s349 + $0xf0] sm:$0xff] %v9292
        %9549 = vst [vmem:[%s349 + $0xf8] sm:$0xff] %v9293
        %9550 = vst [vmem:[%s349 + $0x100] sm:$0xff] %v9294
        %9551 = vst [vmem:[%s349 + $0x108] sm:$0xff] %v9295
        %9552 = vst [vmem:[%s349 + $0x110] sm:$0xff] %v9296
        %9553 = vst [vmem:[%s349 + $0x118] sm:$0xff] %v9297
        %9554 = vst [vmem:[%s349 + $0x120] sm:$0xff] %v9298
        %9555 = vst [vmem:[%s349 + $0x128] sm:$0xff] %v9299
        %9556 = vst [vmem:[%s349 + $0x130] sm:$0xff] %v9300
        %9557 = vst [vmem:[%s349 + $0x138] sm:$0xff] %v9301
        %9558 = vst [vmem:[%s349 + $0x140] sm:$0xff] %v9302
        %9559 = vst [vmem:[%s349 + $0x148] sm:$0xff] %v9303
        %9560 = vst [vmem:[%s349 + $0x150] sm:$0xff] %v9304
        %9561 = vst [vmem:[%s349 + $0x158] sm:$0xff] %v9305
        %9562 = vst [vmem:[%s349 + $0x160] sm:$0xff] %v9306
        %9563 = vst [vmem:[%s349 + $0x168] sm:$0xff] %v9307
        %9564 = vst [vmem:[%s349 + $0x170] sm:$0xff] %v9308
        %9565 = vst [vmem:[%s349 + $0x178] sm:$0xff] %v9309
        %9566 = vst [vmem:[%s349 + $0x180] sm:$0xff] %v9310
        %9567 = vst [vmem:[%s349 + $0x188] sm:$0xff] %v9311
        %9568 = vst [vmem:[%s349 + $0x190] sm:$0xff] %v9312
        %9569 = vst [vmem:[%s349 + $0x198] sm:$0xff] %v9313
        %9570 = vst [vmem:[%s349 + $0x1a0] sm:$0xff] %v9314
        %9571 = vst [vmem:[%s349 + $0x1a8] sm:$0xff] %v9315
        %9572 = vst [vmem:[%s349 + $0x1b0] sm:$0xff] %v9316
        %9573 = vst [vmem:[%s349 + $0x1b8] sm:$0xff] %v9317
        %9574 = vst [vmem:[%s349 + $0x1c0] sm:$0xff] %v9318
        %9575 = vst [vmem:[%s349 + $0x1c8] sm:$0xff] %v9319
        %9576 = vst [vmem:[%s349 + $0x1d0] sm:$0xff] %v9320
        %9577 = vst [vmem:[%s349 + $0x1d8] sm:$0xff] %v9321
        %9578 = vst [vmem:[%s349 + $0x1e0] sm:$0xff] %v9322
        %9579 = vst [vmem:[%s349 + $0x1e8] sm:$0xff] %v9323
        %9580 = vst [vmem:[%s349 + $0x1f0] sm:$0xff] %v9324
        %9581 = vst [vmem:[%s349 + $0x1f8] sm:$0xff] %v9325
        %9582 = vst [vmem:[%s349 + $0x200] sm:$0xff] %v9326
        %9583 = vst [vmem:[%s349 + $0x208] sm:$0xff] %v9327
        %9584 = vst [vmem:[%s349 + $0x210] sm:$0xff] %v9328
        %9585 = vst [vmem:[%s349 + $0x218] sm:$0xff] %v9329
        %9586 = vst [vmem:[%s349 + $0x220] sm:$0xff] %v9330
        %9587 = vst [vmem:[%s349 + $0x228] sm:$0xff] %v9331
        %9588 = vst [vmem:[%s349 + $0x230] sm:$0xff] %v9332
        %9589 = vst [vmem:[%s349 + $0x238] sm:$0xff] %v9333
        %9590 = vst [vmem:[%s349 + $0x240] sm:$0xff] %v9334
        %9591 = vst [vmem:[%s349 + $0x248] sm:$0xff] %v9335
        %9592 = vst [vmem:[%s349 + $0x250] sm:$0xff] %v9336
        %9593 = vst [vmem:[%s349 + $0x258] sm:$0xff] %v9337
        %9594 = vst [vmem:[%s349 + $0x260] sm:$0xff] %v9338
        %9595 = vst [vmem:[%s349 + $0x268] sm:$0xff] %v9339
        %9596 = vst [vmem:[%s349 + $0x270] sm:$0xff] %v9340
        %9597 = vst [vmem:[%s349 + $0x278] sm:$0xff] %v9341
        %9598 = vst [vmem:[%s349 + $0x280] sm:$0xff] %v9342
        %9599 = vst [vmem:[%s349 + $0x288] sm:$0xff] %v9343
        %9600 = vst [vmem:[%s349 + $0x290] sm:$0xff] %v9344
        %9601 = vst [vmem:[%s349 + $0x298] sm:$0xff] %v9345
        %9602 = vst [vmem:[%s349 + $0x2a0] sm:$0xff] %v9346
        %9603 = vst [vmem:[%s349 + $0x2a8] sm:$0xff] %v9347
        %9604 = vst [vmem:[%s349 + $0x2b0] sm:$0xff] %v9348
        %9605 = vst [vmem:[%s349 + $0x2b8] sm:$0xff] %v9349
        %9606 = vst [vmem:[%s349 + $0x2c0] sm:$0xff] %v9350
        %9607 = vst [vmem:[%s349 + $0x2c8] sm:$0xff] %v9351
        %9608 = vst [vmem:[%s349 + $0x2d0] sm:$0xff] %v9352
        %9609 = vst [vmem:[%s349 + $0x2d8] sm:$0xff] %v9353
        %9610 = vst [vmem:[%s349 + $0x2e0] sm:$0xff] %v9354
        %9611 = vst [vmem:[%s349 + $0x2e8] sm:$0xff] %v9355
        %9612 = vst [vmem:[%s349 + $0x2f0] sm:$0xff] %v9356
        %9613 = vst [vmem:[%s349 + $0x2f8] sm:$0xff] %v9357
        %9614 = vst [vmem:[%s349 + $0x300] sm:$0xff] %v9358
        %9615 = vst [vmem:[%s349 + $0x308] sm:$0xff] %v9359
        %9616 = vst [vmem:[%s349 + $0x310] sm:$0xff] %v9360
        %9617 = vst [vmem:[%s349 + $0x318] sm:$0xff] %v9361
        %9618 = vst [vmem:[%s349 + $0x320] sm:$0xff] %v9362
        %9619 = vst [vmem:[%s349 + $0x328] sm:$0xff] %v9363
        %9620 = vst [vmem:[%s349 + $0x330] sm:$0xff] %v9364
        %9621 = vst [vmem:[%s349 + $0x338] sm:$0xff] %v9365
        %9622 = vst [vmem:[%s349 + $0x340] sm:$0xff] %v9366
        %9623 = vst [vmem:[%s349 + $0x348] sm:$0xff] %v9367
        %9624 = vst [vmem:[%s349 + $0x350] sm:$0xff] %v9368
        %9625 = vst [vmem:[%s349 + $0x358] sm:$0xff] %v9369
        %9626 = vst [vmem:[%s349 + $0x360] sm:$0xff] %v9370
        %9627 = vst [vmem:[%s349 + $0x368] sm:$0xff] %v9371
        %9628 = vst [vmem:[%s349 + $0x370] sm:$0xff] %v9372
        %9629 = vst [vmem:[%s349 + $0x378] sm:$0xff] %v9373
        %9630 = vst [vmem:[%s349 + $0x380] sm:$0xff] %v9374
        %9631 = vst [vmem:[%s349 + $0x388] sm:$0xff] %v9375
        %9632 = vst [vmem:[%s349 + $0x390] sm:$0xff] %v9376
        %9633 = vst [vmem:[%s349 + $0x398] sm:$0xff] %v9377
        %9634 = vst [vmem:[%s349 + $0x3a0] sm:$0xff] %v9378
        %9635 = vst [vmem:[%s349 + $0x3a8] sm:$0xff] %v9379
        %9636 = vst [vmem:[%s349 + $0x3b0] sm:$0xff] %v9380
        %9637 = vst [vmem:[%s349 + $0x3b8] sm:$0xff] %v9381
        %9638 = vst [vmem:[%s349 + $0x3c0] sm:$0xff] %v9382
        %9639 = vst [vmem:[%s349 + $0x3c8] sm:$0xff] %v9383
        %9640 = vst [vmem:[%s349 + $0x3d0] sm:$0xff] %v9384
        %9641 = vst [vmem:[%s349 + $0x3d8] sm:$0xff] %v9385
        %9642 = vst [vmem:[%s349 + $0x3e0] sm:$0xff] %v9386
        %9643 = vst [vmem:[%s349 + $0x3e8] sm:$0xff] %v9387
        %9644 = vst [vmem:[%s349 + $0x3f0] sm:$0xff] %v9388
        %9645 = vst [vmem:[%s349 + $0x3f8] sm:$0xff] %v9389
        %9646 = vst [vmem:[%s349 + $0x400] sm:$0xff] %v9390
        %9647 = vst [vmem:[%s349 + $0x408] sm:$0xff] %v9391
        %9648 = vst [vmem:[%s349 + $0x410] sm:$0xff] %v9392
        %9649 = vst [vmem:[%s349 + $0x418] sm:$0xff] %v9393
        %9650 = vst [vmem:[%s349 + $0x420] sm:$0xff] %v9394
        %9651 = vst [vmem:[%s349 + $0x428] sm:$0xff] %v9395
        %9652 = vst [vmem:[%s349 + $0x430] sm:$0xff] %v9396
        %9653 = vst [vmem:[%s349 + $0x438] sm:$0xff] %v9397
        %9654 = vst [vmem:[%s349 + $0x440] sm:$0xff] %v9398
        %9655 = vst [vmem:[%s349 + $0x448] sm:$0xff] %v9399
        %9656 = vst [vmem:[%s349 + $0x450] sm:$0xff] %v9400
        %9657 = vst [vmem:[%s349 + $0x458] sm:$0xff] %v9401
        %9658 = vst [vmem:[%s349 + $0x460] sm:$0xff] %v9402
        %9659 = vst [vmem:[%s349 + $0x468] sm:$0xff] %v9403
        %9660 = vst [vmem:[%s349 + $0x470] sm:$0xff] %v9404
        %9661 = vst [vmem:[%s349 + $0x478] sm:$0xff] %v9405
        %9662 = vst [vmem:[%s349 + $0x480] sm:$0xff] %v9406
        %9663 = vst [vmem:[%s349 + $0x488] sm:$0xff] %v9407
        %9664 = vst [vmem:[%s349 + $0x490] sm:$0xff] %v9408
        %9665 = vst [vmem:[%s349 + $0x498] sm:$0xff] %v9409
        %9666 = vst [vmem:[%s349 + $0x4a0] sm:$0xff] %v9410
        %9667 = vst [vmem:[%s349 + $0x4a8] sm:$0xff] %v9411
        %9668 = vst [vmem:[%s349 + $0x4b0] sm:$0xff] %v9412
        %9669 = vst [vmem:[%s349 + $0x4b8] sm:$0xff] %v9413
        %9670 = vst [vmem:[%s349 + $0x4c0] sm:$0xff] %v9414
        %9671 = vst [vmem:[%s349 + $0x4c8] sm:$0xff] %v9415
        %9672 = vst [vmem:[%s349 + $0x4d0] sm:$0xff] %v9416
        %9673 = vst [vmem:[%s349 + $0x4d8] sm:$0xff] %v9417
        %9674 = vst [vmem:[%s349 + $0x4e0] sm:$0xff] %v9418
        %9675 = vst [vmem:[%s349 + $0x4e8] sm:$0xff] %v9419
        %9676 = vst [vmem:[%s349 + $0x4f0] sm:$0xff] %v9420
        %9677 = vst [vmem:[%s349 + $0x4f8] sm:$0xff] %v9421
        %9678 = vst [vmem:[%s349 + $0x500] sm:$0xff] %v9422
        %9679 = vst [vmem:[%s349 + $0x508] sm:$0xff] %v9423
        %9680 = vst [vmem:[%s349 + $0x510] sm:$0xff] %v9424
        %9681 = vst [vmem:[%s349 + $0x518] sm:$0xff] %v9425
        %9682 = vst [vmem:[%s349 + $0x520] sm:$0xff] %v9426
        %9683 = vst [vmem:[%s349 + $0x528] sm:$0xff] %v9427
        %9684 = vst [vmem:[%s349 + $0x530] sm:$0xff] %v9428
        %9685 = vst [vmem:[%s349 + $0x538] sm:$0xff] %v9429
        %9686 = vst [vmem:[%s349 + $0x540] sm:$0xff] %v9430
        %9687 = vst [vmem:[%s349 + $0x548] sm:$0xff] %v9431
        %9688 = vst [vmem:[%s349 + $0x550] sm:$0xff] %v9432
        %9689 = vst [vmem:[%s349 + $0x558] sm:$0xff] %v9433
        %9690 = vst [vmem:[%s349 + $0x560] sm:$0xff] %v9434
        %9691 = vst [vmem:[%s349 + $0x568] sm:$0xff] %v9435
        %9692 = vst [vmem:[%s349 + $0x570] sm:$0xff] %v9436
        %9693 = vst [vmem:[%s349 + $0x578] sm:$0xff] %v9437
        %9694 = vst [vmem:[%s349 + $0x580] sm:$0xff] %v9438
        %9695 = vst [vmem:[%s349 + $0x588] sm:$0xff] %v9439
        %9696 = vst [vmem:[%s349 + $0x590] sm:$0xff] %v9440
        %9697 = vst [vmem:[%s349 + $0x598] sm:$0xff] %v9441
        %9698 = vst [vmem:[%s349 + $0x5a0] sm:$0xff] %v9442
        %9699 = vst [vmem:[%s349 + $0x5a8] sm:$0xff] %v9443
        %9700 = vst [vmem:[%s349 + $0x5b0] sm:$0xff] %v9444
        %9701 = vst [vmem:[%s349 + $0x5b8] sm:$0xff] %v9445
        %9702 = vst [vmem:[%s349 + $0x5c0] sm:$0xff] %v9446
        %9703 = vst [vmem:[%s349 + $0x5c8] sm:$0xff] %v9447
        %9704 = vst [vmem:[%s349 + $0x5d0] sm:$0xff] %v9448
        %9705 = vst [vmem:[%s349 + $0x5d8] sm:$0xff] %v9449
        %9706 = vst [vmem:[%s349 + $0x5e0] sm:$0xff] %v9450
        %9707 = vst [vmem:[%s349 + $0x5e8] sm:$0xff] %v9451
        %9708 = vst [vmem:[%s349 + $0x5f0] sm:$0xff] %v9452
        %9709 = vst [vmem:[%s349 + $0x5f8] sm:$0xff] %v9453
        %9710 = vst [vmem:[%s349 + $0x600] sm:$0xff] %v9454
        %9711 = vst [vmem:[%s349 + $0x608] sm:$0xff] %v9455
        %9712 = vst [vmem:[%s349 + $0x610] sm:$0xff] %v9456
        %9713 = vst [vmem:[%s349 + $0x618] sm:$0xff] %v9457
        %9714 = vst [vmem:[%s349 + $0x620] sm:$0xff] %v9458
        %9715 = vst [vmem:[%s349 + $0x628] sm:$0xff] %v9459
        %9716 = vst [vmem:[%s349 + $0x630] sm:$0xff] %v9460
        %9717 = vst [vmem:[%s349 + $0x638] sm:$0xff] %v9461
        %9718 = vst [vmem:[%s349 + $0x640] sm:$0xff] %v9462
        %9719 = vst [vmem:[%s349 + $0x648] sm:$0xff] %v9463
        %9720 = vst [vmem:[%s349 + $0x650] sm:$0xff] %v9464
        %9721 = vst [vmem:[%s349 + $0x658] sm:$0xff] %v9465
        %9722 = vst [vmem:[%s349 + $0x660] sm:$0xff] %v9466
        %9723 = vst [vmem:[%s349 + $0x668] sm:$0xff] %v9467
        %9724 = vst [vmem:[%s349 + $0x670] sm:$0xff] %v9468
        %9725 = vst [vmem:[%s349 + $0x678] sm:$0xff] %v9469
        %9726 = vst [vmem:[%s349 + $0x680] sm:$0xff] %v9470
        %9727 = vst [vmem:[%s349 + $0x688] sm:$0xff] %v9471
        %9728 = vst [vmem:[%s349 + $0x690] sm:$0xff] %v9472
        %9729 = vst [vmem:[%s349 + $0x698] sm:$0xff] %v9473
        %9730 = vst [vmem:[%s349 + $0x6a0] sm:$0xff] %v9474
        %9731 = vst [vmem:[%s349 + $0x6a8] sm:$0xff] %v9475
        %9732 = vst [vmem:[%s349 + $0x6b0] sm:$0xff] %v9476
        %9733 = vst [vmem:[%s349 + $0x6b8] sm:$0xff] %v9477
        %9734 = vst [vmem:[%s349 + $0x6c0] sm:$0xff] %v9478
        %9735 = vst [vmem:[%s349 + $0x6c8] sm:$0xff] %v9479
        %9736 = vst [vmem:[%s349 + $0x6d0] sm:$0xff] %v9480
        %9737 = vst [vmem:[%s349 + $0x6d8] sm:$0xff] %v9481
        %9738 = vst [vmem:[%s349 + $0x6e0] sm:$0xff] %v9482
        %9739 = vst [vmem:[%s349 + $0x6e8] sm:$0xff] %v9483
        %9740 = vst [vmem:[%s349 + $0x6f0] sm:$0xff] %v9484
        %9741 = vst [vmem:[%s349 + $0x6f8] sm:$0xff] %v9485
        %9742 = vst [vmem:[%s349 + $0x700] sm:$0xff] %v9486
        %9743 = vst [vmem:[%s349 + $0x708] sm:$0xff] %v9487
        %9744 = vst [vmem:[%s349 + $0x710] sm:$0xff] %v9488
        %9745 = vst [vmem:[%s349 + $0x718] sm:$0xff] %v9489
        %9746 = vst [vmem:[%s349 + $0x720] sm:$0xff] %v9490
        %9747 = vst [vmem:[%s349 + $0x728] sm:$0xff] %v9491
        %9748 = vst [vmem:[%s349 + $0x730] sm:$0xff] %v9492
        %9749 = vst [vmem:[%s349 + $0x738] sm:$0xff] %v9493
        %9750 = vst [vmem:[%s349 + $0x740] sm:$0xff] %v9494
        %9751 = vst [vmem:[%s349 + $0x748] sm:$0xff] %v9495
        %9752 = vst [vmem:[%s349 + $0x750] sm:$0xff] %v9496
        %9753 = vst [vmem:[%s349 + $0x758] sm:$0xff] %v9497
        %9754 = vst [vmem:[%s349 + $0x760] sm:$0xff] %v9498
        %9755 = vst [vmem:[%s349 + $0x768] sm:$0xff] %v9499
        %9756 = vst [vmem:[%s349 + $0x770] sm:$0xff] %v9500
        %9757 = vst [vmem:[%s349 + $0x778] sm:$0xff] %v9501
        %9758 = vst [vmem:[%s349 + $0x780] sm:$0xff] %v9502
        %9759 = vst [vmem:[%s349 + $0x788] sm:$0xff] %v9503
        %9760 = vst [vmem:[%s349 + $0x790] sm:$0xff] %v9504
        %9761 = vst [vmem:[%s349 + $0x798] sm:$0xff] %v9505
        %9762 = vst [vmem:[%s349 + $0x7a0] sm:$0xff] %v9506
        %9763 = vst [vmem:[%s349 + $0x7a8] sm:$0xff] %v9507
        %9764 = vst [vmem:[%s349 + $0x7b0] sm:$0xff] %v9508
        %9765 = vst [vmem:[%s349 + $0x7b8] sm:$0xff] %v9509
        %9766 = vst [vmem:[%s349 + $0x7c0] sm:$0xff] %v9510
        %9767 = vst [vmem:[%s349 + $0x7c8] sm:$0xff] %v9511
        %9768 = vst [vmem:[%s349 + $0x7d0] sm:$0xff] %v9512
        %9769 = vst [vmem:[%s349 + $0x7d8] sm:$0xff] %v9513
        %9770 = vst [vmem:[%s349 + $0x7e0] sm:$0xff] %v9514
        %9771 = vst [vmem:[%s349 + $0x7e8] sm:$0xff] %v9515
        %9772 = vst [vmem:[%s349 + $0x7f0] sm:$0xff] %v9516
        %9773 = vst [vmem:[%s349 + $0x7f8] sm:$0xff] %v9517
        %s9774 = sand.u32 %s159, 1
        %s9775 = scalar_lea.sflag [#allocation4], %s9774
        %s9776 = sand.u32 %s159, 1
        %s9777 = smul.addr %s9776, 2048
        %s9778 = scalar_lea.vmem [#allocation7], %s9777
        %s9779 = sand.u32 %s187, 1
        %s9780 = scalar_lea.sflag [#allocation9], %s9779
        %s9781 = sand.u32 %s187, 1
        %s9782 = smul.addr %s9781, 2048
        %s9783 = scalar_lea.vmem [#allocation8], %s9782
        // Predicated region
        $region45: #{rotary_embedding.1} parent=35 // pred_check
          %p9784 = pneg %p169
        $region46: #{rotary_embedding.1} parent=35 // pred_check_branch
          %9786 = sbr.rel (%p9784) target = $region48
        $region47: #{rotary_embedding.1} parent=35 // pred_region
          %s9787 = smul.u32 256, %s33
          %s9789 = ssub.s32 32768, 32768
          %9790 = vsyncadd %s9775, %s9789
          %s9791 = smul.addr %s34, 256
          %s9792 = sadd.s32 %s9787, %s9791
          %s9793 = smul.addr %s9792, 128
          %s9794 = scalar_lea.hbm %s4, %s9793
          %s9795 = sshll.u32 %s9778, 4
          %s9796 = int_to_ptr.vmem [resolvable:$true] %s9795
          %9801 = dma.vmem_to_hbm [thread:$0]  %s9796, 32768, %s9794, %s9775, 128, 128, 8
        $region48: #{rotary_embedding.1} parent=35 // pred_fallthru
          _
        // Predicated region
        $region49: #{rotary_embedding.1} parent=35 // pred_check
          %p9802 = pneg %p197
        $region50: #{rotary_embedding.1} parent=35 // pred_check_branch
          %9804 = sbr.rel (%p9802) target = $region52
        $region51: #{rotary_embedding.1} parent=35 // pred_region
          %s9805 = smul.u32 256, %s33
          %s9807 = ssub.s32 32768, 32768
          %9808 = vsyncadd %s9780, %s9807
          %s9809 = smul.addr %s34, 256
          %s9810 = sadd.s32 %s9805, %s9809
          %s9811 = smul.addr %s9810, 128
          %s9812 = scalar_lea.hbm %s5, %s9811
          %s9813 = sshll.u32 %s9783, 4
          %s9814 = int_to_ptr.vmem [resolvable:$true] %s9813
          %9819 = dma.vmem_to_hbm [thread:$0]  %s9814, 32768, %s9812, %s9780, 128, 128, 8
        $region52: #{rotary_embedding.1} parent=35 // pred_fallthru
          _
      $region36: #{rotary_embedding.1} parent=5 // pred_fallthru
        _
      %p9820 = scmp.le.s32.totalorder 2, %s24
      // Predicated region
      $region53: #{rotary_embedding.1} parent=5 // pred_check
        %p9821 = pneg %p9820
      $region54: #{rotary_embedding.1} parent=5 // pred_check_branch
        %9823 = sbr.rel (%p9821) target = $region56
      $region55: #{rotary_embedding.1} parent=5 // pred_region
        %s9824 = ssub.s32 %s24, 2
        // Predicated region
        $region57: #{rotary_embedding.1} parent=55 // pred_check
          %p9825 = pneg %p175
        $region58: #{rotary_embedding.1} parent=55 // pred_check_branch
          %9827 = sbr.rel (%p9825) target = $region60
        $region59: #{rotary_embedding.1} parent=55 // pred_region
          %s9828 = sand.u32 %s160, 1
          %s9829 = scalar_lea.sflag [#allocation4], %s9828
          %s9830 = sand.u32 %s160, 1
          %s9831 = smul.addr %s9830, 2048
          %s9832 = scalar_lea.vmem [#allocation7], %s9831
          %9833 = dma.done %s9829, 32768
        $region60: #{rotary_embedding.1} parent=55 // pred_fallthru
          _
        // Predicated region
        $region61: #{rotary_embedding.1} parent=55 // pred_check
          %p9834 = pneg %p203
        $region62: #{rotary_embedding.1} parent=55 // pred_check_branch
          %9836 = sbr.rel (%p9834) target = $region64
        $region63: #{rotary_embedding.1} parent=55 // pred_region
          %s9837 = sand.u32 %s188, 1
          %s9838 = scalar_lea.sflag [#allocation9], %s9837
          %s9839 = sand.u32 %s188, 1
          %s9840 = smul.addr %s9839, 2048
          %s9841 = scalar_lea.vmem [#allocation8], %s9840
          %9842 = dma.done %s9838, 32768
        $region64: #{rotary_embedding.1} parent=55 // pred_fallthru
          _
      $region56: #{rotary_embedding.1} parent=5 // pred_fallthru
        _
    $region6: #{rotary_embedding.1} parent=1 // loop_footer
      %s28 = sadd.s32 1, %s24
    $region7: #{rotary_embedding.1} parent=1 // loop_footer_branch
      %23 = sbr.rel target = $region3
    $region8: #{rotary_embedding.1} parent=1 // loop_exit
      _
    %9843 = vsyncpa [#allocation3], 1
    %s9844 = scalar_lea.sflag [#allocation3], 1
    %9845 = vsyncpa %s9844, 1
    %9846 = vsyncpa [#allocation6], 1
    %s9847 = scalar_lea.sflag [#allocation6], 1
    %9848 = vsyncpa %s9847, 1
    %9849 = vsyncpa [#allocation4], 1
    %s9850 = scalar_lea.sflag [#allocation4], 1
    %9851 = vsyncpa %s9850, 1
    %9852 = vsyncpa [#allocation9], 1
    %s9853 = scalar_lea.sflag [#allocation9], 1
    %9854 = vsyncpa %s9853, 1

</llo_original>
